<compile_context>
chip_gen: v7x
topology: tpu7x:2x2x1
jax: 0.10.0
libtpu: 0.0.40
codegen_flags: <defaults>
</compile_context>

<pallas_src>
import functools
import math

import jax
import jax.numpy as jnp
from jax import lax
from jax.experimental import pallas as pl
from jax.experimental.pallas import tpu as pltpu

BN_EPS = 1e-5
LANE = 128


def _row_tile(m, cap):
    """Largest multiple-of-8 divisor of m that is <= cap (else m itself)."""
    if m <= cap:
        return m
    t = cap - cap % 8
    while t >= 8:
        if m % t == 0:
            return t
        t -= 8
    return m


# ----------------------------------------------------------------------------
# Pallas kernels
# ----------------------------------------------------------------------------
def _bn_relu_kernel(x_ref, scale_ref, shift_ref, o_ref):
    y = x_ref[...] * scale_ref[...] + shift_ref[...]
    o_ref[...] = jnp.maximum(y, 0.0).astype(o_ref.dtype)


def _conv3x3_kernel(*refs, W, TM, relu, has_residual):
    """Direct 3x3 conv: 9 bf16 MXU matmuls, f32 accumulation, fused epilogue."""
    if has_residual:
        a0_ref, a1_ref, a2_ref, w_ref, b_ref, res_ref, o_ref = refs
    else:
        a0_ref, a1_ref, a2_ref, w_ref, b_ref, o_ref = refs
        res_ref = None
    TN = o_ref.shape[-1]
    a_refs = (a0_ref, a1_ref, a2_ref)
    m0 = pl.program_id(2) * TM            # grid = (N, Cout/TN, M/TM)
    aligned = (W % 8 == 0) and (TM % 8 == 0)

    acc = jnp.zeros((TM, TN), jnp.float32)
    for dj in range(3):                   # column tap: pre-shifted input view
        for di in range(3):               # row tap: contiguous flat-row offset
            start = m0 + di * W
            if aligned:
                start = pl.multiple_of(start, 8)
            a = a_refs[dj][pl.ds(start, TM), :]               # (TM, Cin) bf16
            acc = acc + jnp.dot(a, w_ref[di * 3 + dj],
                                preferred_element_type=jnp.float32)
    y = acc + b_ref[...]                  # bias (BN already folded for conv1)
    if relu:
        y = jnp.maximum(y, 0.0)
    if has_residual:
        y = y + res_ref[...]              # fused residual add (conv2)
    o_ref[...] = y.astype(o_ref.dtype)


# ----------------------------------------------------------------------------
# Kernel wrappers
# ----------------------------------------------------------------------------
def bn_relu(x, scale, shift):
    """y = relu(x * scale + shift) per channel; emits bf16 for the conv GEMM."""
    N, H, W, C = x.shape
    M = N * H * W
    tm = _row_tile(M, 1024)
    out = pl.pallas_call(
        _bn_relu_kernel,
        out_shape=jax.ShapeDtypeStruct((M, C), jnp.bfloat16),
        grid_spec=pltpu.PrefetchScalarGridSpec(
            num_scalar_prefetch=0,
            grid=(M // tm,),
            in_specs=[
                pl.BlockSpec((tm, C), lambda i: (i, 0)),
                pl.BlockSpec((1, C), lambda i: (0, 0)),
                pl.BlockSpec((1, C), lambda i: (0, 0)),
            ],
            out_specs=pl.BlockSpec((tm, C), lambda i: (i, 0)),
        ),
        compiler_params=pltpu.CompilerParams(
            dimension_semantics=("parallel",)),
    )(x.reshape(M, C),
      scale.reshape(1, C).astype(jnp.float32),
      shift.reshape(1, C).astype(jnp.float32))
    return out.reshape(N, H, W, C)


def conv3x3(x, w, b, *, relu, residual=None, out_dtype=jnp.float32):
    """3x3 stride-1 pad-1 conv with fused bias (+ReLU) (+residual add).

    x: (N, H, W, Cin) bf16; w: (3, 3, Cin, Cout); b: (Cout,);
    residual: optional (N, H, W, Cout) f32 added in the epilogue.
    """
    N, H, W, Cin = x.shape
    Cout = w.shape[-1]
    M = H * W
    TM = _row_tile(M, 512)
    TN = 256 if Cout % 256 == 0 else LANE

    xpad = jnp.pad(x.astype(jnp.bfloat16), ((0, 0), (1, 1), (1, 1), (0, 0)))
    # Column-shifted views, flattened over (row, col).  For output flat index m
    # and tap (di, dj) the needed rows of a[dj] are [m + di*W, m + di*W + TM):
    # contiguous, so no im2col blowup and no in-kernel reshapes.
    a = [xpad[:, :, dj:dj + W, :].reshape(N, (H + 2) * W, Cin)
         for dj in range(3)]
    wmat = w.reshape(9, Cin, Cout).astype(jnp.bfloat16)
    bias = b.reshape(1, Cout).astype(jnp.float32)

    full_rows = (H + 2) * W
    in_specs = [pl.BlockSpec((None, full_rows, Cin),
                             lambda n, j, m: (n, 0, 0))] * 3
    in_specs += [
        pl.BlockSpec((9, Cin, TN), lambda n, j, m: (0, 0, j)),
        pl.BlockSpec((1, TN), lambda n, j, m: (0, j)),
    ]
    inputs = a + [wmat, bias]
    if residual is not None:
        in_specs.append(pl.BlockSpec((None, TM, TN), lambda n, j, m: (n, m, j)))
        inputs.append(residual.reshape(N, M, Cout).astype(jnp.float32))

    out = pl.pallas_call(
        functools.partial(_conv3x3_kernel, W=W, TM=TM, relu=relu,
                          has_residual=residual is not None),
        out_shape=jax.ShapeDtypeStruct((N, M, Cout), out_dtype),
        grid_spec=pltpu.PrefetchScalarGridSpec(
            num_scalar_prefetch=0,
            grid=(N, Cout // TN, M // TM),
            in_specs=in_specs,
            out_specs=pl.BlockSpec((None, TM, TN), lambda n, j, m: (n, m, j)),
        ),
        compiler_params=pltpu.CompilerParams(
            dimension_semantics=("parallel", "parallel", "parallel"),
            vmem_limit_bytes=48 * 1024 * 1024),
    )(*inputs)
    return out.reshape(N, H, W, Cout)


# ----------------------------------------------------------------------------
# Parameters and forward pass
# ----------------------------------------------------------------------------
def make_refine_params(key, planes):
    ks = jax.random.split(key, 6)
    std = math.sqrt(2.0 / (9 * planes))
    return {
        "w1": jax.random.normal(ks[0], (3, 3, planes, planes), jnp.float32) * std,
        "b1": jax.random.normal(ks[1], (planes,), jnp.float32) * 0.01,
        "w2": jax.random.normal(ks[2], (3, 3, planes, planes), jnp.float32) * std,
        "b2": jax.random.normal(ks[3], (planes,), jnp.float32) * 0.01,
        "gamma": 1.0 + 0.1 * jax.random.normal(ks[4], (planes,), jnp.float32),
        "beta": 0.1 * jax.random.normal(ks[5], (planes,), jnp.float32),
        "mean": jnp.zeros((planes,), jnp.float32),
        "var": jnp.ones((planes,), jnp.float32),
    }


def refine_forward(params, x_nchw):
    """Pallas forward of Refine.  x: (N, C, H, W) -> (N, C, H, W)."""
    x = jnp.transpose(x_nchw, (0, 2, 3, 1)).astype(jnp.float32)      # NHWC
    N, H, W, C = x.shape

    w1, b1 = params["w1"], params["b1"]
    w2, b2 = params["w2"], params["b2"]
    gamma, beta = params["gamma"], params["beta"]
    mean, var = params["mean"], params["var"]

    # Pad channels to a multiple of 128 so every tile is lane-dense.
    Cp = ((C + LANE - 1) // LANE) * LANE
    if Cp != C:
        pc = Cp - C
        x = jnp.pad(x, ((0, 0), (0, 0), (0, 0), (0, pc)))
        w1 = jnp.pad(w1, ((0, 0), (0, 0), (0, pc), (0, pc)))
        w2 = jnp.pad(w2, ((0, 0), (0, 0), (0, pc), (0, pc)))
        b1 = jnp.pad(b1, (0, pc))
        b2 = jnp.pad(b2, (0, pc))
        gamma = jnp.pad(gamma, (0, pc))          # -> scale 0 on pad channels
        beta = jnp.pad(beta, (0, pc))
        mean = jnp.pad(mean, (0, pc))
        var = jnp.pad(var, (0, pc), constant_values=1.0)

    # Inference BatchNorm as a per-channel affine.
    scale = gamma / jnp.sqrt(var + BN_EPS)
    shift = beta - mean * scale

    # 1) s = relu(bn(x))                                  (bf16 conv operand)
    s = bn_relu(x, scale, shift)

    # 2) t = relu(bn(conv1(s))): fold the post-conv BN into conv1's w/b.
    w1f = w1 * scale[None, None, None, :]
    b1f = b1 * scale + shift
    t = conv3x3(s, w1f, b1f, relu=True, out_dtype=jnp.bfloat16)

    # 3) out = x + conv2(t): residual add fused into conv2's epilogue.
    out = conv3x3(t, w2, b2, relu=False, residual=x, out_dtype=jnp.float32)

    return jnp.transpose(out[..., :C], (0, 3, 1, 2))


def refine_reference(params, x_nchw):
    """Pure-JAX f32 reference of Refine.forward (inference-mode BN)."""
    scale = params["gamma"] / jnp.sqrt(params["var"] + BN_EPS)
    shift = params["beta"] - params["mean"] * scale

    def bn_relu_ref(v):
        return jnp.maximum(v * scale[None, :, None, None]
                           + shift[None, :, None, None], 0.0)

    def conv_ref(v, w, b):
        y = lax.conv_general_dilated(
            v, w, window_strides=(1, 1), padding=((1, 1), (1, 1)),
            dimension_numbers=("NCHW", "HWIO", "NCHW"),
            precision=lax.Precision.HIGHEST)
        return y + b[None, :, None, None]

    h = conv_ref(bn_relu_ref(x_nchw), params["w1"], params["b1"])
    h = conv_ref(bn_relu_ref(h), params["w2"], params["b2"])
    return x_nchw + h


if __name__ == "__main__":
    key = jax.random.PRNGKey(0)
    pkey, xkey = jax.random.split(key)
    planes, batch, hw = 128, 2, 16
    params = make_refine_params(pkey, planes)
    x = jax.random.normal(xkey, (batch, planes, hw, hw), jnp.float32)   # NCHW

    out = jax.jit(refine_forward)(params, x)
    out = jax.block_until_ready(out)
    assert out.shape == x.shape, out.shape
    assert bool(jnp.all(jnp.isfinite(out)))

    ref = refine_reference(params, x)
    err = float(jnp.max(jnp.abs(out - ref)))
    assert err < 1e-1, f"max |pallas - reference| = {err}"   # bf16 operands, f32 acc

    print("KERNEL_OK")
</pallas_src>

<mosaic_0001>
module attributes {stable_mosaic.version = 11 : i64} {
  func.func @_bn_relu_kernel(%arg0: i32, %arg1: memref<512x128xf32, #tpu.memory_space<vmem>>, %arg2: memref<1x128xf32, #tpu.memory_space<vmem>>, %arg3: memref<1x128xf32, #tpu.memory_space<vmem>>, %arg4: memref<512x128xbf16, #tpu.memory_space<vmem>>) attributes {dimension_semantics = [#tpu.dimension_semantics<parallel>], iteration_bounds = array<i64: 1>, scalar_prefetch = 0 : i64, scratch_operands = 0 : i64, tpu.core_type = #tpu.core_type<tc>, window_params = [{transform_indices = @transform_0, window_bounds = array<i64: 512, 128>}, {pipeline_mode = #tpu.pipeline_mode<synchronous>, transform_indices = @transform_1, window_bounds = array<i64: 1, 128>}, {pipeline_mode = #tpu.pipeline_mode<synchronous>, transform_indices = @transform_2, window_bounds = array<i64: 1, 128>}, {transform_indices = @transform_3, window_bounds = array<i64: 512, 128>}]} {
    %c0 = arith.constant 0 : index
    %c0_0 = arith.constant 0 : index
    %0 = vector.load %arg1[%c0, %c0_0] : memref<512x128xf32, #tpu.memory_space<vmem>>, vector<512x128xf32>
    %c0_1 = arith.constant 0 : index
    %c0_2 = arith.constant 0 : index
    %1 = vector.load %arg2[%c0_1, %c0_2] : memref<1x128xf32, #tpu.memory_space<vmem>>, vector<1x128xf32>
    %2 = vector.broadcast %1 : vector<1x128xf32> to vector<512x128xf32>
    %3 = arith.mulf %0, %2 : vector<512x128xf32>
    %c0_3 = arith.constant 0 : index
    %c0_4 = arith.constant 0 : index
    %4 = vector.load %arg3[%c0_3, %c0_4] : memref<1x128xf32, #tpu.memory_space<vmem>>, vector<1x128xf32>
    %5 = vector.broadcast %4 : vector<1x128xf32> to vector<512x128xf32>
    %6 = arith.addf %3, %5 : vector<512x128xf32>
    %cst = arith.constant 0.000000e+00 : f32
    %7 = vector.broadcast %cst : f32 to vector<512x128xf32>
    %8 = arith.maximumf %6, %7 : vector<512x128xf32>
    %9 = arith.truncf %8 : vector<512x128xf32> to vector<512x128xbf16>
    %c0_5 = arith.constant 0 : index
    %c0_6 = arith.constant 0 : index
    %10 = vector.load %arg4[%c0_5, %c0_6] : memref<512x128xbf16, #tpu.memory_space<vmem>>, vector<512x128xbf16>
    tpu.vector_store %arg4[%c0_5, %c0_6], %9 {strides = array<i32>} : memref<512x128xbf16, #tpu.memory_space<vmem>>, vector<512x128xbf16>,
    return
  }
  func.func @transform_0(%arg0: i32) -> (i32, i32) {
    %c0_i32 = arith.constant 0 : i32
    %c0_i32_0 = arith.constant 0 : i32
    return %arg0, %c0_i32 : i32, i32
  }
  func.func @transform_1(%arg0: i32) -> (i32, i32) {
    %c0_i32 = arith.constant 0 : i32
    %c0_i32_0 = arith.constant 0 : i32
    %c0_i32_1 = arith.constant 0 : i32
    return %c0_i32, %c0_i32_0 : i32, i32
  }
  func.func @transform_2(%arg0: i32) -> (i32, i32) {
    %c0_i32 = arith.constant 0 : i32
    %c0_i32_0 = arith.constant 0 : i32
    %c0_i32_1 = arith.constant 0 : i32
    return %c0_i32, %c0_i32_0 : i32, i32
  }
  func.func @transform_3(%arg0: i32) -> (i32, i32) {
    %c0_i32 = arith.constant 0 : i32
    %c0_i32_0 = arith.constant 0 : i32
    return %arg0, %c0_i32 : i32, i32
  }
}

module attributes {stable_mosaic.version = 11 : i64} {
  func.func @_conv3x3_kernel(%arg0: i32, %arg1: i32, %arg2: i32, %arg3: memref<1x288x128xbf16, #tpu.memory_space<vmem>>, %arg4: memref<1x288x128xbf16, #tpu.memory_space<vmem>>, %arg5: memref<1x288x128xbf16, #tpu.memory_space<vmem>>, %arg6: memref<9x128x128xbf16, #tpu.memory_space<vmem>>, %arg7: memref<1x128xf32, #tpu.memory_space<vmem>>, %arg8: memref<1x256x128xbf16, #tpu.memory_space<vmem>>) attributes {dimension_semantics = [#tpu.dimension_semantics<parallel>, #tpu.dimension_semantics<parallel>, #tpu.dimension_semantics<parallel>], iteration_bounds = array<i64: 2, 1, 1>, scalar_prefetch = 0 : i64, scratch_operands = 0 : i64, tpu.core_type = #tpu.core_type<tc>, window_params = [{transform_indices = @transform_0, window_bounds = array<i64: 1, 288, 128>}, {transform_indices = @transform_1, window_bounds = array<i64: 1, 288, 128>}, {transform_indices = @transform_2, window_bounds = array<i64: 1, 288, 128>}, {transform_indices = @transform_3, window_bounds = array<i64: 9, 128, 128>}, {transform_indices = @transform_4, window_bounds = array<i64: 1, 128>}, {transform_indices = @transform_5, window_bounds = array<i64: 1, 256, 128>}]} {
    %c256_i32 = arith.constant 256 : i32
    %0 = arith.muli %arg2, %c256_i32 : i32
    %cst = arith.constant 0.000000e+00 : f32
    %1 = vector.broadcast %cst : f32 to vector<256x128xf32>
    %c0_i32 = arith.constant 0 : i32
    %2 = arith.addi %0, %c0_i32 : i32
    %3 = tpu.assume_multiple %2, 8 : i32
    %c0 = arith.constant 0 : index
    %4 = arith.index_cast %3 : i32 to index
    %c0_0 = arith.constant 0 : index
    %5 = vector.load %arg3[%c0, %4, %c0_0] : memref<1x288x128xbf16, #tpu.memory_space<vmem>>, vector<1x256x128xbf16>
    %6 = vector.shape_cast %5 : vector<1x256x128xbf16> to vector<256x128xbf16>
    %c0_1 = arith.constant 0 : index
    %c0_2 = arith.constant 0 : index
    %c0_3 = arith.constant 0 : index
    %7 = vector.load %arg6[%c0_1, %c0_2, %c0_3] : memref<9x128x128xbf16, #tpu.memory_space<vmem>>, vector<1x128x128xbf16>
    %8 = vector.shape_cast %7 : vector<1x128x128xbf16> to vector<128x128xbf16>
    %cst_4 = arith.constant dense<0.000000e+00> : vector<256x128xf32>
    %9 = tpu.matmul %6, %8, %cst_4 {dimension_numbers = #tpu.dot_dimension_numbers<[1], [0], [0], [1], [0, 0, 1, 1], [], []>} : vector<256x128xbf16>, vector<128x128xbf16>, vector<256x128xf32> -> vector<256x128xf32>
    %10 = arith.addf %1, %9 : vector<256x128xf32>
    %c16_i32 = arith.constant 16 : i32
    %11 = arith.addi %0, %c16_i32 : i32
    %12 = tpu.assume_multiple %11, 8 : i32
    %c0_5 = arith.constant 0 : index
    %13 = arith.index_cast %12 : i32 to index
    %c0_6 = arith.constant 0 : index
    %14 = vector.load %arg3[%c0_5, %13, %c0_6] : memref<1x288x128xbf16, #tpu.memory_space<vmem>>, vector<1x256x128xbf16>
    %15 = vector.shape_cast %14 : vector<1x256x128xbf16> to vector<256x128xbf16>
    %c3 = arith.constant 3 : index
    %c0_7 = arith.constant 0 : index
    %c0_8 = arith.constant 0 : index
    %16 = vector.load %arg6[%c3, %c0_7, %c0_8] : memref<9x128x128xbf16, #tpu.memory_space<vmem>>, vector<1x128x128xbf16>
    %17 = vector.shape_cast %16 : vector<1x128x128xbf16> to vector<128x128xbf16>
    %cst_9 = arith.constant dense<0.000000e+00> : vector<256x128xf32>
    %18 = tpu.matmul %15, %17, %cst_9 {dimension_numbers = #tpu.dot_dimension_numbers<[1], [0], [0], [1], [0, 0, 1, 1], [], []>} : vector<256x128xbf16>, vector<128x128xbf16>, vector<256x128xf32> -> vector<256x128xf32>
    %19 = arith.addf %10, %18 : vector<256x128xf32>
    %c32_i32 = arith.constant 32 : i32
    %20 = arith.addi %0, %c32_i32 : i32
    %21 = tpu.assume_multiple %20, 8 : i32
    %c0_10 = arith.constant 0 : index
    %22 = arith.index_cast %21 : i32 to index
    %c0_11 = arith.constant 0 : index
    %23 = vector.load %arg3[%c0_10, %22, %c0_11] : memref<1x288x128xbf16, #tpu.memory_space<vmem>>, vector<1x256x128xbf16>
    %24 = vector.shape_cast %23 : vector<1x256x128xbf16> to vector<256x128xbf16>
    %c6 = arith.constant 6 : index
    %c0_12 = arith.constant 0 : index
    %c0_13 = arith.constant 0 : index
    %25 = vector.load %arg6[%c6, %c0_12, %c0_13] : memref<9x128x128xbf16, #tpu.memory_space<vmem>>, vector<1x128x128xbf16>
    %26 = vector.shape_cast %25 : vector<1x128x128xbf16> to vector<128x128xbf16>
    %cst_14 = arith.constant dense<0.000000e+00> : vector<256x128xf32>
    %27 = tpu.matmul %24, %26, %cst_14 {dimension_numbers = #tpu.dot_dimension_numbers<[1], [0], [0], [1], [0, 0, 1, 1], [], []>} : vector<256x128xbf16>, vector<128x128xbf16>, vector<256x128xf32> -> vector<256x128xf32>
    %28 = arith.addf %19, %27 : vector<256x128xf32>
    %c0_i32_15 = arith.constant 0 : i32
    %29 = arith.addi %0, %c0_i32_15 : i32
    %30 = tpu.assume_multiple %29, 8 : i32
    %c0_16 = arith.constant 0 : index
    %31 = arith.index_cast %30 : i32 to index
    %c0_17 = arith.constant 0 : index
    %32 = vector.load %arg4[%c0_16, %31, %c0_17] : memref<1x288x128xbf16, #tpu.memory_space<vmem>>, vector<1x256x128xbf16>
    %33 = vector.shape_cast %32 : vector<1x256x128xbf16> to vector<256x128xbf16>
    %c1 = arith.constant 1 : index
    %c0_18 = arith.constant 0 : index
    %c0_19 = arith.constant 0 : index
    %34 = vector.load %arg6[%c1, %c0_18, %c0_19] : memref<9x128x128xbf16, #tpu.memory_space<vmem>>, vector<1x128x128xbf16>
    %35 = vector.shape_cast %34 : vector<1x128x128xbf16> to vector<128x128xbf16>
    %cst_20 = arith.constant dense<0.000000e+00> : vector<256x128xf32>
    %36 = tpu.matmul %33, %35, %cst_20 {dimension_numbers = #tpu.dot_dimension_numbers<[1], [0], [0], [1], [0, 0, 1, 1], [], []>} : vector<256x128xbf16>, vector<128x128xbf16>, vector<256x128xf32> -> vector<256x128xf32>
    %37 = arith.addf %28, %36 : vector<256x128xf32>
    %c16_i32_21 = arith.constant 16 : i32
    %38 = arith.addi %0, %c16_i32_21 : i32
    %39 = tpu.assume_multiple %38, 8 : i32
    %c0_22 = arith.constant 0 : index
    %40 = arith.index_cast %39 : i32 to index
    %c0_23 = arith.constant 0 : index
    %41 = vector.load %arg4[%c0_22, %40, %c0_23] : memref<1x288x128xbf16, #tpu.memory_space<vmem>>, vector<1x256x128xbf16>
    %42 = vector.shape_cast %41 : vector<1x256x128xbf16> to vector<256x128xbf16>
    %c4 = arith.constant 4 : index
    %c0_24 = arith.constant 0 : index
    %c0_25 = arith.constant 0 : index
    %43 = vector.load %arg6[%c4, %c0_24, %c0_25] : memref<9x128x128xbf16, #tpu.memory_space<vmem>>, vector<1x128x128xbf16>
    %44 = vector.shape_cast %43 : vector<1x128x128xbf16> to vector<128x128xbf16>
    %cst_26 = arith.constant dense<0.000000e+00> : vector<256x128xf32>
    %45 = tpu.matmul %42, %44, %cst_26 {dimension_numbers = #tpu.dot_dimension_numbers<[1], [0], [0], [1], [0, 0, 1, 1], [], []>} : vector<256x128xbf16>, vector<128x128xbf16>, vector<256x128xf32> -> vector<256x128xf32>
    %46 = arith.addf %37, %45 : vector<256x128xf32>
    %c32_i32_27 = arith.constant 32 : i32
    %47 = arith.addi %0, %c32_i32_27 : i32
    %48 = tpu.assume_multiple %47, 8 : i32
    %c0_28 = arith.constant 0 : index
    %49 = arith.index_cast %48 : i32 to index
    %c0_29 = arith.constant 0 : index
    %50 = vector.load %arg4[%c0_28, %49, %c0_29] : memref<1x288x128xbf16, #tpu.memory_space<vmem>>, vector<1x256x128xbf16>
    %51 = vector.shape_cast %50 : vector<1x256x128xbf16> to vector<256x128xbf16>
    %c7 = arith.constant 7 : index
    %c0_30 = arith.constant 0 : index
    %c0_31 = arith.constant 0 : index
    %52 = vector.load %arg6[%c7, %c0_30, %c0_31] : memref<9x128x128xbf16, #tpu.memory_space<vmem>>, vector<1x128x128xbf16>
    %53 = vector.shape_cast %52 : vector<1x128x128xbf16> to vector<128x128xbf16>
    %cst_32 = arith.constant dense<0.000000e+00> : vector<256x128xf32>
    %54 = tpu.matmul %51, %53, %cst_32 {dimension_numbers = #tpu.dot_dimension_numbers<[1], [0], [0], [1], [0, 0, 1, 1], [], []>} : vector<256x128xbf16>, vector<128x128xbf16>, vector<256x128xf32> -> vector<256x128xf32>
    %55 = arith.addf %46, %54 : vector<256x128xf32>
    %c0_i32_33 = arith.constant 0 : i32
    %56 = arith.addi %0, %c0_i32_33 : i32
    %57 = tpu.assume_multiple %56, 8 : i32
    %c0_34 = arith.constant 0 : index
    %58 = arith.index_cast %57 : i32 to index
    %c0_35 = arith.constant 0 : index
    %59 = vector.load %arg5[%c0_34, %58, %c0_35] : memref<1x288x128xbf16, #tpu.memory_space<vmem>>, vector<1x256x128xbf16>
    %60 = vector.shape_cast %59 : vector<1x256x128xbf16> to vector<256x128xbf16>
    %c2 = arith.constant 2 : index
    %c0_36 = arith.constant 0 : index
    %c0_37 = arith.constant 0 : index
    %61 = vector.load %arg6[%c2, %c0_36, %c0_37] : memref<9x128x128xbf16, #tpu.memory_space<vmem>>, vector<1x128x128xbf16>
    %62 = vector.shape_cast %61 : vector<1x128x128xbf16> to vector<128x128xbf16>
    %cst_38 = arith.constant dense<0.000000e+00> : vector<256x128xf32>
    %63 = tpu.matmul %60, %62, %cst_38 {dimension_numbers = #tpu.dot_dimension_numbers<[1], [0], [0], [1], [0, 0, 1, 1], [], []>} : vector<256x128xbf16>, vector<128x128xbf16>, vector<256x128xf32> -> vector<256x128xf32>
    %64 = arith.addf %55, %63 : vector<256x128xf32>
    %c16_i32_39 = arith.constant 16 : i32
    %65 = arith.addi %0, %c16_i32_39 : i32
    %66 = tpu.assume_multiple %65, 8 : i32
    %c0_40 = arith.constant 0 : index
    %67 = arith.index_cast %66 : i32 to index
    %c0_41 = arith.constant 0 : index
    %68 = vector.load %arg5[%c0_40, %67, %c0_41] : memref<1x288x128xbf16, #tpu.memory_space<vmem>>, vector<1x256x128xbf16>
    %69 = vector.shape_cast %68 : vector<1x256x128xbf16> to vector<256x128xbf16>
    %c5 = arith.constant 5 : index
    %c0_42 = arith.constant 0 : index
    %c0_43 = arith.constant 0 : index
    %70 = vector.load %arg6[%c5, %c0_42, %c0_43] : memref<9x128x128xbf16, #tpu.memory_space<vmem>>, vector<1x128x128xbf16>
    %71 = vector.shape_cast %70 : vector<1x128x128xbf16> to vector<128x128xbf16>
    %cst_44 = arith.constant dense<0.000000e+00> : vector<256x128xf32>
    %72 = tpu.matmul %69, %71, %cst_44 {dimension_numbers = #tpu.dot_dimension_numbers<[1], [0], [0], [1], [0, 0, 1, 1], [], []>} : vector<256x128xbf16>, vector<128x128xbf16>, vector<256x128xf32> -> vector<256x128xf32>
    %73 = arith.addf %64, %72 : vector<256x128xf32>
    %c32_i32_45 = arith.constant 32 : i32
    %74 = arith.addi %0, %c32_i32_45 : i32
    %75 = tpu.assume_multiple %74, 8 : i32
    %c0_46 = arith.constant 0 : index
    %76 = arith.index_cast %75 : i32 to index
    %c0_47 = arith.constant 0 : index
    %77 = vector.load %arg5[%c0_46, %76, %c0_47] : memref<1x288x128xbf16, #tpu.memory_space<vmem>>, vector<1x256x128xbf16>
    %78 = vector.shape_cast %77 : vector<1x256x128xbf16> to vector<256x128xbf16>
    %c8 = arith.constant 8 : index
    %c0_48 = arith.constant 0 : index
    %c0_49 = arith.constant 0 : index
    %79 = vector.load %arg6[%c8, %c0_48, %c0_49] : memref<9x128x128xbf16, #tpu.memory_space<vmem>>, vector<1x128x128xbf16>
    %80 = vector.shape_cast %79 : vector<1x128x128xbf16> to vector<128x128xbf16>
    %cst_50 = arith.constant dense<0.000000e+00> : vector<256x128xf32>
    %81 = tpu.matmul %78, %80, %cst_50 {dimension_numbers = #tpu.dot_dimension_numbers<[1], [0], [0], [1], [0, 0, 1, 1], [], []>} : vector<256x128xbf16>, vector<128x128xbf16>, vector<256x128xf32> -> vector<256x128xf32>
    %82 = arith.addf %73, %81 : vector<256x128xf32>
    %c0_51 = arith.constant 0 : index
    %c0_52 = arith.constant 0 : index
    %83 = vector.load %arg7[%c0_51, %c0_52] : memref<1x128xf32, #tpu.memory_space<vmem>>, vector<1x128xf32>
    %84 = vector.broadcast %83 : vector<1x128xf32> to vector<256x128xf32>
    %85 = arith.addf %82, %84 : vector<256x128xf32>
    %cst_53 = arith.constant 0.000000e+00 : f32
    %86 = vector.broadcast %cst_53 : f32 to vector<256x128xf32>
    %87 = arith.maximumf %85, %86 : vector<256x128xf32>
    %88 = arith.truncf %87 : vector<256x128xf32> to vector<256x128xbf16>
    %c0_54 = arith.constant 0 : index
    %c0_55 = arith.constant 0 : index
    %c0_56 = arith.constant 0 : index
    %89 = vector.load %arg8[%c0_54, %c0_55, %c0_56] : memref<1x256x128xbf16, #tpu.memory_space<vmem>>, vector<1x256x128xbf16>
    %90 = vector.shape_cast %89 : vector<1x256x128xbf16> to vector<256x128xbf16>
    %91 = vector.shape_cast %88 : vector<256x128xbf16> to vector<1x256x128xbf16>
    tpu.vector_store %arg8[%c0_54, %c0_55, %c0_56], %91 {strides = array<i32>} : memref<1x256x128xbf16, #tpu.memory_space<vmem>>, vector<1x256x128xbf16>,
    return
  }
  func.func @transform_0(%arg0: i32, %arg1: i32, %arg2: i32) -> (i32, i32, i32) {
    %c0_i32 = arith.constant 0 : i32
    %c0_i32_0 = arith.constant 0 : i32
    %c0_i32_1 = arith.constant 0 : i32
    return %arg0, %c0_i32, %c0_i32_0 : i32, i32, i32
  }
  func.func @transform_1(%arg0: i32, %arg1: i32, %arg2: i32) -> (i32, i32, i32) {
    %c0_i32 = arith.constant 0 : i32
    %c0_i32_0 = arith.constant 0 : i32
    %c0_i32_1 = arith.constant 0 : i32
    return %arg0, %c0_i32, %c0_i32_0 : i32, i32, i32
  }
  func.func @transform_2(%arg0: i32, %arg1: i32, %arg2: i32) -> (i32, i32, i32) {
    %c0_i32 = arith.constant 0 : i32
    %c0_i32_0 = arith.constant 0 : i32
    %c0_i32_1 = arith.constant 0 : i32
    return %arg0, %c0_i32, %c0_i32_0 : i32, i32, i32
  }
  func.func @transform_3(%arg0: i32, %arg1: i32, %arg2: i32) -> (i32, i32, i32) {
    %c0_i32 = arith.constant 0 : i32
    %c0_i32_0 = arith.constant 0 : i32
    %c0_i32_1 = arith.constant 0 : i32
    return %c0_i32, %c0_i32_0, %arg1 : i32, i32, i32
  }
  func.func @transform_4(%arg0: i32, %arg1: i32, %arg2: i32) -> (i32, i32) {
    %c0_i32 = arith.constant 0 : i32
    %c0_i32_0 = arith.constant 0 : i32
    return %c0_i32, %arg1 : i32, i32
  }
  func.func @transform_5(%arg0: i32, %arg1: i32, %arg2: i32) -> (i32, i32, i32) {
    %c0_i32 = arith.constant 0 : i32
    return %arg0, %arg2, %arg1 : i32, i32, i32
  }
}

module attributes {stable_mosaic.version = 11 : i64} {
  func.func @_conv3x3_kernel(%arg0: i32, %arg1: i32, %arg2: i32, %arg3: memref<1x288x128xbf16, #tpu.memory_space<vmem>>, %arg4: memref<1x288x128xbf16, #tpu.memory_space<vmem>>, %arg5: memref<1x288x128xbf16, #tpu.memory_space<vmem>>, %arg6: memref<9x128x128xbf16, #tpu.memory_space<vmem>>, %arg7: memref<1x128xf32, #tpu.memory_space<vmem>>, %arg8: memref<1x256x128xf32, #tpu.memory_space<vmem>>, %arg9: memref<1x256x128xf32, #tpu.memory_space<vmem>>) attributes {dimension_semantics = [#tpu.dimension_semantics<parallel>, #tpu.dimension_semantics<parallel>, #tpu.dimension_semantics<parallel>], iteration_bounds = array<i64: 2, 1, 1>, scalar_prefetch = 0 : i64, scratch_operands = 0 : i64, tpu.core_type = #tpu.core_type<tc>, window_params = [{transform_indices = @transform_0, window_bounds = array<i64: 1, 288, 128>}, {transform_indices = @transform_1, window_bounds = array<i64: 1, 288, 128>}, {transform_indices = @transform_2, window_bounds = array<i64: 1, 288, 128>}, {transform_indices = @transform_3, window_bounds = array<i64: 9, 128, 128>}, {transform_indices = @transform_4, window_bounds = array<i64: 1, 128>}, {transform_indices = @transform_5, window_bounds = array<i64: 1, 256, 128>}, {transform_indices = @transform_6, window_bounds = array<i64: 1, 256, 128>}]} {
    %c256_i32 = arith.constant 256 : i32
    %0 = arith.muli %arg2, %c256_i32 : i32
    %cst = arith.constant 0.000000e+00 : f32
    %1 = vector.broadcast %cst : f32 to vector<256x128xf32>
    %c0_i32 = arith.constant 0 : i32
    %2 = arith.addi %0, %c0_i32 : i32
    %3 = tpu.assume_multiple %2, 8 : i32
    %c0 = arith.constant 0 : index
    %4 = arith.index_cast %3 : i32 to index
    %c0_0 = arith.constant 0 : index
    %5 = vector.load %arg3[%c0, %4, %c0_0] : memref<1x288x128xbf16, #tpu.memory_space<vmem>>, vector<1x256x128xbf16>
    %6 = vector.shape_cast %5 : vector<1x256x128xbf16> to vector<256x128xbf16>
    %c0_1 = arith.constant 0 : index
    %c0_2 = arith.constant 0 : index
    %c0_3 = arith.constant 0 : index
    %7 = vector.load %arg6[%c0_1, %c0_2, %c0_3] : memref<9x128x128xbf16, #tpu.memory_space<vmem>>, vector<1x128x128xbf16>
    %8 = vector.shape_cast %7 : vector<1x128x128xbf16> to vector<128x128xbf16>
    %cst_4 = arith.constant dense<0.000000e+00> : vector<256x128xf32>
    %9 = tpu.matmul %6, %8, %cst_4 {dimension_numbers = #tpu.dot_dimension_numbers<[1], [0], [0], [1], [0, 0, 1, 1], [], []>} : vector<256x128xbf16>, vector<128x128xbf16>, vector<256x128xf32> -> vector<256x128xf32>
    %10 = arith.addf %1, %9 : vector<256x128xf32>
    %c16_i32 = arith.constant 16 : i32
    %11 = arith.addi %0, %c16_i32 : i32
    %12 = tpu.assume_multiple %11, 8 : i32
    %c0_5 = arith.constant 0 : index
    %13 = arith.index_cast %12 : i32 to index
    %c0_6 = arith.constant 0 : index
    %14 = vector.load %arg3[%c0_5, %13, %c0_6] : memref<1x288x128xbf16, #tpu.memory_space<vmem>>, vector<1x256x128xbf16>
    %15 = vector.shape_cast %14 : vector<1x256x128xbf16> to vector<256x128xbf16>
    %c3 = arith.constant 3 : index
    %c0_7 = arith.constant 0 : index
    %c0_8 = arith.constant 0 : index
    %16 = vector.load %arg6[%c3, %c0_7, %c0_8] : memref<9x128x128xbf16, #tpu.memory_space<vmem>>, vector<1x128x128xbf16>
    %17 = vector.shape_cast %16 : vector<1x128x128xbf16> to vector<128x128xbf16>
    %cst_9 = arith.constant dense<0.000000e+00> : vector<256x128xf32>
    %18 = tpu.matmul %15, %17, %cst_9 {dimension_numbers = #tpu.dot_dimension_numbers<[1], [0], [0], [1], [0, 0, 1, 1], [], []>} : vector<256x128xbf16>, vector<128x128xbf16>, vector<256x128xf32> -> vector<256x128xf32>
    %19 = arith.addf %10, %18 : vector<256x128xf32>
    %c32_i32 = arith.constant 32 : i32
    %20 = arith.addi %0, %c32_i32 : i32
    %21 = tpu.assume_multiple %20, 8 : i32
    %c0_10 = arith.constant 0 : index
    %22 = arith.index_cast %21 : i32 to index
    %c0_11 = arith.constant 0 : index
    %23 = vector.load %arg3[%c0_10, %22, %c0_11] : memref<1x288x128xbf16, #tpu.memory_space<vmem>>, vector<1x256x128xbf16>
    %24 = vector.shape_cast %23 : vector<1x256x128xbf16> to vector<256x128xbf16>
    %c6 = arith.constant 6 : index
    %c0_12 = arith.constant 0 : index
    %c0_13 = arith.constant 0 : index
    %25 = vector.load %arg6[%c6, %c0_12, %c0_13] : memref<9x128x128xbf16, #tpu.memory_space<vmem>>, vector<1x128x128xbf16>
    %26 = vector.shape_cast %25 : vector<1x128x128xbf16> to vector<128x128xbf16>
    %cst_14 = arith.constant dense<0.000000e+00> : vector<256x128xf32>
    %27 = tpu.matmul %24, %26, %cst_14 {dimension_numbers = #tpu.dot_dimension_numbers<[1], [0], [0], [1], [0, 0, 1, 1], [], []>} : vector<256x128xbf16>, vector<128x128xbf16>, vector<256x128xf32> -> vector<256x128xf32>
    %28 = arith.addf %19, %27 : vector<256x128xf32>
    %c0_i32_15 = arith.constant 0 : i32
    %29 = arith.addi %0, %c0_i32_15 : i32
    %30 = tpu.assume_multiple %29, 8 : i32
    %c0_16 = arith.constant 0 : index
    %31 = arith.index_cast %30 : i32 to index
    %c0_17 = arith.constant 0 : index
    %32 = vector.load %arg4[%c0_16, %31, %c0_17] : memref<1x288x128xbf16, #tpu.memory_space<vmem>>, vector<1x256x128xbf16>
    %33 = vector.shape_cast %32 : vector<1x256x128xbf16> to vector<256x128xbf16>
    %c1 = arith.constant 1 : index
    %c0_18 = arith.constant 0 : index
    %c0_19 = arith.constant 0 : index
    %34 = vector.load %arg6[%c1, %c0_18, %c0_19] : memref<9x128x128xbf16, #tpu.memory_space<vmem>>, vector<1x128x128xbf16>
    %35 = vector.shape_cast %34 : vector<1x128x128xbf16> to vector<128x128xbf16>
    %cst_20 = arith.constant dense<0.000000e+00> : vector<256x128xf32>
    %36 = tpu.matmul %33, %35, %cst_20 {dimension_numbers = #tpu.dot_dimension_numbers<[1], [0], [0], [1], [0, 0, 1, 1], [], []>} : vector<256x128xbf16>, vector<128x128xbf16>, vector<256x128xf32> -> vector<256x128xf32>
    %37 = arith.addf %28, %36 : vector<256x128xf32>
    %c16_i32_21 = arith.constant 16 : i32
    %38 = arith.addi %0, %c16_i32_21 : i32
    %39 = tpu.assume_multiple %38, 8 : i32
    %c0_22 = arith.constant 0 : index
    %40 = arith.index_cast %39 : i32 to index
    %c0_23 = arith.constant 0 : index
    %41 = vector.load %arg4[%c0_22, %40, %c0_23] : memref<1x288x128xbf16, #tpu.memory_space<vmem>>, vector<1x256x128xbf16>
    %42 = vector.shape_cast %41 : vector<1x256x128xbf16> to vector<256x128xbf16>
    %c4 = arith.constant 4 : index
    %c0_24 = arith.constant 0 : index
    %c0_25 = arith.constant 0 : index
    %43 = vector.load %arg6[%c4, %c0_24, %c0_25] : memref<9x128x128xbf16, #tpu.memory_space<vmem>>, vector<1x128x128xbf16>
    %44 = vector.shape_cast %43 : vector<1x128x128xbf16> to vector<128x128xbf16>
    %cst_26 = arith.constant dense<0.000000e+00> : vector<256x128xf32>
    %45 = tpu.matmul %42, %44, %cst_26 {dimension_numbers = #tpu.dot_dimension_numbers<[1], [0], [0], [1], [0, 0, 1, 1], [], []>} : vector<256x128xbf16>, vector<128x128xbf16>, vector<256x128xf32> -> vector<256x128xf32>
    %46 = arith.addf %37, %45 : vector<256x128xf32>
    %c32_i32_27 = arith.constant 32 : i32
    %47 = arith.addi %0, %c32_i32_27 : i32
    %48 = tpu.assume_multiple %47, 8 : i32
    %c0_28 = arith.constant 0 : index
    %49 = arith.index_cast %48 : i32 to index
    %c0_29 = arith.constant 0 : index
    %50 = vector.load %arg4[%c0_28, %49, %c0_29] : memref<1x288x128xbf16, #tpu.memory_space<vmem>>, vector<1x256x128xbf16>
    %51 = vector.shape_cast %50 : vector<1x256x128xbf16> to vector<256x128xbf16>
    %c7 = arith.constant 7 : index
    %c0_30 = arith.constant 0 : index
    %c0_31 = arith.constant 0 : index
    %52 = vector.load %arg6[%c7, %c0_30, %c0_31] : memref<9x128x128xbf16, #tpu.memory_space<vmem>>, vector<1x128x128xbf16>
    %53 = vector.shape_cast %52 : vector<1x128x128xbf16> to vector<128x128xbf16>
    %cst_32 = arith.constant dense<0.000000e+00> : vector<256x128xf32>
    %54 = tpu.matmul %51, %53, %cst_32 {dimension_numbers = #tpu.dot_dimension_numbers<[1], [0], [0], [1], [0, 0, 1, 1], [], []>} : vector<256x128xbf16>, vector<128x128xbf16>, vector<256x128xf32> -> vector<256x128xf32>
    %55 = arith.addf %46, %54 : vector<256x128xf32>
    %c0_i32_33 = arith.constant 0 : i32
    %56 = arith.addi %0, %c0_i32_33 : i32
    %57 = tpu.assume_multiple %56, 8 : i32
    %c0_34 = arith.constant 0 : index
    %58 = arith.index_cast %57 : i32 to index
    %c0_35 = arith.constant 0 : index
    %59 = vector.load %arg5[%c0_34, %58, %c0_35] : memref<1x288x128xbf16, #tpu.memory_space<vmem>>, vector<1x256x128xbf16>
    %60 = vector.shape_cast %59 : vector<1x256x128xbf16> to vector<256x128xbf16>
    %c2 = arith.constant 2 : index
    %c0_36 = arith.constant 0 : index
    %c0_37 = arith.constant 0 : index
    %61 = vector.load %arg6[%c2, %c0_36, %c0_37] : memref<9x128x128xbf16, #tpu.memory_space<vmem>>, vector<1x128x128xbf16>
    %62 = vector.shape_cast %61 : vector<1x128x128xbf16> to vector<128x128xbf16>
    %cst_38 = arith.constant dense<0.000000e+00> : vector<256x128xf32>
    %63 = tpu.matmul %60, %62, %cst_38 {dimension_numbers = #tpu.dot_dimension_numbers<[1], [0], [0], [1], [0, 0, 1, 1], [], []>} : vector<256x128xbf16>, vector<128x128xbf16>, vector<256x128xf32> -> vector<256x128xf32>
    %64 = arith.addf %55, %63 : vector<256x128xf32>
    %c16_i32_39 = arith.constant 16 : i32
    %65 = arith.addi %0, %c16_i32_39 : i32
    %66 = tpu.assume_multiple %65, 8 : i32
    %c0_40 = arith.constant 0 : index
    %67 = arith.index_cast %66 : i32 to index
    %c0_41 = arith.constant 0 : index
    %68 = vector.load %arg5[%c0_40, %67, %c0_41] : memref<1x288x128xbf16, #tpu.memory_space<vmem>>, vector<1x256x128xbf16>
    %69 = vector.shape_cast %68 : vector<1x256x128xbf16> to vector<256x128xbf16>
    %c5 = arith.constant 5 : index
    %c0_42 = arith.constant 0 : index
    %c0_43 = arith.constant 0 : index
    %70 = vector.load %arg6[%c5, %c0_42, %c0_43] : memref<9x128x128xbf16, #tpu.memory_space<vmem>>, vector<1x128x128xbf16>
    %71 = vector.shape_cast %70 : vector<1x128x128xbf16> to vector<128x128xbf16>
    %cst_44 = arith.constant dense<0.000000e+00> : vector<256x128xf32>
    %72 = tpu.matmul %69, %71, %cst_44 {dimension_numbers = #tpu.dot_dimension_numbers<[1], [0], [0], [1], [0, 0, 1, 1], [], []>} : vector<256x128xbf16>, vector<128x128xbf16>, vector<256x128xf32> -> vector<256x128xf32>
    %73 = arith.addf %64, %72 : vector<256x128xf32>
    %c32_i32_45 = arith.constant 32 : i32
    %74 = arith.addi %0, %c32_i32_45 : i32
    %75 = tpu.assume_multiple %74, 8 : i32
    %c0_46 = arith.constant 0 : index
    %76 = arith.index_cast %75 : i32 to index
    %c0_47 = arith.constant 0 : index
    %77 = vector.load %arg5[%c0_46, %76, %c0_47] : memref<1x288x128xbf16, #tpu.memory_space<vmem>>, vector<1x256x128xbf16>
    %78 = vector.shape_cast %77 : vector<1x256x128xbf16> to vector<256x128xbf16>
    %c8 = arith.constant 8 : index
    %c0_48 = arith.constant 0 : index
    %c0_49 = arith.constant 0 : index
    %79 = vector.load %arg6[%c8, %c0_48, %c0_49] : memref<9x128x128xbf16, #tpu.memory_space<vmem>>, vector<1x128x128xbf16>
    %80 = vector.shape_cast %79 : vector<1x128x128xbf16> to vector<128x128xbf16>
    %cst_50 = arith.constant dense<0.000000e+00> : vector<256x128xf32>
    %81 = tpu.matmul %78, %80, %cst_50 {dimension_numbers = #tpu.dot_dimension_numbers<[1], [0], [0], [1], [0, 0, 1, 1], [], []>} : vector<256x128xbf16>, vector<128x128xbf16>, vector<256x128xf32> -> vector<256x128xf32>
    %82 = arith.addf %73, %81 : vector<256x128xf32>
    %c0_51 = arith.constant 0 : index
    %c0_52 = arith.constant 0 : index
    %83 = vector.load %arg7[%c0_51, %c0_52] : memref<1x128xf32, #tpu.memory_space<vmem>>, vector<1x128xf32>
    %84 = vector.broadcast %83 : vector<1x128xf32> to vector<256x128xf32>
    %85 = arith.addf %82, %84 : vector<256x128xf32>
    %c0_53 = arith.constant 0 : index
    %c0_54 = arith.constant 0 : index
    %c0_55 = arith.constant 0 : index
    %86 = vector.load %arg8[%c0_53, %c0_54, %c0_55] : memref<1x256x128xf32, #tpu.memory_space<vmem>>, vector<1x256x128xf32>
    %87 = vector.shape_cast %86 : vector<1x256x128xf32> to vector<256x128xf32>
    %88 = arith.addf %85, %87 : vector<256x128xf32>
    %c0_56 = arith.constant 0 : index
    %c0_57 = arith.constant 0 : index
    %c0_58 = arith.constant 0 : index
    %89 = vector.load %arg9[%c0_56, %c0_57, %c0_58] : memref<1x256x128xf32, #tpu.memory_space<vmem>>, vector<1x256x128xf32>
    %90 = vector.shape_cast %89 : vector<1x256x128xf32> to vector<256x128xf32>
    %91 = vector.shape_cast %88 : vector<256x128xf32> to vector<1x256x128xf32>
    tpu.vector_store %arg9[%c0_56, %c0_57, %c0_58], %91 {strides = array<i32>} : memref<1x256x128xf32, #tpu.memory_space<vmem>>, vector<1x256x128xf32>,
    return
  }
  func.func @transform_0(%arg0: i32, %arg1: i32, %arg2: i32) -> (i32, i32, i32) {
    %c0_i32 = arith.constant 0 : i32
    %c0_i32_0 = arith.constant 0 : i32
    %c0_i32_1 = arith.constant 0 : i32
    return %arg0, %c0_i32, %c0_i32_0 : i32, i32, i32
  }
  func.func @transform_1(%arg0: i32, %arg1: i32, %arg2: i32) -> (i32, i32, i32) {
    %c0_i32 = arith.constant 0 : i32
    %c0_i32_0 = arith.constant 0 : i32
    %c0_i32_1 = arith.constant 0 : i32
    return %arg0, %c0_i32, %c0_i32_0 : i32, i32, i32
  }
  func.func @transform_2(%arg0: i32, %arg1: i32, %arg2: i32) -> (i32, i32, i32) {
    %c0_i32 = arith.constant 0 : i32
    %c0_i32_0 = arith.constant 0 : i32
    %c0_i32_1 = arith.constant 0 : i32
    return %arg0, %c0_i32, %c0_i32_0 : i32, i32, i32
  }
  func.func @transform_3(%arg0: i32, %arg1: i32, %arg2: i32) -> (i32, i32, i32) {
    %c0_i32 = arith.constant 0 : i32
    %c0_i32_0 = arith.constant 0 : i32
    %c0_i32_1 = arith.constant 0 : i32
    return %c0_i32, %c0_i32_0, %arg1 : i32, i32, i32
  }
  func.func @transform_4(%arg0: i32, %arg1: i32, %arg2: i32) -> (i32, i32) {
    %c0_i32 = arith.constant 0 : i32
    %c0_i32_0 = arith.constant 0 : i32
    return %c0_i32, %arg1 : i32, i32
  }
  func.func @transform_5(%arg0: i32, %arg1: i32, %arg2: i32) -> (i32, i32, i32) {
    %c0_i32 = arith.constant 0 : i32
    return %arg0, %arg2, %arg1 : i32, i32, i32
  }
  func.func @transform_6(%arg0: i32, %arg1: i32, %arg2: i32) -> (i32, i32, i32) {
    %c0_i32 = arith.constant 0 : i32
    return %arg0, %arg2, %arg1 : i32, i32, i32
  }
}

</mosaic_0001>

<llo_original>
// kernel: refine_forward.3
$region0: #{refine_forward.3}
  #allocation0 [shape = 'u32[]', space=smem, size = 0x4, offset = 0x4, fixed_abs, tag = 'smem constant byte address 0x4 - core index']
  #allocation1 [shape = 'u32[144,128]{1,0:T(1,128)}', space=vmem, size = 0x12000, scoped, tag = 'internal scratch']
  %s0 = inlined_call_operand.hbm [shape: f32[512,128], index: 0, kind: input, shape index: {}]
  %s1 = inlined_call_operand.vmem [shape: f32[1,128], index: 1, kind: input, shape index: {}]
  %s2 = inlined_call_operand.vmem [shape: f32[1,128], index: 2, kind: input, shape index: {}]
  %s3 = inlined_call_operand.vmem [shape: bf16[512,128], index: 3, kind: output, shape index: {}]
  %s4 = sld [smem:[#allocation0]]
  $region26: #{refine_forward.3} parent=0
    _
  %s6 = ssub.s32 1, %s4
  %s7 = scalar_select 0, %s6, %s4
  $region1: #{refine_forward.3} parent=0
    #allocation2 [shape = 'u8[262144]{0}', space=vmem, size = 0x40000, scoped, tag = 'input window, operand 0, single buffered']
    #allocation3 [shape = 's32[1]{0}', space=sflag, size = 0x4, scoped, tag = 'scoped memory for refine_forward.3']
    %8 = vsyncpa [#allocation3], 0
    // Predicated region
    $region2: #{refine_forward.3} parent=1 // pred_check
      _
    $region3: #{refine_forward.3} parent=1 // pred_check_branch
      %10 = sbr.rel (0) target = $region5
    $region4: #{refine_forward.3} parent=1 // pred_region
      %s12 = ssub.s32 8192, 8192
      %13 = vsyncadd [#allocation3], %s12
      %s14 = sshll.u32 [#allocation2], 4
      %s15 = int_to_ptr.vmem [resolvable:$true] %s14
      %20 = dma.hbm_to_vmem [thread:$0]  %s0, 8192, %s15, [#allocation3], 128, 128, 8
    $region5: #{refine_forward.3} parent=1 // pred_fallthru
      _
    // Predicated region
    $region6: #{refine_forward.3} parent=1 // pred_check
      _
    $region7: #{refine_forward.3} parent=1 // pred_check_branch
      %22 = sbr.rel (0) target = $region9
    $region8: #{refine_forward.3} parent=1 // pred_region
      _
    $region9: #{refine_forward.3} parent=1 // pred_fallthru
      _
    // Predicated region
    $region10: #{refine_forward.3} parent=1 // pred_check
      _
    $region11: #{refine_forward.3} parent=1 // pred_check_branch
      %24 = sbr.rel (0) target = $region13
    $region12: #{refine_forward.3} parent=1 // pred_region
      _
    $region13: #{refine_forward.3} parent=1 // pred_fallthru
      _
    // Predicated region
    $region14: #{refine_forward.3} parent=1 // pred_check
      _
    $region15: #{refine_forward.3} parent=1 // pred_check_branch
      %26 = sbr.rel (0) target = $region17
    $region16: #{refine_forward.3} parent=1 // pred_region
      %27 = dma.done [#allocation3], 8192
    $region17: #{refine_forward.3} parent=1 // pred_fallthru
      _
    %v28 = vld [vmem:[#allocation2] sm:$0xff]
    %v29 = vld [vmem:[#allocation2 + $0x8] sm:$0xff]
    %v30 = vld [vmem:[#allocation2 + $0x10] sm:$0xff]
    %v31 = vld [vmem:[#allocation2 + $0x18] sm:$0xff]
    %v32 = vld [vmem:[#allocation2 + $0x20] sm:$0xff]
    %v33 = vld [vmem:[#allocation2 + $0x28] sm:$0xff]
    %v34 = vld [vmem:[#allocation2 + $0x30] sm:$0xff]
    %v35 = vld [vmem:[#allocation2 + $0x38] sm:$0xff]
    %v36 = vld [vmem:[#allocation2 + $0x40] sm:$0xff]
    %v37 = vld [vmem:[#allocation2 + $0x48] sm:$0xff]
    %v38 = vld [vmem:[#allocation2 + $0x50] sm:$0xff]
    %v39 = vld [vmem:[#allocation2 + $0x58] sm:$0xff]
    %v40 = vld [vmem:[#allocation2 + $0x60] sm:$0xff]
    %v41 = vld [vmem:[#allocation2 + $0x68] sm:$0xff]
    %v42 = vld [vmem:[#allocation2 + $0x70] sm:$0xff]
    %v43 = vld [vmem:[#allocation2 + $0x78] sm:$0xff]
    %v44 = vld [vmem:[#allocation2 + $0x80] sm:$0xff]
    %v45 = vld [vmem:[#allocation2 + $0x88] sm:$0xff]
    %v46 = vld [vmem:[#allocation2 + $0x90] sm:$0xff]
    %v47 = vld [vmem:[#allocation2 + $0x98] sm:$0xff]
    %v48 = vld [vmem:[#allocation2 + $0xa0] sm:$0xff]
    %v49 = vld [vmem:[#allocation2 + $0xa8] sm:$0xff]
    %v50 = vld [vmem:[#allocation2 + $0xb0] sm:$0xff]
    %v51 = vld [vmem:[#allocation2 + $0xb8] sm:$0xff]
    %v52 = vld [vmem:[#allocation2 + $0xc0] sm:$0xff]
    %v53 = vld [vmem:[#allocation2 + $0xc8] sm:$0xff]
    %v54 = vld [vmem:[#allocation2 + $0xd0] sm:$0xff]
    %v55 = vld [vmem:[#allocation2 + $0xd8] sm:$0xff]
    %v56 = vld [vmem:[#allocation2 + $0xe0] sm:$0xff]
    %v57 = vld [vmem:[#allocation2 + $0xe8] sm:$0xff]
    %v58 = vld [vmem:[#allocation2 + $0xf0] sm:$0xff]
    %v59 = vld [vmem:[#allocation2 + $0xf8] sm:$0xff]
    %v60 = vld [vmem:[#allocation2 + $0x100] sm:$0xff]
    %v61 = vld [vmem:[#allocation2 + $0x108] sm:$0xff]
    %v62 = vld [vmem:[#allocation2 + $0x110] sm:$0xff]
    %v63 = vld [vmem:[#allocation2 + $0x118] sm:$0xff]
    %v64 = vld [vmem:[#allocation2 + $0x120] sm:$0xff]
    %v65 = vld [vmem:[#allocation2 + $0x128] sm:$0xff]
    %v66 = vld [vmem:[#allocation2 + $0x130] sm:$0xff]
    %v67 = vld [vmem:[#allocation2 + $0x138] sm:$0xff]
    %v68 = vld [vmem:[#allocation2 + $0x140] sm:$0xff]
    %v69 = vld [vmem:[#allocation2 + $0x148] sm:$0xff]
    %v70 = vld [vmem:[#allocation2 + $0x150] sm:$0xff]
    %v71 = vld [vmem:[#allocation2 + $0x158] sm:$0xff]
    %v72 = vld [vmem:[#allocation2 + $0x160] sm:$0xff]
    %v73 = vld [vmem:[#allocation2 + $0x168] sm:$0xff]
    %v74 = vld [vmem:[#allocation2 + $0x170] sm:$0xff]
    %v75 = vld [vmem:[#allocation2 + $0x178] sm:$0xff]
    %v76 = vld [vmem:[#allocation2 + $0x180] sm:$0xff]
    %v77 = vld [vmem:[#allocation2 + $0x188] sm:$0xff]
    %v78 = vld [vmem:[#allocation2 + $0x190] sm:$0xff]
    %v79 = vld [vmem:[#allocation2 + $0x198] sm:$0xff]
    %v80 = vld [vmem:[#allocation2 + $0x1a0] sm:$0xff]
    %v81 = vld [vmem:[#allocation2 + $0x1a8] sm:$0xff]
    %v82 = vld [vmem:[#allocation2 + $0x1b0] sm:$0xff]
    %v83 = vld [vmem:[#allocation2 + $0x1b8] sm:$0xff]
    %v84 = vld [vmem:[#allocation2 + $0x1c0] sm:$0xff]
    %v85 = vld [vmem:[#allocation2 + $0x1c8] sm:$0xff]
    %v86 = vld [vmem:[#allocation2 + $0x1d0] sm:$0xff]
    %v87 = vld [vmem:[#allocation2 + $0x1d8] sm:$0xff]
    %v88 = vld [vmem:[#allocation2 + $0x1e0] sm:$0xff]
    %v89 = vld [vmem:[#allocation2 + $0x1e8] sm:$0xff]
    %v90 = vld [vmem:[#allocation2 + $0x1f0] sm:$0xff]
    %v91 = vld [vmem:[#allocation2 + $0x1f8] sm:$0xff]
    %v92 = vld [vmem:[%s1] sm:$0x1]
    %v94 = vlaneseq
    %v95 = vshrl.u32 %v94, 7
    %v96 = vsub.s32 0, %v95
    %v97 = vrot.slane %v92, %v96
    %v99 = vmul.f32 %v28, %v97
    %v100 = vmul.f32 %v29, %v97
    %v101 = vmul.f32 %v30, %v97
    %v102 = vmul.f32 %v31, %v97
    %v103 = vmul.f32 %v32, %v97
    %v104 = vmul.f32 %v33, %v97
    %v105 = vmul.f32 %v34, %v97
    %v106 = vmul.f32 %v35, %v97
    %v107 = vmul.f32 %v36, %v97
    %v108 = vmul.f32 %v37, %v97
    %v109 = vmul.f32 %v38, %v97
    %v110 = vmul.f32 %v39, %v97
    %v111 = vmul.f32 %v40, %v97
    %v112 = vmul.f32 %v41, %v97
    %v113 = vmul.f32 %v42, %v97
    %v114 = vmul.f32 %v43, %v97
    %v115 = vmul.f32 %v44, %v97
    %v116 = vmul.f32 %v45, %v97
    %v117 = vmul.f32 %v46, %v97
    %v118 = vmul.f32 %v47, %v97
    %v119 = vmul.f32 %v48, %v97
    %v120 = vmul.f32 %v49, %v97
    %v121 = vmul.f32 %v50, %v97
    %v122 = vmul.f32 %v51, %v97
    %v123 = vmul.f32 %v52, %v97
    %v124 = vmul.f32 %v53, %v97
    %v125 = vmul.f32 %v54, %v97
    %v126 = vmul.f32 %v55, %v97
    %v127 = vmul.f32 %v56, %v97
    %v128 = vmul.f32 %v57, %v97
    %v129 = vmul.f32 %v58, %v97
    %v130 = vmul.f32 %v59, %v97
    %v131 = vmul.f32 %v60, %v97
    %v132 = vmul.f32 %v61, %v97
    %v133 = vmul.f32 %v62, %v97
    %v134 = vmul.f32 %v63, %v97
    %v135 = vmul.f32 %v64, %v97
    %v136 = vmul.f32 %v65, %v97
    %v137 = vmul.f32 %v66, %v97
    %v138 = vmul.f32 %v67, %v97
    %v139 = vmul.f32 %v68, %v97
    %v140 = vmul.f32 %v69, %v97
    %v141 = vmul.f32 %v70, %v97
    %v142 = vmul.f32 %v71, %v97
    %v143 = vmul.f32 %v72, %v97
    %v144 = vmul.f32 %v73, %v97
    %v145 = vmul.f32 %v74, %v97
    %v146 = vmul.f32 %v75, %v97
    %v147 = vmul.f32 %v76, %v97
    %v148 = vmul.f32 %v77, %v97
    %v149 = vmul.f32 %v78, %v97
    %v150 = vmul.f32 %v79, %v97
    %v151 = vmul.f32 %v80, %v97
    %v152 = vmul.f32 %v81, %v97
    %v153 = vmul.f32 %v82, %v97
    %v154 = vmul.f32 %v83, %v97
    %v155 = vmul.f32 %v84, %v97
    %v156 = vmul.f32 %v85, %v97
    %v157 = vmul.f32 %v86, %v97
    %v158 = vmul.f32 %v87, %v97
    %v159 = vmul.f32 %v88, %v97
    %v160 = vmul.f32 %v89, %v97
    %v161 = vmul.f32 %v90, %v97
    %v162 = vmul.f32 %v91, %v97
    %v163 = vld [vmem:[%s2] sm:$0x1]
    %v165 = vlaneseq
    %v166 = vshrl.u32 %v165, 7
    %v167 = vsub.s32 0, %v166
    %v168 = vrot.slane %v163, %v167
    %v170 = vadd.f32 %v99, %v168
    %v171 = vadd.f32 %v100, %v168
    %v172 = vadd.f32 %v101, %v168
    %v173 = vadd.f32 %v102, %v168
    %v174 = vadd.f32 %v103, %v168
    %v175 = vadd.f32 %v104, %v168
    %v176 = vadd.f32 %v105, %v168
    %v177 = vadd.f32 %v106, %v168
    %v178 = vadd.f32 %v107, %v168
    %v179 = vadd.f32 %v108, %v168
    %v180 = vadd.f32 %v109, %v168
    %v181 = vadd.f32 %v110, %v168
    %v182 = vadd.f32 %v111, %v168
    %v183 = vadd.f32 %v112, %v168
    %v184 = vadd.f32 %v113, %v168
    %v185 = vadd.f32 %v114, %v168
    %v186 = vadd.f32 %v115, %v168
    %v187 = vadd.f32 %v116, %v168
    %v188 = vadd.f32 %v117, %v168
    %v189 = vadd.f32 %v118, %v168
    %v190 = vadd.f32 %v119, %v168
    %v191 = vadd.f32 %v120, %v168
    %v192 = vadd.f32 %v121, %v168
    %v193 = vadd.f32 %v122, %v168
    %v194 = vadd.f32 %v123, %v168
    %v195 = vadd.f32 %v124, %v168
    %v196 = vadd.f32 %v125, %v168
    %v197 = vadd.f32 %v126, %v168
    %v198 = vadd.f32 %v127, %v168
    %v199 = vadd.f32 %v128, %v168
    %v200 = vadd.f32 %v129, %v168
    %v201 = vadd.f32 %v130, %v168
    %v202 = vadd.f32 %v131, %v168
    %v203 = vadd.f32 %v132, %v168
    %v204 = vadd.f32 %v133, %v168
    %v205 = vadd.f32 %v134, %v168
    %v206 = vadd.f32 %v135, %v168
    %v207 = vadd.f32 %v136, %v168
    %v208 = vadd.f32 %v137, %v168
    %v209 = vadd.f32 %v138, %v168
    %v210 = vadd.f32 %v139, %v168
    %v211 = vadd.f32 %v140, %v168
    %v212 = vadd.f32 %v141, %v168
    %v213 = vadd.f32 %v142, %v168
    %v214 = vadd.f32 %v143, %v168
    %v215 = vadd.f32 %v144, %v168
    %v216 = vadd.f32 %v145, %v168
    %v217 = vadd.f32 %v146, %v168
    %v218 = vadd.f32 %v147, %v168
    %v219 = vadd.f32 %v148, %v168
    %v220 = vadd.f32 %v149, %v168
    %v221 = vadd.f32 %v150, %v168
    %v222 = vadd.f32 %v151, %v168
    %v223 = vadd.f32 %v152, %v168
    %v224 = vadd.f32 %v153, %v168
    %v225 = vadd.f32 %v154, %v168
    %v226 = vadd.f32 %v155, %v168
    %v227 = vadd.f32 %v156, %v168
    %v228 = vadd.f32 %v157, %v168
    %v229 = vadd.f32 %v158, %v168
    %v230 = vadd.f32 %v159, %v168
    %v231 = vadd.f32 %v160, %v168
    %v232 = vadd.f32 %v161, %v168
    %v233 = vadd.f32 %v162, %v168
    %v234 = vmax.f32 %v170, 0.0
    %v235 = vmax.f32 %v171, 0.0
    %v236 = vmax.f32 %v172, 0.0
    %v237 = vmax.f32 %v173, 0.0
    %v238 = vmax.f32 %v174, 0.0
    %v239 = vmax.f32 %v175, 0.0
    %v240 = vmax.f32 %v176, 0.0
    %v241 = vmax.f32 %v177, 0.0
    %v242 = vmax.f32 %v178, 0.0
    %v243 = vmax.f32 %v179, 0.0
    %v244 = vmax.f32 %v180, 0.0
    %v245 = vmax.f32 %v181, 0.0
    %v246 = vmax.f32 %v182, 0.0
    %v247 = vmax.f32 %v183, 0.0
    %v248 = vmax.f32 %v184, 0.0
    %v249 = vmax.f32 %v185, 0.0
    %v250 = vmax.f32 %v186, 0.0
    %v251 = vmax.f32 %v187, 0.0
    %v252 = vmax.f32 %v188, 0.0
    %v253 = vmax.f32 %v189, 0.0
    %v254 = vmax.f32 %v190, 0.0
    %v255 = vmax.f32 %v191, 0.0
    %v256 = vmax.f32 %v192, 0.0
    %v257 = vmax.f32 %v193, 0.0
    %v258 = vmax.f32 %v194, 0.0
    %v259 = vmax.f32 %v195, 0.0
    %v260 = vmax.f32 %v196, 0.0
    %v261 = vmax.f32 %v197, 0.0
    %v262 = vmax.f32 %v198, 0.0
    %v263 = vmax.f32 %v199, 0.0
    %v264 = vmax.f32 %v200, 0.0
    %v265 = vmax.f32 %v201, 0.0
    %v266 = vmax.f32 %v202, 0.0
    %v267 = vmax.f32 %v203, 0.0
    %v268 = vmax.f32 %v204, 0.0
    %v269 = vmax.f32 %v205, 0.0
    %v270 = vmax.f32 %v206, 0.0
    %v271 = vmax.f32 %v207, 0.0
    %v272 = vmax.f32 %v208, 0.0
    %v273 = vmax.f32 %v209, 0.0
    %v274 = vmax.f32 %v210, 0.0
    %v275 = vmax.f32 %v211, 0.0
    %v276 = vmax.f32 %v212, 0.0
    %v277 = vmax.f32 %v213, 0.0
    %v278 = vmax.f32 %v214, 0.0
    %v279 = vmax.f32 %v215, 0.0
    %v280 = vmax.f32 %v216, 0.0
    %v281 = vmax.f32 %v217, 0.0
    %v282 = vmax.f32 %v218, 0.0
    %v283 = vmax.f32 %v219, 0.0
    %v284 = vmax.f32 %v220, 0.0
    %v285 = vmax.f32 %v221, 0.0
    %v286 = vmax.f32 %v222, 0.0
    %v287 = vmax.f32 %v223, 0.0
    %v288 = vmax.f32 %v224, 0.0
    %v289 = vmax.f32 %v225, 0.0
    %v290 = vmax.f32 %v226, 0.0
    %v291 = vmax.f32 %v227, 0.0
    %v292 = vmax.f32 %v228, 0.0
    %v293 = vmax.f32 %v229, 0.0
    %v294 = vmax.f32 %v230, 0.0
    %v295 = vmax.f32 %v231, 0.0
    %v296 = vmax.f32 %v232, 0.0
    %v297 = vmax.f32 %v233, 0.0
    %v298 = vpack.c.bf16 %v235, %v234
    %v299 = vpack.c.bf16 %v237, %v236
    %v300 = vpack.c.bf16 %v239, %v238
    %v301 = vpack.c.bf16 %v241, %v240
    %v302 = vpack.c.bf16 %v243, %v242
    %v303 = vpack.c.bf16 %v245, %v244
    %v304 = vpack.c.bf16 %v247, %v246
    %v305 = vpack.c.bf16 %v249, %v248
    %v306 = vpack.c.bf16 %v251, %v250
    %v307 = vpack.c.bf16 %v253, %v252
    %v308 = vpack.c.bf16 %v255, %v254
    %v309 = vpack.c.bf16 %v257, %v256
    %v310 = vpack.c.bf16 %v259, %v258
    %v311 = vpack.c.bf16 %v261, %v260
    %v312 = vpack.c.bf16 %v263, %v262
    %v313 = vpack.c.bf16 %v265, %v264
    %v314 = vpack.c.bf16 %v267, %v266
    %v315 = vpack.c.bf16 %v269, %v268
    %v316 = vpack.c.bf16 %v271, %v270
    %v317 = vpack.c.bf16 %v273, %v272
    %v318 = vpack.c.bf16 %v275, %v274
    %v319 = vpack.c.bf16 %v277, %v276
    %v320 = vpack.c.bf16 %v279, %v278
    %v321 = vpack.c.bf16 %v281, %v280
    %v322 = vpack.c.bf16 %v283, %v282
    %v323 = vpack.c.bf16 %v285, %v284
    %v324 = vpack.c.bf16 %v287, %v286
    %v325 = vpack.c.bf16 %v289, %v288
    %v326 = vpack.c.bf16 %v291, %v290
    %v327 = vpack.c.bf16 %v293, %v292
    %v328 = vpack.c.bf16 %v295, %v294
    %v329 = vpack.c.bf16 %v297, %v296
    %v362 = vunpack.c.l.b16 %v298
    %v363 = vunpack.c.h.b16 %v298
    %v364 = vunpack.c.l.b16 %v299
    %v365 = vunpack.c.h.b16 %v299
    %v366 = vunpack.c.l.b16 %v300
    %v367 = vunpack.c.h.b16 %v300
    %v368 = vunpack.c.l.b16 %v301
    %v369 = vunpack.c.h.b16 %v301
    %v370 = vunpack.c.l.b16 %v302
    %v371 = vunpack.c.h.b16 %v302
    %v372 = vunpack.c.l.b16 %v303
    %v373 = vunpack.c.h.b16 %v303
    %v374 = vunpack.c.l.b16 %v304
    %v375 = vunpack.c.h.b16 %v304
    %v376 = vunpack.c.l.b16 %v305
    %v377 = vunpack.c.h.b16 %v305
    %v378 = vunpack.c.l.b16 %v306
    %v379 = vunpack.c.h.b16 %v306
    %v380 = vunpack.c.l.b16 %v307
    %v381 = vunpack.c.h.b16 %v307
    %v382 = vunpack.c.l.b16 %v308
    %v383 = vunpack.c.h.b16 %v308
    %v384 = vunpack.c.l.b16 %v309
    %v385 = vunpack.c.h.b16 %v309
    %v386 = vunpack.c.l.b16 %v310
    %v387 = vunpack.c.h.b16 %v310
    %v388 = vunpack.c.l.b16 %v311
    %v389 = vunpack.c.h.b16 %v311
    %v390 = vunpack.c.l.b16 %v312
    %v391 = vunpack.c.h.b16 %v312
    %v392 = vunpack.c.l.b16 %v313
    %v393 = vunpack.c.h.b16 %v313
    %v394 = vunpack.c.l.b16 %v314
    %v395 = vunpack.c.h.b16 %v314
    %v396 = vunpack.c.l.b16 %v315
    %v397 = vunpack.c.h.b16 %v315
    %v398 = vunpack.c.l.b16 %v316
    %v399 = vunpack.c.h.b16 %v316
    %v400 = vunpack.c.l.b16 %v317
    %v401 = vunpack.c.h.b16 %v317
    %v402 = vunpack.c.l.b16 %v318
    %v403 = vunpack.c.h.b16 %v318
    %v404 = vunpack.c.l.b16 %v319
    %v405 = vunpack.c.h.b16 %v319
    %v406 = vunpack.c.l.b16 %v320
    %v407 = vunpack.c.h.b16 %v320
    %v408 = vunpack.c.l.b16 %v321
    %v409 = vunpack.c.h.b16 %v321
    %v410 = vunpack.c.l.b16 %v322
    %v411 = vunpack.c.h.b16 %v322
    %v412 = vunpack.c.l.b16 %v323
    %v413 = vunpack.c.h.b16 %v323
    %v414 = vunpack.c.l.b16 %v324
    %v415 = vunpack.c.h.b16 %v324
    %v416 = vunpack.c.l.b16 %v325
    %v417 = vunpack.c.h.b16 %v325
    %v418 = vunpack.c.l.b16 %v326
    %v419 = vunpack.c.h.b16 %v326
    %v420 = vunpack.c.l.b16 %v327
    %v421 = vunpack.c.h.b16 %v327
    %v422 = vunpack.c.l.b16 %v328
    %v423 = vunpack.c.h.b16 %v328
    %v424 = vunpack.c.l.b16 %v329
    %v425 = vunpack.c.h.b16 %v329
    %v426 = vpack.c.b16 %v362, %v362
    %v427 = vpack.c.b16 %v363, %v363
    %v428 = vpack.c.b16 %v364, %v364
    %v429 = vpack.c.b16 %v365, %v365
    %v430 = vpack.c.b16 %v366, %v366
    %v431 = vpack.c.b16 %v367, %v367
    %v432 = vpack.c.b16 %v368, %v368
    %v433 = vpack.c.b16 %v369, %v369
    %v434 = vpack.c.b16 %v370, %v370
    %v435 = vpack.c.b16 %v371, %v371
    %v436 = vpack.c.b16 %v372, %v372
    %v437 = vpack.c.b16 %v373, %v373
    %v438 = vpack.c.b16 %v374, %v374
    %v439 = vpack.c.b16 %v375, %v375
    %v440 = vpack.c.b16 %v376, %v376
    %v441 = vpack.c.b16 %v377, %v377
    %v442 = vpack.c.b16 %v378, %v378
    %v443 = vpack.c.b16 %v379, %v379
    %v444 = vpack.c.b16 %v380, %v380
    %v445 = vpack.c.b16 %v381, %v381
    %v446 = vpack.c.b16 %v382, %v382
    %v447 = vpack.c.b16 %v383, %v383
    %v448 = vpack.c.b16 %v384, %v384
    %v449 = vpack.c.b16 %v385, %v385
    %v450 = vpack.c.b16 %v386, %v386
    %v451 = vpack.c.b16 %v387, %v387
    %v452 = vpack.c.b16 %v388, %v388
    %v453 = vpack.c.b16 %v389, %v389
    %v454 = vpack.c.b16 %v390, %v390
    %v455 = vpack.c.b16 %v391, %v391
    %v456 = vpack.c.b16 %v392, %v392
    %v457 = vpack.c.b16 %v393, %v393
    %v458 = vpack.c.b16 %v394, %v394
    %v459 = vpack.c.b16 %v395, %v395
    %v460 = vpack.c.b16 %v396, %v396
    %v461 = vpack.c.b16 %v397, %v397
    %v462 = vpack.c.b16 %v398, %v398
    %v463 = vpack.c.b16 %v399, %v399
    %v464 = vpack.c.b16 %v400, %v400
    %v465 = vpack.c.b16 %v401, %v401
    %v466 = vpack.c.b16 %v402, %v402
    %v467 = vpack.c.b16 %v403, %v403
    %v468 = vpack.c.b16 %v404, %v404
    %v469 = vpack.c.b16 %v405, %v405
    %v470 = vpack.c.b16 %v406, %v406
    %v471 = vpack.c.b16 %v407, %v407
    %v472 = vpack.c.b16 %v408, %v408
    %v473 = vpack.c.b16 %v409, %v409
    %v474 = vpack.c.b16 %v410, %v410
    %v475 = vpack.c.b16 %v411, %v411
    %v476 = vpack.c.b16 %v412, %v412
    %v477 = vpack.c.b16 %v413, %v413
    %v478 = vpack.c.b16 %v414, %v414
    %v479 = vpack.c.b16 %v415, %v415
    %v480 = vpack.c.b16 %v416, %v416
    %v481 = vpack.c.b16 %v417, %v417
    %v482 = vpack.c.b16 %v418, %v418
    %v483 = vpack.c.b16 %v419, %v419
    %v484 = vpack.c.b16 %v420, %v420
    %v485 = vpack.c.b16 %v421, %v421
    %v486 = vpack.c.b16 %v422, %v422
    %v487 = vpack.c.b16 %v423, %v423
    %v488 = vpack.c.b16 %v424, %v424
    %v489 = vpack.c.b16 %v425, %v425
    %554 = vst [vmem:[%s3] sm:$0xf] %v426
    %555 = vst [vmem:[%s3 + $0x4] sm:$0xf] %v427
    %556 = vst [vmem:[%s3 + $0x8] sm:$0xf] %v428
    %557 = vst [vmem:[%s3 + $0xc] sm:$0xf] %v429
    %558 = vst [vmem:[%s3 + $0x10] sm:$0xf] %v430
    %559 = vst [vmem:[%s3 + $0x14] sm:$0xf] %v431
    %560 = vst [vmem:[%s3 + $0x18] sm:$0xf] %v432
    %561 = vst [vmem:[%s3 + $0x1c] sm:$0xf] %v433
    %562 = vst [vmem:[%s3 + $0x20] sm:$0xf] %v434
    %563 = vst [vmem:[%s3 + $0x24] sm:$0xf] %v435
    %564 = vst [vmem:[%s3 + $0x28] sm:$0xf] %v436
    %565 = vst [vmem:[%s3 + $0x2c] sm:$0xf] %v437
    %566 = vst [vmem:[%s3 + $0x30] sm:$0xf] %v438
    %567 = vst [vmem:[%s3 + $0x34] sm:$0xf] %v439
    %568 = vst [vmem:[%s3 + $0x38] sm:$0xf] %v440
    %569 = vst [vmem:[%s3 + $0x3c] sm:$0xf] %v441
    %570 = vst [vmem:[%s3 + $0x40] sm:$0xf] %v442
    %571 = vst [vmem:[%s3 + $0x44] sm:$0xf] %v443
    %572 = vst [vmem:[%s3 + $0x48] sm:$0xf] %v444
    %573 = vst [vmem:[%s3 + $0x4c] sm:$0xf] %v445
    %574 = vst [vmem:[%s3 + $0x50] sm:$0xf] %v446
    %575 = vst [vmem:[%s3 + $0x54] sm:$0xf] %v447
    %576 = vst [vmem:[%s3 + $0x58] sm:$0xf] %v448
    %577 = vst [vmem:[%s3 + $0x5c] sm:$0xf] %v449
    %578 = vst [vmem:[%s3 + $0x60] sm:$0xf] %v450
    %579 = vst [vmem:[%s3 + $0x64] sm:$0xf] %v451
    %580 = vst [vmem:[%s3 + $0x68] sm:$0xf] %v452
    %581 = vst [vmem:[%s3 + $0x6c] sm:$0xf] %v453
    %582 = vst [vmem:[%s3 + $0x70] sm:$0xf] %v454
    %583 = vst [vmem:[%s3 + $0x74] sm:$0xf] %v455
    %584 = vst [vmem:[%s3 + $0x78] sm:$0xf] %v456
    %585 = vst [vmem:[%s3 + $0x7c] sm:$0xf] %v457
    %586 = vst [vmem:[%s3 + $0x80] sm:$0xf] %v458
    %587 = vst [vmem:[%s3 + $0x84] sm:$0xf] %v459
    %588 = vst [vmem:[%s3 + $0x88] sm:$0xf] %v460
    %589 = vst [vmem:[%s3 + $0x8c] sm:$0xf] %v461
    %590 = vst [vmem:[%s3 + $0x90] sm:$0xf] %v462
    %591 = vst [vmem:[%s3 + $0x94] sm:$0xf] %v463
    %592 = vst [vmem:[%s3 + $0x98] sm:$0xf] %v464
    %593 = vst [vmem:[%s3 + $0x9c] sm:$0xf] %v465
    %594 = vst [vmem:[%s3 + $0xa0] sm:$0xf] %v466
    %595 = vst [vmem:[%s3 + $0xa4] sm:$0xf] %v467
    %596 = vst [vmem:[%s3 + $0xa8] sm:$0xf] %v468
    %597 = vst [vmem:[%s3 + $0xac] sm:$0xf] %v469
    %598 = vst [vmem:[%s3 + $0xb0] sm:$0xf] %v470
    %599 = vst [vmem:[%s3 + $0xb4] sm:$0xf] %v471
    %600 = vst [vmem:[%s3 + $0xb8] sm:$0xf] %v472
    %601 = vst [vmem:[%s3 + $0xbc] sm:$0xf] %v473
    %602 = vst [vmem:[%s3 + $0xc0] sm:$0xf] %v474
    %603 = vst [vmem:[%s3 + $0xc4] sm:$0xf] %v475
    %604 = vst [vmem:[%s3 + $0xc8] sm:$0xf] %v476
    %605 = vst [vmem:[%s3 + $0xcc] sm:$0xf] %v477
    %606 = vst [vmem:[%s3 + $0xd0] sm:$0xf] %v478
    %607 = vst [vmem:[%s3 + $0xd4] sm:$0xf] %v479
    %608 = vst [vmem:[%s3 + $0xd8] sm:$0xf] %v480
    %609 = vst [vmem:[%s3 + $0xdc] sm:$0xf] %v481
    %610 = vst [vmem:[%s3 + $0xe0] sm:$0xf] %v482
    %611 = vst [vmem:[%s3 + $0xe4] sm:$0xf] %v483
    %612 = vst [vmem:[%s3 + $0xe8] sm:$0xf] %v484
    %613 = vst [vmem:[%s3 + $0xec] sm:$0xf] %v485
    %614 = vst [vmem:[%s3 + $0xf0] sm:$0xf] %v486
    %615 = vst [vmem:[%s3 + $0xf4] sm:$0xf] %v487
    %616 = vst [vmem:[%s3 + $0xf8] sm:$0xf] %v488
    %617 = vst [vmem:[%s3 + $0xfc] sm:$0xf] %v489
    // Predicated region
    $region18: #{refine_forward.3} parent=1 // pred_check
      _
    $region19: #{refine_forward.3} parent=1 // pred_check_branch
      %619 = sbr.rel (0) target = $region21
    $region20: #{refine_forward.3} parent=1 // pred_region
      _
    $region21: #{refine_forward.3} parent=1 // pred_fallthru
      _
    // Predicated region
    $region22: #{refine_forward.3} parent=1 // pred_check
      _
    $region23: #{refine_forward.3} parent=1 // pred_check_branch
      %621 = sbr.rel (0) target = $region25
    $region24: #{refine_forward.3} parent=1 // pred_region
      _
    $region25: #{refine_forward.3} parent=1 // pred_fallthru
      _
    %622 = vsyncpa [#allocation3], 1

// kernel: refine_forward.4
$region0: #{refine_forward.4}
  #allocation0 [shape = 'u32[]', space=smem, size = 0x4, offset = 0x4, fixed_abs, tag = 'smem constant byte address 0x4 - core index']
  #allocation1 [shape = 'u32[144,128]{1,0:T(1,128)}', space=vmem, size = 0x12000, scoped, tag = 'internal scratch']
  %s0 = inlined_call_operand.vmem [shape: bf16[2,288,128], index: 0, kind: input, shape index: {}]
  %s1 = inlined_call_operand.vmem [shape: bf16[2,288,128], index: 1, kind: input, shape index: {}]
  %s2 = inlined_call_operand.vmem [shape: bf16[2,288,128], index: 2, kind: input, shape index: {}]
  %s3 = inlined_call_operand.vmem [shape: bf16[9,128,128], index: 3, kind: input, shape index: {}]
  %s4 = inlined_call_operand.vmem [shape: f32[1,128], index: 4, kind: input, shape index: {}]
  %s5 = inlined_call_operand.vmem [shape: bf16[2,256,128], index: 5, kind: output, shape index: {}]
  %s6 = sld [smem:[#allocation0]]
  $region53: #{refine_forward.4} parent=0
    _
  %s8 = ssub.s32 1, %s6
  %s9 = scalar_select 0, %s8, %s6
  loop: start=0, step=1, limit=4
  $region2: #{refine_forward.4} parent=0 // loop_pre_header
    _
  $region3: #{refine_forward.4} parent=0 // loop_header
    %s11 = sphi 0, %s15
    %p12 = scmp.ge.s32.totalorder %s11, 4
    %s18 = sphi 0, %s37
    %s19 = sphi 0, %s33
    %s20 = sphi 0, %s29
    %s21 = sphi 0, %s18
    %s22 = sphi 0, %s19
    %s23 = sphi 0, %s20
    %s24 = sphi 0, %s21
    %s25 = sphi 0, %s22
    %s26 = sphi 0, %s23
    %s40 = sphi 0, %s42
    %s43 = sphi 0, %s40
    %s44 = sphi 0, %s43
    %s60 = sphi 0, %s44
    %s66 = sphi 0, %s68
    %s69 = sphi 0, %s66
    %s70 = sphi 0, %s69
    %s86 = sphi 0, %s70
    %s92 = sphi 0, %s94
    %s95 = sphi 0, %s92
    %s96 = sphi 0, %s95
    %s112 = sphi 0, %s96
    %s118 = sphi 0, %s120
    %s121 = sphi 0, %s118
    %s122 = sphi 0, %s121
    %s138 = sphi 0, %s122
    %s144 = sphi 0, %s146
    %s147 = sphi 0, %s144
    %s148 = sphi 0, %s147
    %s164 = sphi 0, %s148
    %s174 = sphi 0, %s176
    %s177 = sphi 0, %s174
    %s178 = sphi 0, %s177
    %s194 = sphi 0, %s178
  $region4: #{refine_forward.4} parent=0 // loop_header_branch
    %14 = sbr.rel (%p12) target = $region8
  $region5: #{refine_forward.4} parent=0 // loop_body
    %s16 = ssub.s32 %s11, 1
    %s17 = ssub.s32 %s11, 2
    %s27 = sadd.s32 1, %s20
    %p28 = scmp.ge.s32.totalorder %s27, 1
    %s29 = scalar_select %p28, 0, %s27
    %s30 = sadd.s32 1, %s19
    %s31 = scalar_select %p28, %s30, %s19
    %p32 = scmp.ge.s32.totalorder %s31, 1
    %s33 = scalar_select %p32, 0, %s31
    %s34 = sadd.s32 1, %s18
    %s35 = scalar_select %p32, %s34, %s18
    %p36 = scmp.ge.s32.totalorder %s35, 2
    %s37 = scalar_select %p36, 0, %s35
    %s38 = ssub.s32 %s18, %s37
    %p39 = scmp.eq.s32.totalorder %s38, 0
    %s41 = sadd.s32 %s40, 1
    %s42 = scalar_select %p39, %s40, %s41
    %p45 = pneg %p39
    %p46 = scmp.eq.s32.totalorder %s11, 1
    %p47 = por %p45, %p46
    %p48 = scmp.ne.s32.totalorder %s40, %s43
    %p49 = scmp.eq.s32.totalorder %s11, 0
    %p50 = por %p48, %p49
    %p51 = scmp.ne.s32.totalorder %s40, %s43
    %p52 = scmp.eq.s32.totalorder %s16, 1
    %p53 = por %p51, %p52
    %p54 = scmp.ne.s32.totalorder %s43, %s44
    %p55 = scmp.eq.s32.totalorder %s16, 0
    %p56 = por %p54, %p55
    %p57 = scmp.ne.s32.totalorder %s43, %s44
    %p58 = scmp.eq.s32.totalorder %s17, 1
    %p59 = por %p57, %p58
    %p61 = scmp.ne.s32.totalorder %s44, %s60
    %p62 = scmp.eq.s32.totalorder %s17, 0
    %p63 = por %p61, %p62
    %s64 = ssub.s32 %s18, %s37
    %p65 = scmp.eq.s32.totalorder %s64, 0
    %s67 = sadd.s32 %s66, 1
    %s68 = scalar_select %p65, %s66, %s67
    %p71 = pneg %p65
    %p72 = scmp.eq.s32.totalorder %s11, 1
    %p73 = por %p71, %p72
    %p74 = scmp.ne.s32.totalorder %s66, %s69
    %p75 = scmp.eq.s32.totalorder %s11, 0
    %p76 = por %p74, %p75
    %p77 = scmp.ne.s32.totalorder %s66, %s69
    %p78 = scmp.eq.s32.totalorder %s16, 1
    %p79 = por %p77, %p78
    %p80 = scmp.ne.s32.totalorder %s69, %s70
    %p81 = scmp.eq.s32.totalorder %s16, 0
    %p82 = por %p80, %p81
    %p83 = scmp.ne.s32.totalorder %s69, %s70
    %p84 = scmp.eq.s32.totalorder %s17, 1
    %p85 = por %p83, %p84
    %p87 = scmp.ne.s32.totalorder %s70, %s86
    %p88 = scmp.eq.s32.totalorder %s17, 0
    %p89 = por %p87, %p88
    %s90 = ssub.s32 %s18, %s37
    %p91 = scmp.eq.s32.totalorder %s90, 0
    %s93 = sadd.s32 %s92, 1
    %s94 = scalar_select %p91, %s92, %s93
    %p97 = pneg %p91
    %p98 = scmp.eq.s32.totalorder %s11, 1
    %p99 = por %p97, %p98
    %p100 = scmp.ne.s32.totalorder %s92, %s95
    %p101 = scmp.eq.s32.totalorder %s11, 0
    %p102 = por %p100, %p101
    %p103 = scmp.ne.s32.totalorder %s92, %s95
    %p104 = scmp.eq.s32.totalorder %s16, 1
    %p105 = por %p103, %p104
    %p106 = scmp.ne.s32.totalorder %s95, %s96
    %p107 = scmp.eq.s32.totalorder %s16, 0
    %p108 = por %p106, %p107
    %p109 = scmp.ne.s32.totalorder %s95, %s96
    %p110 = scmp.eq.s32.totalorder %s17, 1
    %p111 = por %p109, %p110
    %p113 = scmp.ne.s32.totalorder %s96, %s112
    %p114 = scmp.eq.s32.totalorder %s17, 0
    %p115 = por %p113, %p114
    %s116 = ssub.s32 %s19, %s33
    %p117 = scmp.eq.s32.totalorder %s116, 0
    %s119 = sadd.s32 %s118, 1
    %s120 = scalar_select %p117, %s118, %s119
    %p123 = pneg %p117
    %p124 = scmp.eq.s32.totalorder %s11, 1
    %p125 = por %p123, %p124
    %p126 = scmp.ne.s32.totalorder %s118, %s121
    %p127 = scmp.eq.s32.totalorder %s11, 0
    %p128 = por %p126, %p127
    %p129 = scmp.ne.s32.totalorder %s118, %s121
    %p130 = scmp.eq.s32.totalorder %s16, 1
    %p131 = por %p129, %p130
    %p132 = scmp.ne.s32.totalorder %s121, %s122
    %p133 = scmp.eq.s32.totalorder %s16, 0
    %p134 = por %p132, %p133
    %p135 = scmp.ne.s32.totalorder %s121, %s122
    %p136 = scmp.eq.s32.totalorder %s17, 1
    %p137 = por %p135, %p136
    %p139 = scmp.ne.s32.totalorder %s122, %s138
    %p140 = scmp.eq.s32.totalorder %s17, 0
    %p141 = por %p139, %p140
    %s142 = ssub.s32 %s19, %s33
    %p143 = scmp.eq.s32.totalorder %s142, 0
    %s145 = sadd.s32 %s144, 1
    %s146 = scalar_select %p143, %s144, %s145
    %p149 = pneg %p143
    %p150 = scmp.eq.s32.totalorder %s11, 1
    %p151 = por %p149, %p150
    %p152 = scmp.ne.s32.totalorder %s144, %s147
    %p153 = scmp.eq.s32.totalorder %s11, 0
    %p154 = por %p152, %p153
    %p155 = scmp.ne.s32.totalorder %s144, %s147
    %p156 = scmp.eq.s32.totalorder %s16, 1
    %p157 = por %p155, %p156
    %p158 = scmp.ne.s32.totalorder %s147, %s148
    %p159 = scmp.eq.s32.totalorder %s16, 0
    %p160 = por %p158, %p159
    %p161 = scmp.ne.s32.totalorder %s147, %s148
    %p162 = scmp.eq.s32.totalorder %s17, 1
    %p163 = por %p161, %p162
    %p165 = scmp.ne.s32.totalorder %s148, %s164
    %p166 = scmp.eq.s32.totalorder %s17, 0
    %p167 = por %p165, %p166
    %s168 = ssub.s32 %s18, %s37
    %s169 = ssub.s32 %s20, %s29
    %s170 = sor.u32 %s168, %s169
    %s171 = ssub.s32 %s19, %s33
    %s172 = sor.u32 %s170, %s171
    %p173 = scmp.eq.s32.totalorder %s172, 0
    %s175 = sadd.s32 %s174, 1
    %s176 = scalar_select %p173, %s174, %s175
    %p179 = pneg %p173
    %p180 = scmp.eq.s32.totalorder %s11, 1
    %p181 = por %p179, %p180
    %p182 = scmp.ne.s32.totalorder %s174, %s177
    %p183 = scmp.eq.s32.totalorder %s11, 0
    %p184 = por %p182, %p183
    %p185 = scmp.ne.s32.totalorder %s174, %s177
    %p186 = scmp.eq.s32.totalorder %s16, 1
    %p187 = por %p185, %p186
    %p188 = scmp.ne.s32.totalorder %s177, %s178
    %p189 = scmp.eq.s32.totalorder %s16, 0
    %p190 = por %p188, %p189
    %p191 = scmp.ne.s32.totalorder %s177, %s178
    %p192 = scmp.eq.s32.totalorder %s17, 1
    %p193 = por %p191, %p192
    %p195 = scmp.ne.s32.totalorder %s178, %s194
    %p196 = scmp.eq.s32.totalorder %s17, 0
    %p197 = por %p195, %p196
    %p198 = scmp.le.s32.totalorder 1, %s11
    %p199 = scmp.lt.s32.totalorder %s11, 3
    %p200 = pnand %p198, %p199
    %p201 = pneg %p200
    // Predicated region
    $region9: #{refine_forward.4} parent=5 // pred_check
      _
    $region10: #{refine_forward.4} parent=5 // pred_check_branch
      %203 = sbr.rel (%p200) target = $region12
    $region11: #{refine_forward.4} parent=5 // pred_region
      %s204 = ssub.s32 %s11, 1
      // Predicated region
      $region13: #{refine_forward.4} parent=11 // pred_check
        %p205 = pneg %p134
      $region14: #{refine_forward.4} parent=11 // pred_check_branch
        %207 = sbr.rel (%p205) target = $region16
      $region15: #{refine_forward.4} parent=11 // pred_region
        %p208 = scmp.lt.s32.totalorder %s22, 0
        %s209 = scalar_select %p208, %s22, 0
        %s210 = smul.addr %s209, 4
        %s211 = scalar_lea.vmem %s3, %s210
      $region16: #{refine_forward.4} parent=11 // pred_fallthru
        _
      // Predicated region
      $region17: #{refine_forward.4} parent=11 // pred_check
        %p212 = pneg %p160
      $region18: #{refine_forward.4} parent=11 // pred_check_branch
        %214 = sbr.rel (%p212) target = $region20
      $region19: #{refine_forward.4} parent=11 // pred_region
        %p215 = scmp.lt.s32.totalorder %s22, 0
        %s216 = scalar_select %p215, %s22, 0
        %s217 = scalar_lea.vmem %s4, %s216
      $region20: #{refine_forward.4} parent=11 // pred_fallthru
        _
    $region12: #{refine_forward.4} parent=5 // pred_fallthru
      _
    %p218 = scmp.lt.s32.totalorder %s11, 2
    // Predicated region
    $region21: #{refine_forward.4} parent=5 // pred_check
      %p219 = pneg %p218
    $region22: #{refine_forward.4} parent=5 // pred_check_branch
      %221 = sbr.rel (%p219) target = $region24
    $region23: #{refine_forward.4} parent=5 // pred_region
      // Predicated region
      $region25: #{refine_forward.4} parent=23 // pred_check
        %p222 = pneg %p50
      $region26: #{refine_forward.4} parent=23 // pred_check_branch
        %224 = sbr.rel (%p222) target = $region28
      $region27: #{refine_forward.4} parent=23 // pred_region
        %p225 = scmp.lt.s32.totalorder %s18, 1
        %s226 = scalar_select %p225, %s18, 1
        %s227 = smul.addr %s226, 36
        %s228 = smul.addr %s227, 4
        %s229 = scalar_lea.vmem %s0, %s228
      $region28: #{refine_forward.4} parent=23 // pred_fallthru
        _
      // Predicated region
      $region29: #{refine_forward.4} parent=23 // pred_check
        %p230 = pneg %p76
      $region30: #{refine_forward.4} parent=23 // pred_check_branch
        %232 = sbr.rel (%p230) target = $region32
      $region31: #{refine_forward.4} parent=23 // pred_region
        %p233 = scmp.lt.s32.totalorder %s18, 1
        %s234 = scalar_select %p233, %s18, 1
        %s235 = smul.addr %s234, 36
        %s236 = smul.addr %s235, 4
        %s237 = scalar_lea.vmem %s1, %s236
      $region32: #{refine_forward.4} parent=23 // pred_fallthru
        _
      // Predicated region
      $region33: #{refine_forward.4} parent=23 // pred_check
        %p238 = pneg %p102
      $region34: #{refine_forward.4} parent=23 // pred_check_branch
        %240 = sbr.rel (%p238) target = $region36
      $region35: #{refine_forward.4} parent=23 // pred_region
        %p241 = scmp.lt.s32.totalorder %s18, 1
        %s242 = scalar_select %p241, %s18, 1
        %s243 = smul.addr %s242, 36
        %s244 = smul.addr %s243, 4
        %s245 = scalar_lea.vmem %s2, %s244
      $region36: #{refine_forward.4} parent=23 // pred_fallthru
        _
    $region24: #{refine_forward.4} parent=5 // pred_fallthru
      _
    %p246 = scmp.le.s32.totalorder 1, %s11
    %p247 = scmp.lt.s32.totalorder %s11, 3
    %p248 = pnand %p246, %p247
    %p249 = pneg %p248
    // Predicated region
    $region37: #{refine_forward.4} parent=5 // pred_check
      _
    $region38: #{refine_forward.4} parent=5 // pred_check_branch
      %251 = sbr.rel (%p248) target = $region40
    $region39: #{refine_forward.4} parent=5 // pred_region
      %s252 = ssub.s32 %s11, 1
      %p253 = scmp.lt.s32.totalorder %s21, 1
      %s254 = scalar_select %p253, %s21, 1
      %s255 = smul.addr %s254, 36
      %s256 = smul.addr %s255, 4
      %s257 = scalar_lea.vmem %s0, %s256
      %p258 = pneg %p56
      %p259 = pneg %p53
      %p260 = scmp.lt.s32.totalorder %s21, 1
      %s261 = scalar_select %p260, %s21, 1
      %s262 = smul.addr %s261, 36
      %s263 = smul.addr %s262, 4
      %s264 = scalar_lea.vmem %s1, %s263
      %p265 = pneg %p82
      %p266 = pneg %p79
      %p267 = scmp.lt.s32.totalorder %s21, 1
      %s268 = scalar_select %p267, %s21, 1
      %s269 = smul.addr %s268, 36
      %s270 = smul.addr %s269, 4
      %s271 = scalar_lea.vmem %s2, %s270
      %p272 = pneg %p108
      %p273 = pneg %p105
      %p274 = scmp.lt.s32.totalorder %s22, 0
      %s275 = scalar_select %p274, %s22, 0
      %s276 = smul.addr %s275, 4
      %s277 = scalar_lea.vmem %s3, %s276
      %p278 = pneg %p134
      %p279 = pneg %p131
      %p280 = scmp.lt.s32.totalorder %s22, 0
      %s281 = scalar_select %p280, %s22, 0
      %s282 = scalar_lea.vmem %s4, %s281
      %p283 = pneg %p160
      %p284 = pneg %p157
      %p285 = pneg %p190
      %p286 = pneg %p187
      %s287 = smul.u32 32, %s23
      %p288 = scmp.lt.s32.totalorder %s21, 1
      %s289 = scalar_select %p288, %s21, 1
      %p290 = scmp.lt.s32.totalorder %s287, 31
      %s291 = scalar_select %p290, %s287, 31
      %p292 = scmp.lt.s32.totalorder %s22, 0
      %s293 = scalar_select %p292, %s22, 0
      %s294 = sadd.s32 %s293, %s291
      %s295 = smul.addr %s289, 32
      %s296 = sadd.s32 %s294, %s295
      %s297 = smul.addr %s296, 4
      %s298 = scalar_lea.vmem %s5, %s297
      %p299 = scmp.lt.s32.totalorder %s21, 1
      %s300 = scalar_select %p299, %s21, 1
      %s301 = smul.addr %s300, 36
      %s302 = smul.addr %s301, 4
      %s303 = scalar_lea.vmem %s0, %s302
      %p304 = scmp.lt.s32.totalorder %s21, 1
      %s305 = scalar_select %p304, %s21, 1
      %s306 = smul.addr %s305, 36
      %s307 = smul.addr %s306, 4
      %s308 = scalar_lea.vmem %s1, %s307
      %p309 = scmp.lt.s32.totalorder %s21, 1
      %s310 = scalar_select %p309, %s21, 1
      %s311 = smul.addr %s310, 36
      %s312 = smul.addr %s311, 4
      %s313 = scalar_lea.vmem %s2, %s312
      %p314 = scmp.lt.s32.totalorder %s22, 0
      %s315 = scalar_select %p314, %s22, 0
      %s316 = smul.addr %s315, 4
      %s317 = scalar_lea.vmem %s3, %s316
      %p318 = scmp.lt.s32.totalorder %s22, 0
      %s319 = scalar_select %p318, %s22, 0
      %s320 = scalar_lea.vmem %s4, %s319
      %s321 = smul.u32 32, %s23
      %p322 = scmp.lt.s32.totalorder %s21, 1
      %s323 = scalar_select %p322, %s21, 1
      %p324 = scmp.lt.s32.totalorder %s321, 31
      %s325 = scalar_select %p324, %s321, 31
      %p326 = scmp.lt.s32.totalorder %s22, 0
      %s327 = scalar_select %p326, %s22, 0
      %s328 = sadd.s32 %s327, %s325
      %s329 = smul.addr %s323, 32
      %s330 = sadd.s32 %s328, %s329
      %s331 = smul.addr %s330, 4
      %s332 = scalar_lea.vmem %s5, %s331
      %s333 = smul.u32 32, %s23
      %s335 = smul.u32 %s23, 256
      %s336 = sshra.s32 %s335, 3
      %s337 = sand.u32 %s335, 7
      %s338 = smul.addr %s336, 4
      %s339 = scalar_lea.vmem %s303, %s338
      %v340 = vld [vmem:[%s339] sm:$0xf]
      %v341 = vld [vmem:[%s339 + $0x4] sm:$0xf]
      %v342 = vld [vmem:[%s339 + $0x8] sm:$0xf]
      %v343 = vld [vmem:[%s339 + $0xc] sm:$0xf]
      %v344 = vld [vmem:[%s339 + $0x10] sm:$0xf]
      %v345 = vld [vmem:[%s339 + $0x14] sm:$0xf]
      %v346 = vld [vmem:[%s339 + $0x18] sm:$0xf]
      %v347 = vld [vmem:[%s339 + $0x1c] sm:$0xf]
      %v348 = vld [vmem:[%s339 + $0x20] sm:$0xf]
      %v349 = vld [vmem:[%s339 + $0x24] sm:$0xf]
      %v350 = vld [vmem:[%s339 + $0x28] sm:$0xf]
      %v351 = vld [vmem:[%s339 + $0x2c] sm:$0xf]
      %v352 = vld [vmem:[%s339 + $0x30] sm:$0xf]
      %v353 = vld [vmem:[%s339 + $0x34] sm:$0xf]
      %v354 = vld [vmem:[%s339 + $0x38] sm:$0xf]
      %v355 = vld [vmem:[%s339 + $0x3c] sm:$0xf]
      %v356 = vld [vmem:[%s339 + $0x40] sm:$0xf]
      %v357 = vld [vmem:[%s339 + $0x44] sm:$0xf]
      %v358 = vld [vmem:[%s339 + $0x48] sm:$0xf]
      %v359 = vld [vmem:[%s339 + $0x4c] sm:$0xf]
      %v360 = vld [vmem:[%s339 + $0x50] sm:$0xf]
      %v361 = vld [vmem:[%s339 + $0x54] sm:$0xf]
      %v362 = vld [vmem:[%s339 + $0x58] sm:$0xf]
      %v363 = vld [vmem:[%s339 + $0x5c] sm:$0xf]
      %v364 = vld [vmem:[%s339 + $0x60] sm:$0xf]
      %v365 = vld [vmem:[%s339 + $0x64] sm:$0xf]
      %v366 = vld [vmem:[%s339 + $0x68] sm:$0xf]
      %v367 = vld [vmem:[%s339 + $0x6c] sm:$0xf]
      %v368 = vld [vmem:[%s339 + $0x70] sm:$0xf]
      %v369 = vld [vmem:[%s339 + $0x74] sm:$0xf]
      %v370 = vld [vmem:[%s339 + $0x78] sm:$0xf]
      %v371 = vld [vmem:[%s339 + $0x7c] sm:$0xf]
      %v372 = vld [vmem:[%s317] sm:$0xf]
      %v373 = vld [vmem:[%s317 + $0x4] sm:$0xf]
      %v374 = vld [vmem:[%s317 + $0x8] sm:$0xf]
      %v375 = vld [vmem:[%s317 + $0xc] sm:$0xf]
      %v376 = vld [vmem:[%s317 + $0x10] sm:$0xf]
      %v377 = vld [vmem:[%s317 + $0x14] sm:$0xf]
      %v378 = vld [vmem:[%s317 + $0x18] sm:$0xf]
      %v379 = vld [vmem:[%s317 + $0x1c] sm:$0xf]
      %v380 = vld [vmem:[%s317 + $0x20] sm:$0xf]
      %v381 = vld [vmem:[%s317 + $0x24] sm:$0xf]
      %v382 = vld [vmem:[%s317 + $0x28] sm:$0xf]
      %v383 = vld [vmem:[%s317 + $0x2c] sm:$0xf]
      %v384 = vld [vmem:[%s317 + $0x30] sm:$0xf]
      %v385 = vld [vmem:[%s317 + $0x34] sm:$0xf]
      %v386 = vld [vmem:[%s317 + $0x38] sm:$0xf]
      %v387 = vld [vmem:[%s317 + $0x3c] sm:$0xf]
      %s388 = sadd.s32 %s335, 16
      %s389 = sshra.s32 %s388, 3
      %s390 = sand.u32 %s388, 7
      %s391 = smul.addr %s389, 4
      %s392 = scalar_lea.vmem %s303, %s391
      %v393 = vld [vmem:[%s392] sm:$0xf]
      %v394 = vld [vmem:[%s392 + $0x4] sm:$0xf]
      %v395 = vld [vmem:[%s392 + $0x8] sm:$0xf]
      %v396 = vld [vmem:[%s392 + $0xc] sm:$0xf]
      %v397 = vld [vmem:[%s392 + $0x10] sm:$0xf]
      %v398 = vld [vmem:[%s392 + $0x14] sm:$0xf]
      %v399 = vld [vmem:[%s392 + $0x18] sm:$0xf]
      %v400 = vld [vmem:[%s392 + $0x1c] sm:$0xf]
      %v401 = vld [vmem:[%s392 + $0x20] sm:$0xf]
      %v402 = vld [vmem:[%s392 + $0x24] sm:$0xf]
      %v403 = vld [vmem:[%s392 + $0x28] sm:$0xf]
      %v404 = vld [vmem:[%s392 + $0x2c] sm:$0xf]
      %v405 = vld [vmem:[%s392 + $0x30] sm:$0xf]
      %v406 = vld [vmem:[%s392 + $0x34] sm:$0xf]
      %v407 = vld [vmem:[%s392 + $0x38] sm:$0xf]
      %v408 = vld [vmem:[%s392 + $0x3c] sm:$0xf]
      %v409 = vld [vmem:[%s392 + $0x40] sm:$0xf]
      %v410 = vld [vmem:[%s392 + $0x44] sm:$0xf]
      %v411 = vld [vmem:[%s392 + $0x48] sm:$0xf]
      %v412 = vld [vmem:[%s392 + $0x4c] sm:$0xf]
      %v413 = vld [vmem:[%s392 + $0x50] sm:$0xf]
      %v414 = vld [vmem:[%s392 + $0x54] sm:$0xf]
      %v415 = vld [vmem:[%s392 + $0x58] sm:$0xf]
      %v416 = vld [vmem:[%s392 + $0x5c] sm:$0xf]
      %v417 = vld [vmem:[%s392 + $0x60] sm:$0xf]
      %v418 = vld [vmem:[%s392 + $0x64] sm:$0xf]
      %v419 = vld [vmem:[%s392 + $0x68] sm:$0xf]
      %v420 = vld [vmem:[%s392 + $0x6c] sm:$0xf]
      %v421 = vld [vmem:[%s392 + $0x70] sm:$0xf]
      %v422 = vld [vmem:[%s392 + $0x74] sm:$0xf]
      %v423 = vld [vmem:[%s392 + $0x78] sm:$0xf]
      %v424 = vld [vmem:[%s392 + $0x7c] sm:$0xf]
      %s425 = scalar_lea.vmem %s317, 192
      %v426 = vld [vmem:[%s425] sm:$0xf]
      %v427 = vld [vmem:[%s425 + $0x4] sm:$0xf]
      %v428 = vld [vmem:[%s425 + $0x8] sm:$0xf]
      %v429 = vld [vmem:[%s425 + $0xc] sm:$0xf]
      %v430 = vld [vmem:[%s425 + $0x10] sm:$0xf]
      %v431 = vld [vmem:[%s425 + $0x14] sm:$0xf]
      %v432 = vld [vmem:[%s425 + $0x18] sm:$0xf]
      %v433 = vld [vmem:[%s425 + $0x1c] sm:$0xf]
      %v434 = vld [vmem:[%s425 + $0x20] sm:$0xf]
      %v435 = vld [vmem:[%s425 + $0x24] sm:$0xf]
      %v436 = vld [vmem:[%s425 + $0x28] sm:$0xf]
      %v437 = vld [vmem:[%s425 + $0x2c] sm:$0xf]
      %v438 = vld [vmem:[%s425 + $0x30] sm:$0xf]
      %v439 = vld [vmem:[%s425 + $0x34] sm:$0xf]
      %v440 = vld [vmem:[%s425 + $0x38] sm:$0xf]
      %v441 = vld [vmem:[%s425 + $0x3c] sm:$0xf]
      %v474 = vunpack.c.l.b16 %v393
      %v475 = vunpack.c.l.b16 %v394
      %v476 = vunpack.c.l.b16 %v395
      %v477 = vunpack.c.l.b16 %v396
      %v478 = vunpack.c.l.b16 %v397
      %v479 = vunpack.c.l.b16 %v398
      %v480 = vunpack.c.l.b16 %v399
      %v481 = vunpack.c.l.b16 %v400
      %v482 = vunpack.c.l.b16 %v401
      %v483 = vunpack.c.l.b16 %v402
      %v484 = vunpack.c.l.b16 %v403
      %v485 = vunpack.c.l.b16 %v404
      %v486 = vunpack.c.l.b16 %v405
      %v487 = vunpack.c.l.b16 %v406
      %v488 = vunpack.c.l.b16 %v407
      %v489 = vunpack.c.l.b16 %v408
      %v490 = vunpack.c.l.b16 %v409
      %v491 = vunpack.c.l.b16 %v410
      %v492 = vunpack.c.l.b16 %v411
      %v493 = vunpack.c.l.b16 %v412
      %v494 = vunpack.c.l.b16 %v413
      %v495 = vunpack.c.l.b16 %v414
      %v496 = vunpack.c.l.b16 %v415
      %v497 = vunpack.c.l.b16 %v416
      %v498 = vunpack.c.l.b16 %v417
      %v499 = vunpack.c.l.b16 %v418
      %v500 = vunpack.c.l.b16 %v419
      %v501 = vunpack.c.l.b16 %v420
      %v502 = vunpack.c.l.b16 %v421
      %v503 = vunpack.c.l.b16 %v422
      %v504 = vunpack.c.l.b16 %v423
      %v505 = vunpack.c.l.b16 %v424
      %v506 = vpack.c.b16 %v475, %v474
      %v507 = vpack.c.b16 %v477, %v476
      %v508 = vpack.c.b16 %v479, %v478
      %v509 = vpack.c.b16 %v481, %v480
      %v510 = vpack.c.b16 %v483, %v482
      %v511 = vpack.c.b16 %v485, %v484
      %v512 = vpack.c.b16 %v487, %v486
      %v513 = vpack.c.b16 %v489, %v488
      %v514 = vpack.c.b16 %v491, %v490
      %v515 = vpack.c.b16 %v493, %v492
      %v516 = vpack.c.b16 %v495, %v494
      %v517 = vpack.c.b16 %v497, %v496
      %v518 = vpack.c.b16 %v499, %v498
      %v519 = vpack.c.b16 %v501, %v500
      %v520 = vpack.c.b16 %v503, %v502
      %v521 = vpack.c.b16 %v505, %v504
      %v554 = vunpack.c.l.b16 %v426
      %v555 = vunpack.c.l.b16 %v427
      %v556 = vunpack.c.l.b16 %v428
      %v557 = vunpack.c.l.b16 %v429
      %v558 = vunpack.c.l.b16 %v430
      %v559 = vunpack.c.l.b16 %v431
      %v560 = vunpack.c.l.b16 %v432
      %v561 = vunpack.c.l.b16 %v433
      %v562 = vunpack.c.l.b16 %v434
      %v563 = vunpack.c.l.b16 %v435
      %v564 = vunpack.c.l.b16 %v436
      %v565 = vunpack.c.l.b16 %v437
      %v566 = vunpack.c.l.b16 %v438
      %v567 = vunpack.c.l.b16 %v439
      %v568 = vunpack.c.l.b16 %v440
      %v569 = vunpack.c.l.b16 %v441
      %v570 = vpack.c.b16 %v555, %v554
      %v571 = vpack.c.b16 %v557, %v556
      %v572 = vpack.c.b16 %v559, %v558
      %v573 = vpack.c.b16 %v561, %v560
      %v574 = vpack.c.b16 %v563, %v562
      %v575 = vpack.c.b16 %v565, %v564
      %v576 = vpack.c.b16 %v567, %v566
      %v577 = vpack.c.b16 %v569, %v568
      %586 = vmatprep.subr.bf16.mxu0 0
      %587 = vmatpush1.bf16.msra.mxu0 %v570
      %588 = vmatprep.subr.bf16.mxu0 0
      %589 = vmatpush1.bf16.msra.mxu0 %v571
      %590 = vmatprep.subr.bf16.mxu0 0
      %591 = vmatpush1.bf16.msra.mxu0 %v572
      %592 = vmatprep.subr.bf16.mxu0 0
      %593 = vmatpush1.bf16.msra.mxu0 %v573
      %594 = vmatprep.subr.bf16.mxu0 0
      %595 = vmatpush1.bf16.msra.mxu0 %v574
      %596 = vmatprep.subr.bf16.mxu0 0
      %597 = vmatpush1.bf16.msra.mxu0 %v575
      %598 = vmatprep.subr.bf16.mxu0 0
      %599 = vmatpush1.bf16.msra.mxu0 %v576
      %600 = vmatprep.subr.bf16.mxu0 0
      %601 = vmatpush1.bf16.msra.mxu0 %v577
      %602 = vmatprep.subr.bf16.mxu0 0
      %603 = vmatpush1.bf16.msra.mxu0 0
      %604 = vmatprep.subr.bf16.mxu0 0
      %605 = vmatpush1.bf16.msra.mxu0 0
      %606 = vmatprep.subr.bf16.mxu0 0
      %607 = vmatpush1.bf16.msra.mxu0 0
      %608 = vmatprep.subr.bf16.mxu0 0
      %609 = vmatpush1.bf16.msra.mxu0 0
      %610 = vmatprep.subr.bf16.mxu0 0
      %611 = vmatpush1.bf16.msra.mxu0 0
      %612 = vmatprep.subr.bf16.mxu0 0
      %613 = vmatpush1.bf16.msra.mxu0 0
      %614 = vmatprep.subr.bf16.mxu0 0
      %615 = vmatpush1.bf16.msra.mxu0 0
      %616 = vmatprep.subr.bf16.mxu0 0
      %617 = vmatpush1.bf16.msra.mxu0 0
      %618 = vmatprep.mubr.bf16.mxu0 0
      %619 = vmatmul.mubr.bf16.gmra.mrb[0].mxu0 %v506
      %v620 = vpop.f32.mrb[0].mxu0
      %v621 = vadd.f32 0.0, %v620
      %v622 = vpop.f32.mrb[0].mxu0
      %v623 = vpop.f32.mrb[0].mxu0
      %v624 = vadd.f32 0.0, %v623
      %v625 = vpop.f32.mrb[0].mxu0
      %626 = vmatprep.mubr.bf16.mxu0 0
      %627 = vmatmul.mubr.bf16.gmra.mrb[0].mxu0 %v507
      %v628 = vpop.f32.mrb[0].mxu0
      %v629 = vadd.f32 0.0, %v628
      %v630 = vpop.f32.mrb[0].mxu0
      %v631 = vpop.f32.mrb[0].mxu0
      %v632 = vadd.f32 0.0, %v631
      %v633 = vpop.f32.mrb[0].mxu0
      %634 = vmatprep.mubr.bf16.mxu0 0
      %635 = vmatmul.mubr.bf16.gmra.mrb[0].mxu0 %v508
      %v636 = vpop.f32.mrb[0].mxu0
      %v637 = vadd.f32 0.0, %v636
      %v638 = vpop.f32.mrb[0].mxu0
      %v639 = vpop.f32.mrb[0].mxu0
      %v640 = vadd.f32 0.0, %v639
      %v641 = vpop.f32.mrb[0].mxu0
      %642 = vmatprep.mubr.bf16.mxu0 0
      %643 = vmatmul.mubr.bf16.gmra.mrb[0].mxu0 %v509
      %v644 = vpop.f32.mrb[0].mxu0
      %v645 = vadd.f32 0.0, %v644
      %v646 = vpop.f32.mrb[0].mxu0
      %v647 = vpop.f32.mrb[0].mxu0
      %v648 = vadd.f32 0.0, %v647
      %v649 = vpop.f32.mrb[0].mxu0
      %650 = vmatprep.mubr.bf16.mxu0 0
      %651 = vmatmul.mubr.bf16.gmra.mrb[0].mxu0 %v510
      %v652 = vpop.f32.mrb[0].mxu0
      %v653 = vadd.f32 0.0, %v652
      %v654 = vpop.f32.mrb[0].mxu0
      %v655 = vpop.f32.mrb[0].mxu0
      %v656 = vadd.f32 0.0, %v655
      %v657 = vpop.f32.mrb[0].mxu0
      %658 = vmatprep.mubr.bf16.mxu0 0
      %659 = vmatmul.mubr.bf16.gmra.mrb[0].mxu0 %v511
      %v660 = vpop.f32.mrb[0].mxu0
      %v661 = vadd.f32 0.0, %v660
      %v662 = vpop.f32.mrb[0].mxu0
      %v663 = vpop.f32.mrb[0].mxu0
      %v664 = vadd.f32 0.0, %v663
      %v665 = vpop.f32.mrb[0].mxu0
      %666 = vmatprep.mubr.bf16.mxu0 0
      %667 = vmatmul.mubr.bf16.gmra.mrb[0].mxu0 %v512
      %v668 = vpop.f32.mrb[0].mxu0
      %v669 = vadd.f32 0.0, %v668
      %v670 = vpop.f32.mrb[0].mxu0
      %v671 = vpop.f32.mrb[0].mxu0
      %v672 = vadd.f32 0.0, %v671
      %v673 = vpop.f32.mrb[0].mxu0
      %674 = vmatprep.mubr.bf16.mxu0 0
      %675 = vmatmul.mubr.bf16.gmra.mrb[0].mxu0 %v513
      %v676 = vpop.f32.mrb[0].mxu0
      %v677 = vadd.f32 0.0, %v676
      %v678 = vpop.f32.mrb[0].mxu0
      %v679 = vpop.f32.mrb[0].mxu0
      %v680 = vadd.f32 0.0, %v679
      %v681 = vpop.f32.mrb[0].mxu0
      %682 = vmatprep.mubr.bf16.mxu0 0
      %683 = vmatmul.mubr.bf16.gmra.mrb[0].mxu0 %v514
      %v684 = vpop.f32.mrb[0].mxu0
      %v685 = vadd.f32 0.0, %v684
      %v686 = vpop.f32.mrb[0].mxu0
      %v687 = vpop.f32.mrb[0].mxu0
      %v688 = vadd.f32 0.0, %v687
      %v689 = vpop.f32.mrb[0].mxu0
      %690 = vmatprep.mubr.bf16.mxu0 0
      %691 = vmatmul.mubr.bf16.gmra.mrb[0].mxu0 %v515
      %v692 = vpop.f32.mrb[0].mxu0
      %v693 = vadd.f32 0.0, %v692
      %v694 = vpop.f32.mrb[0].mxu0
      %v695 = vpop.f32.mrb[0].mxu0
      %v696 = vadd.f32 0.0, %v695
      %v697 = vpop.f32.mrb[0].mxu0
      %698 = vmatprep.mubr.bf16.mxu0 0
      %699 = vmatmul.mubr.bf16.gmra.mrb[0].mxu0 %v516
      %v700 = vpop.f32.mrb[0].mxu0
      %v701 = vadd.f32 0.0, %v700
      %v702 = vpop.f32.mrb[0].mxu0
      %v703 = vpop.f32.mrb[0].mxu0
      %v704 = vadd.f32 0.0, %v703
      %v705 = vpop.f32.mrb[0].mxu0
      %706 = vmatprep.mubr.bf16.mxu0 0
      %707 = vmatmul.mubr.bf16.gmra.mrb[0].mxu0 %v517
      %v708 = vpop.f32.mrb[0].mxu0
      %v709 = vadd.f32 0.0, %v708
      %v710 = vpop.f32.mrb[0].mxu0
      %v711 = vpop.f32.mrb[0].mxu0
      %v712 = vadd.f32 0.0, %v711
      %v713 = vpop.f32.mrb[0].mxu0
      %714 = vmatprep.mubr.bf16.mxu0 0
      %715 = vmatmul.mubr.bf16.gmra.mrb[0].mxu0 %v518
      %v716 = vpop.f32.mrb[0].mxu0
      %v717 = vadd.f32 0.0, %v716
      %v718 = vpop.f32.mrb[0].mxu0
      %v719 = vpop.f32.mrb[0].mxu0
      %v720 = vadd.f32 0.0, %v719
      %v721 = vpop.f32.mrb[0].mxu0
      %722 = vmatprep.mubr.bf16.mxu0 0
      %723 = vmatmul.mubr.bf16.gmra.mrb[0].mxu0 %v519
      %v724 = vpop.f32.mrb[0].mxu0
      %v725 = vadd.f32 0.0, %v724
      %v726 = vpop.f32.mrb[0].mxu0
      %v727 = vpop.f32.mrb[0].mxu0
      %v728 = vadd.f32 0.0, %v727
      %v729 = vpop.f32.mrb[0].mxu0
      %730 = vmatprep.mubr.bf16.mxu0 0
      %731 = vmatmul.mubr.bf16.gmra.mrb[0].mxu0 %v520
      %v732 = vpop.f32.mrb[0].mxu0
      %v733 = vadd.f32 0.0, %v732
      %v734 = vpop.f32.mrb[0].mxu0
      %v735 = vpop.f32.mrb[0].mxu0
      %v736 = vadd.f32 0.0, %v735
      %v737 = vpop.f32.mrb[0].mxu0
      %738 = vmatprep.mubr.bf16.mxu0 0
      %739 = vmatmul.mubr.bf16.gmra.mrb[0].mxu0 %v521
      %v740 = vpop.f32.mrb[0].mxu0
      %v741 = vadd.f32 0.0, %v740
      %v742 = vpop.f32.mrb[0].mxu0
      %v743 = vpop.f32.mrb[0].mxu0
      %v744 = vadd.f32 0.0, %v743
      %v745 = vpop.f32.mrb[0].mxu0
      %746 = vdwg.mxu0
      %v779 = vunpack.c.l.b16 %v340
      %v780 = vunpack.c.l.b16 %v341
      %v781 = vunpack.c.l.b16 %v342
      %v782 = vunpack.c.l.b16 %v343
      %v783 = vunpack.c.l.b16 %v344
      %v784 = vunpack.c.l.b16 %v345
      %v785 = vunpack.c.l.b16 %v346
      %v786 = vunpack.c.l.b16 %v347
      %v787 = vunpack.c.l.b16 %v348
      %v788 = vunpack.c.l.b16 %v349
      %v789 = vunpack.c.l.b16 %v350
      %v790 = vunpack.c.l.b16 %v351
      %v791 = vunpack.c.l.b16 %v352
      %v792 = vunpack.c.l.b16 %v353
      %v793 = vunpack.c.l.b16 %v354
      %v794 = vunpack.c.l.b16 %v355
      %v795 = vunpack.c.l.b16 %v356
      %v796 = vunpack.c.l.b16 %v357
      %v797 = vunpack.c.l.b16 %v358
      %v798 = vunpack.c.l.b16 %v359
      %v799 = vunpack.c.l.b16 %v360
      %v800 = vunpack.c.l.b16 %v361
      %v801 = vunpack.c.l.b16 %v362
      %v802 = vunpack.c.l.b16 %v363
      %v803 = vunpack.c.l.b16 %v364
      %v804 = vunpack.c.l.b16 %v365
      %v805 = vunpack.c.l.b16 %v366
      %v806 = vunpack.c.l.b16 %v367
      %v807 = vunpack.c.l.b16 %v368
      %v808 = vunpack.c.l.b16 %v369
      %v809 = vunpack.c.l.b16 %v370
      %v810 = vunpack.c.l.b16 %v371
      %v811 = vpack.c.b16 %v780, %v779
      %v812 = vpack.c.b16 %v782, %v781
      %v813 = vpack.c.b16 %v784, %v783
      %v814 = vpack.c.b16 %v786, %v785
      %v815 = vpack.c.b16 %v788, %v787
      %v816 = vpack.c.b16 %v790, %v789
      %v817 = vpack.c.b16 %v792, %v791
      %v818 = vpack.c.b16 %v794, %v793
      %v819 = vpack.c.b16 %v796, %v795
      %v820 = vpack.c.b16 %v798, %v797
      %v821 = vpack.c.b16 %v800, %v799
      %v822 = vpack.c.b16 %v802, %v801
      %v823 = vpack.c.b16 %v804, %v803
      %v824 = vpack.c.b16 %v806, %v805
      %v825 = vpack.c.b16 %v808, %v807
      %v826 = vpack.c.b16 %v810, %v809
      %v859 = vunpack.c.l.b16 %v372
      %v860 = vunpack.c.l.b16 %v373
      %v861 = vunpack.c.l.b16 %v374
      %v862 = vunpack.c.l.b16 %v375
      %v863 = vunpack.c.l.b16 %v376
      %v864 = vunpack.c.l.b16 %v377
      %v865 = vunpack.c.l.b16 %v378
      %v866 = vunpack.c.l.b16 %v379
      %v867 = vunpack.c.l.b16 %v380
      %v868 = vunpack.c.l.b16 %v381
      %v869 = vunpack.c.l.b16 %v382
      %v870 = vunpack.c.l.b16 %v383
      %v871 = vunpack.c.l.b16 %v384
      %v872 = vunpack.c.l.b16 %v385
      %v873 = vunpack.c.l.b16 %v386
      %v874 = vunpack.c.l.b16 %v387
      %v875 = vpack.c.b16 %v860, %v859
      %v876 = vpack.c.b16 %v862, %v861
      %v877 = vpack.c.b16 %v864, %v863
      %v878 = vpack.c.b16 %v866, %v865
      %v879 = vpack.c.b16 %v868, %v867
      %v880 = vpack.c.b16 %v870, %v869
      %v881 = vpack.c.b16 %v872, %v871
      %v882 = vpack.c.b16 %v874, %v873
      %891 = vmatprep.subr.bf16.mxu0 0
      %892 = vmatpush1.bf16.msra.mxu0 %v875
      %893 = vmatprep.subr.bf16.mxu0 0
      %894 = vmatpush1.bf16.msra.mxu0 %v876
      %895 = vmatprep.subr.bf16.mxu0 0
      %896 = vmatpush1.bf16.msra.mxu0 %v877
      %897 = vmatprep.subr.bf16.mxu0 0
      %898 = vmatpush1.bf16.msra.mxu0 %v878
      %899 = vmatprep.subr.bf16.mxu0 0
      %900 = vmatpush1.bf16.msra.mxu0 %v879
      %901 = vmatprep.subr.bf16.mxu0 0
      %902 = vmatpush1.bf16.msra.mxu0 %v880
      %903 = vmatprep.subr.bf16.mxu0 0
      %904 = vmatpush1.bf16.msra.mxu0 %v881
      %905 = vmatprep.subr.bf16.mxu0 0
      %906 = vmatpush1.bf16.msra.mxu0 %v882
      %907 = vmatprep.subr.bf16.mxu0 0
      %908 = vmatpush1.bf16.msra.mxu0 0
      %909 = vmatprep.subr.bf16.mxu0 0
      %910 = vmatpush1.bf16.msra.mxu0 0
      %911 = vmatprep.subr.bf16.mxu0 0
      %912 = vmatpush1.bf16.msra.mxu0 0
      %913 = vmatprep.subr.bf16.mxu0 0
      %914 = vmatpush1.bf16.msra.mxu0 0
      %915 = vmatprep.subr.bf16.mxu0 0
      %916 = vmatpush1.bf16.msra.mxu0 0
      %917 = vmatprep.subr.bf16.mxu0 0
      %918 = vmatpush1.bf16.msra.mxu0 0
      %919 = vmatprep.subr.bf16.mxu0 0
      %920 = vmatpush1.bf16.msra.mxu0 0
      %921 = vmatprep.subr.bf16.mxu0 0
      %922 = vmatpush1.bf16.msra.mxu0 0
      %923 = vmatprep.mubr.bf16.mxu0 0
      %924 = vmatmul.mubr.bf16.gmra.mrb[0].mxu0 %v811
      %v925 = vpop.f32.mrb[0].mxu0
      %v926 = vadd.f32 %v621, %v925
      %v927 = vpop.f32.mrb[0].mxu0
      %v928 = vpop.f32.mrb[0].mxu0
      %v929 = vadd.f32 %v624, %v928
      %v930 = vpop.f32.mrb[0].mxu0
      %931 = vmatprep.mubr.bf16.mxu0 0
      %932 = vmatmul.mubr.bf16.gmra.mrb[0].mxu0 %v812
      %v933 = vpop.f32.mrb[0].mxu0
      %v934 = vadd.f32 %v629, %v933
      %v935 = vpop.f32.mrb[0].mxu0
      %v936 = vpop.f32.mrb[0].mxu0
      %v937 = vadd.f32 %v632, %v936
      %v938 = vpop.f32.mrb[0].mxu0
      %939 = vmatprep.mubr.bf16.mxu0 0
      %940 = vmatmul.mubr.bf16.gmra.mrb[0].mxu0 %v813
      %v941 = vpop.f32.mrb[0].mxu0
      %v942 = vadd.f32 %v637, %v941
      %v943 = vpop.f32.mrb[0].mxu0
      %v944 = vpop.f32.mrb[0].mxu0
      %v945 = vadd.f32 %v640, %v944
      %v946 = vpop.f32.mrb[0].mxu0
      %947 = vmatprep.mubr.bf16.mxu0 0
      %948 = vmatmul.mubr.bf16.gmra.mrb[0].mxu0 %v814
      %v949 = vpop.f32.mrb[0].mxu0
      %v950 = vadd.f32 %v645, %v949
      %v951 = vpop.f32.mrb[0].mxu0
      %v952 = vpop.f32.mrb[0].mxu0
      %v953 = vadd.f32 %v648, %v952
      %v954 = vpop.f32.mrb[0].mxu0
      %955 = vmatprep.mubr.bf16.mxu0 0
      %956 = vmatmul.mubr.bf16.gmra.mrb[0].mxu0 %v815
      %v957 = vpop.f32.mrb[0].mxu0
      %v958 = vadd.f32 %v653, %v957
      %v959 = vpop.f32.mrb[0].mxu0
      %v960 = vpop.f32.mrb[0].mxu0
      %v961 = vadd.f32 %v656, %v960
      %v962 = vpop.f32.mrb[0].mxu0
      %963 = vmatprep.mubr.bf16.mxu0 0
      %964 = vmatmul.mubr.bf16.gmra.mrb[0].mxu0 %v816
      %v965 = vpop.f32.mrb[0].mxu0
      %v966 = vadd.f32 %v661, %v965
      %v967 = vpop.f32.mrb[0].mxu0
      %v968 = vpop.f32.mrb[0].mxu0
      %v969 = vadd.f32 %v664, %v968
      %v970 = vpop.f32.mrb[0].mxu0
      %971 = vmatprep.mubr.bf16.mxu0 0
      %972 = vmatmul.mubr.bf16.gmra.mrb[0].mxu0 %v817
      %v973 = vpop.f32.mrb[0].mxu0
      %v974 = vadd.f32 %v669, %v973
      %v975 = vpop.f32.mrb[0].mxu0
      %v976 = vpop.f32.mrb[0].mxu0
      %v977 = vadd.f32 %v672, %v976
      %v978 = vpop.f32.mrb[0].mxu0
      %979 = vmatprep.mubr.bf16.mxu0 0
      %980 = vmatmul.mubr.bf16.gmra.mrb[0].mxu0 %v818
      %v981 = vpop.f32.mrb[0].mxu0
      %v982 = vadd.f32 %v677, %v981
      %v983 = vpop.f32.mrb[0].mxu0
      %v984 = vpop.f32.mrb[0].mxu0
      %v985 = vadd.f32 %v680, %v984
      %v986 = vpop.f32.mrb[0].mxu0
      %987 = vmatprep.mubr.bf16.mxu0 0
      %988 = vmatmul.mubr.bf16.gmra.mrb[0].mxu0 %v819
      %v989 = vpop.f32.mrb[0].mxu0
      %v990 = vadd.f32 %v685, %v989
      %v991 = vpop.f32.mrb[0].mxu0
      %v992 = vpop.f32.mrb[0].mxu0
      %v993 = vadd.f32 %v688, %v992
      %v994 = vpop.f32.mrb[0].mxu0
      %995 = vmatprep.mubr.bf16.mxu0 0
      %996 = vmatmul.mubr.bf16.gmra.mrb[0].mxu0 %v820
      %v997 = vpop.f32.mrb[0].mxu0
      %v998 = vadd.f32 %v693, %v997
      %v999 = vpop.f32.mrb[0].mxu0
      %v1000 = vpop.f32.mrb[0].mxu0
      %v1001 = vadd.f32 %v696, %v1000
      %v1002 = vpop.f32.mrb[0].mxu0
      %1003 = vmatprep.mubr.bf16.mxu0 0
      %1004 = vmatmul.mubr.bf16.gmra.mrb[0].mxu0 %v821
      %v1005 = vpop.f32.mrb[0].mxu0
      %v1006 = vadd.f32 %v701, %v1005
      %v1007 = vpop.f32.mrb[0].mxu0
      %v1008 = vpop.f32.mrb[0].mxu0
      %v1009 = vadd.f32 %v704, %v1008
      %v1010 = vpop.f32.mrb[0].mxu0
      %1011 = vmatprep.mubr.bf16.mxu0 0
      %1012 = vmatmul.mubr.bf16.gmra.mrb[0].mxu0 %v822
      %v1013 = vpop.f32.mrb[0].mxu0
      %v1014 = vadd.f32 %v709, %v1013
      %v1015 = vpop.f32.mrb[0].mxu0
      %v1016 = vpop.f32.mrb[0].mxu0
      %v1017 = vadd.f32 %v712, %v1016
      %v1018 = vpop.f32.mrb[0].mxu0
      %1019 = vmatprep.mubr.bf16.mxu0 0
      %1020 = vmatmul.mubr.bf16.gmra.mrb[0].mxu0 %v823
      %v1021 = vpop.f32.mrb[0].mxu0
      %v1022 = vadd.f32 %v717, %v1021
      %v1023 = vpop.f32.mrb[0].mxu0
      %v1024 = vpop.f32.mrb[0].mxu0
      %v1025 = vadd.f32 %v720, %v1024
      %v1026 = vpop.f32.mrb[0].mxu0
      %1027 = vmatprep.mubr.bf16.mxu0 0
      %1028 = vmatmul.mubr.bf16.gmra.mrb[0].mxu0 %v824
      %v1029 = vpop.f32.mrb[0].mxu0
      %v1030 = vadd.f32 %v725, %v1029
      %v1031 = vpop.f32.mrb[0].mxu0
      %v1032 = vpop.f32.mrb[0].mxu0
      %v1033 = vadd.f32 %v728, %v1032
      %v1034 = vpop.f32.mrb[0].mxu0
      %1035 = vmatprep.mubr.bf16.mxu0 0
      %1036 = vmatmul.mubr.bf16.gmra.mrb[0].mxu0 %v825
      %v1037 = vpop.f32.mrb[0].mxu0
      %v1038 = vadd.f32 %v733, %v1037
      %v1039 = vpop.f32.mrb[0].mxu0
      %v1040 = vpop.f32.mrb[0].mxu0
      %v1041 = vadd.f32 %v736, %v1040
      %v1042 = vpop.f32.mrb[0].mxu0
      %1043 = vmatprep.mubr.bf16.mxu0 0
      %1044 = vmatmul.mubr.bf16.gmra.mrb[0].mxu0 %v826
      %v1045 = vpop.f32.mrb[0].mxu0
      %v1046 = vadd.f32 %v741, %v1045
      %v1047 = vpop.f32.mrb[0].mxu0
      %v1048 = vpop.f32.mrb[0].mxu0
      %v1049 = vadd.f32 %v744, %v1048
      %v1050 = vpop.f32.mrb[0].mxu0
      %1051 = vdwg.mxu0
      %s1052 = sadd.s32 %s335, 32
      %s1053 = sshra.s32 %s1052, 3
      %s1054 = sand.u32 %s1052, 7
      %s1055 = smul.addr %s1053, 4
      %s1056 = scalar_lea.vmem %s303, %s1055
      %v1057 = vld [vmem:[%s1056] sm:$0xf]
      %v1058 = vld [vmem:[%s1056 + $0x4] sm:$0xf]
      %v1059 = vld [vmem:[%s1056 + $0x8] sm:$0xf]
      %v1060 = vld [vmem:[%s1056 + $0xc] sm:$0xf]
      %v1061 = vld [vmem:[%s1056 + $0x10] sm:$0xf]
      %v1062 = vld [vmem:[%s1056 + $0x14] sm:$0xf]
      %v1063 = vld [vmem:[%s1056 + $0x18] sm:$0xf]
      %v1064 = vld [vmem:[%s1056 + $0x1c] sm:$0xf]
      %v1065 = vld [vmem:[%s1056 + $0x20] sm:$0xf]
      %v1066 = vld [vmem:[%s1056 + $0x24] sm:$0xf]
      %v1067 = vld [vmem:[%s1056 + $0x28] sm:$0xf]
      %v1068 = vld [vmem:[%s1056 + $0x2c] sm:$0xf]
      %v1069 = vld [vmem:[%s1056 + $0x30] sm:$0xf]
      %v1070 = vld [vmem:[%s1056 + $0x34] sm:$0xf]
      %v1071 = vld [vmem:[%s1056 + $0x38] sm:$0xf]
      %v1072 = vld [vmem:[%s1056 + $0x3c] sm:$0xf]
      %v1073 = vld [vmem:[%s1056 + $0x40] sm:$0xf]
      %v1074 = vld [vmem:[%s1056 + $0x44] sm:$0xf]
      %v1075 = vld [vmem:[%s1056 + $0x48] sm:$0xf]
      %v1076 = vld [vmem:[%s1056 + $0x4c] sm:$0xf]
      %v1077 = vld [vmem:[%s1056 + $0x50] sm:$0xf]
      %v1078 = vld [vmem:[%s1056 + $0x54] sm:$0xf]
      %v1079 = vld [vmem:[%s1056 + $0x58] sm:$0xf]
      %v1080 = vld [vmem:[%s1056 + $0x5c] sm:$0xf]
      %v1081 = vld [vmem:[%s1056 + $0x60] sm:$0xf]
      %v1082 = vld [vmem:[%s1056 + $0x64] sm:$0xf]
      %v1083 = vld [vmem:[%s1056 + $0x68] sm:$0xf]
      %v1084 = vld [vmem:[%s1056 + $0x6c] sm:$0xf]
      %v1085 = vld [vmem:[%s1056 + $0x70] sm:$0xf]
      %v1086 = vld [vmem:[%s1056 + $0x74] sm:$0xf]
      %v1087 = vld [vmem:[%s1056 + $0x78] sm:$0xf]
      %v1088 = vld [vmem:[%s1056 + $0x7c] sm:$0xf]
      %s1089 = scalar_lea.vmem %s317, 384
      %v1090 = vld [vmem:[%s1089] sm:$0xf]
      %v1091 = vld [vmem:[%s1089 + $0x4] sm:$0xf]
      %v1092 = vld [vmem:[%s1089 + $0x8] sm:$0xf]
      %v1093 = vld [vmem:[%s1089 + $0xc] sm:$0xf]
      %v1094 = vld [vmem:[%s1089 + $0x10] sm:$0xf]
      %v1095 = vld [vmem:[%s1089 + $0x14] sm:$0xf]
      %v1096 = vld [vmem:[%s1089 + $0x18] sm:$0xf]
      %v1097 = vld [vmem:[%s1089 + $0x1c] sm:$0xf]
      %v1098 = vld [vmem:[%s1089 + $0x20] sm:$0xf]
      %v1099 = vld [vmem:[%s1089 + $0x24] sm:$0xf]
      %v1100 = vld [vmem:[%s1089 + $0x28] sm:$0xf]
      %v1101 = vld [vmem:[%s1089 + $0x2c] sm:$0xf]
      %v1102 = vld [vmem:[%s1089 + $0x30] sm:$0xf]
      %v1103 = vld [vmem:[%s1089 + $0x34] sm:$0xf]
      %v1104 = vld [vmem:[%s1089 + $0x38] sm:$0xf]
      %v1105 = vld [vmem:[%s1089 + $0x3c] sm:$0xf]
      %v1138 = vunpack.c.l.b16 %v1057
      %v1139 = vunpack.c.l.b16 %v1058
      %v1140 = vunpack.c.l.b16 %v1059
      %v1141 = vunpack.c.l.b16 %v1060
      %v1142 = vunpack.c.l.b16 %v1061
      %v1143 = vunpack.c.l.b16 %v1062
      %v1144 = vunpack.c.l.b16 %v1063
      %v1145 = vunpack.c.l.b16 %v1064
      %v1146 = vunpack.c.l.b16 %v1065
      %v1147 = vunpack.c.l.b16 %v1066
      %v1148 = vunpack.c.l.b16 %v1067
      %v1149 = vunpack.c.l.b16 %v1068
      %v1150 = vunpack.c.l.b16 %v1069
      %v1151 = vunpack.c.l.b16 %v1070
      %v1152 = vunpack.c.l.b16 %v1071
      %v1153 = vunpack.c.l.b16 %v1072
      %v1154 = vunpack.c.l.b16 %v1073
      %v1155 = vunpack.c.l.b16 %v1074
      %v1156 = vunpack.c.l.b16 %v1075
      %v1157 = vunpack.c.l.b16 %v1076
      %v1158 = vunpack.c.l.b16 %v1077
      %v1159 = vunpack.c.l.b16 %v1078
      %v1160 = vunpack.c.l.b16 %v1079
      %v1161 = vunpack.c.l.b16 %v1080
      %v1162 = vunpack.c.l.b16 %v1081
      %v1163 = vunpack.c.l.b16 %v1082
      %v1164 = vunpack.c.l.b16 %v1083
      %v1165 = vunpack.c.l.b16 %v1084
      %v1166 = vunpack.c.l.b16 %v1085
      %v1167 = vunpack.c.l.b16 %v1086
      %v1168 = vunpack.c.l.b16 %v1087
      %v1169 = vunpack.c.l.b16 %v1088
      %v1170 = vpack.c.b16 %v1139, %v1138
      %v1171 = vpack.c.b16 %v1141, %v1140
      %v1172 = vpack.c.b16 %v1143, %v1142
      %v1173 = vpack.c.b16 %v1145, %v1144
      %v1174 = vpack.c.b16 %v1147, %v1146
      %v1175 = vpack.c.b16 %v1149, %v1148
      %v1176 = vpack.c.b16 %v1151, %v1150
      %v1177 = vpack.c.b16 %v1153, %v1152
      %v1178 = vpack.c.b16 %v1155, %v1154
      %v1179 = vpack.c.b16 %v1157, %v1156
      %v1180 = vpack.c.b16 %v1159, %v1158
      %v1181 = vpack.c.b16 %v1161, %v1160
      %v1182 = vpack.c.b16 %v1163, %v1162
      %v1183 = vpack.c.b16 %v1165, %v1164
      %v1184 = vpack.c.b16 %v1167, %v1166
      %v1185 = vpack.c.b16 %v1169, %v1168
      %v1218 = vunpack.c.l.b16 %v1090
      %v1219 = vunpack.c.l.b16 %v1091
      %v1220 = vunpack.c.l.b16 %v1092
      %v1221 = vunpack.c.l.b16 %v1093
      %v1222 = vunpack.c.l.b16 %v1094
      %v1223 = vunpack.c.l.b16 %v1095
      %v1224 = vunpack.c.l.b16 %v1096
      %v1225 = vunpack.c.l.b16 %v1097
      %v1226 = vunpack.c.l.b16 %v1098
      %v1227 = vunpack.c.l.b16 %v1099
      %v1228 = vunpack.c.l.b16 %v1100
      %v1229 = vunpack.c.l.b16 %v1101
      %v1230 = vunpack.c.l.b16 %v1102
      %v1231 = vunpack.c.l.b16 %v1103
      %v1232 = vunpack.c.l.b16 %v1104
      %v1233 = vunpack.c.l.b16 %v1105
      %v1234 = vpack.c.b16 %v1219, %v1218
      %v1235 = vpack.c.b16 %v1221, %v1220
      %v1236 = vpack.c.b16 %v1223, %v1222
      %v1237 = vpack.c.b16 %v1225, %v1224
      %v1238 = vpack.c.b16 %v1227, %v1226
      %v1239 = vpack.c.b16 %v1229, %v1228
      %v1240 = vpack.c.b16 %v1231, %v1230
      %v1241 = vpack.c.b16 %v1233, %v1232
      %1250 = vmatprep.subr.bf16.mxu0 0
      %1251 = vmatpush1.bf16.msra.mxu0 %v1234
      %1252 = vmatprep.subr.bf16.mxu0 0
      %1253 = vmatpush1.bf16.msra.mxu0 %v1235
      %1254 = vmatprep.subr.bf16.mxu0 0
      %1255 = vmatpush1.bf16.msra.mxu0 %v1236
      %1256 = vmatprep.subr.bf16.mxu0 0
      %1257 = vmatpush1.bf16.msra.mxu0 %v1237
      %1258 = vmatprep.subr.bf16.mxu0 0
      %1259 = vmatpush1.bf16.msra.mxu0 %v1238
      %1260 = vmatprep.subr.bf16.mxu0 0
      %1261 = vmatpush1.bf16.msra.mxu0 %v1239
      %1262 = vmatprep.subr.bf16.mxu0 0
      %1263 = vmatpush1.bf16.msra.mxu0 %v1240
      %1264 = vmatprep.subr.bf16.mxu0 0
      %1265 = vmatpush1.bf16.msra.mxu0 %v1241
      %1266 = vmatprep.subr.bf16.mxu0 0
      %1267 = vmatpush1.bf16.msra.mxu0 0
      %1268 = vmatprep.subr.bf16.mxu0 0
      %1269 = vmatpush1.bf16.msra.mxu0 0
      %1270 = vmatprep.subr.bf16.mxu0 0
      %1271 = vmatpush1.bf16.msra.mxu0 0
      %1272 = vmatprep.subr.bf16.mxu0 0
      %1273 = vmatpush1.bf16.msra.mxu0 0
      %1274 = vmatprep.subr.bf16.mxu0 0
      %1275 = vmatpush1.bf16.msra.mxu0 0
      %1276 = vmatprep.subr.bf16.mxu0 0
      %1277 = vmatpush1.bf16.msra.mxu0 0
      %1278 = vmatprep.subr.bf16.mxu0 0
      %1279 = vmatpush1.bf16.msra.mxu0 0
      %1280 = vmatprep.subr.bf16.mxu0 0
      %1281 = vmatpush1.bf16.msra.mxu0 0
      %1282 = vmatprep.mubr.bf16.mxu0 0
      %1283 = vmatmul.mubr.bf16.gmra.mrb[0].mxu0 %v1170
      %v1284 = vpop.f32.mrb[0].mxu0
      %v1285 = vadd.f32 0.0, %v1284
      %v1286 = vpop.f32.mrb[0].mxu0
      %v1287 = vpop.f32.mrb[0].mxu0
      %v1288 = vadd.f32 0.0, %v1287
      %v1289 = vpop.f32.mrb[0].mxu0
      %1290 = vmatprep.mubr.bf16.mxu0 0
      %1291 = vmatmul.mubr.bf16.gmra.mrb[0].mxu0 %v1171
      %v1292 = vpop.f32.mrb[0].mxu0
      %v1293 = vadd.f32 0.0, %v1292
      %v1294 = vpop.f32.mrb[0].mxu0
      %v1295 = vpop.f32.mrb[0].mxu0
      %v1296 = vadd.f32 0.0, %v1295
      %v1297 = vpop.f32.mrb[0].mxu0
      %1298 = vmatprep.mubr.bf16.mxu0 0
      %1299 = vmatmul.mubr.bf16.gmra.mrb[0].mxu0 %v1172
      %v1300 = vpop.f32.mrb[0].mxu0
      %v1301 = vadd.f32 0.0, %v1300
      %v1302 = vpop.f32.mrb[0].mxu0
      %v1303 = vpop.f32.mrb[0].mxu0
      %v1304 = vadd.f32 0.0, %v1303
      %v1305 = vpop.f32.mrb[0].mxu0
      %1306 = vmatprep.mubr.bf16.mxu0 0
      %1307 = vmatmul.mubr.bf16.gmra.mrb[0].mxu0 %v1173
      %v1308 = vpop.f32.mrb[0].mxu0
      %v1309 = vadd.f32 0.0, %v1308
      %v1310 = vpop.f32.mrb[0].mxu0
      %v1311 = vpop.f32.mrb[0].mxu0
      %v1312 = vadd.f32 0.0, %v1311
      %v1313 = vpop.f32.mrb[0].mxu0
      %1314 = vmatprep.mubr.bf16.mxu0 0
      %1315 = vmatmul.mubr.bf16.gmra.mrb[0].mxu0 %v1174
      %v1316 = vpop.f32.mrb[0].mxu0
      %v1317 = vadd.f32 0.0, %v1316
      %v1318 = vpop.f32.mrb[0].mxu0
      %v1319 = vpop.f32.mrb[0].mxu0
      %v1320 = vadd.f32 0.0, %v1319
      %v1321 = vpop.f32.mrb[0].mxu0
      %1322 = vmatprep.mubr.bf16.mxu0 0
      %1323 = vmatmul.mubr.bf16.gmra.mrb[0].mxu0 %v1175
      %v1324 = vpop.f32.mrb[0].mxu0
      %v1325 = vadd.f32 0.0, %v1324
      %v1326 = vpop.f32.mrb[0].mxu0
      %v1327 = vpop.f32.mrb[0].mxu0
      %v1328 = vadd.f32 0.0, %v1327
      %v1329 = vpop.f32.mrb[0].mxu0
      %1330 = vmatprep.mubr.bf16.mxu0 0
      %1331 = vmatmul.mubr.bf16.gmra.mrb[0].mxu0 %v1176
      %v1332 = vpop.f32.mrb[0].mxu0
      %v1333 = vadd.f32 0.0, %v1332
      %v1334 = vpop.f32.mrb[0].mxu0
      %v1335 = vpop.f32.mrb[0].mxu0
      %v1336 = vadd.f32 0.0, %v1335
      %v1337 = vpop.f32.mrb[0].mxu0
      %1338 = vmatprep.mubr.bf16.mxu0 0
      %1339 = vmatmul.mubr.bf16.gmra.mrb[0].mxu0 %v1177
      %v1340 = vpop.f32.mrb[0].mxu0
      %v1341 = vadd.f32 0.0, %v1340
      %v1342 = vpop.f32.mrb[0].mxu0
      %v1343 = vpop.f32.mrb[0].mxu0
      %v1344 = vadd.f32 0.0, %v1343
      %v1345 = vpop.f32.mrb[0].mxu0
      %1346 = vmatprep.mubr.bf16.mxu0 0
      %1347 = vmatmul.mubr.bf16.gmra.mrb[0].mxu0 %v1178
      %v1348 = vpop.f32.mrb[0].mxu0
      %v1349 = vadd.f32 0.0, %v1348
      %v1350 = vpop.f32.mrb[0].mxu0
      %v1351 = vpop.f32.mrb[0].mxu0
      %v1352 = vadd.f32 0.0, %v1351
      %v1353 = vpop.f32.mrb[0].mxu0
      %1354 = vmatprep.mubr.bf16.mxu0 0
      %1355 = vmatmul.mubr.bf16.gmra.mrb[0].mxu0 %v1179
      %v1356 = vpop.f32.mrb[0].mxu0
      %v1357 = vadd.f32 0.0, %v1356
      %v1358 = vpop.f32.mrb[0].mxu0
      %v1359 = vpop.f32.mrb[0].mxu0
      %v1360 = vadd.f32 0.0, %v1359
      %v1361 = vpop.f32.mrb[0].mxu0
      %1362 = vmatprep.mubr.bf16.mxu0 0
      %1363 = vmatmul.mubr.bf16.gmra.mrb[0].mxu0 %v1180
      %v1364 = vpop.f32.mrb[0].mxu0
      %v1365 = vadd.f32 0.0, %v1364
      %v1366 = vpop.f32.mrb[0].mxu0
      %v1367 = vpop.f32.mrb[0].mxu0
      %v1368 = vadd.f32 0.0, %v1367
      %v1369 = vpop.f32.mrb[0].mxu0
      %1370 = vmatprep.mubr.bf16.mxu0 0
      %1371 = vmatmul.mubr.bf16.gmra.mrb[0].mxu0 %v1181
      %v1372 = vpop.f32.mrb[0].mxu0
      %v1373 = vadd.f32 0.0, %v1372
      %v1374 = vpop.f32.mrb[0].mxu0
      %v1375 = vpop.f32.mrb[0].mxu0
      %v1376 = vadd.f32 0.0, %v1375
      %v1377 = vpop.f32.mrb[0].mxu0
      %1378 = vmatprep.mubr.bf16.mxu0 0
      %1379 = vmatmul.mubr.bf16.gmra.mrb[0].mxu0 %v1182
      %v1380 = vpop.f32.mrb[0].mxu0
      %v1381 = vadd.f32 0.0, %v1380
      %v1382 = vpop.f32.mrb[0].mxu0
      %v1383 = vpop.f32.mrb[0].mxu0
      %v1384 = vadd.f32 0.0, %v1383
      %v1385 = vpop.f32.mrb[0].mxu0
      %1386 = vmatprep.mubr.bf16.mxu0 0
      %1387 = vmatmul.mubr.bf16.gmra.mrb[0].mxu0 %v1183
      %v1388 = vpop.f32.mrb[0].mxu0
      %v1389 = vadd.f32 0.0, %v1388
      %v1390 = vpop.f32.mrb[0].mxu0
      %v1391 = vpop.f32.mrb[0].mxu0
      %v1392 = vadd.f32 0.0, %v1391
      %v1393 = vpop.f32.mrb[0].mxu0
      %1394 = vmatprep.mubr.bf16.mxu0 0
      %1395 = vmatmul.mubr.bf16.gmra.mrb[0].mxu0 %v1184
      %v1396 = vpop.f32.mrb[0].mxu0
      %v1397 = vadd.f32 0.0, %v1396
      %v1398 = vpop.f32.mrb[0].mxu0
      %v1399 = vpop.f32.mrb[0].mxu0
      %v1400 = vadd.f32 0.0, %v1399
      %v1401 = vpop.f32.mrb[0].mxu0
      %1402 = vmatprep.mubr.bf16.mxu0 0
      %1403 = vmatmul.mubr.bf16.gmra.mrb[0].mxu0 %v1185
      %v1404 = vpop.f32.mrb[0].mxu0
      %v1405 = vadd.f32 0.0, %v1404
      %v1406 = vpop.f32.mrb[0].mxu0
      %v1407 = vpop.f32.mrb[0].mxu0
      %v1408 = vadd.f32 0.0, %v1407
      %v1409 = vpop.f32.mrb[0].mxu0
      %1410 = vdwg.mxu0
      %v1411 = vadd.f32 %v926, %v1285
      %v1412 = vadd.f32 %v929, %v1288
      %v1413 = vadd.f32 %v934, %v1293
      %v1414 = vadd.f32 %v937, %v1296
      %v1415 = vadd.f32 %v942, %v1301
      %v1416 = vadd.f32 %v945, %v1304
      %v1417 = vadd.f32 %v950, %v1309
      %v1418 = vadd.f32 %v953, %v1312
      %v1419 = vadd.f32 %v958, %v1317
      %v1420 = vadd.f32 %v961, %v1320
      %v1421 = vadd.f32 %v966, %v1325
      %v1422 = vadd.f32 %v969, %v1328
      %v1423 = vadd.f32 %v974, %v1333
      %v1424 = vadd.f32 %v977, %v1336
      %v1425 = vadd.f32 %v982, %v1341
      %v1426 = vadd.f32 %v985, %v1344
      %v1427 = vadd.f32 %v990, %v1349
      %v1428 = vadd.f32 %v993, %v1352
      %v1429 = vadd.f32 %v998, %v1357
      %v1430 = vadd.f32 %v1001, %v1360
      %v1431 = vadd.f32 %v1006, %v1365
      %v1432 = vadd.f32 %v1009, %v1368
      %v1433 = vadd.f32 %v1014, %v1373
      %v1434 = vadd.f32 %v1017, %v1376
      %v1435 = vadd.f32 %v1022, %v1381
      %v1436 = vadd.f32 %v1025, %v1384
      %v1437 = vadd.f32 %v1030, %v1389
      %v1438 = vadd.f32 %v1033, %v1392
      %v1439 = vadd.f32 %v1038, %v1397
      %v1440 = vadd.f32 %v1041, %v1400
      %v1441 = vadd.f32 %v1046, %v1405
      %v1442 = vadd.f32 %v1049, %v1408
      %s1443 = smul.addr %s336, 4
      %s1444 = scalar_lea.vmem %s308, %s1443
      %v1445 = vld [vmem:[%s1444] sm:$0xf]
      %v1446 = vld [vmem:[%s1444 + $0x4] sm:$0xf]
      %v1447 = vld [vmem:[%s1444 + $0x8] sm:$0xf]
      %v1448 = vld [vmem:[%s1444 + $0xc] sm:$0xf]
      %v1449 = vld [vmem:[%s1444 + $0x10] sm:$0xf]
      %v1450 = vld [vmem:[%s1444 + $0x14] sm:$0xf]
      %v1451 = vld [vmem:[%s1444 + $0x18] sm:$0xf]
      %v1452 = vld [vmem:[%s1444 + $0x1c] sm:$0xf]
      %v1453 = vld [vmem:[%s1444 + $0x20] sm:$0xf]
      %v1454 = vld [vmem:[%s1444 + $0x24] sm:$0xf]
      %v1455 = vld [vmem:[%s1444 + $0x28] sm:$0xf]
      %v1456 = vld [vmem:[%s1444 + $0x2c] sm:$0xf]
      %v1457 = vld [vmem:[%s1444 + $0x30] sm:$0xf]
      %v1458 = vld [vmem:[%s1444 + $0x34] sm:$0xf]
      %v1459 = vld [vmem:[%s1444 + $0x38] sm:$0xf]
      %v1460 = vld [vmem:[%s1444 + $0x3c] sm:$0xf]
      %v1461 = vld [vmem:[%s1444 + $0x40] sm:$0xf]
      %v1462 = vld [vmem:[%s1444 + $0x44] sm:$0xf]
      %v1463 = vld [vmem:[%s1444 + $0x48] sm:$0xf]
      %v1464 = vld [vmem:[%s1444 + $0x4c] sm:$0xf]
      %v1465 = vld [vmem:[%s1444 + $0x50] sm:$0xf]
      %v1466 = vld [vmem:[%s1444 + $0x54] sm:$0xf]
      %v1467 = vld [vmem:[%s1444 + $0x58] sm:$0xf]
      %v1468 = vld [vmem:[%s1444 + $0x5c] sm:$0xf]
      %v1469 = vld [vmem:[%s1444 + $0x60] sm:$0xf]
      %v1470 = vld [vmem:[%s1444 + $0x64] sm:$0xf]
      %v1471 = vld [vmem:[%s1444 + $0x68] sm:$0xf]
      %v1472 = vld [vmem:[%s1444 + $0x6c] sm:$0xf]
      %v1473 = vld [vmem:[%s1444 + $0x70] sm:$0xf]
      %v1474 = vld [vmem:[%s1444 + $0x74] sm:$0xf]
      %v1475 = vld [vmem:[%s1444 + $0x78] sm:$0xf]
      %v1476 = vld [vmem:[%s1444 + $0x7c] sm:$0xf]
      %s1477 = scalar_lea.vmem %s317, 64
      %v1478 = vld [vmem:[%s1477] sm:$0xf]
      %v1479 = vld [vmem:[%s1477 + $0x4] sm:$0xf]
      %v1480 = vld [vmem:[%s1477 + $0x8] sm:$0xf]
      %v1481 = vld [vmem:[%s1477 + $0xc] sm:$0xf]
      %v1482 = vld [vmem:[%s1477 + $0x10] sm:$0xf]
      %v1483 = vld [vmem:[%s1477 + $0x14] sm:$0xf]
      %v1484 = vld [vmem:[%s1477 + $0x18] sm:$0xf]
      %v1485 = vld [vmem:[%s1477 + $0x1c] sm:$0xf]
      %v1486 = vld [vmem:[%s1477 + $0x20] sm:$0xf]
      %v1487 = vld [vmem:[%s1477 + $0x24] sm:$0xf]
      %v1488 = vld [vmem:[%s1477 + $0x28] sm:$0xf]
      %v1489 = vld [vmem:[%s1477 + $0x2c] sm:$0xf]
      %v1490 = vld [vmem:[%s1477 + $0x30] sm:$0xf]
      %v1491 = vld [vmem:[%s1477 + $0x34] sm:$0xf]
      %v1492 = vld [vmem:[%s1477 + $0x38] sm:$0xf]
      %v1493 = vld [vmem:[%s1477 + $0x3c] sm:$0xf]
      %v1526 = vunpack.c.l.b16 %v1445
      %v1527 = vunpack.c.l.b16 %v1446
      %v1528 = vunpack.c.l.b16 %v1447
      %v1529 = vunpack.c.l.b16 %v1448
      %v1530 = vunpack.c.l.b16 %v1449
      %v1531 = vunpack.c.l.b16 %v1450
      %v1532 = vunpack.c.l.b16 %v1451
      %v1533 = vunpack.c.l.b16 %v1452
      %v1534 = vunpack.c.l.b16 %v1453
      %v1535 = vunpack.c.l.b16 %v1454
      %v1536 = vunpack.c.l.b16 %v1455
      %v1537 = vunpack.c.l.b16 %v1456
      %v1538 = vunpack.c.l.b16 %v1457
      %v1539 = vunpack.c.l.b16 %v1458
      %v1540 = vunpack.c.l.b16 %v1459
      %v1541 = vunpack.c.l.b16 %v1460
      %v1542 = vunpack.c.l.b16 %v1461
      %v1543 = vunpack.c.l.b16 %v1462
      %v1544 = vunpack.c.l.b16 %v1463
      %v1545 = vunpack.c.l.b16 %v1464
      %v1546 = vunpack.c.l.b16 %v1465
      %v1547 = vunpack.c.l.b16 %v1466
      %v1548 = vunpack.c.l.b16 %v1467
      %v1549 = vunpack.c.l.b16 %v1468
      %v1550 = vunpack.c.l.b16 %v1469
      %v1551 = vunpack.c.l.b16 %v1470
      %v1552 = vunpack.c.l.b16 %v1471
      %v1553 = vunpack.c.l.b16 %v1472
      %v1554 = vunpack.c.l.b16 %v1473
      %v1555 = vunpack.c.l.b16 %v1474
      %v1556 = vunpack.c.l.b16 %v1475
      %v1557 = vunpack.c.l.b16 %v1476
      %v1558 = vpack.c.b16 %v1527, %v1526
      %v1559 = vpack.c.b16 %v1529, %v1528
      %v1560 = vpack.c.b16 %v1531, %v1530
      %v1561 = vpack.c.b16 %v1533, %v1532
      %v1562 = vpack.c.b16 %v1535, %v1534
      %v1563 = vpack.c.b16 %v1537, %v1536
      %v1564 = vpack.c.b16 %v1539, %v1538
      %v1565 = vpack.c.b16 %v1541, %v1540
      %v1566 = vpack.c.b16 %v1543, %v1542
      %v1567 = vpack.c.b16 %v1545, %v1544
      %v1568 = vpack.c.b16 %v1547, %v1546
      %v1569 = vpack.c.b16 %v1549, %v1548
      %v1570 = vpack.c.b16 %v1551, %v1550
      %v1571 = vpack.c.b16 %v1553, %v1552
      %v1572 = vpack.c.b16 %v1555, %v1554
      %v1573 = vpack.c.b16 %v1557, %v1556
      %v1606 = vunpack.c.l.b16 %v1478
      %v1607 = vunpack.c.l.b16 %v1479
      %v1608 = vunpack.c.l.b16 %v1480
      %v1609 = vunpack.c.l.b16 %v1481
      %v1610 = vunpack.c.l.b16 %v1482
      %v1611 = vunpack.c.l.b16 %v1483
      %v1612 = vunpack.c.l.b16 %v1484
      %v1613 = vunpack.c.l.b16 %v1485
      %v1614 = vunpack.c.l.b16 %v1486
      %v1615 = vunpack.c.l.b16 %v1487
      %v1616 = vunpack.c.l.b16 %v1488
      %v1617 = vunpack.c.l.b16 %v1489
      %v1618 = vunpack.c.l.b16 %v1490
      %v1619 = vunpack.c.l.b16 %v1491
      %v1620 = vunpack.c.l.b16 %v1492
      %v1621 = vunpack.c.l.b16 %v1493
      %v1622 = vpack.c.b16 %v1607, %v1606
      %v1623 = vpack.c.b16 %v1609, %v1608
      %v1624 = vpack.c.b16 %v1611, %v1610
      %v1625 = vpack.c.b16 %v1613, %v1612
      %v1626 = vpack.c.b16 %v1615, %v1614
      %v1627 = vpack.c.b16 %v1617, %v1616
      %v1628 = vpack.c.b16 %v1619, %v1618
      %v1629 = vpack.c.b16 %v1621, %v1620
      %1638 = vmatprep.subr.bf16.mxu0 0
      %1639 = vmatpush1.bf16.msra.mxu0 %v1622
      %1640 = vmatprep.subr.bf16.mxu0 0
      %1641 = vmatpush1.bf16.msra.mxu0 %v1623
      %1642 = vmatprep.subr.bf16.mxu0 0
      %1643 = vmatpush1.bf16.msra.mxu0 %v1624
      %1644 = vmatprep.subr.bf16.mxu0 0
      %1645 = vmatpush1.bf16.msra.mxu0 %v1625
      %1646 = vmatprep.subr.bf16.mxu0 0
      %1647 = vmatpush1.bf16.msra.mxu0 %v1626
      %1648 = vmatprep.subr.bf16.mxu0 0
      %1649 = vmatpush1.bf16.msra.mxu0 %v1627
      %1650 = vmatprep.subr.bf16.mxu0 0
      %1651 = vmatpush1.bf16.msra.mxu0 %v1628
      %1652 = vmatprep.subr.bf16.mxu0 0
      %1653 = vmatpush1.bf16.msra.mxu0 %v1629
      %1654 = vmatprep.subr.bf16.mxu0 0
      %1655 = vmatpush1.bf16.msra.mxu0 0
      %1656 = vmatprep.subr.bf16.mxu0 0
      %1657 = vmatpush1.bf16.msra.mxu0 0
      %1658 = vmatprep.subr.bf16.mxu0 0
      %1659 = vmatpush1.bf16.msra.mxu0 0
      %1660 = vmatprep.subr.bf16.mxu0 0
      %1661 = vmatpush1.bf16.msra.mxu0 0
      %1662 = vmatprep.subr.bf16.mxu0 0
      %1663 = vmatpush1.bf16.msra.mxu0 0
      %1664 = vmatprep.subr.bf16.mxu0 0
      %1665 = vmatpush1.bf16.msra.mxu0 0
      %1666 = vmatprep.subr.bf16.mxu0 0
      %1667 = vmatpush1.bf16.msra.mxu0 0
      %1668 = vmatprep.subr.bf16.mxu0 0
      %1669 = vmatpush1.bf16.msra.mxu0 0
      %1670 = vmatprep.mubr.bf16.mxu0 0
      %1671 = vmatmul.mubr.bf16.gmra.mrb[0].mxu0 %v1558
      %v1672 = vpop.f32.mrb[0].mxu0
      %v1673 = vadd.f32 0.0, %v1672
      %v1674 = vpop.f32.mrb[0].mxu0
      %v1675 = vpop.f32.mrb[0].mxu0
      %v1676 = vadd.f32 0.0, %v1675
      %v1677 = vpop.f32.mrb[0].mxu0
      %1678 = vmatprep.mubr.bf16.mxu0 0
      %1679 = vmatmul.mubr.bf16.gmra.mrb[0].mxu0 %v1559
      %v1680 = vpop.f32.mrb[0].mxu0
      %v1681 = vadd.f32 0.0, %v1680
      %v1682 = vpop.f32.mrb[0].mxu0
      %v1683 = vpop.f32.mrb[0].mxu0
      %v1684 = vadd.f32 0.0, %v1683
      %v1685 = vpop.f32.mrb[0].mxu0
      %1686 = vmatprep.mubr.bf16.mxu0 0
      %1687 = vmatmul.mubr.bf16.gmra.mrb[0].mxu0 %v1560
      %v1688 = vpop.f32.mrb[0].mxu0
      %v1689 = vadd.f32 0.0, %v1688
      %v1690 = vpop.f32.mrb[0].mxu0
      %v1691 = vpop.f32.mrb[0].mxu0
      %v1692 = vadd.f32 0.0, %v1691
      %v1693 = vpop.f32.mrb[0].mxu0
      %1694 = vmatprep.mubr.bf16.mxu0 0
      %1695 = vmatmul.mubr.bf16.gmra.mrb[0].mxu0 %v1561
      %v1696 = vpop.f32.mrb[0].mxu0
      %v1697 = vadd.f32 0.0, %v1696
      %v1698 = vpop.f32.mrb[0].mxu0
      %v1699 = vpop.f32.mrb[0].mxu0
      %v1700 = vadd.f32 0.0, %v1699
      %v1701 = vpop.f32.mrb[0].mxu0
      %1702 = vmatprep.mubr.bf16.mxu0 0
      %1703 = vmatmul.mubr.bf16.gmra.mrb[0].mxu0 %v1562
      %v1704 = vpop.f32.mrb[0].mxu0
      %v1705 = vadd.f32 0.0, %v1704
      %v1706 = vpop.f32.mrb[0].mxu0
      %v1707 = vpop.f32.mrb[0].mxu0
      %v1708 = vadd.f32 0.0, %v1707
      %v1709 = vpop.f32.mrb[0].mxu0
      %1710 = vmatprep.mubr.bf16.mxu0 0
      %1711 = vmatmul.mubr.bf16.gmra.mrb[0].mxu0 %v1563
      %v1712 = vpop.f32.mrb[0].mxu0
      %v1713 = vadd.f32 0.0, %v1712
      %v1714 = vpop.f32.mrb[0].mxu0
      %v1715 = vpop.f32.mrb[0].mxu0
      %v1716 = vadd.f32 0.0, %v1715
      %v1717 = vpop.f32.mrb[0].mxu0
      %1718 = vmatprep.mubr.bf16.mxu0 0
      %1719 = vmatmul.mubr.bf16.gmra.mrb[0].mxu0 %v1564
      %v1720 = vpop.f32.mrb[0].mxu0
      %v1721 = vadd.f32 0.0, %v1720
      %v1722 = vpop.f32.mrb[0].mxu0
      %v1723 = vpop.f32.mrb[0].mxu0
      %v1724 = vadd.f32 0.0, %v1723
      %v1725 = vpop.f32.mrb[0].mxu0
      %1726 = vmatprep.mubr.bf16.mxu0 0
      %1727 = vmatmul.mubr.bf16.gmra.mrb[0].mxu0 %v1565
      %v1728 = vpop.f32.mrb[0].mxu0
      %v1729 = vadd.f32 0.0, %v1728
      %v1730 = vpop.f32.mrb[0].mxu0
      %v1731 = vpop.f32.mrb[0].mxu0
      %v1732 = vadd.f32 0.0, %v1731
      %v1733 = vpop.f32.mrb[0].mxu0
      %1734 = vmatprep.mubr.bf16.mxu0 0
      %1735 = vmatmul.mubr.bf16.gmra.mrb[0].mxu0 %v1566
      %v1736 = vpop.f32.mrb[0].mxu0
      %v1737 = vadd.f32 0.0, %v1736
      %v1738 = vpop.f32.mrb[0].mxu0
      %v1739 = vpop.f32.mrb[0].mxu0
      %v1740 = vadd.f32 0.0, %v1739
      %v1741 = vpop.f32.mrb[0].mxu0
      %1742 = vmatprep.mubr.bf16.mxu0 0
      %1743 = vmatmul.mubr.bf16.gmra.mrb[0].mxu0 %v1567
      %v1744 = vpop.f32.mrb[0].mxu0
      %v1745 = vadd.f32 0.0, %v1744
      %v1746 = vpop.f32.mrb[0].mxu0
      %v1747 = vpop.f32.mrb[0].mxu0
      %v1748 = vadd.f32 0.0, %v1747
      %v1749 = vpop.f32.mrb[0].mxu0
      %1750 = vmatprep.mubr.bf16.mxu0 0
      %1751 = vmatmul.mubr.bf16.gmra.mrb[0].mxu0 %v1568
      %v1752 = vpop.f32.mrb[0].mxu0
      %v1753 = vadd.f32 0.0, %v1752
      %v1754 = vpop.f32.mrb[0].mxu0
      %v1755 = vpop.f32.mrb[0].mxu0
      %v1756 = vadd.f32 0.0, %v1755
      %v1757 = vpop.f32.mrb[0].mxu0
      %1758 = vmatprep.mubr.bf16.mxu0 0
      %1759 = vmatmul.mubr.bf16.gmra.mrb[0].mxu0 %v1569
      %v1760 = vpop.f32.mrb[0].mxu0
      %v1761 = vadd.f32 0.0, %v1760
      %v1762 = vpop.f32.mrb[0].mxu0
      %v1763 = vpop.f32.mrb[0].mxu0
      %v1764 = vadd.f32 0.0, %v1763
      %v1765 = vpop.f32.mrb[0].mxu0
      %1766 = vmatprep.mubr.bf16.mxu0 0
      %1767 = vmatmul.mubr.bf16.gmra.mrb[0].mxu0 %v1570
      %v1768 = vpop.f32.mrb[0].mxu0
      %v1769 = vadd.f32 0.0, %v1768
      %v1770 = vpop.f32.mrb[0].mxu0
      %v1771 = vpop.f32.mrb[0].mxu0
      %v1772 = vadd.f32 0.0, %v1771
      %v1773 = vpop.f32.mrb[0].mxu0
      %1774 = vmatprep.mubr.bf16.mxu0 0
      %1775 = vmatmul.mubr.bf16.gmra.mrb[0].mxu0 %v1571
      %v1776 = vpop.f32.mrb[0].mxu0
      %v1777 = vadd.f32 0.0, %v1776
      %v1778 = vpop.f32.mrb[0].mxu0
      %v1779 = vpop.f32.mrb[0].mxu0
      %v1780 = vadd.f32 0.0, %v1779
      %v1781 = vpop.f32.mrb[0].mxu0
      %1782 = vmatprep.mubr.bf16.mxu0 0
      %1783 = vmatmul.mubr.bf16.gmra.mrb[0].mxu0 %v1572
      %v1784 = vpop.f32.mrb[0].mxu0
      %v1785 = vadd.f32 0.0, %v1784
      %v1786 = vpop.f32.mrb[0].mxu0
      %v1787 = vpop.f32.mrb[0].mxu0
      %v1788 = vadd.f32 0.0, %v1787
      %v1789 = vpop.f32.mrb[0].mxu0
      %1790 = vmatprep.mubr.bf16.mxu0 0
      %1791 = vmatmul.mubr.bf16.gmra.mrb[0].mxu0 %v1573
      %v1792 = vpop.f32.mrb[0].mxu0
      %v1793 = vadd.f32 0.0, %v1792
      %v1794 = vpop.f32.mrb[0].mxu0
      %v1795 = vpop.f32.mrb[0].mxu0
      %v1796 = vadd.f32 0.0, %v1795
      %v1797 = vpop.f32.mrb[0].mxu0
      %1798 = vdwg.mxu0
      %v1799 = vadd.f32 %v1411, %v1673
      %v1800 = vadd.f32 %v1412, %v1676
      %v1801 = vadd.f32 %v1413, %v1681
      %v1802 = vadd.f32 %v1414, %v1684
      %v1803 = vadd.f32 %v1415, %v1689
      %v1804 = vadd.f32 %v1416, %v1692
      %v1805 = vadd.f32 %v1417, %v1697
      %v1806 = vadd.f32 %v1418, %v1700
      %v1807 = vadd.f32 %v1419, %v1705
      %v1808 = vadd.f32 %v1420, %v1708
      %v1809 = vadd.f32 %v1421, %v1713
      %v1810 = vadd.f32 %v1422, %v1716
      %v1811 = vadd.f32 %v1423, %v1721
      %v1812 = vadd.f32 %v1424, %v1724
      %v1813 = vadd.f32 %v1425, %v1729
      %v1814 = vadd.f32 %v1426, %v1732
      %v1815 = vadd.f32 %v1427, %v1737
      %v1816 = vadd.f32 %v1428, %v1740
      %v1817 = vadd.f32 %v1429, %v1745
      %v1818 = vadd.f32 %v1430, %v1748
      %v1819 = vadd.f32 %v1431, %v1753
      %v1820 = vadd.f32 %v1432, %v1756
      %v1821 = vadd.f32 %v1433, %v1761
      %v1822 = vadd.f32 %v1434, %v1764
      %v1823 = vadd.f32 %v1435, %v1769
      %v1824 = vadd.f32 %v1436, %v1772
      %v1825 = vadd.f32 %v1437, %v1777
      %v1826 = vadd.f32 %v1438, %v1780
      %v1827 = vadd.f32 %v1439, %v1785
      %v1828 = vadd.f32 %v1440, %v1788
      %v1829 = vadd.f32 %v1441, %v1793
      %v1830 = vadd.f32 %v1442, %v1796
      %s1831 = smul.addr %s389, 4
      %s1832 = scalar_lea.vmem %s308, %s1831
      %v1833 = vld [vmem:[%s1832] sm:$0xf]
      %v1834 = vld [vmem:[%s1832 + $0x4] sm:$0xf]
      %v1835 = vld [vmem:[%s1832 + $0x8] sm:$0xf]
      %v1836 = vld [vmem:[%s1832 + $0xc] sm:$0xf]
      %v1837 = vld [vmem:[%s1832 + $0x10] sm:$0xf]
      %v1838 = vld [vmem:[%s1832 + $0x14] sm:$0xf]
      %v1839 = vld [vmem:[%s1832 + $0x18] sm:$0xf]
      %v1840 = vld [vmem:[%s1832 + $0x1c] sm:$0xf]
      %v1841 = vld [vmem:[%s1832 + $0x20] sm:$0xf]
      %v1842 = vld [vmem:[%s1832 + $0x24] sm:$0xf]
      %v1843 = vld [vmem:[%s1832 + $0x28] sm:$0xf]
      %v1844 = vld [vmem:[%s1832 + $0x2c] sm:$0xf]
      %v1845 = vld [vmem:[%s1832 + $0x30] sm:$0xf]
      %v1846 = vld [vmem:[%s1832 + $0x34] sm:$0xf]
      %v1847 = vld [vmem:[%s1832 + $0x38] sm:$0xf]
      %v1848 = vld [vmem:[%s1832 + $0x3c] sm:$0xf]
      %v1849 = vld [vmem:[%s1832 + $0x40] sm:$0xf]
      %v1850 = vld [vmem:[%s1832 + $0x44] sm:$0xf]
      %v1851 = vld [vmem:[%s1832 + $0x48] sm:$0xf]
      %v1852 = vld [vmem:[%s1832 + $0x4c] sm:$0xf]
      %v1853 = vld [vmem:[%s1832 + $0x50] sm:$0xf]
      %v1854 = vld [vmem:[%s1832 + $0x54] sm:$0xf]
      %v1855 = vld [vmem:[%s1832 + $0x58] sm:$0xf]
      %v1856 = vld [vmem:[%s1832 + $0x5c] sm:$0xf]
      %v1857 = vld [vmem:[%s1832 + $0x60] sm:$0xf]
      %v1858 = vld [vmem:[%s1832 + $0x64] sm:$0xf]
      %v1859 = vld [vmem:[%s1832 + $0x68] sm:$0xf]
      %v1860 = vld [vmem:[%s1832 + $0x6c] sm:$0xf]
      %v1861 = vld [vmem:[%s1832 + $0x70] sm:$0xf]
      %v1862 = vld [vmem:[%s1832 + $0x74] sm:$0xf]
      %v1863 = vld [vmem:[%s1832 + $0x78] sm:$0xf]
      %v1864 = vld [vmem:[%s1832 + $0x7c] sm:$0xf]
      %s1865 = scalar_lea.vmem %s317, 256
      %v1866 = vld [vmem:[%s1865] sm:$0xf]
      %v1867 = vld [vmem:[%s1865 + $0x4] sm:$0xf]
      %v1868 = vld [vmem:[%s1865 + $0x8] sm:$0xf]
      %v1869 = vld [vmem:[%s1865 + $0xc] sm:$0xf]
      %v1870 = vld [vmem:[%s1865 + $0x10] sm:$0xf]
      %v1871 = vld [vmem:[%s1865 + $0x14] sm:$0xf]
      %v1872 = vld [vmem:[%s1865 + $0x18] sm:$0xf]
      %v1873 = vld [vmem:[%s1865 + $0x1c] sm:$0xf]
      %v1874 = vld [vmem:[%s1865 + $0x20] sm:$0xf]
      %v1875 = vld [vmem:[%s1865 + $0x24] sm:$0xf]
      %v1876 = vld [vmem:[%s1865 + $0x28] sm:$0xf]
      %v1877 = vld [vmem:[%s1865 + $0x2c] sm:$0xf]
      %v1878 = vld [vmem:[%s1865 + $0x30] sm:$0xf]
      %v1879 = vld [vmem:[%s1865 + $0x34] sm:$0xf]
      %v1880 = vld [vmem:[%s1865 + $0x38] sm:$0xf]
      %v1881 = vld [vmem:[%s1865 + $0x3c] sm:$0xf]
      %v1914 = vunpack.c.l.b16 %v1833
      %v1915 = vunpack.c.l.b16 %v1834
      %v1916 = vunpack.c.l.b16 %v1835
      %v1917 = vunpack.c.l.b16 %v1836
      %v1918 = vunpack.c.l.b16 %v1837
      %v1919 = vunpack.c.l.b16 %v1838
      %v1920 = vunpack.c.l.b16 %v1839
      %v1921 = vunpack.c.l.b16 %v1840
      %v1922 = vunpack.c.l.b16 %v1841
      %v1923 = vunpack.c.l.b16 %v1842
      %v1924 = vunpack.c.l.b16 %v1843
      %v1925 = vunpack.c.l.b16 %v1844
      %v1926 = vunpack.c.l.b16 %v1845
      %v1927 = vunpack.c.l.b16 %v1846
      %v1928 = vunpack.c.l.b16 %v1847
      %v1929 = vunpack.c.l.b16 %v1848
      %v1930 = vunpack.c.l.b16 %v1849
      %v1931 = vunpack.c.l.b16 %v1850
      %v1932 = vunpack.c.l.b16 %v1851
      %v1933 = vunpack.c.l.b16 %v1852
      %v1934 = vunpack.c.l.b16 %v1853
      %v1935 = vunpack.c.l.b16 %v1854
      %v1936 = vunpack.c.l.b16 %v1855
      %v1937 = vunpack.c.l.b16 %v1856
      %v1938 = vunpack.c.l.b16 %v1857
      %v1939 = vunpack.c.l.b16 %v1858
      %v1940 = vunpack.c.l.b16 %v1859
      %v1941 = vunpack.c.l.b16 %v1860
      %v1942 = vunpack.c.l.b16 %v1861
      %v1943 = vunpack.c.l.b16 %v1862
      %v1944 = vunpack.c.l.b16 %v1863
      %v1945 = vunpack.c.l.b16 %v1864
      %v1946 = vpack.c.b16 %v1915, %v1914
      %v1947 = vpack.c.b16 %v1917, %v1916
      %v1948 = vpack.c.b16 %v1919, %v1918
      %v1949 = vpack.c.b16 %v1921, %v1920
      %v1950 = vpack.c.b16 %v1923, %v1922
      %v1951 = vpack.c.b16 %v1925, %v1924
      %v1952 = vpack.c.b16 %v1927, %v1926
      %v1953 = vpack.c.b16 %v1929, %v1928
      %v1954 = vpack.c.b16 %v1931, %v1930
      %v1955 = vpack.c.b16 %v1933, %v1932
      %v1956 = vpack.c.b16 %v1935, %v1934
      %v1957 = vpack.c.b16 %v1937, %v1936
      %v1958 = vpack.c.b16 %v1939, %v1938
      %v1959 = vpack.c.b16 %v1941, %v1940
      %v1960 = vpack.c.b16 %v1943, %v1942
      %v1961 = vpack.c.b16 %v1945, %v1944
      %v1994 = vunpack.c.l.b16 %v1866
      %v1995 = vunpack.c.l.b16 %v1867
      %v1996 = vunpack.c.l.b16 %v1868
      %v1997 = vunpack.c.l.b16 %v1869
      %v1998 = vunpack.c.l.b16 %v1870
      %v1999 = vunpack.c.l.b16 %v1871
      %v2000 = vunpack.c.l.b16 %v1872
      %v2001 = vunpack.c.l.b16 %v1873
      %v2002 = vunpack.c.l.b16 %v1874
      %v2003 = vunpack.c.l.b16 %v1875
      %v2004 = vunpack.c.l.b16 %v1876
      %v2005 = vunpack.c.l.b16 %v1877
      %v2006 = vunpack.c.l.b16 %v1878
      %v2007 = vunpack.c.l.b16 %v1879
      %v2008 = vunpack.c.l.b16 %v1880
      %v2009 = vunpack.c.l.b16 %v1881
      %v2010 = vpack.c.b16 %v1995, %v1994
      %v2011 = vpack.c.b16 %v1997, %v1996
      %v2012 = vpack.c.b16 %v1999, %v1998
      %v2013 = vpack.c.b16 %v2001, %v2000
      %v2014 = vpack.c.b16 %v2003, %v2002
      %v2015 = vpack.c.b16 %v2005, %v2004
      %v2016 = vpack.c.b16 %v2007, %v2006
      %v2017 = vpack.c.b16 %v2009, %v2008
      %2026 = vmatprep.subr.bf16.mxu0 0
      %2027 = vmatpush1.bf16.msra.mxu0 %v2010
      %2028 = vmatprep.subr.bf16.mxu0 0
      %2029 = vmatpush1.bf16.msra.mxu0 %v2011
      %2030 = vmatprep.subr.bf16.mxu0 0
      %2031 = vmatpush1.bf16.msra.mxu0 %v2012
      %2032 = vmatprep.subr.bf16.mxu0 0
      %2033 = vmatpush1.bf16.msra.mxu0 %v2013
      %2034 = vmatprep.subr.bf16.mxu0 0
      %2035 = vmatpush1.bf16.msra.mxu0 %v2014
      %2036 = vmatprep.subr.bf16.mxu0 0
      %2037 = vmatpush1.bf16.msra.mxu0 %v2015
      %2038 = vmatprep.subr.bf16.mxu0 0
      %2039 = vmatpush1.bf16.msra.mxu0 %v2016
      %2040 = vmatprep.subr.bf16.mxu0 0
      %2041 = vmatpush1.bf16.msra.mxu0 %v2017
      %2042 = vmatprep.subr.bf16.mxu0 0
      %2043 = vmatpush1.bf16.msra.mxu0 0
      %2044 = vmatprep.subr.bf16.mxu0 0
      %2045 = vmatpush1.bf16.msra.mxu0 0
      %2046 = vmatprep.subr.bf16.mxu0 0
      %2047 = vmatpush1.bf16.msra.mxu0 0
      %2048 = vmatprep.subr.bf16.mxu0 0
      %2049 = vmatpush1.bf16.msra.mxu0 0
      %2050 = vmatprep.subr.bf16.mxu0 0
      %2051 = vmatpush1.bf16.msra.mxu0 0
      %2052 = vmatprep.subr.bf16.mxu0 0
      %2053 = vmatpush1.bf16.msra.mxu0 0
      %2054 = vmatprep.subr.bf16.mxu0 0
      %2055 = vmatpush1.bf16.msra.mxu0 0
      %2056 = vmatprep.subr.bf16.mxu0 0
      %2057 = vmatpush1.bf16.msra.mxu0 0
      %2058 = vmatprep.mubr.bf16.mxu0 0
      %2059 = vmatmul.mubr.bf16.gmra.mrb[0].mxu0 %v1946
      %v2060 = vpop.f32.mrb[0].mxu0
      %v2061 = vadd.f32 0.0, %v2060
      %v2062 = vpop.f32.mrb[0].mxu0
      %v2063 = vpop.f32.mrb[0].mxu0
      %v2064 = vadd.f32 0.0, %v2063
      %v2065 = vpop.f32.mrb[0].mxu0
      %2066 = vmatprep.mubr.bf16.mxu0 0
      %2067 = vmatmul.mubr.bf16.gmra.mrb[0].mxu0 %v1947
      %v2068 = vpop.f32.mrb[0].mxu0
      %v2069 = vadd.f32 0.0, %v2068
      %v2070 = vpop.f32.mrb[0].mxu0
      %v2071 = vpop.f32.mrb[0].mxu0
      %v2072 = vadd.f32 0.0, %v2071
      %v2073 = vpop.f32.mrb[0].mxu0
      %2074 = vmatprep.mubr.bf16.mxu0 0
      %2075 = vmatmul.mubr.bf16.gmra.mrb[0].mxu0 %v1948
      %v2076 = vpop.f32.mrb[0].mxu0
      %v2077 = vadd.f32 0.0, %v2076
      %v2078 = vpop.f32.mrb[0].mxu0
      %v2079 = vpop.f32.mrb[0].mxu0
      %v2080 = vadd.f32 0.0, %v2079
      %v2081 = vpop.f32.mrb[0].mxu0
      %2082 = vmatprep.mubr.bf16.mxu0 0
      %2083 = vmatmul.mubr.bf16.gmra.mrb[0].mxu0 %v1949
      %v2084 = vpop.f32.mrb[0].mxu0
      %v2085 = vadd.f32 0.0, %v2084
      %v2086 = vpop.f32.mrb[0].mxu0
      %v2087 = vpop.f32.mrb[0].mxu0
      %v2088 = vadd.f32 0.0, %v2087
      %v2089 = vpop.f32.mrb[0].mxu0
      %2090 = vmatprep.mubr.bf16.mxu0 0
      %2091 = vmatmul.mubr.bf16.gmra.mrb[0].mxu0 %v1950
      %v2092 = vpop.f32.mrb[0].mxu0
      %v2093 = vadd.f32 0.0, %v2092
      %v2094 = vpop.f32.mrb[0].mxu0
      %v2095 = vpop.f32.mrb[0].mxu0
      %v2096 = vadd.f32 0.0, %v2095
      %v2097 = vpop.f32.mrb[0].mxu0
      %2098 = vmatprep.mubr.bf16.mxu0 0
      %2099 = vmatmul.mubr.bf16.gmra.mrb[0].mxu0 %v1951
      %v2100 = vpop.f32.mrb[0].mxu0
      %v2101 = vadd.f32 0.0, %v2100
      %v2102 = vpop.f32.mrb[0].mxu0
      %v2103 = vpop.f32.mrb[0].mxu0
      %v2104 = vadd.f32 0.0, %v2103
      %v2105 = vpop.f32.mrb[0].mxu0
      %2106 = vmatprep.mubr.bf16.mxu0 0
      %2107 = vmatmul.mubr.bf16.gmra.mrb[0].mxu0 %v1952
      %v2108 = vpop.f32.mrb[0].mxu0
      %v2109 = vadd.f32 0.0, %v2108
      %v2110 = vpop.f32.mrb[0].mxu0
      %v2111 = vpop.f32.mrb[0].mxu0
      %v2112 = vadd.f32 0.0, %v2111
      %v2113 = vpop.f32.mrb[0].mxu0
      %2114 = vmatprep.mubr.bf16.mxu0 0
      %2115 = vmatmul.mubr.bf16.gmra.mrb[0].mxu0 %v1953
      %v2116 = vpop.f32.mrb[0].mxu0
      %v2117 = vadd.f32 0.0, %v2116
      %v2118 = vpop.f32.mrb[0].mxu0
      %v2119 = vpop.f32.mrb[0].mxu0
      %v2120 = vadd.f32 0.0, %v2119
      %v2121 = vpop.f32.mrb[0].mxu0
      %2122 = vmatprep.mubr.bf16.mxu0 0
      %2123 = vmatmul.mubr.bf16.gmra.mrb[0].mxu0 %v1954
      %v2124 = vpop.f32.mrb[0].mxu0
      %v2125 = vadd.f32 0.0, %v2124
      %v2126 = vpop.f32.mrb[0].mxu0
      %v2127 = vpop.f32.mrb[0].mxu0
      %v2128 = vadd.f32 0.0, %v2127
      %v2129 = vpop.f32.mrb[0].mxu0
      %2130 = vmatprep.mubr.bf16.mxu0 0
      %2131 = vmatmul.mubr.bf16.gmra.mrb[0].mxu0 %v1955
      %v2132 = vpop.f32.mrb[0].mxu0
      %v2133 = vadd.f32 0.0, %v2132
      %v2134 = vpop.f32.mrb[0].mxu0
      %v2135 = vpop.f32.mrb[0].mxu0
      %v2136 = vadd.f32 0.0, %v2135
      %v2137 = vpop.f32.mrb[0].mxu0
      %2138 = vmatprep.mubr.bf16.mxu0 0
      %2139 = vmatmul.mubr.bf16.gmra.mrb[0].mxu0 %v1956
      %v2140 = vpop.f32.mrb[0].mxu0
      %v2141 = vadd.f32 0.0, %v2140
      %v2142 = vpop.f32.mrb[0].mxu0
      %v2143 = vpop.f32.mrb[0].mxu0
      %v2144 = vadd.f32 0.0, %v2143
      %v2145 = vpop.f32.mrb[0].mxu0
      %2146 = vmatprep.mubr.bf16.mxu0 0
      %2147 = vmatmul.mubr.bf16.gmra.mrb[0].mxu0 %v1957
      %v2148 = vpop.f32.mrb[0].mxu0
      %v2149 = vadd.f32 0.0, %v2148
      %v2150 = vpop.f32.mrb[0].mxu0
      %v2151 = vpop.f32.mrb[0].mxu0
      %v2152 = vadd.f32 0.0, %v2151
      %v2153 = vpop.f32.mrb[0].mxu0
      %2154 = vmatprep.mubr.bf16.mxu0 0
      %2155 = vmatmul.mubr.bf16.gmra.mrb[0].mxu0 %v1958
      %v2156 = vpop.f32.mrb[0].mxu0
      %v2157 = vadd.f32 0.0, %v2156
      %v2158 = vpop.f32.mrb[0].mxu0
      %v2159 = vpop.f32.mrb[0].mxu0
      %v2160 = vadd.f32 0.0, %v2159
      %v2161 = vpop.f32.mrb[0].mxu0
      %2162 = vmatprep.mubr.bf16.mxu0 0
      %2163 = vmatmul.mubr.bf16.gmra.mrb[0].mxu0 %v1959
      %v2164 = vpop.f32.mrb[0].mxu0
      %v2165 = vadd.f32 0.0, %v2164
      %v2166 = vpop.f32.mrb[0].mxu0
      %v2167 = vpop.f32.mrb[0].mxu0
      %v2168 = vadd.f32 0.0, %v2167
      %v2169 = vpop.f32.mrb[0].mxu0
      %2170 = vmatprep.mubr.bf16.mxu0 0
      %2171 = vmatmul.mubr.bf16.gmra.mrb[0].mxu0 %v1960
      %v2172 = vpop.f32.mrb[0].mxu0
      %v2173 = vadd.f32 0.0, %v2172
      %v2174 = vpop.f32.mrb[0].mxu0
      %v2175 = vpop.f32.mrb[0].mxu0
      %v2176 = vadd.f32 0.0, %v2175
      %v2177 = vpop.f32.mrb[0].mxu0
      %2178 = vmatprep.mubr.bf16.mxu0 0
      %2179 = vmatmul.mubr.bf16.gmra.mrb[0].mxu0 %v1961
      %v2180 = vpop.f32.mrb[0].mxu0
      %v2181 = vadd.f32 0.0, %v2180
      %v2182 = vpop.f32.mrb[0].mxu0
      %v2183 = vpop.f32.mrb[0].mxu0
      %v2184 = vadd.f32 0.0, %v2183
      %v2185 = vpop.f32.mrb[0].mxu0
      %2186 = vdwg.mxu0
      %v2187 = vadd.f32 %v1799, %v2061
      %v2188 = vadd.f32 %v1800, %v2064
      %v2189 = vadd.f32 %v1801, %v2069
      %v2190 = vadd.f32 %v1802, %v2072
      %v2191 = vadd.f32 %v1803, %v2077
      %v2192 = vadd.f32 %v1804, %v2080
      %v2193 = vadd.f32 %v1805, %v2085
      %v2194 = vadd.f32 %v1806, %v2088
      %v2195 = vadd.f32 %v1807, %v2093
      %v2196 = vadd.f32 %v1808, %v2096
      %v2197 = vadd.f32 %v1809, %v2101
      %v2198 = vadd.f32 %v1810, %v2104
      %v2199 = vadd.f32 %v1811, %v2109
      %v2200 = vadd.f32 %v1812, %v2112
      %v2201 = vadd.f32 %v1813, %v2117
      %v2202 = vadd.f32 %v1814, %v2120
      %v2203 = vadd.f32 %v1815, %v2125
      %v2204 = vadd.f32 %v1816, %v2128
      %v2205 = vadd.f32 %v1817, %v2133
      %v2206 = vadd.f32 %v1818, %v2136
      %v2207 = vadd.f32 %v1819, %v2141
      %v2208 = vadd.f32 %v1820, %v2144
      %v2209 = vadd.f32 %v1821, %v2149
      %v2210 = vadd.f32 %v1822, %v2152
      %v2211 = vadd.f32 %v1823, %v2157
      %v2212 = vadd.f32 %v1824, %v2160
      %v2213 = vadd.f32 %v1825, %v2165
      %v2214 = vadd.f32 %v1826, %v2168
      %v2215 = vadd.f32 %v1827, %v2173
      %v2216 = vadd.f32 %v1828, %v2176
      %v2217 = vadd.f32 %v1829, %v2181
      %v2218 = vadd.f32 %v1830, %v2184
      %s2219 = smul.addr %s1053, 4
      %s2220 = scalar_lea.vmem %s308, %s2219
      %v2221 = vld [vmem:[%s2220] sm:$0xf]
      %v2222 = vld [vmem:[%s2220 + $0x4] sm:$0xf]
      %v2223 = vld [vmem:[%s2220 + $0x8] sm:$0xf]
      %v2224 = vld [vmem:[%s2220 + $0xc] sm:$0xf]
      %v2225 = vld [vmem:[%s2220 + $0x10] sm:$0xf]
      %v2226 = vld [vmem:[%s2220 + $0x14] sm:$0xf]
      %v2227 = vld [vmem:[%s2220 + $0x18] sm:$0xf]
      %v2228 = vld [vmem:[%s2220 + $0x1c] sm:$0xf]
      %v2229 = vld [vmem:[%s2220 + $0x20] sm:$0xf]
      %v2230 = vld [vmem:[%s2220 + $0x24] sm:$0xf]
      %v2231 = vld [vmem:[%s2220 + $0x28] sm:$0xf]
      %v2232 = vld [vmem:[%s2220 + $0x2c] sm:$0xf]
      %v2233 = vld [vmem:[%s2220 + $0x30] sm:$0xf]
      %v2234 = vld [vmem:[%s2220 + $0x34] sm:$0xf]
      %v2235 = vld [vmem:[%s2220 + $0x38] sm:$0xf]
      %v2236 = vld [vmem:[%s2220 + $0x3c] sm:$0xf]
      %v2237 = vld [vmem:[%s2220 + $0x40] sm:$0xf]
      %v2238 = vld [vmem:[%s2220 + $0x44] sm:$0xf]
      %v2239 = vld [vmem:[%s2220 + $0x48] sm:$0xf]
      %v2240 = vld [vmem:[%s2220 + $0x4c] sm:$0xf]
      %v2241 = vld [vmem:[%s2220 + $0x50] sm:$0xf]
      %v2242 = vld [vmem:[%s2220 + $0x54] sm:$0xf]
      %v2243 = vld [vmem:[%s2220 + $0x58] sm:$0xf]
      %v2244 = vld [vmem:[%s2220 + $0x5c] sm:$0xf]
      %v2245 = vld [vmem:[%s2220 + $0x60] sm:$0xf]
      %v2246 = vld [vmem:[%s2220 + $0x64] sm:$0xf]
      %v2247 = vld [vmem:[%s2220 + $0x68] sm:$0xf]
      %v2248 = vld [vmem:[%s2220 + $0x6c] sm:$0xf]
      %v2249 = vld [vmem:[%s2220 + $0x70] sm:$0xf]
      %v2250 = vld [vmem:[%s2220 + $0x74] sm:$0xf]
      %v2251 = vld [vmem:[%s2220 + $0x78] sm:$0xf]
      %v2252 = vld [vmem:[%s2220 + $0x7c] sm:$0xf]
      %s2253 = scalar_lea.vmem %s317, 448
      %v2254 = vld [vmem:[%s2253] sm:$0xf]
      %v2255 = vld [vmem:[%s2253 + $0x4] sm:$0xf]
      %v2256 = vld [vmem:[%s2253 + $0x8] sm:$0xf]
      %v2257 = vld [vmem:[%s2253 + $0xc] sm:$0xf]
      %v2258 = vld [vmem:[%s2253 + $0x10] sm:$0xf]
      %v2259 = vld [vmem:[%s2253 + $0x14] sm:$0xf]
      %v2260 = vld [vmem:[%s2253 + $0x18] sm:$0xf]
      %v2261 = vld [vmem:[%s2253 + $0x1c] sm:$0xf]
      %v2262 = vld [vmem:[%s2253 + $0x20] sm:$0xf]
      %v2263 = vld [vmem:[%s2253 + $0x24] sm:$0xf]
      %v2264 = vld [vmem:[%s2253 + $0x28] sm:$0xf]
      %v2265 = vld [vmem:[%s2253 + $0x2c] sm:$0xf]
      %v2266 = vld [vmem:[%s2253 + $0x30] sm:$0xf]
      %v2267 = vld [vmem:[%s2253 + $0x34] sm:$0xf]
      %v2268 = vld [vmem:[%s2253 + $0x38] sm:$0xf]
      %v2269 = vld [vmem:[%s2253 + $0x3c] sm:$0xf]
      %v2302 = vunpack.c.l.b16 %v2221
      %v2303 = vunpack.c.l.b16 %v2222
      %v2304 = vunpack.c.l.b16 %v2223
      %v2305 = vunpack.c.l.b16 %v2224
      %v2306 = vunpack.c.l.b16 %v2225
      %v2307 = vunpack.c.l.b16 %v2226
      %v2308 = vunpack.c.l.b16 %v2227
      %v2309 = vunpack.c.l.b16 %v2228
      %v2310 = vunpack.c.l.b16 %v2229
      %v2311 = vunpack.c.l.b16 %v2230
      %v2312 = vunpack.c.l.b16 %v2231
      %v2313 = vunpack.c.l.b16 %v2232
      %v2314 = vunpack.c.l.b16 %v2233
      %v2315 = vunpack.c.l.b16 %v2234
      %v2316 = vunpack.c.l.b16 %v2235
      %v2317 = vunpack.c.l.b16 %v2236
      %v2318 = vunpack.c.l.b16 %v2237
      %v2319 = vunpack.c.l.b16 %v2238
      %v2320 = vunpack.c.l.b16 %v2239
      %v2321 = vunpack.c.l.b16 %v2240
      %v2322 = vunpack.c.l.b16 %v2241
      %v2323 = vunpack.c.l.b16 %v2242
      %v2324 = vunpack.c.l.b16 %v2243
      %v2325 = vunpack.c.l.b16 %v2244
      %v2326 = vunpack.c.l.b16 %v2245
      %v2327 = vunpack.c.l.b16 %v2246
      %v2328 = vunpack.c.l.b16 %v2247
      %v2329 = vunpack.c.l.b16 %v2248
      %v2330 = vunpack.c.l.b16 %v2249
      %v2331 = vunpack.c.l.b16 %v2250
      %v2332 = vunpack.c.l.b16 %v2251
      %v2333 = vunpack.c.l.b16 %v2252
      %v2334 = vpack.c.b16 %v2303, %v2302
      %v2335 = vpack.c.b16 %v2305, %v2304
      %v2336 = vpack.c.b16 %v2307, %v2306
      %v2337 = vpack.c.b16 %v2309, %v2308
      %v2338 = vpack.c.b16 %v2311, %v2310
      %v2339 = vpack.c.b16 %v2313, %v2312
      %v2340 = vpack.c.b16 %v2315, %v2314
      %v2341 = vpack.c.b16 %v2317, %v2316
      %v2342 = vpack.c.b16 %v2319, %v2318
      %v2343 = vpack.c.b16 %v2321, %v2320
      %v2344 = vpack.c.b16 %v2323, %v2322
      %v2345 = vpack.c.b16 %v2325, %v2324
      %v2346 = vpack.c.b16 %v2327, %v2326
      %v2347 = vpack.c.b16 %v2329, %v2328
      %v2348 = vpack.c.b16 %v2331, %v2330
      %v2349 = vpack.c.b16 %v2333, %v2332
      %v2382 = vunpack.c.l.b16 %v2254
      %v2383 = vunpack.c.l.b16 %v2255
      %v2384 = vunpack.c.l.b16 %v2256
      %v2385 = vunpack.c.l.b16 %v2257
      %v2386 = vunpack.c.l.b16 %v2258
      %v2387 = vunpack.c.l.b16 %v2259
      %v2388 = vunpack.c.l.b16 %v2260
      %v2389 = vunpack.c.l.b16 %v2261
      %v2390 = vunpack.c.l.b16 %v2262
      %v2391 = vunpack.c.l.b16 %v2263
      %v2392 = vunpack.c.l.b16 %v2264
      %v2393 = vunpack.c.l.b16 %v2265
      %v2394 = vunpack.c.l.b16 %v2266
      %v2395 = vunpack.c.l.b16 %v2267
      %v2396 = vunpack.c.l.b16 %v2268
      %v2397 = vunpack.c.l.b16 %v2269
      %v2398 = vpack.c.b16 %v2383, %v2382
      %v2399 = vpack.c.b16 %v2385, %v2384
      %v2400 = vpack.c.b16 %v2387, %v2386
      %v2401 = vpack.c.b16 %v2389, %v2388
      %v2402 = vpack.c.b16 %v2391, %v2390
      %v2403 = vpack.c.b16 %v2393, %v2392
      %v2404 = vpack.c.b16 %v2395, %v2394
      %v2405 = vpack.c.b16 %v2397, %v2396
      %2414 = vmatprep.subr.bf16.mxu0 0
      %2415 = vmatpush1.bf16.msra.mxu0 %v2398
      %2416 = vmatprep.subr.bf16.mxu0 0
      %2417 = vmatpush1.bf16.msra.mxu0 %v2399
      %2418 = vmatprep.subr.bf16.mxu0 0
      %2419 = vmatpush1.bf16.msra.mxu0 %v2400
      %2420 = vmatprep.subr.bf16.mxu0 0
      %2421 = vmatpush1.bf16.msra.mxu0 %v2401
      %2422 = vmatprep.subr.bf16.mxu0 0
      %2423 = vmatpush1.bf16.msra.mxu0 %v2402
      %2424 = vmatprep.subr.bf16.mxu0 0
      %2425 = vmatpush1.bf16.msra.mxu0 %v2403
      %2426 = vmatprep.subr.bf16.mxu0 0
      %2427 = vmatpush1.bf16.msra.mxu0 %v2404
      %2428 = vmatprep.subr.bf16.mxu0 0
      %2429 = vmatpush1.bf16.msra.mxu0 %v2405
      %2430 = vmatprep.subr.bf16.mxu0 0
      %2431 = vmatpush1.bf16.msra.mxu0 0
      %2432 = vmatprep.subr.bf16.mxu0 0
      %2433 = vmatpush1.bf16.msra.mxu0 0
      %2434 = vmatprep.subr.bf16.mxu0 0
      %2435 = vmatpush1.bf16.msra.mxu0 0
      %2436 = vmatprep.subr.bf16.mxu0 0
      %2437 = vmatpush1.bf16.msra.mxu0 0
      %2438 = vmatprep.subr.bf16.mxu0 0
      %2439 = vmatpush1.bf16.msra.mxu0 0
      %2440 = vmatprep.subr.bf16.mxu0 0
      %2441 = vmatpush1.bf16.msra.mxu0 0
      %2442 = vmatprep.subr.bf16.mxu0 0
      %2443 = vmatpush1.bf16.msra.mxu0 0
      %2444 = vmatprep.subr.bf16.mxu0 0
      %2445 = vmatpush1.bf16.msra.mxu0 0
      %2446 = vmatprep.mubr.bf16.mxu0 0
      %2447 = vmatmul.mubr.bf16.gmra.mrb[0].mxu0 %v2334
      %v2448 = vpop.f32.mrb[0].mxu0
      %v2449 = vadd.f32 0.0, %v2448
      %v2450 = vpop.f32.mrb[0].mxu0
      %v2451 = vpop.f32.mrb[0].mxu0
      %v2452 = vadd.f32 0.0, %v2451
      %v2453 = vpop.f32.mrb[0].mxu0
      %2454 = vmatprep.mubr.bf16.mxu0 0
      %2455 = vmatmul.mubr.bf16.gmra.mrb[0].mxu0 %v2335
      %v2456 = vpop.f32.mrb[0].mxu0
      %v2457 = vadd.f32 0.0, %v2456
      %v2458 = vpop.f32.mrb[0].mxu0
      %v2459 = vpop.f32.mrb[0].mxu0
      %v2460 = vadd.f32 0.0, %v2459
      %v2461 = vpop.f32.mrb[0].mxu0
      %2462 = vmatprep.mubr.bf16.mxu0 0
      %2463 = vmatmul.mubr.bf16.gmra.mrb[0].mxu0 %v2336
      %v2464 = vpop.f32.mrb[0].mxu0
      %v2465 = vadd.f32 0.0, %v2464
      %v2466 = vpop.f32.mrb[0].mxu0
      %v2467 = vpop.f32.mrb[0].mxu0
      %v2468 = vadd.f32 0.0, %v2467
      %v2469 = vpop.f32.mrb[0].mxu0
      %2470 = vmatprep.mubr.bf16.mxu0 0
      %2471 = vmatmul.mubr.bf16.gmra.mrb[0].mxu0 %v2337
      %v2472 = vpop.f32.mrb[0].mxu0
      %v2473 = vadd.f32 0.0, %v2472
      %v2474 = vpop.f32.mrb[0].mxu0
      %v2475 = vpop.f32.mrb[0].mxu0
      %v2476 = vadd.f32 0.0, %v2475
      %v2477 = vpop.f32.mrb[0].mxu0
      %2478 = vmatprep.mubr.bf16.mxu0 0
      %2479 = vmatmul.mubr.bf16.gmra.mrb[0].mxu0 %v2338
      %v2480 = vpop.f32.mrb[0].mxu0
      %v2481 = vadd.f32 0.0, %v2480
      %v2482 = vpop.f32.mrb[0].mxu0
      %v2483 = vpop.f32.mrb[0].mxu0
      %v2484 = vadd.f32 0.0, %v2483
      %v2485 = vpop.f32.mrb[0].mxu0
      %2486 = vmatprep.mubr.bf16.mxu0 0
      %2487 = vmatmul.mubr.bf16.gmra.mrb[0].mxu0 %v2339
      %v2488 = vpop.f32.mrb[0].mxu0
      %v2489 = vadd.f32 0.0, %v2488
      %v2490 = vpop.f32.mrb[0].mxu0
      %v2491 = vpop.f32.mrb[0].mxu0
      %v2492 = vadd.f32 0.0, %v2491
      %v2493 = vpop.f32.mrb[0].mxu0
      %2494 = vmatprep.mubr.bf16.mxu0 0
      %2495 = vmatmul.mubr.bf16.gmra.mrb[0].mxu0 %v2340
      %v2496 = vpop.f32.mrb[0].mxu0
      %v2497 = vadd.f32 0.0, %v2496
      %v2498 = vpop.f32.mrb[0].mxu0
      %v2499 = vpop.f32.mrb[0].mxu0
      %v2500 = vadd.f32 0.0, %v2499
      %v2501 = vpop.f32.mrb[0].mxu0
      %2502 = vmatprep.mubr.bf16.mxu0 0
      %2503 = vmatmul.mubr.bf16.gmra.mrb[0].mxu0 %v2341
      %v2504 = vpop.f32.mrb[0].mxu0
      %v2505 = vadd.f32 0.0, %v2504
      %v2506 = vpop.f32.mrb[0].mxu0
      %v2507 = vpop.f32.mrb[0].mxu0
      %v2508 = vadd.f32 0.0, %v2507
      %v2509 = vpop.f32.mrb[0].mxu0
      %2510 = vmatprep.mubr.bf16.mxu0 0
      %2511 = vmatmul.mubr.bf16.gmra.mrb[0].mxu0 %v2342
      %v2512 = vpop.f32.mrb[0].mxu0
      %v2513 = vadd.f32 0.0, %v2512
      %v2514 = vpop.f32.mrb[0].mxu0
      %v2515 = vpop.f32.mrb[0].mxu0
      %v2516 = vadd.f32 0.0, %v2515
      %v2517 = vpop.f32.mrb[0].mxu0
      %2518 = vmatprep.mubr.bf16.mxu0 0
      %2519 = vmatmul.mubr.bf16.gmra.mrb[0].mxu0 %v2343
      %v2520 = vpop.f32.mrb[0].mxu0
      %v2521 = vadd.f32 0.0, %v2520
      %v2522 = vpop.f32.mrb[0].mxu0
      %v2523 = vpop.f32.mrb[0].mxu0
      %v2524 = vadd.f32 0.0, %v2523
      %v2525 = vpop.f32.mrb[0].mxu0
      %2526 = vmatprep.mubr.bf16.mxu0 0
      %2527 = vmatmul.mubr.bf16.gmra.mrb[0].mxu0 %v2344
      %v2528 = vpop.f32.mrb[0].mxu0
      %v2529 = vadd.f32 0.0, %v2528
      %v2530 = vpop.f32.mrb[0].mxu0
      %v2531 = vpop.f32.mrb[0].mxu0
      %v2532 = vadd.f32 0.0, %v2531
      %v2533 = vpop.f32.mrb[0].mxu0
      %2534 = vmatprep.mubr.bf16.mxu0 0
      %2535 = vmatmul.mubr.bf16.gmra.mrb[0].mxu0 %v2345
      %v2536 = vpop.f32.mrb[0].mxu0
      %v2537 = vadd.f32 0.0, %v2536
      %v2538 = vpop.f32.mrb[0].mxu0
      %v2539 = vpop.f32.mrb[0].mxu0
      %v2540 = vadd.f32 0.0, %v2539
      %v2541 = vpop.f32.mrb[0].mxu0
      %2542 = vmatprep.mubr.bf16.mxu0 0
      %2543 = vmatmul.mubr.bf16.gmra.mrb[0].mxu0 %v2346
      %v2544 = vpop.f32.mrb[0].mxu0
      %v2545 = vadd.f32 0.0, %v2544
      %v2546 = vpop.f32.mrb[0].mxu0
      %v2547 = vpop.f32.mrb[0].mxu0
      %v2548 = vadd.f32 0.0, %v2547
      %v2549 = vpop.f32.mrb[0].mxu0
      %2550 = vmatprep.mubr.bf16.mxu0 0
      %2551 = vmatmul.mubr.bf16.gmra.mrb[0].mxu0 %v2347
      %v2552 = vpop.f32.mrb[0].mxu0
      %v2553 = vadd.f32 0.0, %v2552
      %v2554 = vpop.f32.mrb[0].mxu0
      %v2555 = vpop.f32.mrb[0].mxu0
      %v2556 = vadd.f32 0.0, %v2555
      %v2557 = vpop.f32.mrb[0].mxu0
      %2558 = vmatprep.mubr.bf16.mxu0 0
      %2559 = vmatmul.mubr.bf16.gmra.mrb[0].mxu0 %v2348
      %v2560 = vpop.f32.mrb[0].mxu0
      %v2561 = vadd.f32 0.0, %v2560
      %v2562 = vpop.f32.mrb[0].mxu0
      %v2563 = vpop.f32.mrb[0].mxu0
      %v2564 = vadd.f32 0.0, %v2563
      %v2565 = vpop.f32.mrb[0].mxu0
      %2566 = vmatprep.mubr.bf16.mxu0 0
      %2567 = vmatmul.mubr.bf16.gmra.mrb[0].mxu0 %v2349
      %v2568 = vpop.f32.mrb[0].mxu0
      %v2569 = vadd.f32 0.0, %v2568
      %v2570 = vpop.f32.mrb[0].mxu0
      %v2571 = vpop.f32.mrb[0].mxu0
      %v2572 = vadd.f32 0.0, %v2571
      %v2573 = vpop.f32.mrb[0].mxu0
      %2574 = vdwg.mxu0
      %v2575 = vadd.f32 %v2187, %v2449
      %v2576 = vadd.f32 %v2188, %v2452
      %v2577 = vadd.f32 %v2189, %v2457
      %v2578 = vadd.f32 %v2190, %v2460
      %v2579 = vadd.f32 %v2191, %v2465
      %v2580 = vadd.f32 %v2192, %v2468
      %v2581 = vadd.f32 %v2193, %v2473
      %v2582 = vadd.f32 %v2194, %v2476
      %v2583 = vadd.f32 %v2195, %v2481
      %v2584 = vadd.f32 %v2196, %v2484
      %v2585 = vadd.f32 %v2197, %v2489
      %v2586 = vadd.f32 %v2198, %v2492
      %v2587 = vadd.f32 %v2199, %v2497
      %v2588 = vadd.f32 %v2200, %v2500
      %v2589 = vadd.f32 %v2201, %v2505
      %v2590 = vadd.f32 %v2202, %v2508
      %v2591 = vadd.f32 %v2203, %v2513
      %v2592 = vadd.f32 %v2204, %v2516
      %v2593 = vadd.f32 %v2205, %v2521
      %v2594 = vadd.f32 %v2206, %v2524
      %v2595 = vadd.f32 %v2207, %v2529
      %v2596 = vadd.f32 %v2208, %v2532
      %v2597 = vadd.f32 %v2209, %v2537
      %v2598 = vadd.f32 %v2210, %v2540
      %v2599 = vadd.f32 %v2211, %v2545
      %v2600 = vadd.f32 %v2212, %v2548
      %v2601 = vadd.f32 %v2213, %v2553
      %v2602 = vadd.f32 %v2214, %v2556
      %v2603 = vadd.f32 %v2215, %v2561
      %v2604 = vadd.f32 %v2216, %v2564
      %v2605 = vadd.f32 %v2217, %v2569
      %v2606 = vadd.f32 %v2218, %v2572
      %s2607 = smul.addr %s336, 4
      %s2608 = scalar_lea.vmem %s313, %s2607
      %v2609 = vld [vmem:[%s2608] sm:$0xf]
      %v2610 = vld [vmem:[%s2608 + $0x4] sm:$0xf]
      %v2611 = vld [vmem:[%s2608 + $0x8] sm:$0xf]
      %v2612 = vld [vmem:[%s2608 + $0xc] sm:$0xf]
      %v2613 = vld [vmem:[%s2608 + $0x10] sm:$0xf]
      %v2614 = vld [vmem:[%s2608 + $0x14] sm:$0xf]
      %v2615 = vld [vmem:[%s2608 + $0x18] sm:$0xf]
      %v2616 = vld [vmem:[%s2608 + $0x1c] sm:$0xf]
      %v2617 = vld [vmem:[%s2608 + $0x20] sm:$0xf]
      %v2618 = vld [vmem:[%s2608 + $0x24] sm:$0xf]
      %v2619 = vld [vmem:[%s2608 + $0x28] sm:$0xf]
      %v2620 = vld [vmem:[%s2608 + $0x2c] sm:$0xf]
      %v2621 = vld [vmem:[%s2608 + $0x30] sm:$0xf]
      %v2622 = vld [vmem:[%s2608 + $0x34] sm:$0xf]
      %v2623 = vld [vmem:[%s2608 + $0x38] sm:$0xf]
      %v2624 = vld [vmem:[%s2608 + $0x3c] sm:$0xf]
      %v2625 = vld [vmem:[%s2608 + $0x40] sm:$0xf]
      %v2626 = vld [vmem:[%s2608 + $0x44] sm:$0xf]
      %v2627 = vld [vmem:[%s2608 + $0x48] sm:$0xf]
      %v2628 = vld [vmem:[%s2608 + $0x4c] sm:$0xf]
      %v2629 = vld [vmem:[%s2608 + $0x50] sm:$0xf]
      %v2630 = vld [vmem:[%s2608 + $0x54] sm:$0xf]
      %v2631 = vld [vmem:[%s2608 + $0x58] sm:$0xf]
      %v2632 = vld [vmem:[%s2608 + $0x5c] sm:$0xf]
      %v2633 = vld [vmem:[%s2608 + $0x60] sm:$0xf]
      %v2634 = vld [vmem:[%s2608 + $0x64] sm:$0xf]
      %v2635 = vld [vmem:[%s2608 + $0x68] sm:$0xf]
      %v2636 = vld [vmem:[%s2608 + $0x6c] sm:$0xf]
      %v2637 = vld [vmem:[%s2608 + $0x70] sm:$0xf]
      %v2638 = vld [vmem:[%s2608 + $0x74] sm:$0xf]
      %v2639 = vld [vmem:[%s2608 + $0x78] sm:$0xf]
      %v2640 = vld [vmem:[%s2608 + $0x7c] sm:$0xf]
      %s2641 = scalar_lea.vmem %s317, 128
      %v2642 = vld [vmem:[%s2641] sm:$0xf]
      %v2643 = vld [vmem:[%s2641 + $0x4] sm:$0xf]
      %v2644 = vld [vmem:[%s2641 + $0x8] sm:$0xf]
      %v2645 = vld [vmem:[%s2641 + $0xc] sm:$0xf]
      %v2646 = vld [vmem:[%s2641 + $0x10] sm:$0xf]
      %v2647 = vld [vmem:[%s2641 + $0x14] sm:$0xf]
      %v2648 = vld [vmem:[%s2641 + $0x18] sm:$0xf]
      %v2649 = vld [vmem:[%s2641 + $0x1c] sm:$0xf]
      %v2650 = vld [vmem:[%s2641 + $0x20] sm:$0xf]
      %v2651 = vld [vmem:[%s2641 + $0x24] sm:$0xf]
      %v2652 = vld [vmem:[%s2641 + $0x28] sm:$0xf]
      %v2653 = vld [vmem:[%s2641 + $0x2c] sm:$0xf]
      %v2654 = vld [vmem:[%s2641 + $0x30] sm:$0xf]
      %v2655 = vld [vmem:[%s2641 + $0x34] sm:$0xf]
      %v2656 = vld [vmem:[%s2641 + $0x38] sm:$0xf]
      %v2657 = vld [vmem:[%s2641 + $0x3c] sm:$0xf]
      %v2690 = vunpack.c.l.b16 %v2609
      %v2691 = vunpack.c.l.b16 %v2610
      %v2692 = vunpack.c.l.b16 %v2611
      %v2693 = vunpack.c.l.b16 %v2612
      %v2694 = vunpack.c.l.b16 %v2613
      %v2695 = vunpack.c.l.b16 %v2614
      %v2696 = vunpack.c.l.b16 %v2615
      %v2697 = vunpack.c.l.b16 %v2616
      %v2698 = vunpack.c.l.b16 %v2617
      %v2699 = vunpack.c.l.b16 %v2618
      %v2700 = vunpack.c.l.b16 %v2619
      %v2701 = vunpack.c.l.b16 %v2620
      %v2702 = vunpack.c.l.b16 %v2621
      %v2703 = vunpack.c.l.b16 %v2622
      %v2704 = vunpack.c.l.b16 %v2623
      %v2705 = vunpack.c.l.b16 %v2624
      %v2706 = vunpack.c.l.b16 %v2625
      %v2707 = vunpack.c.l.b16 %v2626
      %v2708 = vunpack.c.l.b16 %v2627
      %v2709 = vunpack.c.l.b16 %v2628
      %v2710 = vunpack.c.l.b16 %v2629
      %v2711 = vunpack.c.l.b16 %v2630
      %v2712 = vunpack.c.l.b16 %v2631
      %v2713 = vunpack.c.l.b16 %v2632
      %v2714 = vunpack.c.l.b16 %v2633
      %v2715 = vunpack.c.l.b16 %v2634
      %v2716 = vunpack.c.l.b16 %v2635
      %v2717 = vunpack.c.l.b16 %v2636
      %v2718 = vunpack.c.l.b16 %v2637
      %v2719 = vunpack.c.l.b16 %v2638
      %v2720 = vunpack.c.l.b16 %v2639
      %v2721 = vunpack.c.l.b16 %v2640
      %v2722 = vpack.c.b16 %v2691, %v2690
      %v2723 = vpack.c.b16 %v2693, %v2692
      %v2724 = vpack.c.b16 %v2695, %v2694
      %v2725 = vpack.c.b16 %v2697, %v2696
      %v2726 = vpack.c.b16 %v2699, %v2698
      %v2727 = vpack.c.b16 %v2701, %v2700
      %v2728 = vpack.c.b16 %v2703, %v2702
      %v2729 = vpack.c.b16 %v2705, %v2704
      %v2730 = vpack.c.b16 %v2707, %v2706
      %v2731 = vpack.c.b16 %v2709, %v2708
      %v2732 = vpack.c.b16 %v2711, %v2710
      %v2733 = vpack.c.b16 %v2713, %v2712
      %v2734 = vpack.c.b16 %v2715, %v2714
      %v2735 = vpack.c.b16 %v2717, %v2716
      %v2736 = vpack.c.b16 %v2719, %v2718
      %v2737 = vpack.c.b16 %v2721, %v2720
      %v2770 = vunpack.c.l.b16 %v2642
      %v2771 = vunpack.c.l.b16 %v2643
      %v2772 = vunpack.c.l.b16 %v2644
      %v2773 = vunpack.c.l.b16 %v2645
      %v2774 = vunpack.c.l.b16 %v2646
      %v2775 = vunpack.c.l.b16 %v2647
      %v2776 = vunpack.c.l.b16 %v2648
      %v2777 = vunpack.c.l.b16 %v2649
      %v2778 = vunpack.c.l.b16 %v2650
      %v2779 = vunpack.c.l.b16 %v2651
      %v2780 = vunpack.c.l.b16 %v2652
      %v2781 = vunpack.c.l.b16 %v2653
      %v2782 = vunpack.c.l.b16 %v2654
      %v2783 = vunpack.c.l.b16 %v2655
      %v2784 = vunpack.c.l.b16 %v2656
      %v2785 = vunpack.c.l.b16 %v2657
      %v2786 = vpack.c.b16 %v2771, %v2770
      %v2787 = vpack.c.b16 %v2773, %v2772
      %v2788 = vpack.c.b16 %v2775, %v2774
      %v2789 = vpack.c.b16 %v2777, %v2776
      %v2790 = vpack.c.b16 %v2779, %v2778
      %v2791 = vpack.c.b16 %v2781, %v2780
      %v2792 = vpack.c.b16 %v2783, %v2782
      %v2793 = vpack.c.b16 %v2785, %v2784
      %2802 = vmatprep.subr.bf16.mxu0 0
      %2803 = vmatpush1.bf16.msra.mxu0 %v2786
      %2804 = vmatprep.subr.bf16.mxu0 0
      %2805 = vmatpush1.bf16.msra.mxu0 %v2787
      %2806 = vmatprep.subr.bf16.mxu0 0
      %2807 = vmatpush1.bf16.msra.mxu0 %v2788
      %2808 = vmatprep.subr.bf16.mxu0 0
      %2809 = vmatpush1.bf16.msra.mxu0 %v2789
      %2810 = vmatprep.subr.bf16.mxu0 0
      %2811 = vmatpush1.bf16.msra.mxu0 %v2790
      %2812 = vmatprep.subr.bf16.mxu0 0
      %2813 = vmatpush1.bf16.msra.mxu0 %v2791
      %2814 = vmatprep.subr.bf16.mxu0 0
      %2815 = vmatpush1.bf16.msra.mxu0 %v2792
      %2816 = vmatprep.subr.bf16.mxu0 0
      %2817 = vmatpush1.bf16.msra.mxu0 %v2793
      %2818 = vmatprep.subr.bf16.mxu0 0
      %2819 = vmatpush1.bf16.msra.mxu0 0
      %2820 = vmatprep.subr.bf16.mxu0 0
      %2821 = vmatpush1.bf16.msra.mxu0 0
      %2822 = vmatprep.subr.bf16.mxu0 0
      %2823 = vmatpush1.bf16.msra.mxu0 0
      %2824 = vmatprep.subr.bf16.mxu0 0
      %2825 = vmatpush1.bf16.msra.mxu0 0
      %2826 = vmatprep.subr.bf16.mxu0 0
      %2827 = vmatpush1.bf16.msra.mxu0 0
      %2828 = vmatprep.subr.bf16.mxu0 0
      %2829 = vmatpush1.bf16.msra.mxu0 0
      %2830 = vmatprep.subr.bf16.mxu0 0
      %2831 = vmatpush1.bf16.msra.mxu0 0
      %2832 = vmatprep.subr.bf16.mxu0 0
      %2833 = vmatpush1.bf16.msra.mxu0 0
      %2834 = vmatprep.mubr.bf16.mxu0 0
      %2835 = vmatmul.mubr.bf16.gmra.mrb[0].mxu0 %v2722
      %v2836 = vpop.f32.mrb[0].mxu0
      %v2837 = vadd.f32 0.0, %v2836
      %v2838 = vpop.f32.mrb[0].mxu0
      %v2839 = vpop.f32.mrb[0].mxu0
      %v2840 = vadd.f32 0.0, %v2839
      %v2841 = vpop.f32.mrb[0].mxu0
      %2842 = vmatprep.mubr.bf16.mxu0 0
      %2843 = vmatmul.mubr.bf16.gmra.mrb[0].mxu0 %v2723
      %v2844 = vpop.f32.mrb[0].mxu0
      %v2845 = vadd.f32 0.0, %v2844
      %v2846 = vpop.f32.mrb[0].mxu0
      %v2847 = vpop.f32.mrb[0].mxu0
      %v2848 = vadd.f32 0.0, %v2847
      %v2849 = vpop.f32.mrb[0].mxu0
      %2850 = vmatprep.mubr.bf16.mxu0 0
      %2851 = vmatmul.mubr.bf16.gmra.mrb[0].mxu0 %v2724
      %v2852 = vpop.f32.mrb[0].mxu0
      %v2853 = vadd.f32 0.0, %v2852
      %v2854 = vpop.f32.mrb[0].mxu0
      %v2855 = vpop.f32.mrb[0].mxu0
      %v2856 = vadd.f32 0.0, %v2855
      %v2857 = vpop.f32.mrb[0].mxu0
      %2858 = vmatprep.mubr.bf16.mxu0 0
      %2859 = vmatmul.mubr.bf16.gmra.mrb[0].mxu0 %v2725
      %v2860 = vpop.f32.mrb[0].mxu0
      %v2861 = vadd.f32 0.0, %v2860
      %v2862 = vpop.f32.mrb[0].mxu0
      %v2863 = vpop.f32.mrb[0].mxu0
      %v2864 = vadd.f32 0.0, %v2863
      %v2865 = vpop.f32.mrb[0].mxu0
      %2866 = vmatprep.mubr.bf16.mxu0 0
      %2867 = vmatmul.mubr.bf16.gmra.mrb[0].mxu0 %v2726
      %v2868 = vpop.f32.mrb[0].mxu0
      %v2869 = vadd.f32 0.0, %v2868
      %v2870 = vpop.f32.mrb[0].mxu0
      %v2871 = vpop.f32.mrb[0].mxu0
      %v2872 = vadd.f32 0.0, %v2871
      %v2873 = vpop.f32.mrb[0].mxu0
      %2874 = vmatprep.mubr.bf16.mxu0 0
      %2875 = vmatmul.mubr.bf16.gmra.mrb[0].mxu0 %v2727
      %v2876 = vpop.f32.mrb[0].mxu0
      %v2877 = vadd.f32 0.0, %v2876
      %v2878 = vpop.f32.mrb[0].mxu0
      %v2879 = vpop.f32.mrb[0].mxu0
      %v2880 = vadd.f32 0.0, %v2879
      %v2881 = vpop.f32.mrb[0].mxu0
      %2882 = vmatprep.mubr.bf16.mxu0 0
      %2883 = vmatmul.mubr.bf16.gmra.mrb[0].mxu0 %v2728
      %v2884 = vpop.f32.mrb[0].mxu0
      %v2885 = vadd.f32 0.0, %v2884
      %v2886 = vpop.f32.mrb[0].mxu0
      %v2887 = vpop.f32.mrb[0].mxu0
      %v2888 = vadd.f32 0.0, %v2887
      %v2889 = vpop.f32.mrb[0].mxu0
      %2890 = vmatprep.mubr.bf16.mxu0 0
      %2891 = vmatmul.mubr.bf16.gmra.mrb[0].mxu0 %v2729
      %v2892 = vpop.f32.mrb[0].mxu0
      %v2893 = vadd.f32 0.0, %v2892
      %v2894 = vpop.f32.mrb[0].mxu0
      %v2895 = vpop.f32.mrb[0].mxu0
      %v2896 = vadd.f32 0.0, %v2895
      %v2897 = vpop.f32.mrb[0].mxu0
      %2898 = vmatprep.mubr.bf16.mxu0 0
      %2899 = vmatmul.mubr.bf16.gmra.mrb[0].mxu0 %v2730
      %v2900 = vpop.f32.mrb[0].mxu0
      %v2901 = vadd.f32 0.0, %v2900
      %v2902 = vpop.f32.mrb[0].mxu0
      %v2903 = vpop.f32.mrb[0].mxu0
      %v2904 = vadd.f32 0.0, %v2903
      %v2905 = vpop.f32.mrb[0].mxu0
      %2906 = vmatprep.mubr.bf16.mxu0 0
      %2907 = vmatmul.mubr.bf16.gmra.mrb[0].mxu0 %v2731
      %v2908 = vpop.f32.mrb[0].mxu0
      %v2909 = vadd.f32 0.0, %v2908
      %v2910 = vpop.f32.mrb[0].mxu0
      %v2911 = vpop.f32.mrb[0].mxu0
      %v2912 = vadd.f32 0.0, %v2911
      %v2913 = vpop.f32.mrb[0].mxu0
      %2914 = vmatprep.mubr.bf16.mxu0 0
      %2915 = vmatmul.mubr.bf16.gmra.mrb[0].mxu0 %v2732
      %v2916 = vpop.f32.mrb[0].mxu0
      %v2917 = vadd.f32 0.0, %v2916
      %v2918 = vpop.f32.mrb[0].mxu0
      %v2919 = vpop.f32.mrb[0].mxu0
      %v2920 = vadd.f32 0.0, %v2919
      %v2921 = vpop.f32.mrb[0].mxu0
      %2922 = vmatprep.mubr.bf16.mxu0 0
      %2923 = vmatmul.mubr.bf16.gmra.mrb[0].mxu0 %v2733
      %v2924 = vpop.f32.mrb[0].mxu0
      %v2925 = vadd.f32 0.0, %v2924
      %v2926 = vpop.f32.mrb[0].mxu0
      %v2927 = vpop.f32.mrb[0].mxu0
      %v2928 = vadd.f32 0.0, %v2927
      %v2929 = vpop.f32.mrb[0].mxu0
      %2930 = vmatprep.mubr.bf16.mxu0 0
      %2931 = vmatmul.mubr.bf16.gmra.mrb[0].mxu0 %v2734
      %v2932 = vpop.f32.mrb[0].mxu0
      %v2933 = vadd.f32 0.0, %v2932
      %v2934 = vpop.f32.mrb[0].mxu0
      %v2935 = vpop.f32.mrb[0].mxu0
      %v2936 = vadd.f32 0.0, %v2935
      %v2937 = vpop.f32.mrb[0].mxu0
      %2938 = vmatprep.mubr.bf16.mxu0 0
      %2939 = vmatmul.mubr.bf16.gmra.mrb[0].mxu0 %v2735
      %v2940 = vpop.f32.mrb[0].mxu0
      %v2941 = vadd.f32 0.0, %v2940
      %v2942 = vpop.f32.mrb[0].mxu0
      %v2943 = vpop.f32.mrb[0].mxu0
      %v2944 = vadd.f32 0.0, %v2943
      %v2945 = vpop.f32.mrb[0].mxu0
      %2946 = vmatprep.mubr.bf16.mxu0 0
      %2947 = vmatmul.mubr.bf16.gmra.mrb[0].mxu0 %v2736
      %v2948 = vpop.f32.mrb[0].mxu0
      %v2949 = vadd.f32 0.0, %v2948
      %v2950 = vpop.f32.mrb[0].mxu0
      %v2951 = vpop.f32.mrb[0].mxu0
      %v2952 = vadd.f32 0.0, %v2951
      %v2953 = vpop.f32.mrb[0].mxu0
      %2954 = vmatprep.mubr.bf16.mxu0 0
      %2955 = vmatmul.mubr.bf16.gmra.mrb[0].mxu0 %v2737
      %v2956 = vpop.f32.mrb[0].mxu0
      %v2957 = vadd.f32 0.0, %v2956
      %v2958 = vpop.f32.mrb[0].mxu0
      %v2959 = vpop.f32.mrb[0].mxu0
      %v2960 = vadd.f32 0.0, %v2959
      %v2961 = vpop.f32.mrb[0].mxu0
      %2962 = vdwg.mxu0
      %v2963 = vadd.f32 %v2575, %v2837
      %v2964 = vadd.f32 %v2576, %v2840
      %v2965 = vadd.f32 %v2577, %v2845
      %v2966 = vadd.f32 %v2578, %v2848
      %v2967 = vadd.f32 %v2579, %v2853
      %v2968 = vadd.f32 %v2580, %v2856
      %v2969 = vadd.f32 %v2581, %v2861
      %v2970 = vadd.f32 %v2582, %v2864
      %v2971 = vadd.f32 %v2583, %v2869
      %v2972 = vadd.f32 %v2584, %v2872
      %v2973 = vadd.f32 %v2585, %v2877
      %v2974 = vadd.f32 %v2586, %v2880
      %v2975 = vadd.f32 %v2587, %v2885
      %v2976 = vadd.f32 %v2588, %v2888
      %v2977 = vadd.f32 %v2589, %v2893
      %v2978 = vadd.f32 %v2590, %v2896
      %v2979 = vadd.f32 %v2591, %v2901
      %v2980 = vadd.f32 %v2592, %v2904
      %v2981 = vadd.f32 %v2593, %v2909
      %v2982 = vadd.f32 %v2594, %v2912
      %v2983 = vadd.f32 %v2595, %v2917
      %v2984 = vadd.f32 %v2596, %v2920
      %v2985 = vadd.f32 %v2597, %v2925
      %v2986 = vadd.f32 %v2598, %v2928
      %v2987 = vadd.f32 %v2599, %v2933
      %v2988 = vadd.f32 %v2600, %v2936
      %v2989 = vadd.f32 %v2601, %v2941
      %v2990 = vadd.f32 %v2602, %v2944
      %v2991 = vadd.f32 %v2603, %v2949
      %v2992 = vadd.f32 %v2604, %v2952
      %v2993 = vadd.f32 %v2605, %v2957
      %v2994 = vadd.f32 %v2606, %v2960
      %s2995 = smul.addr %s389, 4
      %s2996 = scalar_lea.vmem %s313, %s2995
      %v2997 = vld [vmem:[%s2996] sm:$0xf]
      %v2998 = vld [vmem:[%s2996 + $0x4] sm:$0xf]
      %v2999 = vld [vmem:[%s2996 + $0x8] sm:$0xf]
      %v3000 = vld [vmem:[%s2996 + $0xc] sm:$0xf]
      %v3001 = vld [vmem:[%s2996 + $0x10] sm:$0xf]
      %v3002 = vld [vmem:[%s2996 + $0x14] sm:$0xf]
      %v3003 = vld [vmem:[%s2996 + $0x18] sm:$0xf]
      %v3004 = vld [vmem:[%s2996 + $0x1c] sm:$0xf]
      %v3005 = vld [vmem:[%s2996 + $0x20] sm:$0xf]
      %v3006 = vld [vmem:[%s2996 + $0x24] sm:$0xf]
      %v3007 = vld [vmem:[%s2996 + $0x28] sm:$0xf]
      %v3008 = vld [vmem:[%s2996 + $0x2c] sm:$0xf]
      %v3009 = vld [vmem:[%s2996 + $0x30] sm:$0xf]
      %v3010 = vld [vmem:[%s2996 + $0x34] sm:$0xf]
      %v3011 = vld [vmem:[%s2996 + $0x38] sm:$0xf]
      %v3012 = vld [vmem:[%s2996 + $0x3c] sm:$0xf]
      %v3013 = vld [vmem:[%s2996 + $0x40] sm:$0xf]
      %v3014 = vld [vmem:[%s2996 + $0x44] sm:$0xf]
      %v3015 = vld [vmem:[%s2996 + $0x48] sm:$0xf]
      %v3016 = vld [vmem:[%s2996 + $0x4c] sm:$0xf]
      %v3017 = vld [vmem:[%s2996 + $0x50] sm:$0xf]
      %v3018 = vld [vmem:[%s2996 + $0x54] sm:$0xf]
      %v3019 = vld [vmem:[%s2996 + $0x58] sm:$0xf]
      %v3020 = vld [vmem:[%s2996 + $0x5c] sm:$0xf]
      %v3021 = vld [vmem:[%s2996 + $0x60] sm:$0xf]
      %v3022 = vld [vmem:[%s2996 + $0x64] sm:$0xf]
      %v3023 = vld [vmem:[%s2996 + $0x68] sm:$0xf]
      %v3024 = vld [vmem:[%s2996 + $0x6c] sm:$0xf]
      %v3025 = vld [vmem:[%s2996 + $0x70] sm:$0xf]
      %v3026 = vld [vmem:[%s2996 + $0x74] sm:$0xf]
      %v3027 = vld [vmem:[%s2996 + $0x78] sm:$0xf]
      %v3028 = vld [vmem:[%s2996 + $0x7c] sm:$0xf]
      %s3029 = scalar_lea.vmem %s317, 320
      %v3030 = vld [vmem:[%s3029] sm:$0xf]
      %v3031 = vld [vmem:[%s3029 + $0x4] sm:$0xf]
      %v3032 = vld [vmem:[%s3029 + $0x8] sm:$0xf]
      %v3033 = vld [vmem:[%s3029 + $0xc] sm:$0xf]
      %v3034 = vld [vmem:[%s3029 + $0x10] sm:$0xf]
      %v3035 = vld [vmem:[%s3029 + $0x14] sm:$0xf]
      %v3036 = vld [vmem:[%s3029 + $0x18] sm:$0xf]
      %v3037 = vld [vmem:[%s3029 + $0x1c] sm:$0xf]
      %v3038 = vld [vmem:[%s3029 + $0x20] sm:$0xf]
      %v3039 = vld [vmem:[%s3029 + $0x24] sm:$0xf]
      %v3040 = vld [vmem:[%s3029 + $0x28] sm:$0xf]
      %v3041 = vld [vmem:[%s3029 + $0x2c] sm:$0xf]
      %v3042 = vld [vmem:[%s3029 + $0x30] sm:$0xf]
      %v3043 = vld [vmem:[%s3029 + $0x34] sm:$0xf]
      %v3044 = vld [vmem:[%s3029 + $0x38] sm:$0xf]
      %v3045 = vld [vmem:[%s3029 + $0x3c] sm:$0xf]
      %v3078 = vunpack.c.l.b16 %v2997
      %v3079 = vunpack.c.l.b16 %v2998
      %v3080 = vunpack.c.l.b16 %v2999
      %v3081 = vunpack.c.l.b16 %v3000
      %v3082 = vunpack.c.l.b16 %v3001
      %v3083 = vunpack.c.l.b16 %v3002
      %v3084 = vunpack.c.l.b16 %v3003
      %v3085 = vunpack.c.l.b16 %v3004
      %v3086 = vunpack.c.l.b16 %v3005
      %v3087 = vunpack.c.l.b16 %v3006
      %v3088 = vunpack.c.l.b16 %v3007
      %v3089 = vunpack.c.l.b16 %v3008
      %v3090 = vunpack.c.l.b16 %v3009
      %v3091 = vunpack.c.l.b16 %v3010
      %v3092 = vunpack.c.l.b16 %v3011
      %v3093 = vunpack.c.l.b16 %v3012
      %v3094 = vunpack.c.l.b16 %v3013
      %v3095 = vunpack.c.l.b16 %v3014
      %v3096 = vunpack.c.l.b16 %v3015
      %v3097 = vunpack.c.l.b16 %v3016
      %v3098 = vunpack.c.l.b16 %v3017
      %v3099 = vunpack.c.l.b16 %v3018
      %v3100 = vunpack.c.l.b16 %v3019
      %v3101 = vunpack.c.l.b16 %v3020
      %v3102 = vunpack.c.l.b16 %v3021
      %v3103 = vunpack.c.l.b16 %v3022
      %v3104 = vunpack.c.l.b16 %v3023
      %v3105 = vunpack.c.l.b16 %v3024
      %v3106 = vunpack.c.l.b16 %v3025
      %v3107 = vunpack.c.l.b16 %v3026
      %v3108 = vunpack.c.l.b16 %v3027
      %v3109 = vunpack.c.l.b16 %v3028
      %v3110 = vpack.c.b16 %v3079, %v3078
      %v3111 = vpack.c.b16 %v3081, %v3080
      %v3112 = vpack.c.b16 %v3083, %v3082
      %v3113 = vpack.c.b16 %v3085, %v3084
      %v3114 = vpack.c.b16 %v3087, %v3086
      %v3115 = vpack.c.b16 %v3089, %v3088
      %v3116 = vpack.c.b16 %v3091, %v3090
      %v3117 = vpack.c.b16 %v3093, %v3092
      %v3118 = vpack.c.b16 %v3095, %v3094
      %v3119 = vpack.c.b16 %v3097, %v3096
      %v3120 = vpack.c.b16 %v3099, %v3098
      %v3121 = vpack.c.b16 %v3101, %v3100
      %v3122 = vpack.c.b16 %v3103, %v3102
      %v3123 = vpack.c.b16 %v3105, %v3104
      %v3124 = vpack.c.b16 %v3107, %v3106
      %v3125 = vpack.c.b16 %v3109, %v3108
      %v3158 = vunpack.c.l.b16 %v3030
      %v3159 = vunpack.c.l.b16 %v3031
      %v3160 = vunpack.c.l.b16 %v3032
      %v3161 = vunpack.c.l.b16 %v3033
      %v3162 = vunpack.c.l.b16 %v3034
      %v3163 = vunpack.c.l.b16 %v3035
      %v3164 = vunpack.c.l.b16 %v3036
      %v3165 = vunpack.c.l.b16 %v3037
      %v3166 = vunpack.c.l.b16 %v3038
      %v3167 = vunpack.c.l.b16 %v3039
      %v3168 = vunpack.c.l.b16 %v3040
      %v3169 = vunpack.c.l.b16 %v3041
      %v3170 = vunpack.c.l.b16 %v3042
      %v3171 = vunpack.c.l.b16 %v3043
      %v3172 = vunpack.c.l.b16 %v3044
      %v3173 = vunpack.c.l.b16 %v3045
      %v3174 = vpack.c.b16 %v3159, %v3158
      %v3175 = vpack.c.b16 %v3161, %v3160
      %v3176 = vpack.c.b16 %v3163, %v3162
      %v3177 = vpack.c.b16 %v3165, %v3164
      %v3178 = vpack.c.b16 %v3167, %v3166
      %v3179 = vpack.c.b16 %v3169, %v3168
      %v3180 = vpack.c.b16 %v3171, %v3170
      %v3181 = vpack.c.b16 %v3173, %v3172
      %3190 = vmatprep.subr.bf16.mxu0 0
      %3191 = vmatpush1.bf16.msra.mxu0 %v3174
      %3192 = vmatprep.subr.bf16.mxu0 0
      %3193 = vmatpush1.bf16.msra.mxu0 %v3175
      %3194 = vmatprep.subr.bf16.mxu0 0
      %3195 = vmatpush1.bf16.msra.mxu0 %v3176
      %3196 = vmatprep.subr.bf16.mxu0 0
      %3197 = vmatpush1.bf16.msra.mxu0 %v3177
      %3198 = vmatprep.subr.bf16.mxu0 0
      %3199 = vmatpush1.bf16.msra.mxu0 %v3178
      %3200 = vmatprep.subr.bf16.mxu0 0
      %3201 = vmatpush1.bf16.msra.mxu0 %v3179
      %3202 = vmatprep.subr.bf16.mxu0 0
      %3203 = vmatpush1.bf16.msra.mxu0 %v3180
      %3204 = vmatprep.subr.bf16.mxu0 0
      %3205 = vmatpush1.bf16.msra.mxu0 %v3181
      %3206 = vmatprep.subr.bf16.mxu0 0
      %3207 = vmatpush1.bf16.msra.mxu0 0
      %3208 = vmatprep.subr.bf16.mxu0 0
      %3209 = vmatpush1.bf16.msra.mxu0 0
      %3210 = vmatprep.subr.bf16.mxu0 0
      %3211 = vmatpush1.bf16.msra.mxu0 0
      %3212 = vmatprep.subr.bf16.mxu0 0
      %3213 = vmatpush1.bf16.msra.mxu0 0
      %3214 = vmatprep.subr.bf16.mxu0 0
      %3215 = vmatpush1.bf16.msra.mxu0 0
      %3216 = vmatprep.subr.bf16.mxu0 0
      %3217 = vmatpush1.bf16.msra.mxu0 0
      %3218 = vmatprep.subr.bf16.mxu0 0
      %3219 = vmatpush1.bf16.msra.mxu0 0
      %3220 = vmatprep.subr.bf16.mxu0 0
      %3221 = vmatpush1.bf16.msra.mxu0 0
      %3222 = vmatprep.mubr.bf16.mxu0 0
      %3223 = vmatmul.mubr.bf16.gmra.mrb[0].mxu0 %v3110
      %v3224 = vpop.f32.mrb[0].mxu0
      %v3225 = vadd.f32 0.0, %v3224
      %v3226 = vpop.f32.mrb[0].mxu0
      %v3227 = vpop.f32.mrb[0].mxu0
      %v3228 = vadd.f32 0.0, %v3227
      %v3229 = vpop.f32.mrb[0].mxu0
      %3230 = vmatprep.mubr.bf16.mxu0 0
      %3231 = vmatmul.mubr.bf16.gmra.mrb[0].mxu0 %v3111
      %v3232 = vpop.f32.mrb[0].mxu0
      %v3233 = vadd.f32 0.0, %v3232
      %v3234 = vpop.f32.mrb[0].mxu0
      %v3235 = vpop.f32.mrb[0].mxu0
      %v3236 = vadd.f32 0.0, %v3235
      %v3237 = vpop.f32.mrb[0].mxu0
      %3238 = vmatprep.mubr.bf16.mxu0 0
      %3239 = vmatmul.mubr.bf16.gmra.mrb[0].mxu0 %v3112
      %v3240 = vpop.f32.mrb[0].mxu0
      %v3241 = vadd.f32 0.0, %v3240
      %v3242 = vpop.f32.mrb[0].mxu0
      %v3243 = vpop.f32.mrb[0].mxu0
      %v3244 = vadd.f32 0.0, %v3243
      %v3245 = vpop.f32.mrb[0].mxu0
      %3246 = vmatprep.mubr.bf16.mxu0 0
      %3247 = vmatmul.mubr.bf16.gmra.mrb[0].mxu0 %v3113
      %v3248 = vpop.f32.mrb[0].mxu0
      %v3249 = vadd.f32 0.0, %v3248
      %v3250 = vpop.f32.mrb[0].mxu0
      %v3251 = vpop.f32.mrb[0].mxu0
      %v3252 = vadd.f32 0.0, %v3251
      %v3253 = vpop.f32.mrb[0].mxu0
      %3254 = vmatprep.mubr.bf16.mxu0 0
      %3255 = vmatmul.mubr.bf16.gmra.mrb[0].mxu0 %v3114
      %v3256 = vpop.f32.mrb[0].mxu0
      %v3257 = vadd.f32 0.0, %v3256
      %v3258 = vpop.f32.mrb[0].mxu0
      %v3259 = vpop.f32.mrb[0].mxu0
      %v3260 = vadd.f32 0.0, %v3259
      %v3261 = vpop.f32.mrb[0].mxu0
      %3262 = vmatprep.mubr.bf16.mxu0 0
      %3263 = vmatmul.mubr.bf16.gmra.mrb[0].mxu0 %v3115
      %v3264 = vpop.f32.mrb[0].mxu0
      %v3265 = vadd.f32 0.0, %v3264
      %v3266 = vpop.f32.mrb[0].mxu0
      %v3267 = vpop.f32.mrb[0].mxu0
      %v3268 = vadd.f32 0.0, %v3267
      %v3269 = vpop.f32.mrb[0].mxu0
      %3270 = vmatprep.mubr.bf16.mxu0 0
      %3271 = vmatmul.mubr.bf16.gmra.mrb[0].mxu0 %v3116
      %v3272 = vpop.f32.mrb[0].mxu0
      %v3273 = vadd.f32 0.0, %v3272
      %v3274 = vpop.f32.mrb[0].mxu0
      %v3275 = vpop.f32.mrb[0].mxu0
      %v3276 = vadd.f32 0.0, %v3275
      %v3277 = vpop.f32.mrb[0].mxu0
      %3278 = vmatprep.mubr.bf16.mxu0 0
      %3279 = vmatmul.mubr.bf16.gmra.mrb[0].mxu0 %v3117
      %v3280 = vpop.f32.mrb[0].mxu0
      %v3281 = vadd.f32 0.0, %v3280
      %v3282 = vpop.f32.mrb[0].mxu0
      %v3283 = vpop.f32.mrb[0].mxu0
      %v3284 = vadd.f32 0.0, %v3283
      %v3285 = vpop.f32.mrb[0].mxu0
      %3286 = vmatprep.mubr.bf16.mxu0 0
      %3287 = vmatmul.mubr.bf16.gmra.mrb[0].mxu0 %v3118
      %v3288 = vpop.f32.mrb[0].mxu0
      %v3289 = vadd.f32 0.0, %v3288
      %v3290 = vpop.f32.mrb[0].mxu0
      %v3291 = vpop.f32.mrb[0].mxu0
      %v3292 = vadd.f32 0.0, %v3291
      %v3293 = vpop.f32.mrb[0].mxu0
      %3294 = vmatprep.mubr.bf16.mxu0 0
      %3295 = vmatmul.mubr.bf16.gmra.mrb[0].mxu0 %v3119
      %v3296 = vpop.f32.mrb[0].mxu0
      %v3297 = vadd.f32 0.0, %v3296
      %v3298 = vpop.f32.mrb[0].mxu0
      %v3299 = vpop.f32.mrb[0].mxu0
      %v3300 = vadd.f32 0.0, %v3299
      %v3301 = vpop.f32.mrb[0].mxu0
      %3302 = vmatprep.mubr.bf16.mxu0 0
      %3303 = vmatmul.mubr.bf16.gmra.mrb[0].mxu0 %v3120
      %v3304 = vpop.f32.mrb[0].mxu0
      %v3305 = vadd.f32 0.0, %v3304
      %v3306 = vpop.f32.mrb[0].mxu0
      %v3307 = vpop.f32.mrb[0].mxu0
      %v3308 = vadd.f32 0.0, %v3307
      %v3309 = vpop.f32.mrb[0].mxu0
      %3310 = vmatprep.mubr.bf16.mxu0 0
      %3311 = vmatmul.mubr.bf16.gmra.mrb[0].mxu0 %v3121
      %v3312 = vpop.f32.mrb[0].mxu0
      %v3313 = vadd.f32 0.0, %v3312
      %v3314 = vpop.f32.mrb[0].mxu0
      %v3315 = vpop.f32.mrb[0].mxu0
      %v3316 = vadd.f32 0.0, %v3315
      %v3317 = vpop.f32.mrb[0].mxu0
      %3318 = vmatprep.mubr.bf16.mxu0 0
      %3319 = vmatmul.mubr.bf16.gmra.mrb[0].mxu0 %v3122
      %v3320 = vpop.f32.mrb[0].mxu0
      %v3321 = vadd.f32 0.0, %v3320
      %v3322 = vpop.f32.mrb[0].mxu0
      %v3323 = vpop.f32.mrb[0].mxu0
      %v3324 = vadd.f32 0.0, %v3323
      %v3325 = vpop.f32.mrb[0].mxu0
      %3326 = vmatprep.mubr.bf16.mxu0 0
      %3327 = vmatmul.mubr.bf16.gmra.mrb[0].mxu0 %v3123
      %v3328 = vpop.f32.mrb[0].mxu0
      %v3329 = vadd.f32 0.0, %v3328
      %v3330 = vpop.f32.mrb[0].mxu0
      %v3331 = vpop.f32.mrb[0].mxu0
      %v3332 = vadd.f32 0.0, %v3331
      %v3333 = vpop.f32.mrb[0].mxu0
      %3334 = vmatprep.mubr.bf16.mxu0 0
      %3335 = vmatmul.mubr.bf16.gmra.mrb[0].mxu0 %v3124
      %v3336 = vpop.f32.mrb[0].mxu0
      %v3337 = vadd.f32 0.0, %v3336
      %v3338 = vpop.f32.mrb[0].mxu0
      %v3339 = vpop.f32.mrb[0].mxu0
      %v3340 = vadd.f32 0.0, %v3339
      %v3341 = vpop.f32.mrb[0].mxu0
      %3342 = vmatprep.mubr.bf16.mxu0 0
      %3343 = vmatmul.mubr.bf16.gmra.mrb[0].mxu0 %v3125
      %v3344 = vpop.f32.mrb[0].mxu0
      %v3345 = vadd.f32 0.0, %v3344
      %v3346 = vpop.f32.mrb[0].mxu0
      %v3347 = vpop.f32.mrb[0].mxu0
      %v3348 = vadd.f32 0.0, %v3347
      %v3349 = vpop.f32.mrb[0].mxu0
      %3350 = vdwg.mxu0
      %v3351 = vadd.f32 %v2963, %v3225
      %v3352 = vadd.f32 %v2964, %v3228
      %v3353 = vadd.f32 %v2965, %v3233
      %v3354 = vadd.f32 %v2966, %v3236
      %v3355 = vadd.f32 %v2967, %v3241
      %v3356 = vadd.f32 %v2968, %v3244
      %v3357 = vadd.f32 %v2969, %v3249
      %v3358 = vadd.f32 %v2970, %v3252
      %v3359 = vadd.f32 %v2971, %v3257
      %v3360 = vadd.f32 %v2972, %v3260
      %v3361 = vadd.f32 %v2973, %v3265
      %v3362 = vadd.f32 %v2974, %v3268
      %v3363 = vadd.f32 %v2975, %v3273
      %v3364 = vadd.f32 %v2976, %v3276
      %v3365 = vadd.f32 %v2977, %v3281
      %v3366 = vadd.f32 %v2978, %v3284
      %v3367 = vadd.f32 %v2979, %v3289
      %v3368 = vadd.f32 %v2980, %v3292
      %v3369 = vadd.f32 %v2981, %v3297
      %v3370 = vadd.f32 %v2982, %v3300
      %v3371 = vadd.f32 %v2983, %v3305
      %v3372 = vadd.f32 %v2984, %v3308
      %v3373 = vadd.f32 %v2985, %v3313
      %v3374 = vadd.f32 %v2986, %v3316
      %v3375 = vadd.f32 %v2987, %v3321
      %v3376 = vadd.f32 %v2988, %v3324
      %v3377 = vadd.f32 %v2989, %v3329
      %v3378 = vadd.f32 %v2990, %v3332
      %v3379 = vadd.f32 %v2991, %v3337
      %v3380 = vadd.f32 %v2992, %v3340
      %v3381 = vadd.f32 %v2993, %v3345
      %v3382 = vadd.f32 %v2994, %v3348
      %s3383 = smul.addr %s1053, 4
      %s3384 = scalar_lea.vmem %s313, %s3383
      %v3385 = vld [vmem:[%s3384] sm:$0xf]
      %v3386 = vld [vmem:[%s3384 + $0x4] sm:$0xf]
      %v3387 = vld [vmem:[%s3384 + $0x8] sm:$0xf]
      %v3388 = vld [vmem:[%s3384 + $0xc] sm:$0xf]
      %v3389 = vld [vmem:[%s3384 + $0x10] sm:$0xf]
      %v3390 = vld [vmem:[%s3384 + $0x14] sm:$0xf]
      %v3391 = vld [vmem:[%s3384 + $0x18] sm:$0xf]
      %v3392 = vld [vmem:[%s3384 + $0x1c] sm:$0xf]
      %v3393 = vld [vmem:[%s3384 + $0x20] sm:$0xf]
      %v3394 = vld [vmem:[%s3384 + $0x24] sm:$0xf]
      %v3395 = vld [vmem:[%s3384 + $0x28] sm:$0xf]
      %v3396 = vld [vmem:[%s3384 + $0x2c] sm:$0xf]
      %v3397 = vld [vmem:[%s3384 + $0x30] sm:$0xf]
      %v3398 = vld [vmem:[%s3384 + $0x34] sm:$0xf]
      %v3399 = vld [vmem:[%s3384 + $0x38] sm:$0xf]
      %v3400 = vld [vmem:[%s3384 + $0x3c] sm:$0xf]
      %v3401 = vld [vmem:[%s3384 + $0x40] sm:$0xf]
      %v3402 = vld [vmem:[%s3384 + $0x44] sm:$0xf]
      %v3403 = vld [vmem:[%s3384 + $0x48] sm:$0xf]
      %v3404 = vld [vmem:[%s3384 + $0x4c] sm:$0xf]
      %v3405 = vld [vmem:[%s3384 + $0x50] sm:$0xf]
      %v3406 = vld [vmem:[%s3384 + $0x54] sm:$0xf]
      %v3407 = vld [vmem:[%s3384 + $0x58] sm:$0xf]
      %v3408 = vld [vmem:[%s3384 + $0x5c] sm:$0xf]
      %v3409 = vld [vmem:[%s3384 + $0x60] sm:$0xf]
      %v3410 = vld [vmem:[%s3384 + $0x64] sm:$0xf]
      %v3411 = vld [vmem:[%s3384 + $0x68] sm:$0xf]
      %v3412 = vld [vmem:[%s3384 + $0x6c] sm:$0xf]
      %v3413 = vld [vmem:[%s3384 + $0x70] sm:$0xf]
      %v3414 = vld [vmem:[%s3384 + $0x74] sm:$0xf]
      %v3415 = vld [vmem:[%s3384 + $0x78] sm:$0xf]
      %v3416 = vld [vmem:[%s3384 + $0x7c] sm:$0xf]
      %s3417 = scalar_lea.vmem %s317, 512
      %v3418 = vld [vmem:[%s3417] sm:$0xf]
      %v3419 = vld [vmem:[%s3417 + $0x4] sm:$0xf]
      %v3420 = vld [vmem:[%s3417 + $0x8] sm:$0xf]
      %v3421 = vld [vmem:[%s3417 + $0xc] sm:$0xf]
      %v3422 = vld [vmem:[%s3417 + $0x10] sm:$0xf]
      %v3423 = vld [vmem:[%s3417 + $0x14] sm:$0xf]
      %v3424 = vld [vmem:[%s3417 + $0x18] sm:$0xf]
      %v3425 = vld [vmem:[%s3417 + $0x1c] sm:$0xf]
      %v3426 = vld [vmem:[%s3417 + $0x20] sm:$0xf]
      %v3427 = vld [vmem:[%s3417 + $0x24] sm:$0xf]
      %v3428 = vld [vmem:[%s3417 + $0x28] sm:$0xf]
      %v3429 = vld [vmem:[%s3417 + $0x2c] sm:$0xf]
      %v3430 = vld [vmem:[%s3417 + $0x30] sm:$0xf]
      %v3431 = vld [vmem:[%s3417 + $0x34] sm:$0xf]
      %v3432 = vld [vmem:[%s3417 + $0x38] sm:$0xf]
      %v3433 = vld [vmem:[%s3417 + $0x3c] sm:$0xf]
      %v3466 = vunpack.c.l.b16 %v3385
      %v3467 = vunpack.c.l.b16 %v3386
      %v3468 = vunpack.c.l.b16 %v3387
      %v3469 = vunpack.c.l.b16 %v3388
      %v3470 = vunpack.c.l.b16 %v3389
      %v3471 = vunpack.c.l.b16 %v3390
      %v3472 = vunpack.c.l.b16 %v3391
      %v3473 = vunpack.c.l.b16 %v3392
      %v3474 = vunpack.c.l.b16 %v3393
      %v3475 = vunpack.c.l.b16 %v3394
      %v3476 = vunpack.c.l.b16 %v3395
      %v3477 = vunpack.c.l.b16 %v3396
      %v3478 = vunpack.c.l.b16 %v3397
      %v3479 = vunpack.c.l.b16 %v3398
      %v3480 = vunpack.c.l.b16 %v3399
      %v3481 = vunpack.c.l.b16 %v3400
      %v3482 = vunpack.c.l.b16 %v3401
      %v3483 = vunpack.c.l.b16 %v3402
      %v3484 = vunpack.c.l.b16 %v3403
      %v3485 = vunpack.c.l.b16 %v3404
      %v3486 = vunpack.c.l.b16 %v3405
      %v3487 = vunpack.c.l.b16 %v3406
      %v3488 = vunpack.c.l.b16 %v3407
      %v3489 = vunpack.c.l.b16 %v3408
      %v3490 = vunpack.c.l.b16 %v3409
      %v3491 = vunpack.c.l.b16 %v3410
      %v3492 = vunpack.c.l.b16 %v3411
      %v3493 = vunpack.c.l.b16 %v3412
      %v3494 = vunpack.c.l.b16 %v3413
      %v3495 = vunpack.c.l.b16 %v3414
      %v3496 = vunpack.c.l.b16 %v3415
      %v3497 = vunpack.c.l.b16 %v3416
      %v3498 = vpack.c.b16 %v3467, %v3466
      %v3499 = vpack.c.b16 %v3469, %v3468
      %v3500 = vpack.c.b16 %v3471, %v3470
      %v3501 = vpack.c.b16 %v3473, %v3472
      %v3502 = vpack.c.b16 %v3475, %v3474
      %v3503 = vpack.c.b16 %v3477, %v3476
      %v3504 = vpack.c.b16 %v3479, %v3478
      %v3505 = vpack.c.b16 %v3481, %v3480
      %v3506 = vpack.c.b16 %v3483, %v3482
      %v3507 = vpack.c.b16 %v3485, %v3484
      %v3508 = vpack.c.b16 %v3487, %v3486
      %v3509 = vpack.c.b16 %v3489, %v3488
      %v3510 = vpack.c.b16 %v3491, %v3490
      %v3511 = vpack.c.b16 %v3493, %v3492
      %v3512 = vpack.c.b16 %v3495, %v3494
      %v3513 = vpack.c.b16 %v3497, %v3496
      %v3546 = vunpack.c.l.b16 %v3418
      %v3547 = vunpack.c.l.b16 %v3419
      %v3548 = vunpack.c.l.b16 %v3420
      %v3549 = vunpack.c.l.b16 %v3421
      %v3550 = vunpack.c.l.b16 %v3422
      %v3551 = vunpack.c.l.b16 %v3423
      %v3552 = vunpack.c.l.b16 %v3424
      %v3553 = vunpack.c.l.b16 %v3425
      %v3554 = vunpack.c.l.b16 %v3426
      %v3555 = vunpack.c.l.b16 %v3427
      %v3556 = vunpack.c.l.b16 %v3428
      %v3557 = vunpack.c.l.b16 %v3429
      %v3558 = vunpack.c.l.b16 %v3430
      %v3559 = vunpack.c.l.b16 %v3431
      %v3560 = vunpack.c.l.b16 %v3432
      %v3561 = vunpack.c.l.b16 %v3433
      %v3562 = vpack.c.b16 %v3547, %v3546
      %v3563 = vpack.c.b16 %v3549, %v3548
      %v3564 = vpack.c.b16 %v3551, %v3550
      %v3565 = vpack.c.b16 %v3553, %v3552
      %v3566 = vpack.c.b16 %v3555, %v3554
      %v3567 = vpack.c.b16 %v3557, %v3556
      %v3568 = vpack.c.b16 %v3559, %v3558
      %v3569 = vpack.c.b16 %v3561, %v3560
      %3578 = vmatprep.subr.bf16.mxu0 0
      %3579 = vmatpush1.bf16.msra.mxu0 %v3562
      %3580 = vmatprep.subr.bf16.mxu0 0
      %3581 = vmatpush1.bf16.msra.mxu0 %v3563
      %3582 = vmatprep.subr.bf16.mxu0 0
      %3583 = vmatpush1.bf16.msra.mxu0 %v3564
      %3584 = vmatprep.subr.bf16.mxu0 0
      %3585 = vmatpush1.bf16.msra.mxu0 %v3565
      %3586 = vmatprep.subr.bf16.mxu0 0
      %3587 = vmatpush1.bf16.msra.mxu0 %v3566
      %3588 = vmatprep.subr.bf16.mxu0 0
      %3589 = vmatpush1.bf16.msra.mxu0 %v3567
      %3590 = vmatprep.subr.bf16.mxu0 0
      %3591 = vmatpush1.bf16.msra.mxu0 %v3568
      %3592 = vmatprep.subr.bf16.mxu0 0
      %3593 = vmatpush1.bf16.msra.mxu0 %v3569
      %3594 = vmatprep.subr.bf16.mxu0 0
      %3595 = vmatpush1.bf16.msra.mxu0 0
      %3596 = vmatprep.subr.bf16.mxu0 0
      %3597 = vmatpush1.bf16.msra.mxu0 0
      %3598 = vmatprep.subr.bf16.mxu0 0
      %3599 = vmatpush1.bf16.msra.mxu0 0
      %3600 = vmatprep.subr.bf16.mxu0 0
      %3601 = vmatpush1.bf16.msra.mxu0 0
      %3602 = vmatprep.subr.bf16.mxu0 0
      %3603 = vmatpush1.bf16.msra.mxu0 0
      %3604 = vmatprep.subr.bf16.mxu0 0
      %3605 = vmatpush1.bf16.msra.mxu0 0
      %3606 = vmatprep.subr.bf16.mxu0 0
      %3607 = vmatpush1.bf16.msra.mxu0 0
      %3608 = vmatprep.subr.bf16.mxu0 0
      %3609 = vmatpush1.bf16.msra.mxu0 0
      %3610 = vmatprep.mubr.bf16.mxu0 0
      %3611 = vmatmul.mubr.bf16.gmra.mrb[0].mxu0 %v3498
      %v3612 = vpop.f32.mrb[0].mxu0
      %v3613 = vadd.f32 0.0, %v3612
      %v3614 = vpop.f32.mrb[0].mxu0
      %v3615 = vpop.f32.mrb[0].mxu0
      %v3616 = vadd.f32 0.0, %v3615
      %v3617 = vpop.f32.mrb[0].mxu0
      %3618 = vmatprep.mubr.bf16.mxu0 0
      %3619 = vmatmul.mubr.bf16.gmra.mrb[0].mxu0 %v3499
      %v3620 = vpop.f32.mrb[0].mxu0
      %v3621 = vadd.f32 0.0, %v3620
      %v3622 = vpop.f32.mrb[0].mxu0
      %v3623 = vpop.f32.mrb[0].mxu0
      %v3624 = vadd.f32 0.0, %v3623
      %v3625 = vpop.f32.mrb[0].mxu0
      %3626 = vmatprep.mubr.bf16.mxu0 0
      %3627 = vmatmul.mubr.bf16.gmra.mrb[0].mxu0 %v3500
      %v3628 = vpop.f32.mrb[0].mxu0
      %v3629 = vadd.f32 0.0, %v3628
      %v3630 = vpop.f32.mrb[0].mxu0
      %v3631 = vpop.f32.mrb[0].mxu0
      %v3632 = vadd.f32 0.0, %v3631
      %v3633 = vpop.f32.mrb[0].mxu0
      %3634 = vmatprep.mubr.bf16.mxu0 0
      %3635 = vmatmul.mubr.bf16.gmra.mrb[0].mxu0 %v3501
      %v3636 = vpop.f32.mrb[0].mxu0
      %v3637 = vadd.f32 0.0, %v3636
      %v3638 = vpop.f32.mrb[0].mxu0
      %v3639 = vpop.f32.mrb[0].mxu0
      %v3640 = vadd.f32 0.0, %v3639
      %v3641 = vpop.f32.mrb[0].mxu0
      %3642 = vmatprep.mubr.bf16.mxu0 0
      %3643 = vmatmul.mubr.bf16.gmra.mrb[0].mxu0 %v3502
      %v3644 = vpop.f32.mrb[0].mxu0
      %v3645 = vadd.f32 0.0, %v3644
      %v3646 = vpop.f32.mrb[0].mxu0
      %v3647 = vpop.f32.mrb[0].mxu0
      %v3648 = vadd.f32 0.0, %v3647
      %v3649 = vpop.f32.mrb[0].mxu0
      %3650 = vmatprep.mubr.bf16.mxu0 0
      %3651 = vmatmul.mubr.bf16.gmra.mrb[0].mxu0 %v3503
      %v3652 = vpop.f32.mrb[0].mxu0
      %v3653 = vadd.f32 0.0, %v3652
      %v3654 = vpop.f32.mrb[0].mxu0
      %v3655 = vpop.f32.mrb[0].mxu0
      %v3656 = vadd.f32 0.0, %v3655
      %v3657 = vpop.f32.mrb[0].mxu0
      %3658 = vmatprep.mubr.bf16.mxu0 0
      %3659 = vmatmul.mubr.bf16.gmra.mrb[0].mxu0 %v3504
      %v3660 = vpop.f32.mrb[0].mxu0
      %v3661 = vadd.f32 0.0, %v3660
      %v3662 = vpop.f32.mrb[0].mxu0
      %v3663 = vpop.f32.mrb[0].mxu0
      %v3664 = vadd.f32 0.0, %v3663
      %v3665 = vpop.f32.mrb[0].mxu0
      %3666 = vmatprep.mubr.bf16.mxu0 0
      %3667 = vmatmul.mubr.bf16.gmra.mrb[0].mxu0 %v3505
      %v3668 = vpop.f32.mrb[0].mxu0
      %v3669 = vadd.f32 0.0, %v3668
      %v3670 = vpop.f32.mrb[0].mxu0
      %v3671 = vpop.f32.mrb[0].mxu0
      %v3672 = vadd.f32 0.0, %v3671
      %v3673 = vpop.f32.mrb[0].mxu0
      %3674 = vmatprep.mubr.bf16.mxu0 0
      %3675 = vmatmul.mubr.bf16.gmra.mrb[0].mxu0 %v3506
      %v3676 = vpop.f32.mrb[0].mxu0
      %v3677 = vadd.f32 0.0, %v3676
      %v3678 = vpop.f32.mrb[0].mxu0
      %v3679 = vpop.f32.mrb[0].mxu0
      %v3680 = vadd.f32 0.0, %v3679
      %v3681 = vpop.f32.mrb[0].mxu0
      %3682 = vmatprep.mubr.bf16.mxu0 0
      %3683 = vmatmul.mubr.bf16.gmra.mrb[0].mxu0 %v3507
      %v3684 = vpop.f32.mrb[0].mxu0
      %v3685 = vadd.f32 0.0, %v3684
      %v3686 = vpop.f32.mrb[0].mxu0
      %v3687 = vpop.f32.mrb[0].mxu0
      %v3688 = vadd.f32 0.0, %v3687
      %v3689 = vpop.f32.mrb[0].mxu0
      %3690 = vmatprep.mubr.bf16.mxu0 0
      %3691 = vmatmul.mubr.bf16.gmra.mrb[0].mxu0 %v3508
      %v3692 = vpop.f32.mrb[0].mxu0
      %v3693 = vadd.f32 0.0, %v3692
      %v3694 = vpop.f32.mrb[0].mxu0
      %v3695 = vpop.f32.mrb[0].mxu0
      %v3696 = vadd.f32 0.0, %v3695
      %v3697 = vpop.f32.mrb[0].mxu0
      %3698 = vmatprep.mubr.bf16.mxu0 0
      %3699 = vmatmul.mubr.bf16.gmra.mrb[0].mxu0 %v3509
      %v3700 = vpop.f32.mrb[0].mxu0
      %v3701 = vadd.f32 0.0, %v3700
      %v3702 = vpop.f32.mrb[0].mxu0
      %v3703 = vpop.f32.mrb[0].mxu0
      %v3704 = vadd.f32 0.0, %v3703
      %v3705 = vpop.f32.mrb[0].mxu0
      %3706 = vmatprep.mubr.bf16.mxu0 0
      %3707 = vmatmul.mubr.bf16.gmra.mrb[0].mxu0 %v3510
      %v3708 = vpop.f32.mrb[0].mxu0
      %v3709 = vadd.f32 0.0, %v3708
      %v3710 = vpop.f32.mrb[0].mxu0
      %v3711 = vpop.f32.mrb[0].mxu0
      %v3712 = vadd.f32 0.0, %v3711
      %v3713 = vpop.f32.mrb[0].mxu0
      %3714 = vmatprep.mubr.bf16.mxu0 0
      %3715 = vmatmul.mubr.bf16.gmra.mrb[0].mxu0 %v3511
      %v3716 = vpop.f32.mrb[0].mxu0
      %v3717 = vadd.f32 0.0, %v3716
      %v3718 = vpop.f32.mrb[0].mxu0
      %v3719 = vpop.f32.mrb[0].mxu0
      %v3720 = vadd.f32 0.0, %v3719
      %v3721 = vpop.f32.mrb[0].mxu0
      %3722 = vmatprep.mubr.bf16.mxu0 0
      %3723 = vmatmul.mubr.bf16.gmra.mrb[0].mxu0 %v3512
      %v3724 = vpop.f32.mrb[0].mxu0
      %v3725 = vadd.f32 0.0, %v3724
      %v3726 = vpop.f32.mrb[0].mxu0
      %v3727 = vpop.f32.mrb[0].mxu0
      %v3728 = vadd.f32 0.0, %v3727
      %v3729 = vpop.f32.mrb[0].mxu0
      %3730 = vmatprep.mubr.bf16.mxu0 0
      %3731 = vmatmul.mubr.bf16.gmra.mrb[0].mxu0 %v3513
      %v3732 = vpop.f32.mrb[0].mxu0
      %v3733 = vadd.f32 0.0, %v3732
      %v3734 = vpop.f32.mrb[0].mxu0
      %v3735 = vpop.f32.mrb[0].mxu0
      %v3736 = vadd.f32 0.0, %v3735
      %v3737 = vpop.f32.mrb[0].mxu0
      %3738 = vdwg.mxu0
      %v3739 = vadd.f32 %v3351, %v3613
      %v3740 = vadd.f32 %v3352, %v3616
      %v3741 = vadd.f32 %v3353, %v3621
      %v3742 = vadd.f32 %v3354, %v3624
      %v3743 = vadd.f32 %v3355, %v3629
      %v3744 = vadd.f32 %v3356, %v3632
      %v3745 = vadd.f32 %v3357, %v3637
      %v3746 = vadd.f32 %v3358, %v3640
      %v3747 = vadd.f32 %v3359, %v3645
      %v3748 = vadd.f32 %v3360, %v3648
      %v3749 = vadd.f32 %v3361, %v3653
      %v3750 = vadd.f32 %v3362, %v3656
      %v3751 = vadd.f32 %v3363, %v3661
      %v3752 = vadd.f32 %v3364, %v3664
      %v3753 = vadd.f32 %v3365, %v3669
      %v3754 = vadd.f32 %v3366, %v3672
      %v3755 = vadd.f32 %v3367, %v3677
      %v3756 = vadd.f32 %v3368, %v3680
      %v3757 = vadd.f32 %v3369, %v3685
      %v3758 = vadd.f32 %v3370, %v3688
      %v3759 = vadd.f32 %v3371, %v3693
      %v3760 = vadd.f32 %v3372, %v3696
      %v3761 = vadd.f32 %v3373, %v3701
      %v3762 = vadd.f32 %v3374, %v3704
      %v3763 = vadd.f32 %v3375, %v3709
      %v3764 = vadd.f32 %v3376, %v3712
      %v3765 = vadd.f32 %v3377, %v3717
      %v3766 = vadd.f32 %v3378, %v3720
      %v3767 = vadd.f32 %v3379, %v3725
      %v3768 = vadd.f32 %v3380, %v3728
      %v3769 = vadd.f32 %v3381, %v3733
      %v3770 = vadd.f32 %v3382, %v3736
      %v3771 = vld [vmem:[%s320] sm:$0x1]
      %v3773 = vlaneseq
      %v3774 = vshrl.u32 %v3773, 7
      %v3775 = vsub.s32 0, %v3774
      %v3776 = vrot.slane %v3771, %v3775
      %v3778 = vadd.f32 %v3739, %v3776
      %v3779 = vadd.f32 %v3740, %v3776
      %v3780 = vadd.f32 %v3741, %v3776
      %v3781 = vadd.f32 %v3742, %v3776
      %v3782 = vadd.f32 %v3743, %v3776
      %v3783 = vadd.f32 %v3744, %v3776
      %v3784 = vadd.f32 %v3745, %v3776
      %v3785 = vadd.f32 %v3746, %v3776
      %v3786 = vadd.f32 %v3747, %v3776
      %v3787 = vadd.f32 %v3748, %v3776
      %v3788 = vadd.f32 %v3749, %v3776
      %v3789 = vadd.f32 %v3750, %v3776
      %v3790 = vadd.f32 %v3751, %v3776
      %v3791 = vadd.f32 %v3752, %v3776
      %v3792 = vadd.f32 %v3753, %v3776
      %v3793 = vadd.f32 %v3754, %v3776
      %v3794 = vadd.f32 %v3755, %v3776
      %v3795 = vadd.f32 %v3756, %v3776
      %v3796 = vadd.f32 %v3757, %v3776
      %v3797 = vadd.f32 %v3758, %v3776
      %v3798 = vadd.f32 %v3759, %v3776
      %v3799 = vadd.f32 %v3760, %v3776
      %v3800 = vadd.f32 %v3761, %v3776
      %v3801 = vadd.f32 %v3762, %v3776
      %v3802 = vadd.f32 %v3763, %v3776
      %v3803 = vadd.f32 %v3764, %v3776
      %v3804 = vadd.f32 %v3765, %v3776
      %v3805 = vadd.f32 %v3766, %v3776
      %v3806 = vadd.f32 %v3767, %v3776
      %v3807 = vadd.f32 %v3768, %v3776
      %v3808 = vadd.f32 %v3769, %v3776
      %v3809 = vadd.f32 %v3770, %v3776
      %v3810 = vmax.f32 %v3778, 0.0
      %v3811 = vmax.f32 %v3779, 0.0
      %v3812 = vmax.f32 %v3780, 0.0
      %v3813 = vmax.f32 %v3781, 0.0
      %v3814 = vmax.f32 %v3782, 0.0
      %v3815 = vmax.f32 %v3783, 0.0
      %v3816 = vmax.f32 %v3784, 0.0
      %v3817 = vmax.f32 %v3785, 0.0
      %v3818 = vmax.f32 %v3786, 0.0
      %v3819 = vmax.f32 %v3787, 0.0
      %v3820 = vmax.f32 %v3788, 0.0
      %v3821 = vmax.f32 %v3789, 0.0
      %v3822 = vmax.f32 %v3790, 0.0
      %v3823 = vmax.f32 %v3791, 0.0
      %v3824 = vmax.f32 %v3792, 0.0
      %v3825 = vmax.f32 %v3793, 0.0
      %v3826 = vmax.f32 %v3794, 0.0
      %v3827 = vmax.f32 %v3795, 0.0
      %v3828 = vmax.f32 %v3796, 0.0
      %v3829 = vmax.f32 %v3797, 0.0
      %v3830 = vmax.f32 %v3798, 0.0
      %v3831 = vmax.f32 %v3799, 0.0
      %v3832 = vmax.f32 %v3800, 0.0
      %v3833 = vmax.f32 %v3801, 0.0
      %v3834 = vmax.f32 %v3802, 0.0
      %v3835 = vmax.f32 %v3803, 0.0
      %v3836 = vmax.f32 %v3804, 0.0
      %v3837 = vmax.f32 %v3805, 0.0
      %v3838 = vmax.f32 %v3806, 0.0
      %v3839 = vmax.f32 %v3807, 0.0
      %v3840 = vmax.f32 %v3808, 0.0
      %v3841 = vmax.f32 %v3809, 0.0
      %v3842 = vpack.c.bf16 %v3811, %v3810
      %v3843 = vpack.c.bf16 %v3813, %v3812
      %v3844 = vpack.c.bf16 %v3815, %v3814
      %v3845 = vpack.c.bf16 %v3817, %v3816
      %v3846 = vpack.c.bf16 %v3819, %v3818
      %v3847 = vpack.c.bf16 %v3821, %v3820
      %v3848 = vpack.c.bf16 %v3823, %v3822
      %v3849 = vpack.c.bf16 %v3825, %v3824
      %v3850 = vpack.c.bf16 %v3827, %v3826
      %v3851 = vpack.c.bf16 %v3829, %v3828
      %v3852 = vpack.c.bf16 %v3831, %v3830
      %v3853 = vpack.c.bf16 %v3833, %v3832
      %v3854 = vpack.c.bf16 %v3835, %v3834
      %v3855 = vpack.c.bf16 %v3837, %v3836
      %v3856 = vpack.c.bf16 %v3839, %v3838
      %v3857 = vpack.c.bf16 %v3841, %v3840
      %v3874 = vunpack.c.l.b16 %v3842
      %v3875 = vunpack.c.h.b16 %v3842
      %v3876 = vunpack.c.l.b16 %v3843
      %v3877 = vunpack.c.h.b16 %v3843
      %v3878 = vunpack.c.l.b16 %v3844
      %v3879 = vunpack.c.h.b16 %v3844
      %v3880 = vunpack.c.l.b16 %v3845
      %v3881 = vunpack.c.h.b16 %v3845
      %v3882 = vunpack.c.l.b16 %v3846
      %v3883 = vunpack.c.h.b16 %v3846
      %v3884 = vunpack.c.l.b16 %v3847
      %v3885 = vunpack.c.h.b16 %v3847
      %v3886 = vunpack.c.l.b16 %v3848
      %v3887 = vunpack.c.h.b16 %v3848
      %v3888 = vunpack.c.l.b16 %v3849
      %v3889 = vunpack.c.h.b16 %v3849
      %v3890 = vunpack.c.l.b16 %v3850
      %v3891 = vunpack.c.h.b16 %v3850
      %v3892 = vunpack.c.l.b16 %v3851
      %v3893 = vunpack.c.h.b16 %v3851
      %v3894 = vunpack.c.l.b16 %v3852
      %v3895 = vunpack.c.h.b16 %v3852
      %v3896 = vunpack.c.l.b16 %v3853
      %v3897 = vunpack.c.h.b16 %v3853
      %v3898 = vunpack.c.l.b16 %v3854
      %v3899 = vunpack.c.h.b16 %v3854
      %v3900 = vunpack.c.l.b16 %v3855
      %v3901 = vunpack.c.h.b16 %v3855
      %v3902 = vunpack.c.l.b16 %v3856
      %v3903 = vunpack.c.h.b16 %v3856
      %v3904 = vunpack.c.l.b16 %v3857
      %v3905 = vunpack.c.h.b16 %v3857
      %v3906 = vpack.c.b16 %v3874, %v3874
      %v3907 = vpack.c.b16 %v3875, %v3875
      %v3908 = vpack.c.b16 %v3876, %v3876
      %v3909 = vpack.c.b16 %v3877, %v3877
      %v3910 = vpack.c.b16 %v3878, %v3878
      %v3911 = vpack.c.b16 %v3879, %v3879
      %v3912 = vpack.c.b16 %v3880, %v3880
      %v3913 = vpack.c.b16 %v3881, %v3881
      %v3914 = vpack.c.b16 %v3882, %v3882
      %v3915 = vpack.c.b16 %v3883, %v3883
      %v3916 = vpack.c.b16 %v3884, %v3884
      %v3917 = vpack.c.b16 %v3885, %v3885
      %v3918 = vpack.c.b16 %v3886, %v3886
      %v3919 = vpack.c.b16 %v3887, %v3887
      %v3920 = vpack.c.b16 %v3888, %v3888
      %v3921 = vpack.c.b16 %v3889, %v3889
      %v3922 = vpack.c.b16 %v3890, %v3890
      %v3923 = vpack.c.b16 %v3891, %v3891
      %v3924 = vpack.c.b16 %v3892, %v3892
      %v3925 = vpack.c.b16 %v3893, %v3893
      %v3926 = vpack.c.b16 %v3894, %v3894
      %v3927 = vpack.c.b16 %v3895, %v3895
      %v3928 = vpack.c.b16 %v3896, %v3896
      %v3929 = vpack.c.b16 %v3897, %v3897
      %v3930 = vpack.c.b16 %v3898, %v3898
      %v3931 = vpack.c.b16 %v3899, %v3899
      %v3932 = vpack.c.b16 %v3900, %v3900
      %v3933 = vpack.c.b16 %v3901, %v3901
      %v3934 = vpack.c.b16 %v3902, %v3902
      %v3935 = vpack.c.b16 %v3903, %v3903
      %v3936 = vpack.c.b16 %v3904, %v3904
      %v3937 = vpack.c.b16 %v3905, %v3905
      %3970 = vst [vmem:[%s332] sm:$0xf] %v3906
      %3971 = vst [vmem:[%s332 + $0x4] sm:$0xf] %v3907
      %3972 = vst [vmem:[%s332 + $0x8] sm:$0xf] %v3908
      %3973 = vst [vmem:[%s332 + $0xc] sm:$0xf] %v3909
      %3974 = vst [vmem:[%s332 + $0x10] sm:$0xf] %v3910
      %3975 = vst [vmem:[%s332 + $0x14] sm:$0xf] %v3911
      %3976 = vst [vmem:[%s332 + $0x18] sm:$0xf] %v3912
      %3977 = vst [vmem:[%s332 + $0x1c] sm:$0xf] %v3913
      %3978 = vst [vmem:[%s332 + $0x20] sm:$0xf] %v3914
      %3979 = vst [vmem:[%s332 + $0x24] sm:$0xf] %v3915
      %3980 = vst [vmem:[%s332 + $0x28] sm:$0xf] %v3916
      %3981 = vst [vmem:[%s332 + $0x2c] sm:$0xf] %v3917
      %3982 = vst [vmem:[%s332 + $0x30] sm:$0xf] %v3918
      %3983 = vst [vmem:[%s332 + $0x34] sm:$0xf] %v3919
      %3984 = vst [vmem:[%s332 + $0x38] sm:$0xf] %v3920
      %3985 = vst [vmem:[%s332 + $0x3c] sm:$0xf] %v3921
      %3986 = vst [vmem:[%s332 + $0x40] sm:$0xf] %v3922
      %3987 = vst [vmem:[%s332 + $0x44] sm:$0xf] %v3923
      %3988 = vst [vmem:[%s332 + $0x48] sm:$0xf] %v3924
      %3989 = vst [vmem:[%s332 + $0x4c] sm:$0xf] %v3925
      %3990 = vst [vmem:[%s332 + $0x50] sm:$0xf] %v3926
      %3991 = vst [vmem:[%s332 + $0x54] sm:$0xf] %v3927
      %3992 = vst [vmem:[%s332 + $0x58] sm:$0xf] %v3928
      %3993 = vst [vmem:[%s332 + $0x5c] sm:$0xf] %v3929
      %3994 = vst [vmem:[%s332 + $0x60] sm:$0xf] %v3930
      %3995 = vst [vmem:[%s332 + $0x64] sm:$0xf] %v3931
      %3996 = vst [vmem:[%s332 + $0x68] sm:$0xf] %v3932
      %3997 = vst [vmem:[%s332 + $0x6c] sm:$0xf] %v3933
      %3998 = vst [vmem:[%s332 + $0x70] sm:$0xf] %v3934
      %3999 = vst [vmem:[%s332 + $0x74] sm:$0xf] %v3935
      %4000 = vst [vmem:[%s332 + $0x78] sm:$0xf] %v3936
      %4001 = vst [vmem:[%s332 + $0x7c] sm:$0xf] %v3937
      %s4002 = smul.u32 32, %s23
      %p4003 = scmp.lt.s32.totalorder %s21, 1
      %s4004 = scalar_select %p4003, %s21, 1
      %p4005 = scmp.lt.s32.totalorder %s4002, 31
      %s4006 = scalar_select %p4005, %s4002, 31
      %p4007 = scmp.lt.s32.totalorder %s22, 0
      %s4008 = scalar_select %p4007, %s22, 0
      %s4009 = sadd.s32 %s4008, %s4006
      %s4010 = smul.addr %s4004, 32
      %s4011 = sadd.s32 %s4009, %s4010
      %s4012 = smul.addr %s4011, 4
      %s4013 = scalar_lea.vmem %s5, %s4012
      // Predicated region
      $region41: #{refine_forward.4} parent=39 // pred_check
        %p4014 = pneg %p187
      $region42: #{refine_forward.4} parent=39 // pred_check_branch
        %4016 = sbr.rel (%p4014) target = $region44
      $region43: #{refine_forward.4} parent=39 // pred_region
        %s4017 = smul.u32 32, %s23
      $region44: #{refine_forward.4} parent=39 // pred_fallthru
        _
    $region40: #{refine_forward.4} parent=5 // pred_fallthru
      _
    %p4018 = scmp.le.s32.totalorder 2, %s11
    // Predicated region
    $region45: #{refine_forward.4} parent=5 // pred_check
      %p4019 = pneg %p4018
    $region46: #{refine_forward.4} parent=5 // pred_check_branch
      %4021 = sbr.rel (%p4019) target = $region48
    $region47: #{refine_forward.4} parent=5 // pred_region
      %s4022 = ssub.s32 %s11, 2
      // Predicated region
      $region49: #{refine_forward.4} parent=47 // pred_check
        %p4023 = pneg %p193
      $region50: #{refine_forward.4} parent=47 // pred_check_branch
        %4025 = sbr.rel (%p4023) target = $region52
      $region51: #{refine_forward.4} parent=47 // pred_region
        %s4026 = smul.u32 32, %s26
        %p4027 = scmp.lt.s32.totalorder %s24, 1
        %s4028 = scalar_select %p4027, %s24, 1
        %p4029 = scmp.lt.s32.totalorder %s4026, 31
        %s4030 = scalar_select %p4029, %s4026, 31
        %p4031 = scmp.lt.s32.totalorder %s25, 0
        %s4032 = scalar_select %p4031, %s25, 0
        %s4033 = sadd.s32 %s4032, %s4030
        %s4034 = smul.addr %s4028, 32
        %s4035 = sadd.s32 %s4033, %s4034
        %s4036 = smul.addr %s4035, 4
        %s4037 = scalar_lea.vmem %s5, %s4036
      $region52: #{refine_forward.4} parent=47 // pred_fallthru
        _
    $region48: #{refine_forward.4} parent=5 // pred_fallthru
      _
  $region6: #{refine_forward.4} parent=0 // loop_footer
    %s15 = sadd.s32 1, %s11
  $region7: #{refine_forward.4} parent=0 // loop_footer_branch
    %10 = sbr.rel target = $region3
  $region8: #{refine_forward.4} parent=0 // loop_exit
    _

// kernel: refine_forward.5
$region0: #{refine_forward.5}
  #allocation0 [shape = 'u32[]', space=smem, size = 0x4, offset = 0x4, fixed_abs, tag = 'smem constant byte address 0x4 - core index']
  #allocation1 [shape = 'u32[144,128]{1,0:T(1,128)}', space=vmem, size = 0x12000, scoped, tag = 'internal scratch']
  %s0 = inlined_call_operand.vmem [shape: bf16[2,288,128], index: 0, kind: input, shape index: {}]
  %s1 = inlined_call_operand.vmem [shape: bf16[2,288,128], index: 1, kind: input, shape index: {}]
  %s2 = inlined_call_operand.vmem [shape: bf16[2,288,128], index: 2, kind: input, shape index: {}]
  %s3 = inlined_call_operand.vmem [shape: bf16[9,128,128], index: 3, kind: input, shape index: {}]
  %s4 = inlined_call_operand.vmem [shape: f32[1,128], index: 4, kind: input, shape index: {}]
  %s5 = inlined_call_operand.vmem [shape: f32[2,256,128], index: 5, kind: input, shape index: {}]
  %s6 = inlined_call_operand.hbm [shape: f32[2,256,128], index: 6, kind: output, shape index: {}]
  %s7 = sld [smem:[#allocation0]]
  $region57: #{refine_forward.5} parent=0
    _
  %s9 = ssub.s32 1, %s7
  %s10 = scalar_select 0, %s9, %s7
  $region1: #{refine_forward.5} parent=0
    #allocation2 [shape = 'u8[262144]{0}', space=vmem, size = 0x40000, scoped, tag = 'output window, operand 0']
    #allocation3 [shape = 's32[2]{0}', space=sflag, size = 0x8, scoped, tag = 'scoped memory for refine_forward.5']
    %11 = vsyncpa [#allocation3], 0
    %s12 = scalar_lea.sflag [#allocation3], 1
    %13 = vsyncpa %s12, 0
    loop: start=0, step=1, limit=4
    $region2: #{refine_forward.5} parent=1 // loop_pre_header
      _
    $region3: #{refine_forward.5} parent=1 // loop_header
      %s15 = sphi 0, %s19
      %p16 = scmp.ge.s32.totalorder %s15, 4
      %s22 = sphi 0, %s41
      %s23 = sphi 0, %s37
      %s24 = sphi 0, %s33
      %s25 = sphi 0, %s22
      %s26 = sphi 0, %s23
      %s27 = sphi 0, %s24
      %s28 = sphi 0, %s25
      %s29 = sphi 0, %s26
      %s30 = sphi 0, %s27
      %s44 = sphi 0, %s46
      %s47 = sphi 0, %s44
      %s48 = sphi 0, %s47
      %s64 = sphi 0, %s48
      %s70 = sphi 0, %s72
      %s73 = sphi 0, %s70
      %s74 = sphi 0, %s73
      %s90 = sphi 0, %s74
      %s96 = sphi 0, %s98
      %s99 = sphi 0, %s96
      %s100 = sphi 0, %s99
      %s116 = sphi 0, %s100
      %s122 = sphi 0, %s124
      %s125 = sphi 0, %s122
      %s126 = sphi 0, %s125
      %s142 = sphi 0, %s126
      %s148 = sphi 0, %s150
      %s151 = sphi 0, %s148
      %s152 = sphi 0, %s151
      %s168 = sphi 0, %s152
      %s178 = sphi 0, %s180
      %s181 = sphi 0, %s178
      %s182 = sphi 0, %s181
      %s198 = sphi 0, %s182
      %s208 = sphi 0, %s210
      %s211 = sphi 0, %s208
      %s212 = sphi 0, %s211
      %s228 = sphi 0, %s212
    $region4: #{refine_forward.5} parent=1 // loop_header_branch
      %18 = sbr.rel (%p16) target = $region8
    $region5: #{refine_forward.5} parent=1 // loop_body
      %s20 = ssub.s32 %s15, 1
      %s21 = ssub.s32 %s15, 2
      %s31 = sadd.s32 1, %s24
      %p32 = scmp.ge.s32.totalorder %s31, 1
      %s33 = scalar_select %p32, 0, %s31
      %s34 = sadd.s32 1, %s23
      %s35 = scalar_select %p32, %s34, %s23
      %p36 = scmp.ge.s32.totalorder %s35, 1
      %s37 = scalar_select %p36, 0, %s35
      %s38 = sadd.s32 1, %s22
      %s39 = scalar_select %p36, %s38, %s22
      %p40 = scmp.ge.s32.totalorder %s39, 2
      %s41 = scalar_select %p40, 0, %s39
      %s42 = ssub.s32 %s22, %s41
      %p43 = scmp.eq.s32.totalorder %s42, 0
      %s45 = sadd.s32 %s44, 1
      %s46 = scalar_select %p43, %s44, %s45
      %p49 = pneg %p43
      %p50 = scmp.eq.s32.totalorder %s15, 1
      %p51 = por %p49, %p50
      %p52 = scmp.ne.s32.totalorder %s44, %s47
      %p53 = scmp.eq.s32.totalorder %s15, 0
      %p54 = por %p52, %p53
      %p55 = scmp.ne.s32.totalorder %s44, %s47
      %p56 = scmp.eq.s32.totalorder %s20, 1
      %p57 = por %p55, %p56
      %p58 = scmp.ne.s32.totalorder %s47, %s48
      %p59 = scmp.eq.s32.totalorder %s20, 0
      %p60 = por %p58, %p59
      %p61 = scmp.ne.s32.totalorder %s47, %s48
      %p62 = scmp.eq.s32.totalorder %s21, 1
      %p63 = por %p61, %p62
      %p65 = scmp.ne.s32.totalorder %s48, %s64
      %p66 = scmp.eq.s32.totalorder %s21, 0
      %p67 = por %p65, %p66
      %s68 = ssub.s32 %s22, %s41
      %p69 = scmp.eq.s32.totalorder %s68, 0
      %s71 = sadd.s32 %s70, 1
      %s72 = scalar_select %p69, %s70, %s71
      %p75 = pneg %p69
      %p76 = scmp.eq.s32.totalorder %s15, 1
      %p77 = por %p75, %p76
      %p78 = scmp.ne.s32.totalorder %s70, %s73
      %p79 = scmp.eq.s32.totalorder %s15, 0
      %p80 = por %p78, %p79
      %p81 = scmp.ne.s32.totalorder %s70, %s73
      %p82 = scmp.eq.s32.totalorder %s20, 1
      %p83 = por %p81, %p82
      %p84 = scmp.ne.s32.totalorder %s73, %s74
      %p85 = scmp.eq.s32.totalorder %s20, 0
      %p86 = por %p84, %p85
      %p87 = scmp.ne.s32.totalorder %s73, %s74
      %p88 = scmp.eq.s32.totalorder %s21, 1
      %p89 = por %p87, %p88
      %p91 = scmp.ne.s32.totalorder %s74, %s90
      %p92 = scmp.eq.s32.totalorder %s21, 0
      %p93 = por %p91, %p92
      %s94 = ssub.s32 %s22, %s41
      %p95 = scmp.eq.s32.totalorder %s94, 0
      %s97 = sadd.s32 %s96, 1
      %s98 = scalar_select %p95, %s96, %s97
      %p101 = pneg %p95
      %p102 = scmp.eq.s32.totalorder %s15, 1
      %p103 = por %p101, %p102
      %p104 = scmp.ne.s32.totalorder %s96, %s99
      %p105 = scmp.eq.s32.totalorder %s15, 0
      %p106 = por %p104, %p105
      %p107 = scmp.ne.s32.totalorder %s96, %s99
      %p108 = scmp.eq.s32.totalorder %s20, 1
      %p109 = por %p107, %p108
      %p110 = scmp.ne.s32.totalorder %s99, %s100
      %p111 = scmp.eq.s32.totalorder %s20, 0
      %p112 = por %p110, %p111
      %p113 = scmp.ne.s32.totalorder %s99, %s100
      %p114 = scmp.eq.s32.totalorder %s21, 1
      %p115 = por %p113, %p114
      %p117 = scmp.ne.s32.totalorder %s100, %s116
      %p118 = scmp.eq.s32.totalorder %s21, 0
      %p119 = por %p117, %p118
      %s120 = ssub.s32 %s23, %s37
      %p121 = scmp.eq.s32.totalorder %s120, 0
      %s123 = sadd.s32 %s122, 1
      %s124 = scalar_select %p121, %s122, %s123
      %p127 = pneg %p121
      %p128 = scmp.eq.s32.totalorder %s15, 1
      %p129 = por %p127, %p128
      %p130 = scmp.ne.s32.totalorder %s122, %s125
      %p131 = scmp.eq.s32.totalorder %s15, 0
      %p132 = por %p130, %p131
      %p133 = scmp.ne.s32.totalorder %s122, %s125
      %p134 = scmp.eq.s32.totalorder %s20, 1
      %p135 = por %p133, %p134
      %p136 = scmp.ne.s32.totalorder %s125, %s126
      %p137 = scmp.eq.s32.totalorder %s20, 0
      %p138 = por %p136, %p137
      %p139 = scmp.ne.s32.totalorder %s125, %s126
      %p140 = scmp.eq.s32.totalorder %s21, 1
      %p141 = por %p139, %p140
      %p143 = scmp.ne.s32.totalorder %s126, %s142
      %p144 = scmp.eq.s32.totalorder %s21, 0
      %p145 = por %p143, %p144
      %s146 = ssub.s32 %s23, %s37
      %p147 = scmp.eq.s32.totalorder %s146, 0
      %s149 = sadd.s32 %s148, 1
      %s150 = scalar_select %p147, %s148, %s149
      %p153 = pneg %p147
      %p154 = scmp.eq.s32.totalorder %s15, 1
      %p155 = por %p153, %p154
      %p156 = scmp.ne.s32.totalorder %s148, %s151
      %p157 = scmp.eq.s32.totalorder %s15, 0
      %p158 = por %p156, %p157
      %p159 = scmp.ne.s32.totalorder %s148, %s151
      %p160 = scmp.eq.s32.totalorder %s20, 1
      %p161 = por %p159, %p160
      %p162 = scmp.ne.s32.totalorder %s151, %s152
      %p163 = scmp.eq.s32.totalorder %s20, 0
      %p164 = por %p162, %p163
      %p165 = scmp.ne.s32.totalorder %s151, %s152
      %p166 = scmp.eq.s32.totalorder %s21, 1
      %p167 = por %p165, %p166
      %p169 = scmp.ne.s32.totalorder %s152, %s168
      %p170 = scmp.eq.s32.totalorder %s21, 0
      %p171 = por %p169, %p170
      %s172 = ssub.s32 %s22, %s41
      %s173 = ssub.s32 %s24, %s33
      %s174 = sor.u32 %s172, %s173
      %s175 = ssub.s32 %s23, %s37
      %s176 = sor.u32 %s174, %s175
      %p177 = scmp.eq.s32.totalorder %s176, 0
      %s179 = sadd.s32 %s178, 1
      %s180 = scalar_select %p177, %s178, %s179
      %p183 = pneg %p177
      %p184 = scmp.eq.s32.totalorder %s15, 1
      %p185 = por %p183, %p184
      %p186 = scmp.ne.s32.totalorder %s178, %s181
      %p187 = scmp.eq.s32.totalorder %s15, 0
      %p188 = por %p186, %p187
      %p189 = scmp.ne.s32.totalorder %s178, %s181
      %p190 = scmp.eq.s32.totalorder %s20, 1
      %p191 = por %p189, %p190
      %p192 = scmp.ne.s32.totalorder %s181, %s182
      %p193 = scmp.eq.s32.totalorder %s20, 0
      %p194 = por %p192, %p193
      %p195 = scmp.ne.s32.totalorder %s181, %s182
      %p196 = scmp.eq.s32.totalorder %s21, 1
      %p197 = por %p195, %p196
      %p199 = scmp.ne.s32.totalorder %s182, %s198
      %p200 = scmp.eq.s32.totalorder %s21, 0
      %p201 = por %p199, %p200
      %s202 = ssub.s32 %s22, %s41
      %s203 = ssub.s32 %s24, %s33
      %s204 = sor.u32 %s202, %s203
      %s205 = ssub.s32 %s23, %s37
      %s206 = sor.u32 %s204, %s205
      %p207 = scmp.eq.s32.totalorder %s206, 0
      %s209 = sadd.s32 %s208, 1
      %s210 = scalar_select %p207, %s208, %s209
      %p213 = pneg %p207
      %p214 = scmp.eq.s32.totalorder %s15, 1
      %p215 = por %p213, %p214
      %p216 = scmp.ne.s32.totalorder %s208, %s211
      %p217 = scmp.eq.s32.totalorder %s15, 0
      %p218 = por %p216, %p217
      %p219 = scmp.ne.s32.totalorder %s208, %s211
      %p220 = scmp.eq.s32.totalorder %s20, 1
      %p221 = por %p219, %p220
      %p222 = scmp.ne.s32.totalorder %s211, %s212
      %p223 = scmp.eq.s32.totalorder %s20, 0
      %p224 = por %p222, %p223
      %p225 = scmp.ne.s32.totalorder %s211, %s212
      %p226 = scmp.eq.s32.totalorder %s21, 1
      %p227 = por %p225, %p226
      %p229 = scmp.ne.s32.totalorder %s212, %s228
      %p230 = scmp.eq.s32.totalorder %s21, 0
      %p231 = por %p229, %p230
      %p232 = scmp.le.s32.totalorder 1, %s15
      %p233 = scmp.lt.s32.totalorder %s15, 3
      %p234 = pnand %p232, %p233
      %p235 = pneg %p234
      // Predicated region
      $region9: #{refine_forward.5} parent=5 // pred_check
        _
      $region10: #{refine_forward.5} parent=5 // pred_check_branch
        %237 = sbr.rel (%p234) target = $region12
      $region11: #{refine_forward.5} parent=5 // pred_region
        %s238 = ssub.s32 %s15, 1
        // Predicated region
        $region13: #{refine_forward.5} parent=11 // pred_check
          %p239 = pneg %p138
        $region14: #{refine_forward.5} parent=11 // pred_check_branch
          %241 = sbr.rel (%p239) target = $region16
        $region15: #{refine_forward.5} parent=11 // pred_region
          %p242 = scmp.lt.s32.totalorder %s26, 0
          %s243 = scalar_select %p242, %s26, 0
          %s244 = smul.addr %s243, 4
          %s245 = scalar_lea.vmem %s3, %s244
        $region16: #{refine_forward.5} parent=11 // pred_fallthru
          _
        // Predicated region
        $region17: #{refine_forward.5} parent=11 // pred_check
          %p246 = pneg %p164
        $region18: #{refine_forward.5} parent=11 // pred_check_branch
          %248 = sbr.rel (%p246) target = $region20
        $region19: #{refine_forward.5} parent=11 // pred_region
          %p249 = scmp.lt.s32.totalorder %s26, 0
          %s250 = scalar_select %p249, %s26, 0
          %s251 = scalar_lea.vmem %s4, %s250
        $region20: #{refine_forward.5} parent=11 // pred_fallthru
          _
      $region12: #{refine_forward.5} parent=5 // pred_fallthru
        _
      %p252 = scmp.lt.s32.totalorder %s15, 2
      // Predicated region
      $region21: #{refine_forward.5} parent=5 // pred_check
        %p253 = pneg %p252
      $region22: #{refine_forward.5} parent=5 // pred_check_branch
        %255 = sbr.rel (%p253) target = $region24
      $region23: #{refine_forward.5} parent=5 // pred_region
        // Predicated region
        $region25: #{refine_forward.5} parent=23 // pred_check
          %p256 = pneg %p54
        $region26: #{refine_forward.5} parent=23 // pred_check_branch
          %258 = sbr.rel (%p256) target = $region28
        $region27: #{refine_forward.5} parent=23 // pred_region
          %p259 = scmp.lt.s32.totalorder %s22, 1
          %s260 = scalar_select %p259, %s22, 1
          %s261 = smul.addr %s260, 36
          %s262 = smul.addr %s261, 4
          %s263 = scalar_lea.vmem %s0, %s262
        $region28: #{refine_forward.5} parent=23 // pred_fallthru
          _
        // Predicated region
        $region29: #{refine_forward.5} parent=23 // pred_check
          %p264 = pneg %p80
        $region30: #{refine_forward.5} parent=23 // pred_check_branch
          %266 = sbr.rel (%p264) target = $region32
        $region31: #{refine_forward.5} parent=23 // pred_region
          %p267 = scmp.lt.s32.totalorder %s22, 1
          %s268 = scalar_select %p267, %s22, 1
          %s269 = smul.addr %s268, 36
          %s270 = smul.addr %s269, 4
          %s271 = scalar_lea.vmem %s1, %s270
        $region32: #{refine_forward.5} parent=23 // pred_fallthru
          _
        // Predicated region
        $region33: #{refine_forward.5} parent=23 // pred_check
          %p272 = pneg %p106
        $region34: #{refine_forward.5} parent=23 // pred_check_branch
          %274 = sbr.rel (%p272) target = $region36
        $region35: #{refine_forward.5} parent=23 // pred_region
          %p275 = scmp.lt.s32.totalorder %s22, 1
          %s276 = scalar_select %p275, %s22, 1
          %s277 = smul.addr %s276, 36
          %s278 = smul.addr %s277, 4
          %s279 = scalar_lea.vmem %s2, %s278
        $region36: #{refine_forward.5} parent=23 // pred_fallthru
          _
        // Predicated region
        $region37: #{refine_forward.5} parent=23 // pred_check
          %p280 = pneg %p188
        $region38: #{refine_forward.5} parent=23 // pred_check_branch
          %282 = sbr.rel (%p280) target = $region40
        $region39: #{refine_forward.5} parent=23 // pred_region
          %s283 = smul.u32 32, %s24
          %p284 = scmp.lt.s32.totalorder %s22, 1
          %s285 = scalar_select %p284, %s22, 1
          %p286 = scmp.lt.s32.totalorder %s283, 31
          %s287 = scalar_select %p286, %s283, 31
          %p288 = scmp.lt.s32.totalorder %s23, 0
          %s289 = scalar_select %p288, %s23, 0
          %s290 = sadd.s32 %s289, %s287
          %s291 = smul.addr %s285, 32
          %s292 = sadd.s32 %s290, %s291
          %s293 = smul.addr %s292, 8
          %s294 = scalar_lea.vmem %s5, %s293
          %s295 = smul.u32 32, %s24
        $region40: #{refine_forward.5} parent=23 // pred_fallthru
          _
      $region24: #{refine_forward.5} parent=5 // pred_fallthru
        _
      %p296 = scmp.le.s32.totalorder 1, %s15
      %p297 = scmp.lt.s32.totalorder %s15, 3
      %p298 = pnand %p296, %p297
      %p299 = pneg %p298
      // Predicated region
      $region41: #{refine_forward.5} parent=5 // pred_check
        _
      $region42: #{refine_forward.5} parent=5 // pred_check_branch
        %301 = sbr.rel (%p298) target = $region44
      $region43: #{refine_forward.5} parent=5 // pred_region
        %s302 = ssub.s32 %s15, 1
        %p303 = scmp.lt.s32.totalorder %s25, 1
        %s304 = scalar_select %p303, %s25, 1
        %s305 = smul.addr %s304, 36
        %s306 = smul.addr %s305, 4
        %s307 = scalar_lea.vmem %s0, %s306
        %p308 = pneg %p60
        %p309 = pneg %p57
        %p310 = scmp.lt.s32.totalorder %s25, 1
        %s311 = scalar_select %p310, %s25, 1
        %s312 = smul.addr %s311, 36
        %s313 = smul.addr %s312, 4
        %s314 = scalar_lea.vmem %s1, %s313
        %p315 = pneg %p86
        %p316 = pneg %p83
        %p317 = scmp.lt.s32.totalorder %s25, 1
        %s318 = scalar_select %p317, %s25, 1
        %s319 = smul.addr %s318, 36
        %s320 = smul.addr %s319, 4
        %s321 = scalar_lea.vmem %s2, %s320
        %p322 = pneg %p112
        %p323 = pneg %p109
        %p324 = scmp.lt.s32.totalorder %s26, 0
        %s325 = scalar_select %p324, %s26, 0
        %s326 = smul.addr %s325, 4
        %s327 = scalar_lea.vmem %s3, %s326
        %p328 = pneg %p138
        %p329 = pneg %p135
        %p330 = scmp.lt.s32.totalorder %s26, 0
        %s331 = scalar_select %p330, %s26, 0
        %s332 = scalar_lea.vmem %s4, %s331
        %p333 = pneg %p164
        %p334 = pneg %p161
        %s335 = smul.u32 32, %s27
        %p336 = scmp.lt.s32.totalorder %s25, 1
        %s337 = scalar_select %p336, %s25, 1
        %p338 = scmp.lt.s32.totalorder %s335, 31
        %s339 = scalar_select %p338, %s335, 31
        %p340 = scmp.lt.s32.totalorder %s26, 0
        %s341 = scalar_select %p340, %s26, 0
        %s342 = sadd.s32 %s341, %s339
        %s343 = smul.addr %s337, 32
        %s344 = sadd.s32 %s342, %s343
        %s345 = smul.addr %s344, 8
        %s346 = scalar_lea.vmem %s5, %s345
        %p347 = pneg %p194
        %p348 = pneg %p191
        %p349 = pneg %p224
        %p350 = pneg %p221
        %s351 = sand.u32 %s211, 1
        %s352 = scalar_lea.sflag [#allocation3], %s351
        %s353 = sand.u32 %s211, 1
        %s354 = smul.addr %s353, 256
        %s355 = scalar_lea.vmem [#allocation2], %s354
        %p356 = scmp.lt.s32.totalorder %s25, 1
        %s357 = scalar_select %p356, %s25, 1
        %s358 = smul.addr %s357, 36
        %s359 = smul.addr %s358, 4
        %s360 = scalar_lea.vmem %s0, %s359
        %p361 = scmp.lt.s32.totalorder %s25, 1
        %s362 = scalar_select %p361, %s25, 1
        %s363 = smul.addr %s362, 36
        %s364 = smul.addr %s363, 4
        %s365 = scalar_lea.vmem %s1, %s364
        %p366 = scmp.lt.s32.totalorder %s25, 1
        %s367 = scalar_select %p366, %s25, 1
        %s368 = smul.addr %s367, 36
        %s369 = smul.addr %s368, 4
        %s370 = scalar_lea.vmem %s2, %s369
        %p371 = scmp.lt.s32.totalorder %s26, 0
        %s372 = scalar_select %p371, %s26, 0
        %s373 = smul.addr %s372, 4
        %s374 = scalar_lea.vmem %s3, %s373
        %p375 = scmp.lt.s32.totalorder %s26, 0
        %s376 = scalar_select %p375, %s26, 0
        %s377 = scalar_lea.vmem %s4, %s376
        %s378 = smul.u32 32, %s27
        %p379 = scmp.lt.s32.totalorder %s25, 1
        %s380 = scalar_select %p379, %s25, 1
        %p381 = scmp.lt.s32.totalorder %s378, 31
        %s382 = scalar_select %p381, %s378, 31
        %p383 = scmp.lt.s32.totalorder %s26, 0
        %s384 = scalar_select %p383, %s26, 0
        %s385 = sadd.s32 %s384, %s382
        %s386 = smul.addr %s380, 32
        %s387 = sadd.s32 %s385, %s386
        %s388 = smul.addr %s387, 8
        %s389 = scalar_lea.vmem %s5, %s388
        %s390 = smul.u32 32, %s27
        %s391 = smul.u32 32, %s27
        %s393 = smul.u32 %s27, 256
        %s394 = sshra.s32 %s393, 3
        %s395 = sand.u32 %s393, 7
        %s396 = smul.addr %s394, 4
        %s397 = scalar_lea.vmem %s360, %s396
        %v398 = vld [vmem:[%s397] sm:$0xf]
        %v399 = vld [vmem:[%s397 + $0x4] sm:$0xf]
        %v400 = vld [vmem:[%s397 + $0x8] sm:$0xf]
        %v401 = vld [vmem:[%s397 + $0xc] sm:$0xf]
        %v402 = vld [vmem:[%s397 + $0x10] sm:$0xf]
        %v403 = vld [vmem:[%s397 + $0x14] sm:$0xf]
        %v404 = vld [vmem:[%s397 + $0x18] sm:$0xf]
        %v405 = vld [vmem:[%s397 + $0x1c] sm:$0xf]
        %v406 = vld [vmem:[%s397 + $0x20] sm:$0xf]
        %v407 = vld [vmem:[%s397 + $0x24] sm:$0xf]
        %v408 = vld [vmem:[%s397 + $0x28] sm:$0xf]
        %v409 = vld [vmem:[%s397 + $0x2c] sm:$0xf]
        %v410 = vld [vmem:[%s397 + $0x30] sm:$0xf]
        %v411 = vld [vmem:[%s397 + $0x34] sm:$0xf]
        %v412 = vld [vmem:[%s397 + $0x38] sm:$0xf]
        %v413 = vld [vmem:[%s397 + $0x3c] sm:$0xf]
        %v414 = vld [vmem:[%s397 + $0x40] sm:$0xf]
        %v415 = vld [vmem:[%s397 + $0x44] sm:$0xf]
        %v416 = vld [vmem:[%s397 + $0x48] sm:$0xf]
        %v417 = vld [vmem:[%s397 + $0x4c] sm:$0xf]
        %v418 = vld [vmem:[%s397 + $0x50] sm:$0xf]
        %v419 = vld [vmem:[%s397 + $0x54] sm:$0xf]
        %v420 = vld [vmem:[%s397 + $0x58] sm:$0xf]
        %v421 = vld [vmem:[%s397 + $0x5c] sm:$0xf]
        %v422 = vld [vmem:[%s397 + $0x60] sm:$0xf]
        %v423 = vld [vmem:[%s397 + $0x64] sm:$0xf]
        %v424 = vld [vmem:[%s397 + $0x68] sm:$0xf]
        %v425 = vld [vmem:[%s397 + $0x6c] sm:$0xf]
        %v426 = vld [vmem:[%s397 + $0x70] sm:$0xf]
        %v427 = vld [vmem:[%s397 + $0x74] sm:$0xf]
        %v428 = vld [vmem:[%s397 + $0x78] sm:$0xf]
        %v429 = vld [vmem:[%s397 + $0x7c] sm:$0xf]
        %v430 = vld [vmem:[%s374] sm:$0xf]
        %v431 = vld [vmem:[%s374 + $0x4] sm:$0xf]
        %v432 = vld [vmem:[%s374 + $0x8] sm:$0xf]
        %v433 = vld [vmem:[%s374 + $0xc] sm:$0xf]
        %v434 = vld [vmem:[%s374 + $0x10] sm:$0xf]
        %v435 = vld [vmem:[%s374 + $0x14] sm:$0xf]
        %v436 = vld [vmem:[%s374 + $0x18] sm:$0xf]
        %v437 = vld [vmem:[%s374 + $0x1c] sm:$0xf]
        %v438 = vld [vmem:[%s374 + $0x20] sm:$0xf]
        %v439 = vld [vmem:[%s374 + $0x24] sm:$0xf]
        %v440 = vld [vmem:[%s374 + $0x28] sm:$0xf]
        %v441 = vld [vmem:[%s374 + $0x2c] sm:$0xf]
        %v442 = vld [vmem:[%s374 + $0x30] sm:$0xf]
        %v443 = vld [vmem:[%s374 + $0x34] sm:$0xf]
        %v444 = vld [vmem:[%s374 + $0x38] sm:$0xf]
        %v445 = vld [vmem:[%s374 + $0x3c] sm:$0xf]
        %s446 = sadd.s32 %s393, 16
        %s447 = sshra.s32 %s446, 3
        %s448 = sand.u32 %s446, 7
        %s449 = smul.addr %s447, 4
        %s450 = scalar_lea.vmem %s360, %s449
        %v451 = vld [vmem:[%s450] sm:$0xf]
        %v452 = vld [vmem:[%s450 + $0x4] sm:$0xf]
        %v453 = vld [vmem:[%s450 + $0x8] sm:$0xf]
        %v454 = vld [vmem:[%s450 + $0xc] sm:$0xf]
        %v455 = vld [vmem:[%s450 + $0x10] sm:$0xf]
        %v456 = vld [vmem:[%s450 + $0x14] sm:$0xf]
        %v457 = vld [vmem:[%s450 + $0x18] sm:$0xf]
        %v458 = vld [vmem:[%s450 + $0x1c] sm:$0xf]
        %v459 = vld [vmem:[%s450 + $0x20] sm:$0xf]
        %v460 = vld [vmem:[%s450 + $0x24] sm:$0xf]
        %v461 = vld [vmem:[%s450 + $0x28] sm:$0xf]
        %v462 = vld [vmem:[%s450 + $0x2c] sm:$0xf]
        %v463 = vld [vmem:[%s450 + $0x30] sm:$0xf]
        %v464 = vld [vmem:[%s450 + $0x34] sm:$0xf]
        %v465 = vld [vmem:[%s450 + $0x38] sm:$0xf]
        %v466 = vld [vmem:[%s450 + $0x3c] sm:$0xf]
        %v467 = vld [vmem:[%s450 + $0x40] sm:$0xf]
        %v468 = vld [vmem:[%s450 + $0x44] sm:$0xf]
        %v469 = vld [vmem:[%s450 + $0x48] sm:$0xf]
        %v470 = vld [vmem:[%s450 + $0x4c] sm:$0xf]
        %v471 = vld [vmem:[%s450 + $0x50] sm:$0xf]
        %v472 = vld [vmem:[%s450 + $0x54] sm:$0xf]
        %v473 = vld [vmem:[%s450 + $0x58] sm:$0xf]
        %v474 = vld [vmem:[%s450 + $0x5c] sm:$0xf]
        %v475 = vld [vmem:[%s450 + $0x60] sm:$0xf]
        %v476 = vld [vmem:[%s450 + $0x64] sm:$0xf]
        %v477 = vld [vmem:[%s450 + $0x68] sm:$0xf]
        %v478 = vld [vmem:[%s450 + $0x6c] sm:$0xf]
        %v479 = vld [vmem:[%s450 + $0x70] sm:$0xf]
        %v480 = vld [vmem:[%s450 + $0x74] sm:$0xf]
        %v481 = vld [vmem:[%s450 + $0x78] sm:$0xf]
        %v482 = vld [vmem:[%s450 + $0x7c] sm:$0xf]
        %s483 = scalar_lea.vmem %s374, 192
        %v484 = vld [vmem:[%s483] sm:$0xf]
        %v485 = vld [vmem:[%s483 + $0x4] sm:$0xf]
        %v486 = vld [vmem:[%s483 + $0x8] sm:$0xf]
        %v487 = vld [vmem:[%s483 + $0xc] sm:$0xf]
        %v488 = vld [vmem:[%s483 + $0x10] sm:$0xf]
        %v489 = vld [vmem:[%s483 + $0x14] sm:$0xf]
        %v490 = vld [vmem:[%s483 + $0x18] sm:$0xf]
        %v491 = vld [vmem:[%s483 + $0x1c] sm:$0xf]
        %v492 = vld [vmem:[%s483 + $0x20] sm:$0xf]
        %v493 = vld [vmem:[%s483 + $0x24] sm:$0xf]
        %v494 = vld [vmem:[%s483 + $0x28] sm:$0xf]
        %v495 = vld [vmem:[%s483 + $0x2c] sm:$0xf]
        %v496 = vld [vmem:[%s483 + $0x30] sm:$0xf]
        %v497 = vld [vmem:[%s483 + $0x34] sm:$0xf]
        %v498 = vld [vmem:[%s483 + $0x38] sm:$0xf]
        %v499 = vld [vmem:[%s483 + $0x3c] sm:$0xf]
        %v532 = vunpack.c.l.b16 %v451
        %v533 = vunpack.c.l.b16 %v452
        %v534 = vunpack.c.l.b16 %v453
        %v535 = vunpack.c.l.b16 %v454
        %v536 = vunpack.c.l.b16 %v455
        %v537 = vunpack.c.l.b16 %v456
        %v538 = vunpack.c.l.b16 %v457
        %v539 = vunpack.c.l.b16 %v458
        %v540 = vunpack.c.l.b16 %v459
        %v541 = vunpack.c.l.b16 %v460
        %v542 = vunpack.c.l.b16 %v461
        %v543 = vunpack.c.l.b16 %v462
        %v544 = vunpack.c.l.b16 %v463
        %v545 = vunpack.c.l.b16 %v464
        %v546 = vunpack.c.l.b16 %v465
        %v547 = vunpack.c.l.b16 %v466
        %v548 = vunpack.c.l.b16 %v467
        %v549 = vunpack.c.l.b16 %v468
        %v550 = vunpack.c.l.b16 %v469
        %v551 = vunpack.c.l.b16 %v470
        %v552 = vunpack.c.l.b16 %v471
        %v553 = vunpack.c.l.b16 %v472
        %v554 = vunpack.c.l.b16 %v473
        %v555 = vunpack.c.l.b16 %v474
        %v556 = vunpack.c.l.b16 %v475
        %v557 = vunpack.c.l.b16 %v476
        %v558 = vunpack.c.l.b16 %v477
        %v559 = vunpack.c.l.b16 %v478
        %v560 = vunpack.c.l.b16 %v479
        %v561 = vunpack.c.l.b16 %v480
        %v562 = vunpack.c.l.b16 %v481
        %v563 = vunpack.c.l.b16 %v482
        %v564 = vpack.c.b16 %v533, %v532
        %v565 = vpack.c.b16 %v535, %v534
        %v566 = vpack.c.b16 %v537, %v536
        %v567 = vpack.c.b16 %v539, %v538
        %v568 = vpack.c.b16 %v541, %v540
        %v569 = vpack.c.b16 %v543, %v542
        %v570 = vpack.c.b16 %v545, %v544
        %v571 = vpack.c.b16 %v547, %v546
        %v572 = vpack.c.b16 %v549, %v548
        %v573 = vpack.c.b16 %v551, %v550
        %v574 = vpack.c.b16 %v553, %v552
        %v575 = vpack.c.b16 %v555, %v554
        %v576 = vpack.c.b16 %v557, %v556
        %v577 = vpack.c.b16 %v559, %v558
        %v578 = vpack.c.b16 %v561, %v560
        %v579 = vpack.c.b16 %v563, %v562
        %v612 = vunpack.c.l.b16 %v484
        %v613 = vunpack.c.l.b16 %v485
        %v614 = vunpack.c.l.b16 %v486
        %v615 = vunpack.c.l.b16 %v487
        %v616 = vunpack.c.l.b16 %v488
        %v617 = vunpack.c.l.b16 %v489
        %v618 = vunpack.c.l.b16 %v490
        %v619 = vunpack.c.l.b16 %v491
        %v620 = vunpack.c.l.b16 %v492
        %v621 = vunpack.c.l.b16 %v493
        %v622 = vunpack.c.l.b16 %v494
        %v623 = vunpack.c.l.b16 %v495
        %v624 = vunpack.c.l.b16 %v496
        %v625 = vunpack.c.l.b16 %v497
        %v626 = vunpack.c.l.b16 %v498
        %v627 = vunpack.c.l.b16 %v499
        %v628 = vpack.c.b16 %v613, %v612
        %v629 = vpack.c.b16 %v615, %v614
        %v630 = vpack.c.b16 %v617, %v616
        %v631 = vpack.c.b16 %v619, %v618
        %v632 = vpack.c.b16 %v621, %v620
        %v633 = vpack.c.b16 %v623, %v622
        %v634 = vpack.c.b16 %v625, %v624
        %v635 = vpack.c.b16 %v627, %v626
        %644 = vmatprep.subr.bf16.mxu0 0
        %645 = vmatpush1.bf16.msra.mxu0 %v628
        %646 = vmatprep.subr.bf16.mxu0 0
        %647 = vmatpush1.bf16.msra.mxu0 %v629
        %648 = vmatprep.subr.bf16.mxu0 0
        %649 = vmatpush1.bf16.msra.mxu0 %v630
        %650 = vmatprep.subr.bf16.mxu0 0
        %651 = vmatpush1.bf16.msra.mxu0 %v631
        %652 = vmatprep.subr.bf16.mxu0 0
        %653 = vmatpush1.bf16.msra.mxu0 %v632
        %654 = vmatprep.subr.bf16.mxu0 0
        %655 = vmatpush1.bf16.msra.mxu0 %v633
        %656 = vmatprep.subr.bf16.mxu0 0
        %657 = vmatpush1.bf16.msra.mxu0 %v634
        %658 = vmatprep.subr.bf16.mxu0 0
        %659 = vmatpush1.bf16.msra.mxu0 %v635
        %660 = vmatprep.subr.bf16.mxu0 0
        %661 = vmatpush1.bf16.msra.mxu0 0
        %662 = vmatprep.subr.bf16.mxu0 0
        %663 = vmatpush1.bf16.msra.mxu0 0
        %664 = vmatprep.subr.bf16.mxu0 0
        %665 = vmatpush1.bf16.msra.mxu0 0
        %666 = vmatprep.subr.bf16.mxu0 0
        %667 = vmatpush1.bf16.msra.mxu0 0
        %668 = vmatprep.subr.bf16.mxu0 0
        %669 = vmatpush1.bf16.msra.mxu0 0
        %670 = vmatprep.subr.bf16.mxu0 0
        %671 = vmatpush1.bf16.msra.mxu0 0
        %672 = vmatprep.subr.bf16.mxu0 0
        %673 = vmatpush1.bf16.msra.mxu0 0
        %674 = vmatprep.subr.bf16.mxu0 0
        %675 = vmatpush1.bf16.msra.mxu0 0
        %676 = vmatprep.mubr.bf16.mxu0 0
        %677 = vmatmul.mubr.bf16.gmra.mrb[0].mxu0 %v564
        %v678 = vpop.f32.mrb[0].mxu0
        %v679 = vadd.f32 0.0, %v678
        %v680 = vpop.f32.mrb[0].mxu0
        %v681 = vpop.f32.mrb[0].mxu0
        %v682 = vadd.f32 0.0, %v681
        %v683 = vpop.f32.mrb[0].mxu0
        %684 = vmatprep.mubr.bf16.mxu0 0
        %685 = vmatmul.mubr.bf16.gmra.mrb[0].mxu0 %v565
        %v686 = vpop.f32.mrb[0].mxu0
        %v687 = vadd.f32 0.0, %v686
        %v688 = vpop.f32.mrb[0].mxu0
        %v689 = vpop.f32.mrb[0].mxu0
        %v690 = vadd.f32 0.0, %v689
        %v691 = vpop.f32.mrb[0].mxu0
        %692 = vmatprep.mubr.bf16.mxu0 0
        %693 = vmatmul.mubr.bf16.gmra.mrb[0].mxu0 %v566
        %v694 = vpop.f32.mrb[0].mxu0
        %v695 = vadd.f32 0.0, %v694
        %v696 = vpop.f32.mrb[0].mxu0
        %v697 = vpop.f32.mrb[0].mxu0
        %v698 = vadd.f32 0.0, %v697
        %v699 = vpop.f32.mrb[0].mxu0
        %700 = vmatprep.mubr.bf16.mxu0 0
        %701 = vmatmul.mubr.bf16.gmra.mrb[0].mxu0 %v567
        %v702 = vpop.f32.mrb[0].mxu0
        %v703 = vadd.f32 0.0, %v702
        %v704 = vpop.f32.mrb[0].mxu0
        %v705 = vpop.f32.mrb[0].mxu0
        %v706 = vadd.f32 0.0, %v705
        %v707 = vpop.f32.mrb[0].mxu0
        %708 = vmatprep.mubr.bf16.mxu0 0
        %709 = vmatmul.mubr.bf16.gmra.mrb[0].mxu0 %v568
        %v710 = vpop.f32.mrb[0].mxu0
        %v711 = vadd.f32 0.0, %v710
        %v712 = vpop.f32.mrb[0].mxu0
        %v713 = vpop.f32.mrb[0].mxu0
        %v714 = vadd.f32 0.0, %v713
        %v715 = vpop.f32.mrb[0].mxu0
        %716 = vmatprep.mubr.bf16.mxu0 0
        %717 = vmatmul.mubr.bf16.gmra.mrb[0].mxu0 %v569
        %v718 = vpop.f32.mrb[0].mxu0
        %v719 = vadd.f32 0.0, %v718
        %v720 = vpop.f32.mrb[0].mxu0
        %v721 = vpop.f32.mrb[0].mxu0
        %v722 = vadd.f32 0.0, %v721
        %v723 = vpop.f32.mrb[0].mxu0
        %724 = vmatprep.mubr.bf16.mxu0 0
        %725 = vmatmul.mubr.bf16.gmra.mrb[0].mxu0 %v570
        %v726 = vpop.f32.mrb[0].mxu0
        %v727 = vadd.f32 0.0, %v726
        %v728 = vpop.f32.mrb[0].mxu0
        %v729 = vpop.f32.mrb[0].mxu0
        %v730 = vadd.f32 0.0, %v729
        %v731 = vpop.f32.mrb[0].mxu0
        %732 = vmatprep.mubr.bf16.mxu0 0
        %733 = vmatmul.mubr.bf16.gmra.mrb[0].mxu0 %v571
        %v734 = vpop.f32.mrb[0].mxu0
        %v735 = vadd.f32 0.0, %v734
        %v736 = vpop.f32.mrb[0].mxu0
        %v737 = vpop.f32.mrb[0].mxu0
        %v738 = vadd.f32 0.0, %v737
        %v739 = vpop.f32.mrb[0].mxu0
        %740 = vmatprep.mubr.bf16.mxu0 0
        %741 = vmatmul.mubr.bf16.gmra.mrb[0].mxu0 %v572
        %v742 = vpop.f32.mrb[0].mxu0
        %v743 = vadd.f32 0.0, %v742
        %v744 = vpop.f32.mrb[0].mxu0
        %v745 = vpop.f32.mrb[0].mxu0
        %v746 = vadd.f32 0.0, %v745
        %v747 = vpop.f32.mrb[0].mxu0
        %748 = vmatprep.mubr.bf16.mxu0 0
        %749 = vmatmul.mubr.bf16.gmra.mrb[0].mxu0 %v573
        %v750 = vpop.f32.mrb[0].mxu0
        %v751 = vadd.f32 0.0, %v750
        %v752 = vpop.f32.mrb[0].mxu0
        %v753 = vpop.f32.mrb[0].mxu0
        %v754 = vadd.f32 0.0, %v753
        %v755 = vpop.f32.mrb[0].mxu0
        %756 = vmatprep.mubr.bf16.mxu0 0
        %757 = vmatmul.mubr.bf16.gmra.mrb[0].mxu0 %v574
        %v758 = vpop.f32.mrb[0].mxu0
        %v759 = vadd.f32 0.0, %v758
        %v760 = vpop.f32.mrb[0].mxu0
        %v761 = vpop.f32.mrb[0].mxu0
        %v762 = vadd.f32 0.0, %v761
        %v763 = vpop.f32.mrb[0].mxu0
        %764 = vmatprep.mubr.bf16.mxu0 0
        %765 = vmatmul.mubr.bf16.gmra.mrb[0].mxu0 %v575
        %v766 = vpop.f32.mrb[0].mxu0
        %v767 = vadd.f32 0.0, %v766
        %v768 = vpop.f32.mrb[0].mxu0
        %v769 = vpop.f32.mrb[0].mxu0
        %v770 = vadd.f32 0.0, %v769
        %v771 = vpop.f32.mrb[0].mxu0
        %772 = vmatprep.mubr.bf16.mxu0 0
        %773 = vmatmul.mubr.bf16.gmra.mrb[0].mxu0 %v576
        %v774 = vpop.f32.mrb[0].mxu0
        %v775 = vadd.f32 0.0, %v774
        %v776 = vpop.f32.mrb[0].mxu0
        %v777 = vpop.f32.mrb[0].mxu0
        %v778 = vadd.f32 0.0, %v777
        %v779 = vpop.f32.mrb[0].mxu0
        %780 = vmatprep.mubr.bf16.mxu0 0
        %781 = vmatmul.mubr.bf16.gmra.mrb[0].mxu0 %v577
        %v782 = vpop.f32.mrb[0].mxu0
        %v783 = vadd.f32 0.0, %v782
        %v784 = vpop.f32.mrb[0].mxu0
        %v785 = vpop.f32.mrb[0].mxu0
        %v786 = vadd.f32 0.0, %v785
        %v787 = vpop.f32.mrb[0].mxu0
        %788 = vmatprep.mubr.bf16.mxu0 0
        %789 = vmatmul.mubr.bf16.gmra.mrb[0].mxu0 %v578
        %v790 = vpop.f32.mrb[0].mxu0
        %v791 = vadd.f32 0.0, %v790
        %v792 = vpop.f32.mrb[0].mxu0
        %v793 = vpop.f32.mrb[0].mxu0
        %v794 = vadd.f32 0.0, %v793
        %v795 = vpop.f32.mrb[0].mxu0
        %796 = vmatprep.mubr.bf16.mxu0 0
        %797 = vmatmul.mubr.bf16.gmra.mrb[0].mxu0 %v579
        %v798 = vpop.f32.mrb[0].mxu0
        %v799 = vadd.f32 0.0, %v798
        %v800 = vpop.f32.mrb[0].mxu0
        %v801 = vpop.f32.mrb[0].mxu0
        %v802 = vadd.f32 0.0, %v801
        %v803 = vpop.f32.mrb[0].mxu0
        %804 = vdwg.mxu0
        %v837 = vunpack.c.l.b16 %v398
        %v838 = vunpack.c.l.b16 %v399
        %v839 = vunpack.c.l.b16 %v400
        %v840 = vunpack.c.l.b16 %v401
        %v841 = vunpack.c.l.b16 %v402
        %v842 = vunpack.c.l.b16 %v403
        %v843 = vunpack.c.l.b16 %v404
        %v844 = vunpack.c.l.b16 %v405
        %v845 = vunpack.c.l.b16 %v406
        %v846 = vunpack.c.l.b16 %v407
        %v847 = vunpack.c.l.b16 %v408
        %v848 = vunpack.c.l.b16 %v409
        %v849 = vunpack.c.l.b16 %v410
        %v850 = vunpack.c.l.b16 %v411
        %v851 = vunpack.c.l.b16 %v412
        %v852 = vunpack.c.l.b16 %v413
        %v853 = vunpack.c.l.b16 %v414
        %v854 = vunpack.c.l.b16 %v415
        %v855 = vunpack.c.l.b16 %v416
        %v856 = vunpack.c.l.b16 %v417
        %v857 = vunpack.c.l.b16 %v418
        %v858 = vunpack.c.l.b16 %v419
        %v859 = vunpack.c.l.b16 %v420
        %v860 = vunpack.c.l.b16 %v421
        %v861 = vunpack.c.l.b16 %v422
        %v862 = vunpack.c.l.b16 %v423
        %v863 = vunpack.c.l.b16 %v424
        %v864 = vunpack.c.l.b16 %v425
        %v865 = vunpack.c.l.b16 %v426
        %v866 = vunpack.c.l.b16 %v427
        %v867 = vunpack.c.l.b16 %v428
        %v868 = vunpack.c.l.b16 %v429
        %v869 = vpack.c.b16 %v838, %v837
        %v870 = vpack.c.b16 %v840, %v839
        %v871 = vpack.c.b16 %v842, %v841
        %v872 = vpack.c.b16 %v844, %v843
        %v873 = vpack.c.b16 %v846, %v845
        %v874 = vpack.c.b16 %v848, %v847
        %v875 = vpack.c.b16 %v850, %v849
        %v876 = vpack.c.b16 %v852, %v851
        %v877 = vpack.c.b16 %v854, %v853
        %v878 = vpack.c.b16 %v856, %v855
        %v879 = vpack.c.b16 %v858, %v857
        %v880 = vpack.c.b16 %v860, %v859
        %v881 = vpack.c.b16 %v862, %v861
        %v882 = vpack.c.b16 %v864, %v863
        %v883 = vpack.c.b16 %v866, %v865
        %v884 = vpack.c.b16 %v868, %v867
        %v917 = vunpack.c.l.b16 %v430
        %v918 = vunpack.c.l.b16 %v431
        %v919 = vunpack.c.l.b16 %v432
        %v920 = vunpack.c.l.b16 %v433
        %v921 = vunpack.c.l.b16 %v434
        %v922 = vunpack.c.l.b16 %v435
        %v923 = vunpack.c.l.b16 %v436
        %v924 = vunpack.c.l.b16 %v437
        %v925 = vunpack.c.l.b16 %v438
        %v926 = vunpack.c.l.b16 %v439
        %v927 = vunpack.c.l.b16 %v440
        %v928 = vunpack.c.l.b16 %v441
        %v929 = vunpack.c.l.b16 %v442
        %v930 = vunpack.c.l.b16 %v443
        %v931 = vunpack.c.l.b16 %v444
        %v932 = vunpack.c.l.b16 %v445
        %v933 = vpack.c.b16 %v918, %v917
        %v934 = vpack.c.b16 %v920, %v919
        %v935 = vpack.c.b16 %v922, %v921
        %v936 = vpack.c.b16 %v924, %v923
        %v937 = vpack.c.b16 %v926, %v925
        %v938 = vpack.c.b16 %v928, %v927
        %v939 = vpack.c.b16 %v930, %v929
        %v940 = vpack.c.b16 %v932, %v931
        %949 = vmatprep.subr.bf16.mxu0 0
        %950 = vmatpush1.bf16.msra.mxu0 %v933
        %951 = vmatprep.subr.bf16.mxu0 0
        %952 = vmatpush1.bf16.msra.mxu0 %v934
        %953 = vmatprep.subr.bf16.mxu0 0
        %954 = vmatpush1.bf16.msra.mxu0 %v935
        %955 = vmatprep.subr.bf16.mxu0 0
        %956 = vmatpush1.bf16.msra.mxu0 %v936
        %957 = vmatprep.subr.bf16.mxu0 0
        %958 = vmatpush1.bf16.msra.mxu0 %v937
        %959 = vmatprep.subr.bf16.mxu0 0
        %960 = vmatpush1.bf16.msra.mxu0 %v938
        %961 = vmatprep.subr.bf16.mxu0 0
        %962 = vmatpush1.bf16.msra.mxu0 %v939
        %963 = vmatprep.subr.bf16.mxu0 0
        %964 = vmatpush1.bf16.msra.mxu0 %v940
        %965 = vmatprep.subr.bf16.mxu0 0
        %966 = vmatpush1.bf16.msra.mxu0 0
        %967 = vmatprep.subr.bf16.mxu0 0
        %968 = vmatpush1.bf16.msra.mxu0 0
        %969 = vmatprep.subr.bf16.mxu0 0
        %970 = vmatpush1.bf16.msra.mxu0 0
        %971 = vmatprep.subr.bf16.mxu0 0
        %972 = vmatpush1.bf16.msra.mxu0 0
        %973 = vmatprep.subr.bf16.mxu0 0
        %974 = vmatpush1.bf16.msra.mxu0 0
        %975 = vmatprep.subr.bf16.mxu0 0
        %976 = vmatpush1.bf16.msra.mxu0 0
        %977 = vmatprep.subr.bf16.mxu0 0
        %978 = vmatpush1.bf16.msra.mxu0 0
        %979 = vmatprep.subr.bf16.mxu0 0
        %980 = vmatpush1.bf16.msra.mxu0 0
        %981 = vmatprep.mubr.bf16.mxu0 0
        %982 = vmatmul.mubr.bf16.gmra.mrb[0].mxu0 %v869
        %v983 = vpop.f32.mrb[0].mxu0
        %v984 = vadd.f32 %v679, %v983
        %v985 = vpop.f32.mrb[0].mxu0
        %v986 = vpop.f32.mrb[0].mxu0
        %v987 = vadd.f32 %v682, %v986
        %v988 = vpop.f32.mrb[0].mxu0
        %989 = vmatprep.mubr.bf16.mxu0 0
        %990 = vmatmul.mubr.bf16.gmra.mrb[0].mxu0 %v870
        %v991 = vpop.f32.mrb[0].mxu0
        %v992 = vadd.f32 %v687, %v991
        %v993 = vpop.f32.mrb[0].mxu0
        %v994 = vpop.f32.mrb[0].mxu0
        %v995 = vadd.f32 %v690, %v994
        %v996 = vpop.f32.mrb[0].mxu0
        %997 = vmatprep.mubr.bf16.mxu0 0
        %998 = vmatmul.mubr.bf16.gmra.mrb[0].mxu0 %v871
        %v999 = vpop.f32.mrb[0].mxu0
        %v1000 = vadd.f32 %v695, %v999
        %v1001 = vpop.f32.mrb[0].mxu0
        %v1002 = vpop.f32.mrb[0].mxu0
        %v1003 = vadd.f32 %v698, %v1002
        %v1004 = vpop.f32.mrb[0].mxu0
        %1005 = vmatprep.mubr.bf16.mxu0 0
        %1006 = vmatmul.mubr.bf16.gmra.mrb[0].mxu0 %v872
        %v1007 = vpop.f32.mrb[0].mxu0
        %v1008 = vadd.f32 %v703, %v1007
        %v1009 = vpop.f32.mrb[0].mxu0
        %v1010 = vpop.f32.mrb[0].mxu0
        %v1011 = vadd.f32 %v706, %v1010
        %v1012 = vpop.f32.mrb[0].mxu0
        %1013 = vmatprep.mubr.bf16.mxu0 0
        %1014 = vmatmul.mubr.bf16.gmra.mrb[0].mxu0 %v873
        %v1015 = vpop.f32.mrb[0].mxu0
        %v1016 = vadd.f32 %v711, %v1015
        %v1017 = vpop.f32.mrb[0].mxu0
        %v1018 = vpop.f32.mrb[0].mxu0
        %v1019 = vadd.f32 %v714, %v1018
        %v1020 = vpop.f32.mrb[0].mxu0
        %1021 = vmatprep.mubr.bf16.mxu0 0
        %1022 = vmatmul.mubr.bf16.gmra.mrb[0].mxu0 %v874
        %v1023 = vpop.f32.mrb[0].mxu0
        %v1024 = vadd.f32 %v719, %v1023
        %v1025 = vpop.f32.mrb[0].mxu0
        %v1026 = vpop.f32.mrb[0].mxu0
        %v1027 = vadd.f32 %v722, %v1026
        %v1028 = vpop.f32.mrb[0].mxu0
        %1029 = vmatprep.mubr.bf16.mxu0 0
        %1030 = vmatmul.mubr.bf16.gmra.mrb[0].mxu0 %v875
        %v1031 = vpop.f32.mrb[0].mxu0
        %v1032 = vadd.f32 %v727, %v1031
        %v1033 = vpop.f32.mrb[0].mxu0
        %v1034 = vpop.f32.mrb[0].mxu0
        %v1035 = vadd.f32 %v730, %v1034
        %v1036 = vpop.f32.mrb[0].mxu0
        %1037 = vmatprep.mubr.bf16.mxu0 0
        %1038 = vmatmul.mubr.bf16.gmra.mrb[0].mxu0 %v876
        %v1039 = vpop.f32.mrb[0].mxu0
        %v1040 = vadd.f32 %v735, %v1039
        %v1041 = vpop.f32.mrb[0].mxu0
        %v1042 = vpop.f32.mrb[0].mxu0
        %v1043 = vadd.f32 %v738, %v1042
        %v1044 = vpop.f32.mrb[0].mxu0
        %1045 = vmatprep.mubr.bf16.mxu0 0
        %1046 = vmatmul.mubr.bf16.gmra.mrb[0].mxu0 %v877
        %v1047 = vpop.f32.mrb[0].mxu0
        %v1048 = vadd.f32 %v743, %v1047
        %v1049 = vpop.f32.mrb[0].mxu0
        %v1050 = vpop.f32.mrb[0].mxu0
        %v1051 = vadd.f32 %v746, %v1050
        %v1052 = vpop.f32.mrb[0].mxu0
        %1053 = vmatprep.mubr.bf16.mxu0 0
        %1054 = vmatmul.mubr.bf16.gmra.mrb[0].mxu0 %v878
        %v1055 = vpop.f32.mrb[0].mxu0
        %v1056 = vadd.f32 %v751, %v1055
        %v1057 = vpop.f32.mrb[0].mxu0
        %v1058 = vpop.f32.mrb[0].mxu0
        %v1059 = vadd.f32 %v754, %v1058
        %v1060 = vpop.f32.mrb[0].mxu0
        %1061 = vmatprep.mubr.bf16.mxu0 0
        %1062 = vmatmul.mubr.bf16.gmra.mrb[0].mxu0 %v879
        %v1063 = vpop.f32.mrb[0].mxu0
        %v1064 = vadd.f32 %v759, %v1063
        %v1065 = vpop.f32.mrb[0].mxu0
        %v1066 = vpop.f32.mrb[0].mxu0
        %v1067 = vadd.f32 %v762, %v1066
        %v1068 = vpop.f32.mrb[0].mxu0
        %1069 = vmatprep.mubr.bf16.mxu0 0
        %1070 = vmatmul.mubr.bf16.gmra.mrb[0].mxu0 %v880
        %v1071 = vpop.f32.mrb[0].mxu0
        %v1072 = vadd.f32 %v767, %v1071
        %v1073 = vpop.f32.mrb[0].mxu0
        %v1074 = vpop.f32.mrb[0].mxu0
        %v1075 = vadd.f32 %v770, %v1074
        %v1076 = vpop.f32.mrb[0].mxu0
        %1077 = vmatprep.mubr.bf16.mxu0 0
        %1078 = vmatmul.mubr.bf16.gmra.mrb[0].mxu0 %v881
        %v1079 = vpop.f32.mrb[0].mxu0
        %v1080 = vadd.f32 %v775, %v1079
        %v1081 = vpop.f32.mrb[0].mxu0
        %v1082 = vpop.f32.mrb[0].mxu0
        %v1083 = vadd.f32 %v778, %v1082
        %v1084 = vpop.f32.mrb[0].mxu0
        %1085 = vmatprep.mubr.bf16.mxu0 0
        %1086 = vmatmul.mubr.bf16.gmra.mrb[0].mxu0 %v882
        %v1087 = vpop.f32.mrb[0].mxu0
        %v1088 = vadd.f32 %v783, %v1087
        %v1089 = vpop.f32.mrb[0].mxu0
        %v1090 = vpop.f32.mrb[0].mxu0
        %v1091 = vadd.f32 %v786, %v1090
        %v1092 = vpop.f32.mrb[0].mxu0
        %1093 = vmatprep.mubr.bf16.mxu0 0
        %1094 = vmatmul.mubr.bf16.gmra.mrb[0].mxu0 %v883
        %v1095 = vpop.f32.mrb[0].mxu0
        %v1096 = vadd.f32 %v791, %v1095
        %v1097 = vpop.f32.mrb[0].mxu0
        %v1098 = vpop.f32.mrb[0].mxu0
        %v1099 = vadd.f32 %v794, %v1098
        %v1100 = vpop.f32.mrb[0].mxu0
        %1101 = vmatprep.mubr.bf16.mxu0 0
        %1102 = vmatmul.mubr.bf16.gmra.mrb[0].mxu0 %v884
        %v1103 = vpop.f32.mrb[0].mxu0
        %v1104 = vadd.f32 %v799, %v1103
        %v1105 = vpop.f32.mrb[0].mxu0
        %v1106 = vpop.f32.mrb[0].mxu0
        %v1107 = vadd.f32 %v802, %v1106
        %v1108 = vpop.f32.mrb[0].mxu0
        %1109 = vdwg.mxu0
        %s1110 = sadd.s32 %s393, 32
        %s1111 = sshra.s32 %s1110, 3
        %s1112 = sand.u32 %s1110, 7
        %s1113 = smul.addr %s1111, 4
        %s1114 = scalar_lea.vmem %s360, %s1113
        %v1115 = vld [vmem:[%s1114] sm:$0xf]
        %v1116 = vld [vmem:[%s1114 + $0x4] sm:$0xf]
        %v1117 = vld [vmem:[%s1114 + $0x8] sm:$0xf]
        %v1118 = vld [vmem:[%s1114 + $0xc] sm:$0xf]
        %v1119 = vld [vmem:[%s1114 + $0x10] sm:$0xf]
        %v1120 = vld [vmem:[%s1114 + $0x14] sm:$0xf]
        %v1121 = vld [vmem:[%s1114 + $0x18] sm:$0xf]
        %v1122 = vld [vmem:[%s1114 + $0x1c] sm:$0xf]
        %v1123 = vld [vmem:[%s1114 + $0x20] sm:$0xf]
        %v1124 = vld [vmem:[%s1114 + $0x24] sm:$0xf]
        %v1125 = vld [vmem:[%s1114 + $0x28] sm:$0xf]
        %v1126 = vld [vmem:[%s1114 + $0x2c] sm:$0xf]
        %v1127 = vld [vmem:[%s1114 + $0x30] sm:$0xf]
        %v1128 = vld [vmem:[%s1114 + $0x34] sm:$0xf]
        %v1129 = vld [vmem:[%s1114 + $0x38] sm:$0xf]
        %v1130 = vld [vmem:[%s1114 + $0x3c] sm:$0xf]
        %v1131 = vld [vmem:[%s1114 + $0x40] sm:$0xf]
        %v1132 = vld [vmem:[%s1114 + $0x44] sm:$0xf]
        %v1133 = vld [vmem:[%s1114 + $0x48] sm:$0xf]
        %v1134 = vld [vmem:[%s1114 + $0x4c] sm:$0xf]
        %v1135 = vld [vmem:[%s1114 + $0x50] sm:$0xf]
        %v1136 = vld [vmem:[%s1114 + $0x54] sm:$0xf]
        %v1137 = vld [vmem:[%s1114 + $0x58] sm:$0xf]
        %v1138 = vld [vmem:[%s1114 + $0x5c] sm:$0xf]
        %v1139 = vld [vmem:[%s1114 + $0x60] sm:$0xf]
        %v1140 = vld [vmem:[%s1114 + $0x64] sm:$0xf]
        %v1141 = vld [vmem:[%s1114 + $0x68] sm:$0xf]
        %v1142 = vld [vmem:[%s1114 + $0x6c] sm:$0xf]
        %v1143 = vld [vmem:[%s1114 + $0x70] sm:$0xf]
        %v1144 = vld [vmem:[%s1114 + $0x74] sm:$0xf]
        %v1145 = vld [vmem:[%s1114 + $0x78] sm:$0xf]
        %v1146 = vld [vmem:[%s1114 + $0x7c] sm:$0xf]
        %s1147 = scalar_lea.vmem %s374, 384
        %v1148 = vld [vmem:[%s1147] sm:$0xf]
        %v1149 = vld [vmem:[%s1147 + $0x4] sm:$0xf]
        %v1150 = vld [vmem:[%s1147 + $0x8] sm:$0xf]
        %v1151 = vld [vmem:[%s1147 + $0xc] sm:$0xf]
        %v1152 = vld [vmem:[%s1147 + $0x10] sm:$0xf]
        %v1153 = vld [vmem:[%s1147 + $0x14] sm:$0xf]
        %v1154 = vld [vmem:[%s1147 + $0x18] sm:$0xf]
        %v1155 = vld [vmem:[%s1147 + $0x1c] sm:$0xf]
        %v1156 = vld [vmem:[%s1147 + $0x20] sm:$0xf]
        %v1157 = vld [vmem:[%s1147 + $0x24] sm:$0xf]
        %v1158 = vld [vmem:[%s1147 + $0x28] sm:$0xf]
        %v1159 = vld [vmem:[%s1147 + $0x2c] sm:$0xf]
        %v1160 = vld [vmem:[%s1147 + $0x30] sm:$0xf]
        %v1161 = vld [vmem:[%s1147 + $0x34] sm:$0xf]
        %v1162 = vld [vmem:[%s1147 + $0x38] sm:$0xf]
        %v1163 = vld [vmem:[%s1147 + $0x3c] sm:$0xf]
        %v1196 = vunpack.c.l.b16 %v1115
        %v1197 = vunpack.c.l.b16 %v1116
        %v1198 = vunpack.c.l.b16 %v1117
        %v1199 = vunpack.c.l.b16 %v1118
        %v1200 = vunpack.c.l.b16 %v1119
        %v1201 = vunpack.c.l.b16 %v1120
        %v1202 = vunpack.c.l.b16 %v1121
        %v1203 = vunpack.c.l.b16 %v1122
        %v1204 = vunpack.c.l.b16 %v1123
        %v1205 = vunpack.c.l.b16 %v1124
        %v1206 = vunpack.c.l.b16 %v1125
        %v1207 = vunpack.c.l.b16 %v1126
        %v1208 = vunpack.c.l.b16 %v1127
        %v1209 = vunpack.c.l.b16 %v1128
        %v1210 = vunpack.c.l.b16 %v1129
        %v1211 = vunpack.c.l.b16 %v1130
        %v1212 = vunpack.c.l.b16 %v1131
        %v1213 = vunpack.c.l.b16 %v1132
        %v1214 = vunpack.c.l.b16 %v1133
        %v1215 = vunpack.c.l.b16 %v1134
        %v1216 = vunpack.c.l.b16 %v1135
        %v1217 = vunpack.c.l.b16 %v1136
        %v1218 = vunpack.c.l.b16 %v1137
        %v1219 = vunpack.c.l.b16 %v1138
        %v1220 = vunpack.c.l.b16 %v1139
        %v1221 = vunpack.c.l.b16 %v1140
        %v1222 = vunpack.c.l.b16 %v1141
        %v1223 = vunpack.c.l.b16 %v1142
        %v1224 = vunpack.c.l.b16 %v1143
        %v1225 = vunpack.c.l.b16 %v1144
        %v1226 = vunpack.c.l.b16 %v1145
        %v1227 = vunpack.c.l.b16 %v1146
        %v1228 = vpack.c.b16 %v1197, %v1196
        %v1229 = vpack.c.b16 %v1199, %v1198
        %v1230 = vpack.c.b16 %v1201, %v1200
        %v1231 = vpack.c.b16 %v1203, %v1202
        %v1232 = vpack.c.b16 %v1205, %v1204
        %v1233 = vpack.c.b16 %v1207, %v1206
        %v1234 = vpack.c.b16 %v1209, %v1208
        %v1235 = vpack.c.b16 %v1211, %v1210
        %v1236 = vpack.c.b16 %v1213, %v1212
        %v1237 = vpack.c.b16 %v1215, %v1214
        %v1238 = vpack.c.b16 %v1217, %v1216
        %v1239 = vpack.c.b16 %v1219, %v1218
        %v1240 = vpack.c.b16 %v1221, %v1220
        %v1241 = vpack.c.b16 %v1223, %v1222
        %v1242 = vpack.c.b16 %v1225, %v1224
        %v1243 = vpack.c.b16 %v1227, %v1226
        %v1276 = vunpack.c.l.b16 %v1148
        %v1277 = vunpack.c.l.b16 %v1149
        %v1278 = vunpack.c.l.b16 %v1150
        %v1279 = vunpack.c.l.b16 %v1151
        %v1280 = vunpack.c.l.b16 %v1152
        %v1281 = vunpack.c.l.b16 %v1153
        %v1282 = vunpack.c.l.b16 %v1154
        %v1283 = vunpack.c.l.b16 %v1155
        %v1284 = vunpack.c.l.b16 %v1156
        %v1285 = vunpack.c.l.b16 %v1157
        %v1286 = vunpack.c.l.b16 %v1158
        %v1287 = vunpack.c.l.b16 %v1159
        %v1288 = vunpack.c.l.b16 %v1160
        %v1289 = vunpack.c.l.b16 %v1161
        %v1290 = vunpack.c.l.b16 %v1162
        %v1291 = vunpack.c.l.b16 %v1163
        %v1292 = vpack.c.b16 %v1277, %v1276
        %v1293 = vpack.c.b16 %v1279, %v1278
        %v1294 = vpack.c.b16 %v1281, %v1280
        %v1295 = vpack.c.b16 %v1283, %v1282
        %v1296 = vpack.c.b16 %v1285, %v1284
        %v1297 = vpack.c.b16 %v1287, %v1286
        %v1298 = vpack.c.b16 %v1289, %v1288
        %v1299 = vpack.c.b16 %v1291, %v1290
        %1308 = vmatprep.subr.bf16.mxu0 0
        %1309 = vmatpush1.bf16.msra.mxu0 %v1292
        %1310 = vmatprep.subr.bf16.mxu0 0
        %1311 = vmatpush1.bf16.msra.mxu0 %v1293
        %1312 = vmatprep.subr.bf16.mxu0 0
        %1313 = vmatpush1.bf16.msra.mxu0 %v1294
        %1314 = vmatprep.subr.bf16.mxu0 0
        %1315 = vmatpush1.bf16.msra.mxu0 %v1295
        %1316 = vmatprep.subr.bf16.mxu0 0
        %1317 = vmatpush1.bf16.msra.mxu0 %v1296
        %1318 = vmatprep.subr.bf16.mxu0 0
        %1319 = vmatpush1.bf16.msra.mxu0 %v1297
        %1320 = vmatprep.subr.bf16.mxu0 0
        %1321 = vmatpush1.bf16.msra.mxu0 %v1298
        %1322 = vmatprep.subr.bf16.mxu0 0
        %1323 = vmatpush1.bf16.msra.mxu0 %v1299
        %1324 = vmatprep.subr.bf16.mxu0 0
        %1325 = vmatpush1.bf16.msra.mxu0 0
        %1326 = vmatprep.subr.bf16.mxu0 0
        %1327 = vmatpush1.bf16.msra.mxu0 0
        %1328 = vmatprep.subr.bf16.mxu0 0
        %1329 = vmatpush1.bf16.msra.mxu0 0
        %1330 = vmatprep.subr.bf16.mxu0 0
        %1331 = vmatpush1.bf16.msra.mxu0 0
        %1332 = vmatprep.subr.bf16.mxu0 0
        %1333 = vmatpush1.bf16.msra.mxu0 0
        %1334 = vmatprep.subr.bf16.mxu0 0
        %1335 = vmatpush1.bf16.msra.mxu0 0
        %1336 = vmatprep.subr.bf16.mxu0 0
        %1337 = vmatpush1.bf16.msra.mxu0 0
        %1338 = vmatprep.subr.bf16.mxu0 0
        %1339 = vmatpush1.bf16.msra.mxu0 0
        %1340 = vmatprep.mubr.bf16.mxu0 0
        %1341 = vmatmul.mubr.bf16.gmra.mrb[0].mxu0 %v1228
        %v1342 = vpop.f32.mrb[0].mxu0
        %v1343 = vadd.f32 0.0, %v1342
        %v1344 = vpop.f32.mrb[0].mxu0
        %v1345 = vpop.f32.mrb[0].mxu0
        %v1346 = vadd.f32 0.0, %v1345
        %v1347 = vpop.f32.mrb[0].mxu0
        %1348 = vmatprep.mubr.bf16.mxu0 0
        %1349 = vmatmul.mubr.bf16.gmra.mrb[0].mxu0 %v1229
        %v1350 = vpop.f32.mrb[0].mxu0
        %v1351 = vadd.f32 0.0, %v1350
        %v1352 = vpop.f32.mrb[0].mxu0
        %v1353 = vpop.f32.mrb[0].mxu0
        %v1354 = vadd.f32 0.0, %v1353
        %v1355 = vpop.f32.mrb[0].mxu0
        %1356 = vmatprep.mubr.bf16.mxu0 0
        %1357 = vmatmul.mubr.bf16.gmra.mrb[0].mxu0 %v1230
        %v1358 = vpop.f32.mrb[0].mxu0
        %v1359 = vadd.f32 0.0, %v1358
        %v1360 = vpop.f32.mrb[0].mxu0
        %v1361 = vpop.f32.mrb[0].mxu0
        %v1362 = vadd.f32 0.0, %v1361
        %v1363 = vpop.f32.mrb[0].mxu0
        %1364 = vmatprep.mubr.bf16.mxu0 0
        %1365 = vmatmul.mubr.bf16.gmra.mrb[0].mxu0 %v1231
        %v1366 = vpop.f32.mrb[0].mxu0
        %v1367 = vadd.f32 0.0, %v1366
        %v1368 = vpop.f32.mrb[0].mxu0
        %v1369 = vpop.f32.mrb[0].mxu0
        %v1370 = vadd.f32 0.0, %v1369
        %v1371 = vpop.f32.mrb[0].mxu0
        %1372 = vmatprep.mubr.bf16.mxu0 0
        %1373 = vmatmul.mubr.bf16.gmra.mrb[0].mxu0 %v1232
        %v1374 = vpop.f32.mrb[0].mxu0
        %v1375 = vadd.f32 0.0, %v1374
        %v1376 = vpop.f32.mrb[0].mxu0
        %v1377 = vpop.f32.mrb[0].mxu0
        %v1378 = vadd.f32 0.0, %v1377
        %v1379 = vpop.f32.mrb[0].mxu0
        %1380 = vmatprep.mubr.bf16.mxu0 0
        %1381 = vmatmul.mubr.bf16.gmra.mrb[0].mxu0 %v1233
        %v1382 = vpop.f32.mrb[0].mxu0
        %v1383 = vadd.f32 0.0, %v1382
        %v1384 = vpop.f32.mrb[0].mxu0
        %v1385 = vpop.f32.mrb[0].mxu0
        %v1386 = vadd.f32 0.0, %v1385
        %v1387 = vpop.f32.mrb[0].mxu0
        %1388 = vmatprep.mubr.bf16.mxu0 0
        %1389 = vmatmul.mubr.bf16.gmra.mrb[0].mxu0 %v1234
        %v1390 = vpop.f32.mrb[0].mxu0
        %v1391 = vadd.f32 0.0, %v1390
        %v1392 = vpop.f32.mrb[0].mxu0
        %v1393 = vpop.f32.mrb[0].mxu0
        %v1394 = vadd.f32 0.0, %v1393
        %v1395 = vpop.f32.mrb[0].mxu0
        %1396 = vmatprep.mubr.bf16.mxu0 0
        %1397 = vmatmul.mubr.bf16.gmra.mrb[0].mxu0 %v1235
        %v1398 = vpop.f32.mrb[0].mxu0
        %v1399 = vadd.f32 0.0, %v1398
        %v1400 = vpop.f32.mrb[0].mxu0
        %v1401 = vpop.f32.mrb[0].mxu0
        %v1402 = vadd.f32 0.0, %v1401
        %v1403 = vpop.f32.mrb[0].mxu0
        %1404 = vmatprep.mubr.bf16.mxu0 0
        %1405 = vmatmul.mubr.bf16.gmra.mrb[0].mxu0 %v1236
        %v1406 = vpop.f32.mrb[0].mxu0
        %v1407 = vadd.f32 0.0, %v1406
        %v1408 = vpop.f32.mrb[0].mxu0
        %v1409 = vpop.f32.mrb[0].mxu0
        %v1410 = vadd.f32 0.0, %v1409
        %v1411 = vpop.f32.mrb[0].mxu0
        %1412 = vmatprep.mubr.bf16.mxu0 0
        %1413 = vmatmul.mubr.bf16.gmra.mrb[0].mxu0 %v1237
        %v1414 = vpop.f32.mrb[0].mxu0
        %v1415 = vadd.f32 0.0, %v1414
        %v1416 = vpop.f32.mrb[0].mxu0
        %v1417 = vpop.f32.mrb[0].mxu0
        %v1418 = vadd.f32 0.0, %v1417
        %v1419 = vpop.f32.mrb[0].mxu0
        %1420 = vmatprep.mubr.bf16.mxu0 0
        %1421 = vmatmul.mubr.bf16.gmra.mrb[0].mxu0 %v1238
        %v1422 = vpop.f32.mrb[0].mxu0
        %v1423 = vadd.f32 0.0, %v1422
        %v1424 = vpop.f32.mrb[0].mxu0
        %v1425 = vpop.f32.mrb[0].mxu0
        %v1426 = vadd.f32 0.0, %v1425
        %v1427 = vpop.f32.mrb[0].mxu0
        %1428 = vmatprep.mubr.bf16.mxu0 0
        %1429 = vmatmul.mubr.bf16.gmra.mrb[0].mxu0 %v1239
        %v1430 = vpop.f32.mrb[0].mxu0
        %v1431 = vadd.f32 0.0, %v1430
        %v1432 = vpop.f32.mrb[0].mxu0
        %v1433 = vpop.f32.mrb[0].mxu0
        %v1434 = vadd.f32 0.0, %v1433
        %v1435 = vpop.f32.mrb[0].mxu0
        %1436 = vmatprep.mubr.bf16.mxu0 0
        %1437 = vmatmul.mubr.bf16.gmra.mrb[0].mxu0 %v1240
        %v1438 = vpop.f32.mrb[0].mxu0
        %v1439 = vadd.f32 0.0, %v1438
        %v1440 = vpop.f32.mrb[0].mxu0
        %v1441 = vpop.f32.mrb[0].mxu0
        %v1442 = vadd.f32 0.0, %v1441
        %v1443 = vpop.f32.mrb[0].mxu0
        %1444 = vmatprep.mubr.bf16.mxu0 0
        %1445 = vmatmul.mubr.bf16.gmra.mrb[0].mxu0 %v1241
        %v1446 = vpop.f32.mrb[0].mxu0
        %v1447 = vadd.f32 0.0, %v1446
        %v1448 = vpop.f32.mrb[0].mxu0
        %v1449 = vpop.f32.mrb[0].mxu0
        %v1450 = vadd.f32 0.0, %v1449
        %v1451 = vpop.f32.mrb[0].mxu0
        %1452 = vmatprep.mubr.bf16.mxu0 0
        %1453 = vmatmul.mubr.bf16.gmra.mrb[0].mxu0 %v1242
        %v1454 = vpop.f32.mrb[0].mxu0
        %v1455 = vadd.f32 0.0, %v1454
        %v1456 = vpop.f32.mrb[0].mxu0
        %v1457 = vpop.f32.mrb[0].mxu0
        %v1458 = vadd.f32 0.0, %v1457
        %v1459 = vpop.f32.mrb[0].mxu0
        %1460 = vmatprep.mubr.bf16.mxu0 0
        %1461 = vmatmul.mubr.bf16.gmra.mrb[0].mxu0 %v1243
        %v1462 = vpop.f32.mrb[0].mxu0
        %v1463 = vadd.f32 0.0, %v1462
        %v1464 = vpop.f32.mrb[0].mxu0
        %v1465 = vpop.f32.mrb[0].mxu0
        %v1466 = vadd.f32 0.0, %v1465
        %v1467 = vpop.f32.mrb[0].mxu0
        %1468 = vdwg.mxu0
        %v1469 = vadd.f32 %v984, %v1343
        %v1470 = vadd.f32 %v987, %v1346
        %v1471 = vadd.f32 %v992, %v1351
        %v1472 = vadd.f32 %v995, %v1354
        %v1473 = vadd.f32 %v1000, %v1359
        %v1474 = vadd.f32 %v1003, %v1362
        %v1475 = vadd.f32 %v1008, %v1367
        %v1476 = vadd.f32 %v1011, %v1370
        %v1477 = vadd.f32 %v1016, %v1375
        %v1478 = vadd.f32 %v1019, %v1378
        %v1479 = vadd.f32 %v1024, %v1383
        %v1480 = vadd.f32 %v1027, %v1386
        %v1481 = vadd.f32 %v1032, %v1391
        %v1482 = vadd.f32 %v1035, %v1394
        %v1483 = vadd.f32 %v1040, %v1399
        %v1484 = vadd.f32 %v1043, %v1402
        %v1485 = vadd.f32 %v1048, %v1407
        %v1486 = vadd.f32 %v1051, %v1410
        %v1487 = vadd.f32 %v1056, %v1415
        %v1488 = vadd.f32 %v1059, %v1418
        %v1489 = vadd.f32 %v1064, %v1423
        %v1490 = vadd.f32 %v1067, %v1426
        %v1491 = vadd.f32 %v1072, %v1431
        %v1492 = vadd.f32 %v1075, %v1434
        %v1493 = vadd.f32 %v1080, %v1439
        %v1494 = vadd.f32 %v1083, %v1442
        %v1495 = vadd.f32 %v1088, %v1447
        %v1496 = vadd.f32 %v1091, %v1450
        %v1497 = vadd.f32 %v1096, %v1455
        %v1498 = vadd.f32 %v1099, %v1458
        %v1499 = vadd.f32 %v1104, %v1463
        %v1500 = vadd.f32 %v1107, %v1466
        %s1501 = smul.addr %s394, 4
        %s1502 = scalar_lea.vmem %s365, %s1501
        %v1503 = vld [vmem:[%s1502] sm:$0xf]
        %v1504 = vld [vmem:[%s1502 + $0x4] sm:$0xf]
        %v1505 = vld [vmem:[%s1502 + $0x8] sm:$0xf]
        %v1506 = vld [vmem:[%s1502 + $0xc] sm:$0xf]
        %v1507 = vld [vmem:[%s1502 + $0x10] sm:$0xf]
        %v1508 = vld [vmem:[%s1502 + $0x14] sm:$0xf]
        %v1509 = vld [vmem:[%s1502 + $0x18] sm:$0xf]
        %v1510 = vld [vmem:[%s1502 + $0x1c] sm:$0xf]
        %v1511 = vld [vmem:[%s1502 + $0x20] sm:$0xf]
        %v1512 = vld [vmem:[%s1502 + $0x24] sm:$0xf]
        %v1513 = vld [vmem:[%s1502 + $0x28] sm:$0xf]
        %v1514 = vld [vmem:[%s1502 + $0x2c] sm:$0xf]
        %v1515 = vld [vmem:[%s1502 + $0x30] sm:$0xf]
        %v1516 = vld [vmem:[%s1502 + $0x34] sm:$0xf]
        %v1517 = vld [vmem:[%s1502 + $0x38] sm:$0xf]
        %v1518 = vld [vmem:[%s1502 + $0x3c] sm:$0xf]
        %v1519 = vld [vmem:[%s1502 + $0x40] sm:$0xf]
        %v1520 = vld [vmem:[%s1502 + $0x44] sm:$0xf]
        %v1521 = vld [vmem:[%s1502 + $0x48] sm:$0xf]
        %v1522 = vld [vmem:[%s1502 + $0x4c] sm:$0xf]
        %v1523 = vld [vmem:[%s1502 + $0x50] sm:$0xf]
        %v1524 = vld [vmem:[%s1502 + $0x54] sm:$0xf]
        %v1525 = vld [vmem:[%s1502 + $0x58] sm:$0xf]
        %v1526 = vld [vmem:[%s1502 + $0x5c] sm:$0xf]
        %v1527 = vld [vmem:[%s1502 + $0x60] sm:$0xf]
        %v1528 = vld [vmem:[%s1502 + $0x64] sm:$0xf]
        %v1529 = vld [vmem:[%s1502 + $0x68] sm:$0xf]
        %v1530 = vld [vmem:[%s1502 + $0x6c] sm:$0xf]
        %v1531 = vld [vmem:[%s1502 + $0x70] sm:$0xf]
        %v1532 = vld [vmem:[%s1502 + $0x74] sm:$0xf]
        %v1533 = vld [vmem:[%s1502 + $0x78] sm:$0xf]
        %v1534 = vld [vmem:[%s1502 + $0x7c] sm:$0xf]
        %s1535 = scalar_lea.vmem %s374, 64
        %v1536 = vld [vmem:[%s1535] sm:$0xf]
        %v1537 = vld [vmem:[%s1535 + $0x4] sm:$0xf]
        %v1538 = vld [vmem:[%s1535 + $0x8] sm:$0xf]
        %v1539 = vld [vmem:[%s1535 + $0xc] sm:$0xf]
        %v1540 = vld [vmem:[%s1535 + $0x10] sm:$0xf]
        %v1541 = vld [vmem:[%s1535 + $0x14] sm:$0xf]
        %v1542 = vld [vmem:[%s1535 + $0x18] sm:$0xf]
        %v1543 = vld [vmem:[%s1535 + $0x1c] sm:$0xf]
        %v1544 = vld [vmem:[%s1535 + $0x20] sm:$0xf]
        %v1545 = vld [vmem:[%s1535 + $0x24] sm:$0xf]
        %v1546 = vld [vmem:[%s1535 + $0x28] sm:$0xf]
        %v1547 = vld [vmem:[%s1535 + $0x2c] sm:$0xf]
        %v1548 = vld [vmem:[%s1535 + $0x30] sm:$0xf]
        %v1549 = vld [vmem:[%s1535 + $0x34] sm:$0xf]
        %v1550 = vld [vmem:[%s1535 + $0x38] sm:$0xf]
        %v1551 = vld [vmem:[%s1535 + $0x3c] sm:$0xf]
        %v1584 = vunpack.c.l.b16 %v1503
        %v1585 = vunpack.c.l.b16 %v1504
        %v1586 = vunpack.c.l.b16 %v1505
        %v1587 = vunpack.c.l.b16 %v1506
        %v1588 = vunpack.c.l.b16 %v1507
        %v1589 = vunpack.c.l.b16 %v1508
        %v1590 = vunpack.c.l.b16 %v1509
        %v1591 = vunpack.c.l.b16 %v1510
        %v1592 = vunpack.c.l.b16 %v1511
        %v1593 = vunpack.c.l.b16 %v1512
        %v1594 = vunpack.c.l.b16 %v1513
        %v1595 = vunpack.c.l.b16 %v1514
        %v1596 = vunpack.c.l.b16 %v1515
        %v1597 = vunpack.c.l.b16 %v1516
        %v1598 = vunpack.c.l.b16 %v1517
        %v1599 = vunpack.c.l.b16 %v1518
        %v1600 = vunpack.c.l.b16 %v1519
        %v1601 = vunpack.c.l.b16 %v1520
        %v1602 = vunpack.c.l.b16 %v1521
        %v1603 = vunpack.c.l.b16 %v1522
        %v1604 = vunpack.c.l.b16 %v1523
        %v1605 = vunpack.c.l.b16 %v1524
        %v1606 = vunpack.c.l.b16 %v1525
        %v1607 = vunpack.c.l.b16 %v1526
        %v1608 = vunpack.c.l.b16 %v1527
        %v1609 = vunpack.c.l.b16 %v1528
        %v1610 = vunpack.c.l.b16 %v1529
        %v1611 = vunpack.c.l.b16 %v1530
        %v1612 = vunpack.c.l.b16 %v1531
        %v1613 = vunpack.c.l.b16 %v1532
        %v1614 = vunpack.c.l.b16 %v1533
        %v1615 = vunpack.c.l.b16 %v1534
        %v1616 = vpack.c.b16 %v1585, %v1584
        %v1617 = vpack.c.b16 %v1587, %v1586
        %v1618 = vpack.c.b16 %v1589, %v1588
        %v1619 = vpack.c.b16 %v1591, %v1590
        %v1620 = vpack.c.b16 %v1593, %v1592
        %v1621 = vpack.c.b16 %v1595, %v1594
        %v1622 = vpack.c.b16 %v1597, %v1596
        %v1623 = vpack.c.b16 %v1599, %v1598
        %v1624 = vpack.c.b16 %v1601, %v1600
        %v1625 = vpack.c.b16 %v1603, %v1602
        %v1626 = vpack.c.b16 %v1605, %v1604
        %v1627 = vpack.c.b16 %v1607, %v1606
        %v1628 = vpack.c.b16 %v1609, %v1608
        %v1629 = vpack.c.b16 %v1611, %v1610
        %v1630 = vpack.c.b16 %v1613, %v1612
        %v1631 = vpack.c.b16 %v1615, %v1614
        %v1664 = vunpack.c.l.b16 %v1536
        %v1665 = vunpack.c.l.b16 %v1537
        %v1666 = vunpack.c.l.b16 %v1538
        %v1667 = vunpack.c.l.b16 %v1539
        %v1668 = vunpack.c.l.b16 %v1540
        %v1669 = vunpack.c.l.b16 %v1541
        %v1670 = vunpack.c.l.b16 %v1542
        %v1671 = vunpack.c.l.b16 %v1543
        %v1672 = vunpack.c.l.b16 %v1544
        %v1673 = vunpack.c.l.b16 %v1545
        %v1674 = vunpack.c.l.b16 %v1546
        %v1675 = vunpack.c.l.b16 %v1547
        %v1676 = vunpack.c.l.b16 %v1548
        %v1677 = vunpack.c.l.b16 %v1549
        %v1678 = vunpack.c.l.b16 %v1550
        %v1679 = vunpack.c.l.b16 %v1551
        %v1680 = vpack.c.b16 %v1665, %v1664
        %v1681 = vpack.c.b16 %v1667, %v1666
        %v1682 = vpack.c.b16 %v1669, %v1668
        %v1683 = vpack.c.b16 %v1671, %v1670
        %v1684 = vpack.c.b16 %v1673, %v1672
        %v1685 = vpack.c.b16 %v1675, %v1674
        %v1686 = vpack.c.b16 %v1677, %v1676
        %v1687 = vpack.c.b16 %v1679, %v1678
        %1696 = vmatprep.subr.bf16.mxu0 0
        %1697 = vmatpush1.bf16.msra.mxu0 %v1680
        %1698 = vmatprep.subr.bf16.mxu0 0
        %1699 = vmatpush1.bf16.msra.mxu0 %v1681
        %1700 = vmatprep.subr.bf16.mxu0 0
        %1701 = vmatpush1.bf16.msra.mxu0 %v1682
        %1702 = vmatprep.subr.bf16.mxu0 0
        %1703 = vmatpush1.bf16.msra.mxu0 %v1683
        %1704 = vmatprep.subr.bf16.mxu0 0
        %1705 = vmatpush1.bf16.msra.mxu0 %v1684
        %1706 = vmatprep.subr.bf16.mxu0 0
        %1707 = vmatpush1.bf16.msra.mxu0 %v1685
        %1708 = vmatprep.subr.bf16.mxu0 0
        %1709 = vmatpush1.bf16.msra.mxu0 %v1686
        %1710 = vmatprep.subr.bf16.mxu0 0
        %1711 = vmatpush1.bf16.msra.mxu0 %v1687
        %1712 = vmatprep.subr.bf16.mxu0 0
        %1713 = vmatpush1.bf16.msra.mxu0 0
        %1714 = vmatprep.subr.bf16.mxu0 0
        %1715 = vmatpush1.bf16.msra.mxu0 0
        %1716 = vmatprep.subr.bf16.mxu0 0
        %1717 = vmatpush1.bf16.msra.mxu0 0
        %1718 = vmatprep.subr.bf16.mxu0 0
        %1719 = vmatpush1.bf16.msra.mxu0 0
        %1720 = vmatprep.subr.bf16.mxu0 0
        %1721 = vmatpush1.bf16.msra.mxu0 0
        %1722 = vmatprep.subr.bf16.mxu0 0
        %1723 = vmatpush1.bf16.msra.mxu0 0
        %1724 = vmatprep.subr.bf16.mxu0 0
        %1725 = vmatpush1.bf16.msra.mxu0 0
        %1726 = vmatprep.subr.bf16.mxu0 0
        %1727 = vmatpush1.bf16.msra.mxu0 0
        %1728 = vmatprep.mubr.bf16.mxu0 0
        %1729 = vmatmul.mubr.bf16.gmra.mrb[0].mxu0 %v1616
        %v1730 = vpop.f32.mrb[0].mxu0
        %v1731 = vadd.f32 0.0, %v1730
        %v1732 = vpop.f32.mrb[0].mxu0
        %v1733 = vpop.f32.mrb[0].mxu0
        %v1734 = vadd.f32 0.0, %v1733
        %v1735 = vpop.f32.mrb[0].mxu0
        %1736 = vmatprep.mubr.bf16.mxu0 0
        %1737 = vmatmul.mubr.bf16.gmra.mrb[0].mxu0 %v1617
        %v1738 = vpop.f32.mrb[0].mxu0
        %v1739 = vadd.f32 0.0, %v1738
        %v1740 = vpop.f32.mrb[0].mxu0
        %v1741 = vpop.f32.mrb[0].mxu0
        %v1742 = vadd.f32 0.0, %v1741
        %v1743 = vpop.f32.mrb[0].mxu0
        %1744 = vmatprep.mubr.bf16.mxu0 0
        %1745 = vmatmul.mubr.bf16.gmra.mrb[0].mxu0 %v1618
        %v1746 = vpop.f32.mrb[0].mxu0
        %v1747 = vadd.f32 0.0, %v1746
        %v1748 = vpop.f32.mrb[0].mxu0
        %v1749 = vpop.f32.mrb[0].mxu0
        %v1750 = vadd.f32 0.0, %v1749
        %v1751 = vpop.f32.mrb[0].mxu0
        %1752 = vmatprep.mubr.bf16.mxu0 0
        %1753 = vmatmul.mubr.bf16.gmra.mrb[0].mxu0 %v1619
        %v1754 = vpop.f32.mrb[0].mxu0
        %v1755 = vadd.f32 0.0, %v1754
        %v1756 = vpop.f32.mrb[0].mxu0
        %v1757 = vpop.f32.mrb[0].mxu0
        %v1758 = vadd.f32 0.0, %v1757
        %v1759 = vpop.f32.mrb[0].mxu0
        %1760 = vmatprep.mubr.bf16.mxu0 0
        %1761 = vmatmul.mubr.bf16.gmra.mrb[0].mxu0 %v1620
        %v1762 = vpop.f32.mrb[0].mxu0
        %v1763 = vadd.f32 0.0, %v1762
        %v1764 = vpop.f32.mrb[0].mxu0
        %v1765 = vpop.f32.mrb[0].mxu0
        %v1766 = vadd.f32 0.0, %v1765
        %v1767 = vpop.f32.mrb[0].mxu0
        %1768 = vmatprep.mubr.bf16.mxu0 0
        %1769 = vmatmul.mubr.bf16.gmra.mrb[0].mxu0 %v1621
        %v1770 = vpop.f32.mrb[0].mxu0
        %v1771 = vadd.f32 0.0, %v1770
        %v1772 = vpop.f32.mrb[0].mxu0
        %v1773 = vpop.f32.mrb[0].mxu0
        %v1774 = vadd.f32 0.0, %v1773
        %v1775 = vpop.f32.mrb[0].mxu0
        %1776 = vmatprep.mubr.bf16.mxu0 0
        %1777 = vmatmul.mubr.bf16.gmra.mrb[0].mxu0 %v1622
        %v1778 = vpop.f32.mrb[0].mxu0
        %v1779 = vadd.f32 0.0, %v1778
        %v1780 = vpop.f32.mrb[0].mxu0
        %v1781 = vpop.f32.mrb[0].mxu0
        %v1782 = vadd.f32 0.0, %v1781
        %v1783 = vpop.f32.mrb[0].mxu0
        %1784 = vmatprep.mubr.bf16.mxu0 0
        %1785 = vmatmul.mubr.bf16.gmra.mrb[0].mxu0 %v1623
        %v1786 = vpop.f32.mrb[0].mxu0
        %v1787 = vadd.f32 0.0, %v1786
        %v1788 = vpop.f32.mrb[0].mxu0
        %v1789 = vpop.f32.mrb[0].mxu0
        %v1790 = vadd.f32 0.0, %v1789
        %v1791 = vpop.f32.mrb[0].mxu0
        %1792 = vmatprep.mubr.bf16.mxu0 0
        %1793 = vmatmul.mubr.bf16.gmra.mrb[0].mxu0 %v1624
        %v1794 = vpop.f32.mrb[0].mxu0
        %v1795 = vadd.f32 0.0, %v1794
        %v1796 = vpop.f32.mrb[0].mxu0
        %v1797 = vpop.f32.mrb[0].mxu0
        %v1798 = vadd.f32 0.0, %v1797
        %v1799 = vpop.f32.mrb[0].mxu0
        %1800 = vmatprep.mubr.bf16.mxu0 0
        %1801 = vmatmul.mubr.bf16.gmra.mrb[0].mxu0 %v1625
        %v1802 = vpop.f32.mrb[0].mxu0
        %v1803 = vadd.f32 0.0, %v1802
        %v1804 = vpop.f32.mrb[0].mxu0
        %v1805 = vpop.f32.mrb[0].mxu0
        %v1806 = vadd.f32 0.0, %v1805
        %v1807 = vpop.f32.mrb[0].mxu0
        %1808 = vmatprep.mubr.bf16.mxu0 0
        %1809 = vmatmul.mubr.bf16.gmra.mrb[0].mxu0 %v1626
        %v1810 = vpop.f32.mrb[0].mxu0
        %v1811 = vadd.f32 0.0, %v1810
        %v1812 = vpop.f32.mrb[0].mxu0
        %v1813 = vpop.f32.mrb[0].mxu0
        %v1814 = vadd.f32 0.0, %v1813
        %v1815 = vpop.f32.mrb[0].mxu0
        %1816 = vmatprep.mubr.bf16.mxu0 0
        %1817 = vmatmul.mubr.bf16.gmra.mrb[0].mxu0 %v1627
        %v1818 = vpop.f32.mrb[0].mxu0
        %v1819 = vadd.f32 0.0, %v1818
        %v1820 = vpop.f32.mrb[0].mxu0
        %v1821 = vpop.f32.mrb[0].mxu0
        %v1822 = vadd.f32 0.0, %v1821
        %v1823 = vpop.f32.mrb[0].mxu0
        %1824 = vmatprep.mubr.bf16.mxu0 0
        %1825 = vmatmul.mubr.bf16.gmra.mrb[0].mxu0 %v1628
        %v1826 = vpop.f32.mrb[0].mxu0
        %v1827 = vadd.f32 0.0, %v1826
        %v1828 = vpop.f32.mrb[0].mxu0
        %v1829 = vpop.f32.mrb[0].mxu0
        %v1830 = vadd.f32 0.0, %v1829
        %v1831 = vpop.f32.mrb[0].mxu0
        %1832 = vmatprep.mubr.bf16.mxu0 0
        %1833 = vmatmul.mubr.bf16.gmra.mrb[0].mxu0 %v1629
        %v1834 = vpop.f32.mrb[0].mxu0
        %v1835 = vadd.f32 0.0, %v1834
        %v1836 = vpop.f32.mrb[0].mxu0
        %v1837 = vpop.f32.mrb[0].mxu0
        %v1838 = vadd.f32 0.0, %v1837
        %v1839 = vpop.f32.mrb[0].mxu0
        %1840 = vmatprep.mubr.bf16.mxu0 0
        %1841 = vmatmul.mubr.bf16.gmra.mrb[0].mxu0 %v1630
        %v1842 = vpop.f32.mrb[0].mxu0
        %v1843 = vadd.f32 0.0, %v1842
        %v1844 = vpop.f32.mrb[0].mxu0
        %v1845 = vpop.f32.mrb[0].mxu0
        %v1846 = vadd.f32 0.0, %v1845
        %v1847 = vpop.f32.mrb[0].mxu0
        %1848 = vmatprep.mubr.bf16.mxu0 0
        %1849 = vmatmul.mubr.bf16.gmra.mrb[0].mxu0 %v1631
        %v1850 = vpop.f32.mrb[0].mxu0
        %v1851 = vadd.f32 0.0, %v1850
        %v1852 = vpop.f32.mrb[0].mxu0
        %v1853 = vpop.f32.mrb[0].mxu0
        %v1854 = vadd.f32 0.0, %v1853
        %v1855 = vpop.f32.mrb[0].mxu0
        %1856 = vdwg.mxu0
        %v1857 = vadd.f32 %v1469, %v1731
        %v1858 = vadd.f32 %v1470, %v1734
        %v1859 = vadd.f32 %v1471, %v1739
        %v1860 = vadd.f32 %v1472, %v1742
        %v1861 = vadd.f32 %v1473, %v1747
        %v1862 = vadd.f32 %v1474, %v1750
        %v1863 = vadd.f32 %v1475, %v1755
        %v1864 = vadd.f32 %v1476, %v1758
        %v1865 = vadd.f32 %v1477, %v1763
        %v1866 = vadd.f32 %v1478, %v1766
        %v1867 = vadd.f32 %v1479, %v1771
        %v1868 = vadd.f32 %v1480, %v1774
        %v1869 = vadd.f32 %v1481, %v1779
        %v1870 = vadd.f32 %v1482, %v1782
        %v1871 = vadd.f32 %v1483, %v1787
        %v1872 = vadd.f32 %v1484, %v1790
        %v1873 = vadd.f32 %v1485, %v1795
        %v1874 = vadd.f32 %v1486, %v1798
        %v1875 = vadd.f32 %v1487, %v1803
        %v1876 = vadd.f32 %v1488, %v1806
        %v1877 = vadd.f32 %v1489, %v1811
        %v1878 = vadd.f32 %v1490, %v1814
        %v1879 = vadd.f32 %v1491, %v1819
        %v1880 = vadd.f32 %v1492, %v1822
        %v1881 = vadd.f32 %v1493, %v1827
        %v1882 = vadd.f32 %v1494, %v1830
        %v1883 = vadd.f32 %v1495, %v1835
        %v1884 = vadd.f32 %v1496, %v1838
        %v1885 = vadd.f32 %v1497, %v1843
        %v1886 = vadd.f32 %v1498, %v1846
        %v1887 = vadd.f32 %v1499, %v1851
        %v1888 = vadd.f32 %v1500, %v1854
        %s1889 = smul.addr %s447, 4
        %s1890 = scalar_lea.vmem %s365, %s1889
        %v1891 = vld [vmem:[%s1890] sm:$0xf]
        %v1892 = vld [vmem:[%s1890 + $0x4] sm:$0xf]
        %v1893 = vld [vmem:[%s1890 + $0x8] sm:$0xf]
        %v1894 = vld [vmem:[%s1890 + $0xc] sm:$0xf]
        %v1895 = vld [vmem:[%s1890 + $0x10] sm:$0xf]
        %v1896 = vld [vmem:[%s1890 + $0x14] sm:$0xf]
        %v1897 = vld [vmem:[%s1890 + $0x18] sm:$0xf]
        %v1898 = vld [vmem:[%s1890 + $0x1c] sm:$0xf]
        %v1899 = vld [vmem:[%s1890 + $0x20] sm:$0xf]
        %v1900 = vld [vmem:[%s1890 + $0x24] sm:$0xf]
        %v1901 = vld [vmem:[%s1890 + $0x28] sm:$0xf]
        %v1902 = vld [vmem:[%s1890 + $0x2c] sm:$0xf]
        %v1903 = vld [vmem:[%s1890 + $0x30] sm:$0xf]
        %v1904 = vld [vmem:[%s1890 + $0x34] sm:$0xf]
        %v1905 = vld [vmem:[%s1890 + $0x38] sm:$0xf]
        %v1906 = vld [vmem:[%s1890 + $0x3c] sm:$0xf]
        %v1907 = vld [vmem:[%s1890 + $0x40] sm:$0xf]
        %v1908 = vld [vmem:[%s1890 + $0x44] sm:$0xf]
        %v1909 = vld [vmem:[%s1890 + $0x48] sm:$0xf]
        %v1910 = vld [vmem:[%s1890 + $0x4c] sm:$0xf]
        %v1911 = vld [vmem:[%s1890 + $0x50] sm:$0xf]
        %v1912 = vld [vmem:[%s1890 + $0x54] sm:$0xf]
        %v1913 = vld [vmem:[%s1890 + $0x58] sm:$0xf]
        %v1914 = vld [vmem:[%s1890 + $0x5c] sm:$0xf]
        %v1915 = vld [vmem:[%s1890 + $0x60] sm:$0xf]
        %v1916 = vld [vmem:[%s1890 + $0x64] sm:$0xf]
        %v1917 = vld [vmem:[%s1890 + $0x68] sm:$0xf]
        %v1918 = vld [vmem:[%s1890 + $0x6c] sm:$0xf]
        %v1919 = vld [vmem:[%s1890 + $0x70] sm:$0xf]
        %v1920 = vld [vmem:[%s1890 + $0x74] sm:$0xf]
        %v1921 = vld [vmem:[%s1890 + $0x78] sm:$0xf]
        %v1922 = vld [vmem:[%s1890 + $0x7c] sm:$0xf]
        %s1923 = scalar_lea.vmem %s374, 256
        %v1924 = vld [vmem:[%s1923] sm:$0xf]
        %v1925 = vld [vmem:[%s1923 + $0x4] sm:$0xf]
        %v1926 = vld [vmem:[%s1923 + $0x8] sm:$0xf]
        %v1927 = vld [vmem:[%s1923 + $0xc] sm:$0xf]
        %v1928 = vld [vmem:[%s1923 + $0x10] sm:$0xf]
        %v1929 = vld [vmem:[%s1923 + $0x14] sm:$0xf]
        %v1930 = vld [vmem:[%s1923 + $0x18] sm:$0xf]
        %v1931 = vld [vmem:[%s1923 + $0x1c] sm:$0xf]
        %v1932 = vld [vmem:[%s1923 + $0x20] sm:$0xf]
        %v1933 = vld [vmem:[%s1923 + $0x24] sm:$0xf]
        %v1934 = vld [vmem:[%s1923 + $0x28] sm:$0xf]
        %v1935 = vld [vmem:[%s1923 + $0x2c] sm:$0xf]
        %v1936 = vld [vmem:[%s1923 + $0x30] sm:$0xf]
        %v1937 = vld [vmem:[%s1923 + $0x34] sm:$0xf]
        %v1938 = vld [vmem:[%s1923 + $0x38] sm:$0xf]
        %v1939 = vld [vmem:[%s1923 + $0x3c] sm:$0xf]
        %v1972 = vunpack.c.l.b16 %v1891
        %v1973 = vunpack.c.l.b16 %v1892
        %v1974 = vunpack.c.l.b16 %v1893
        %v1975 = vunpack.c.l.b16 %v1894
        %v1976 = vunpack.c.l.b16 %v1895
        %v1977 = vunpack.c.l.b16 %v1896
        %v1978 = vunpack.c.l.b16 %v1897
        %v1979 = vunpack.c.l.b16 %v1898
        %v1980 = vunpack.c.l.b16 %v1899
        %v1981 = vunpack.c.l.b16 %v1900
        %v1982 = vunpack.c.l.b16 %v1901
        %v1983 = vunpack.c.l.b16 %v1902
        %v1984 = vunpack.c.l.b16 %v1903
        %v1985 = vunpack.c.l.b16 %v1904
        %v1986 = vunpack.c.l.b16 %v1905
        %v1987 = vunpack.c.l.b16 %v1906
        %v1988 = vunpack.c.l.b16 %v1907
        %v1989 = vunpack.c.l.b16 %v1908
        %v1990 = vunpack.c.l.b16 %v1909
        %v1991 = vunpack.c.l.b16 %v1910
        %v1992 = vunpack.c.l.b16 %v1911
        %v1993 = vunpack.c.l.b16 %v1912
        %v1994 = vunpack.c.l.b16 %v1913
        %v1995 = vunpack.c.l.b16 %v1914
        %v1996 = vunpack.c.l.b16 %v1915
        %v1997 = vunpack.c.l.b16 %v1916
        %v1998 = vunpack.c.l.b16 %v1917
        %v1999 = vunpack.c.l.b16 %v1918
        %v2000 = vunpack.c.l.b16 %v1919
        %v2001 = vunpack.c.l.b16 %v1920
        %v2002 = vunpack.c.l.b16 %v1921
        %v2003 = vunpack.c.l.b16 %v1922
        %v2004 = vpack.c.b16 %v1973, %v1972
        %v2005 = vpack.c.b16 %v1975, %v1974
        %v2006 = vpack.c.b16 %v1977, %v1976
        %v2007 = vpack.c.b16 %v1979, %v1978
        %v2008 = vpack.c.b16 %v1981, %v1980
        %v2009 = vpack.c.b16 %v1983, %v1982
        %v2010 = vpack.c.b16 %v1985, %v1984
        %v2011 = vpack.c.b16 %v1987, %v1986
        %v2012 = vpack.c.b16 %v1989, %v1988
        %v2013 = vpack.c.b16 %v1991, %v1990
        %v2014 = vpack.c.b16 %v1993, %v1992
        %v2015 = vpack.c.b16 %v1995, %v1994
        %v2016 = vpack.c.b16 %v1997, %v1996
        %v2017 = vpack.c.b16 %v1999, %v1998
        %v2018 = vpack.c.b16 %v2001, %v2000
        %v2019 = vpack.c.b16 %v2003, %v2002
        %v2052 = vunpack.c.l.b16 %v1924
        %v2053 = vunpack.c.l.b16 %v1925
        %v2054 = vunpack.c.l.b16 %v1926
        %v2055 = vunpack.c.l.b16 %v1927
        %v2056 = vunpack.c.l.b16 %v1928
        %v2057 = vunpack.c.l.b16 %v1929
        %v2058 = vunpack.c.l.b16 %v1930
        %v2059 = vunpack.c.l.b16 %v1931
        %v2060 = vunpack.c.l.b16 %v1932
        %v2061 = vunpack.c.l.b16 %v1933
        %v2062 = vunpack.c.l.b16 %v1934
        %v2063 = vunpack.c.l.b16 %v1935
        %v2064 = vunpack.c.l.b16 %v1936
        %v2065 = vunpack.c.l.b16 %v1937
        %v2066 = vunpack.c.l.b16 %v1938
        %v2067 = vunpack.c.l.b16 %v1939
        %v2068 = vpack.c.b16 %v2053, %v2052
        %v2069 = vpack.c.b16 %v2055, %v2054
        %v2070 = vpack.c.b16 %v2057, %v2056
        %v2071 = vpack.c.b16 %v2059, %v2058
        %v2072 = vpack.c.b16 %v2061, %v2060
        %v2073 = vpack.c.b16 %v2063, %v2062
        %v2074 = vpack.c.b16 %v2065, %v2064
        %v2075 = vpack.c.b16 %v2067, %v2066
        %2084 = vmatprep.subr.bf16.mxu0 0
        %2085 = vmatpush1.bf16.msra.mxu0 %v2068
        %2086 = vmatprep.subr.bf16.mxu0 0
        %2087 = vmatpush1.bf16.msra.mxu0 %v2069
        %2088 = vmatprep.subr.bf16.mxu0 0
        %2089 = vmatpush1.bf16.msra.mxu0 %v2070
        %2090 = vmatprep.subr.bf16.mxu0 0
        %2091 = vmatpush1.bf16.msra.mxu0 %v2071
        %2092 = vmatprep.subr.bf16.mxu0 0
        %2093 = vmatpush1.bf16.msra.mxu0 %v2072
        %2094 = vmatprep.subr.bf16.mxu0 0
        %2095 = vmatpush1.bf16.msra.mxu0 %v2073
        %2096 = vmatprep.subr.bf16.mxu0 0
        %2097 = vmatpush1.bf16.msra.mxu0 %v2074
        %2098 = vmatprep.subr.bf16.mxu0 0
        %2099 = vmatpush1.bf16.msra.mxu0 %v2075
        %2100 = vmatprep.subr.bf16.mxu0 0
        %2101 = vmatpush1.bf16.msra.mxu0 0
        %2102 = vmatprep.subr.bf16.mxu0 0
        %2103 = vmatpush1.bf16.msra.mxu0 0
        %2104 = vmatprep.subr.bf16.mxu0 0
        %2105 = vmatpush1.bf16.msra.mxu0 0
        %2106 = vmatprep.subr.bf16.mxu0 0
        %2107 = vmatpush1.bf16.msra.mxu0 0
        %2108 = vmatprep.subr.bf16.mxu0 0
        %2109 = vmatpush1.bf16.msra.mxu0 0
        %2110 = vmatprep.subr.bf16.mxu0 0
        %2111 = vmatpush1.bf16.msra.mxu0 0
        %2112 = vmatprep.subr.bf16.mxu0 0
        %2113 = vmatpush1.bf16.msra.mxu0 0
        %2114 = vmatprep.subr.bf16.mxu0 0
        %2115 = vmatpush1.bf16.msra.mxu0 0
        %2116 = vmatprep.mubr.bf16.mxu0 0
        %2117 = vmatmul.mubr.bf16.gmra.mrb[0].mxu0 %v2004
        %v2118 = vpop.f32.mrb[0].mxu0
        %v2119 = vadd.f32 0.0, %v2118
        %v2120 = vpop.f32.mrb[0].mxu0
        %v2121 = vpop.f32.mrb[0].mxu0
        %v2122 = vadd.f32 0.0, %v2121
        %v2123 = vpop.f32.mrb[0].mxu0
        %2124 = vmatprep.mubr.bf16.mxu0 0
        %2125 = vmatmul.mubr.bf16.gmra.mrb[0].mxu0 %v2005
        %v2126 = vpop.f32.mrb[0].mxu0
        %v2127 = vadd.f32 0.0, %v2126
        %v2128 = vpop.f32.mrb[0].mxu0
        %v2129 = vpop.f32.mrb[0].mxu0
        %v2130 = vadd.f32 0.0, %v2129
        %v2131 = vpop.f32.mrb[0].mxu0
        %2132 = vmatprep.mubr.bf16.mxu0 0
        %2133 = vmatmul.mubr.bf16.gmra.mrb[0].mxu0 %v2006
        %v2134 = vpop.f32.mrb[0].mxu0
        %v2135 = vadd.f32 0.0, %v2134
        %v2136 = vpop.f32.mrb[0].mxu0
        %v2137 = vpop.f32.mrb[0].mxu0
        %v2138 = vadd.f32 0.0, %v2137
        %v2139 = vpop.f32.mrb[0].mxu0
        %2140 = vmatprep.mubr.bf16.mxu0 0
        %2141 = vmatmul.mubr.bf16.gmra.mrb[0].mxu0 %v2007
        %v2142 = vpop.f32.mrb[0].mxu0
        %v2143 = vadd.f32 0.0, %v2142
        %v2144 = vpop.f32.mrb[0].mxu0
        %v2145 = vpop.f32.mrb[0].mxu0
        %v2146 = vadd.f32 0.0, %v2145
        %v2147 = vpop.f32.mrb[0].mxu0
        %2148 = vmatprep.mubr.bf16.mxu0 0
        %2149 = vmatmul.mubr.bf16.gmra.mrb[0].mxu0 %v2008
        %v2150 = vpop.f32.mrb[0].mxu0
        %v2151 = vadd.f32 0.0, %v2150
        %v2152 = vpop.f32.mrb[0].mxu0
        %v2153 = vpop.f32.mrb[0].mxu0
        %v2154 = vadd.f32 0.0, %v2153
        %v2155 = vpop.f32.mrb[0].mxu0
        %2156 = vmatprep.mubr.bf16.mxu0 0
        %2157 = vmatmul.mubr.bf16.gmra.mrb[0].mxu0 %v2009
        %v2158 = vpop.f32.mrb[0].mxu0
        %v2159 = vadd.f32 0.0, %v2158
        %v2160 = vpop.f32.mrb[0].mxu0
        %v2161 = vpop.f32.mrb[0].mxu0
        %v2162 = vadd.f32 0.0, %v2161
        %v2163 = vpop.f32.mrb[0].mxu0
        %2164 = vmatprep.mubr.bf16.mxu0 0
        %2165 = vmatmul.mubr.bf16.gmra.mrb[0].mxu0 %v2010
        %v2166 = vpop.f32.mrb[0].mxu0
        %v2167 = vadd.f32 0.0, %v2166
        %v2168 = vpop.f32.mrb[0].mxu0
        %v2169 = vpop.f32.mrb[0].mxu0
        %v2170 = vadd.f32 0.0, %v2169
        %v2171 = vpop.f32.mrb[0].mxu0
        %2172 = vmatprep.mubr.bf16.mxu0 0
        %2173 = vmatmul.mubr.bf16.gmra.mrb[0].mxu0 %v2011
        %v2174 = vpop.f32.mrb[0].mxu0
        %v2175 = vadd.f32 0.0, %v2174
        %v2176 = vpop.f32.mrb[0].mxu0
        %v2177 = vpop.f32.mrb[0].mxu0
        %v2178 = vadd.f32 0.0, %v2177
        %v2179 = vpop.f32.mrb[0].mxu0
        %2180 = vmatprep.mubr.bf16.mxu0 0
        %2181 = vmatmul.mubr.bf16.gmra.mrb[0].mxu0 %v2012
        %v2182 = vpop.f32.mrb[0].mxu0
        %v2183 = vadd.f32 0.0, %v2182
        %v2184 = vpop.f32.mrb[0].mxu0
        %v2185 = vpop.f32.mrb[0].mxu0
        %v2186 = vadd.f32 0.0, %v2185
        %v2187 = vpop.f32.mrb[0].mxu0
        %2188 = vmatprep.mubr.bf16.mxu0 0
        %2189 = vmatmul.mubr.bf16.gmra.mrb[0].mxu0 %v2013
        %v2190 = vpop.f32.mrb[0].mxu0
        %v2191 = vadd.f32 0.0, %v2190
        %v2192 = vpop.f32.mrb[0].mxu0
        %v2193 = vpop.f32.mrb[0].mxu0
        %v2194 = vadd.f32 0.0, %v2193
        %v2195 = vpop.f32.mrb[0].mxu0
        %2196 = vmatprep.mubr.bf16.mxu0 0
        %2197 = vmatmul.mubr.bf16.gmra.mrb[0].mxu0 %v2014
        %v2198 = vpop.f32.mrb[0].mxu0
        %v2199 = vadd.f32 0.0, %v2198
        %v2200 = vpop.f32.mrb[0].mxu0
        %v2201 = vpop.f32.mrb[0].mxu0
        %v2202 = vadd.f32 0.0, %v2201
        %v2203 = vpop.f32.mrb[0].mxu0
        %2204 = vmatprep.mubr.bf16.mxu0 0
        %2205 = vmatmul.mubr.bf16.gmra.mrb[0].mxu0 %v2015
        %v2206 = vpop.f32.mrb[0].mxu0
        %v2207 = vadd.f32 0.0, %v2206
        %v2208 = vpop.f32.mrb[0].mxu0
        %v2209 = vpop.f32.mrb[0].mxu0
        %v2210 = vadd.f32 0.0, %v2209
        %v2211 = vpop.f32.mrb[0].mxu0
        %2212 = vmatprep.mubr.bf16.mxu0 0
        %2213 = vmatmul.mubr.bf16.gmra.mrb[0].mxu0 %v2016
        %v2214 = vpop.f32.mrb[0].mxu0
        %v2215 = vadd.f32 0.0, %v2214
        %v2216 = vpop.f32.mrb[0].mxu0
        %v2217 = vpop.f32.mrb[0].mxu0
        %v2218 = vadd.f32 0.0, %v2217
        %v2219 = vpop.f32.mrb[0].mxu0
        %2220 = vmatprep.mubr.bf16.mxu0 0
        %2221 = vmatmul.mubr.bf16.gmra.mrb[0].mxu0 %v2017
        %v2222 = vpop.f32.mrb[0].mxu0
        %v2223 = vadd.f32 0.0, %v2222
        %v2224 = vpop.f32.mrb[0].mxu0
        %v2225 = vpop.f32.mrb[0].mxu0
        %v2226 = vadd.f32 0.0, %v2225
        %v2227 = vpop.f32.mrb[0].mxu0
        %2228 = vmatprep.mubr.bf16.mxu0 0
        %2229 = vmatmul.mubr.bf16.gmra.mrb[0].mxu0 %v2018
        %v2230 = vpop.f32.mrb[0].mxu0
        %v2231 = vadd.f32 0.0, %v2230
        %v2232 = vpop.f32.mrb[0].mxu0
        %v2233 = vpop.f32.mrb[0].mxu0
        %v2234 = vadd.f32 0.0, %v2233
        %v2235 = vpop.f32.mrb[0].mxu0
        %2236 = vmatprep.mubr.bf16.mxu0 0
        %2237 = vmatmul.mubr.bf16.gmra.mrb[0].mxu0 %v2019
        %v2238 = vpop.f32.mrb[0].mxu0
        %v2239 = vadd.f32 0.0, %v2238
        %v2240 = vpop.f32.mrb[0].mxu0
        %v2241 = vpop.f32.mrb[0].mxu0
        %v2242 = vadd.f32 0.0, %v2241
        %v2243 = vpop.f32.mrb[0].mxu0
        %2244 = vdwg.mxu0
        %v2245 = vadd.f32 %v1857, %v2119
        %v2246 = vadd.f32 %v1858, %v2122
        %v2247 = vadd.f32 %v1859, %v2127
        %v2248 = vadd.f32 %v1860, %v2130
        %v2249 = vadd.f32 %v1861, %v2135
        %v2250 = vadd.f32 %v1862, %v2138
        %v2251 = vadd.f32 %v1863, %v2143
        %v2252 = vadd.f32 %v1864, %v2146
        %v2253 = vadd.f32 %v1865, %v2151
        %v2254 = vadd.f32 %v1866, %v2154
        %v2255 = vadd.f32 %v1867, %v2159
        %v2256 = vadd.f32 %v1868, %v2162
        %v2257 = vadd.f32 %v1869, %v2167
        %v2258 = vadd.f32 %v1870, %v2170
        %v2259 = vadd.f32 %v1871, %v2175
        %v2260 = vadd.f32 %v1872, %v2178
        %v2261 = vadd.f32 %v1873, %v2183
        %v2262 = vadd.f32 %v1874, %v2186
        %v2263 = vadd.f32 %v1875, %v2191
        %v2264 = vadd.f32 %v1876, %v2194
        %v2265 = vadd.f32 %v1877, %v2199
        %v2266 = vadd.f32 %v1878, %v2202
        %v2267 = vadd.f32 %v1879, %v2207
        %v2268 = vadd.f32 %v1880, %v2210
        %v2269 = vadd.f32 %v1881, %v2215
        %v2270 = vadd.f32 %v1882, %v2218
        %v2271 = vadd.f32 %v1883, %v2223
        %v2272 = vadd.f32 %v1884, %v2226
        %v2273 = vadd.f32 %v1885, %v2231
        %v2274 = vadd.f32 %v1886, %v2234
        %v2275 = vadd.f32 %v1887, %v2239
        %v2276 = vadd.f32 %v1888, %v2242
        %s2277 = smul.addr %s1111, 4
        %s2278 = scalar_lea.vmem %s365, %s2277
        %v2279 = vld [vmem:[%s2278] sm:$0xf]
        %v2280 = vld [vmem:[%s2278 + $0x4] sm:$0xf]
        %v2281 = vld [vmem:[%s2278 + $0x8] sm:$0xf]
        %v2282 = vld [vmem:[%s2278 + $0xc] sm:$0xf]
        %v2283 = vld [vmem:[%s2278 + $0x10] sm:$0xf]
        %v2284 = vld [vmem:[%s2278 + $0x14] sm:$0xf]
        %v2285 = vld [vmem:[%s2278 + $0x18] sm:$0xf]
        %v2286 = vld [vmem:[%s2278 + $0x1c] sm:$0xf]
        %v2287 = vld [vmem:[%s2278 + $0x20] sm:$0xf]
        %v2288 = vld [vmem:[%s2278 + $0x24] sm:$0xf]
        %v2289 = vld [vmem:[%s2278 + $0x28] sm:$0xf]
        %v2290 = vld [vmem:[%s2278 + $0x2c] sm:$0xf]
        %v2291 = vld [vmem:[%s2278 + $0x30] sm:$0xf]
        %v2292 = vld [vmem:[%s2278 + $0x34] sm:$0xf]
        %v2293 = vld [vmem:[%s2278 + $0x38] sm:$0xf]
        %v2294 = vld [vmem:[%s2278 + $0x3c] sm:$0xf]
        %v2295 = vld [vmem:[%s2278 + $0x40] sm:$0xf]
        %v2296 = vld [vmem:[%s2278 + $0x44] sm:$0xf]
        %v2297 = vld [vmem:[%s2278 + $0x48] sm:$0xf]
        %v2298 = vld [vmem:[%s2278 + $0x4c] sm:$0xf]
        %v2299 = vld [vmem:[%s2278 + $0x50] sm:$0xf]
        %v2300 = vld [vmem:[%s2278 + $0x54] sm:$0xf]
        %v2301 = vld [vmem:[%s2278 + $0x58] sm:$0xf]
        %v2302 = vld [vmem:[%s2278 + $0x5c] sm:$0xf]
        %v2303 = vld [vmem:[%s2278 + $0x60] sm:$0xf]
        %v2304 = vld [vmem:[%s2278 + $0x64] sm:$0xf]
        %v2305 = vld [vmem:[%s2278 + $0x68] sm:$0xf]
        %v2306 = vld [vmem:[%s2278 + $0x6c] sm:$0xf]
        %v2307 = vld [vmem:[%s2278 + $0x70] sm:$0xf]
        %v2308 = vld [vmem:[%s2278 + $0x74] sm:$0xf]
        %v2309 = vld [vmem:[%s2278 + $0x78] sm:$0xf]
        %v2310 = vld [vmem:[%s2278 + $0x7c] sm:$0xf]
        %s2311 = scalar_lea.vmem %s374, 448
        %v2312 = vld [vmem:[%s2311] sm:$0xf]
        %v2313 = vld [vmem:[%s2311 + $0x4] sm:$0xf]
        %v2314 = vld [vmem:[%s2311 + $0x8] sm:$0xf]
        %v2315 = vld [vmem:[%s2311 + $0xc] sm:$0xf]
        %v2316 = vld [vmem:[%s2311 + $0x10] sm:$0xf]
        %v2317 = vld [vmem:[%s2311 + $0x14] sm:$0xf]
        %v2318 = vld [vmem:[%s2311 + $0x18] sm:$0xf]
        %v2319 = vld [vmem:[%s2311 + $0x1c] sm:$0xf]
        %v2320 = vld [vmem:[%s2311 + $0x20] sm:$0xf]
        %v2321 = vld [vmem:[%s2311 + $0x24] sm:$0xf]
        %v2322 = vld [vmem:[%s2311 + $0x28] sm:$0xf]
        %v2323 = vld [vmem:[%s2311 + $0x2c] sm:$0xf]
        %v2324 = vld [vmem:[%s2311 + $0x30] sm:$0xf]
        %v2325 = vld [vmem:[%s2311 + $0x34] sm:$0xf]
        %v2326 = vld [vmem:[%s2311 + $0x38] sm:$0xf]
        %v2327 = vld [vmem:[%s2311 + $0x3c] sm:$0xf]
        %v2360 = vunpack.c.l.b16 %v2279
        %v2361 = vunpack.c.l.b16 %v2280
        %v2362 = vunpack.c.l.b16 %v2281
        %v2363 = vunpack.c.l.b16 %v2282
        %v2364 = vunpack.c.l.b16 %v2283
        %v2365 = vunpack.c.l.b16 %v2284
        %v2366 = vunpack.c.l.b16 %v2285
        %v2367 = vunpack.c.l.b16 %v2286
        %v2368 = vunpack.c.l.b16 %v2287
        %v2369 = vunpack.c.l.b16 %v2288
        %v2370 = vunpack.c.l.b16 %v2289
        %v2371 = vunpack.c.l.b16 %v2290
        %v2372 = vunpack.c.l.b16 %v2291
        %v2373 = vunpack.c.l.b16 %v2292
        %v2374 = vunpack.c.l.b16 %v2293
        %v2375 = vunpack.c.l.b16 %v2294
        %v2376 = vunpack.c.l.b16 %v2295
        %v2377 = vunpack.c.l.b16 %v2296
        %v2378 = vunpack.c.l.b16 %v2297
        %v2379 = vunpack.c.l.b16 %v2298
        %v2380 = vunpack.c.l.b16 %v2299
        %v2381 = vunpack.c.l.b16 %v2300
        %v2382 = vunpack.c.l.b16 %v2301
        %v2383 = vunpack.c.l.b16 %v2302
        %v2384 = vunpack.c.l.b16 %v2303
        %v2385 = vunpack.c.l.b16 %v2304
        %v2386 = vunpack.c.l.b16 %v2305
        %v2387 = vunpack.c.l.b16 %v2306
        %v2388 = vunpack.c.l.b16 %v2307
        %v2389 = vunpack.c.l.b16 %v2308
        %v2390 = vunpack.c.l.b16 %v2309
        %v2391 = vunpack.c.l.b16 %v2310
        %v2392 = vpack.c.b16 %v2361, %v2360
        %v2393 = vpack.c.b16 %v2363, %v2362
        %v2394 = vpack.c.b16 %v2365, %v2364
        %v2395 = vpack.c.b16 %v2367, %v2366
        %v2396 = vpack.c.b16 %v2369, %v2368
        %v2397 = vpack.c.b16 %v2371, %v2370
        %v2398 = vpack.c.b16 %v2373, %v2372
        %v2399 = vpack.c.b16 %v2375, %v2374
        %v2400 = vpack.c.b16 %v2377, %v2376
        %v2401 = vpack.c.b16 %v2379, %v2378
        %v2402 = vpack.c.b16 %v2381, %v2380
        %v2403 = vpack.c.b16 %v2383, %v2382
        %v2404 = vpack.c.b16 %v2385, %v2384
        %v2405 = vpack.c.b16 %v2387, %v2386
        %v2406 = vpack.c.b16 %v2389, %v2388
        %v2407 = vpack.c.b16 %v2391, %v2390
        %v2440 = vunpack.c.l.b16 %v2312
        %v2441 = vunpack.c.l.b16 %v2313
        %v2442 = vunpack.c.l.b16 %v2314
        %v2443 = vunpack.c.l.b16 %v2315
        %v2444 = vunpack.c.l.b16 %v2316
        %v2445 = vunpack.c.l.b16 %v2317
        %v2446 = vunpack.c.l.b16 %v2318
        %v2447 = vunpack.c.l.b16 %v2319
        %v2448 = vunpack.c.l.b16 %v2320
        %v2449 = vunpack.c.l.b16 %v2321
        %v2450 = vunpack.c.l.b16 %v2322
        %v2451 = vunpack.c.l.b16 %v2323
        %v2452 = vunpack.c.l.b16 %v2324
        %v2453 = vunpack.c.l.b16 %v2325
        %v2454 = vunpack.c.l.b16 %v2326
        %v2455 = vunpack.c.l.b16 %v2327
        %v2456 = vpack.c.b16 %v2441, %v2440
        %v2457 = vpack.c.b16 %v2443, %v2442
        %v2458 = vpack.c.b16 %v2445, %v2444
        %v2459 = vpack.c.b16 %v2447, %v2446
        %v2460 = vpack.c.b16 %v2449, %v2448
        %v2461 = vpack.c.b16 %v2451, %v2450
        %v2462 = vpack.c.b16 %v2453, %v2452
        %v2463 = vpack.c.b16 %v2455, %v2454
        %2472 = vmatprep.subr.bf16.mxu0 0
        %2473 = vmatpush1.bf16.msra.mxu0 %v2456
        %2474 = vmatprep.subr.bf16.mxu0 0
        %2475 = vmatpush1.bf16.msra.mxu0 %v2457
        %2476 = vmatprep.subr.bf16.mxu0 0
        %2477 = vmatpush1.bf16.msra.mxu0 %v2458
        %2478 = vmatprep.subr.bf16.mxu0 0
        %2479 = vmatpush1.bf16.msra.mxu0 %v2459
        %2480 = vmatprep.subr.bf16.mxu0 0
        %2481 = vmatpush1.bf16.msra.mxu0 %v2460
        %2482 = vmatprep.subr.bf16.mxu0 0
        %2483 = vmatpush1.bf16.msra.mxu0 %v2461
        %2484 = vmatprep.subr.bf16.mxu0 0
        %2485 = vmatpush1.bf16.msra.mxu0 %v2462
        %2486 = vmatprep.subr.bf16.mxu0 0
        %2487 = vmatpush1.bf16.msra.mxu0 %v2463
        %2488 = vmatprep.subr.bf16.mxu0 0
        %2489 = vmatpush1.bf16.msra.mxu0 0
        %2490 = vmatprep.subr.bf16.mxu0 0
        %2491 = vmatpush1.bf16.msra.mxu0 0
        %2492 = vmatprep.subr.bf16.mxu0 0
        %2493 = vmatpush1.bf16.msra.mxu0 0
        %2494 = vmatprep.subr.bf16.mxu0 0
        %2495 = vmatpush1.bf16.msra.mxu0 0
        %2496 = vmatprep.subr.bf16.mxu0 0
        %2497 = vmatpush1.bf16.msra.mxu0 0
        %2498 = vmatprep.subr.bf16.mxu0 0
        %2499 = vmatpush1.bf16.msra.mxu0 0
        %2500 = vmatprep.subr.bf16.mxu0 0
        %2501 = vmatpush1.bf16.msra.mxu0 0
        %2502 = vmatprep.subr.bf16.mxu0 0
        %2503 = vmatpush1.bf16.msra.mxu0 0
        %2504 = vmatprep.mubr.bf16.mxu0 0
        %2505 = vmatmul.mubr.bf16.gmra.mrb[0].mxu0 %v2392
        %v2506 = vpop.f32.mrb[0].mxu0
        %v2507 = vadd.f32 0.0, %v2506
        %v2508 = vpop.f32.mrb[0].mxu0
        %v2509 = vpop.f32.mrb[0].mxu0
        %v2510 = vadd.f32 0.0, %v2509
        %v2511 = vpop.f32.mrb[0].mxu0
        %2512 = vmatprep.mubr.bf16.mxu0 0
        %2513 = vmatmul.mubr.bf16.gmra.mrb[0].mxu0 %v2393
        %v2514 = vpop.f32.mrb[0].mxu0
        %v2515 = vadd.f32 0.0, %v2514
        %v2516 = vpop.f32.mrb[0].mxu0
        %v2517 = vpop.f32.mrb[0].mxu0
        %v2518 = vadd.f32 0.0, %v2517
        %v2519 = vpop.f32.mrb[0].mxu0
        %2520 = vmatprep.mubr.bf16.mxu0 0
        %2521 = vmatmul.mubr.bf16.gmra.mrb[0].mxu0 %v2394
        %v2522 = vpop.f32.mrb[0].mxu0
        %v2523 = vadd.f32 0.0, %v2522
        %v2524 = vpop.f32.mrb[0].mxu0
        %v2525 = vpop.f32.mrb[0].mxu0
        %v2526 = vadd.f32 0.0, %v2525
        %v2527 = vpop.f32.mrb[0].mxu0
        %2528 = vmatprep.mubr.bf16.mxu0 0
        %2529 = vmatmul.mubr.bf16.gmra.mrb[0].mxu0 %v2395
        %v2530 = vpop.f32.mrb[0].mxu0
        %v2531 = vadd.f32 0.0, %v2530
        %v2532 = vpop.f32.mrb[0].mxu0
        %v2533 = vpop.f32.mrb[0].mxu0
        %v2534 = vadd.f32 0.0, %v2533
        %v2535 = vpop.f32.mrb[0].mxu0
        %2536 = vmatprep.mubr.bf16.mxu0 0
        %2537 = vmatmul.mubr.bf16.gmra.mrb[0].mxu0 %v2396
        %v2538 = vpop.f32.mrb[0].mxu0
        %v2539 = vadd.f32 0.0, %v2538
        %v2540 = vpop.f32.mrb[0].mxu0
        %v2541 = vpop.f32.mrb[0].mxu0
        %v2542 = vadd.f32 0.0, %v2541
        %v2543 = vpop.f32.mrb[0].mxu0
        %2544 = vmatprep.mubr.bf16.mxu0 0
        %2545 = vmatmul.mubr.bf16.gmra.mrb[0].mxu0 %v2397
        %v2546 = vpop.f32.mrb[0].mxu0
        %v2547 = vadd.f32 0.0, %v2546
        %v2548 = vpop.f32.mrb[0].mxu0
        %v2549 = vpop.f32.mrb[0].mxu0
        %v2550 = vadd.f32 0.0, %v2549
        %v2551 = vpop.f32.mrb[0].mxu0
        %2552 = vmatprep.mubr.bf16.mxu0 0
        %2553 = vmatmul.mubr.bf16.gmra.mrb[0].mxu0 %v2398
        %v2554 = vpop.f32.mrb[0].mxu0
        %v2555 = vadd.f32 0.0, %v2554
        %v2556 = vpop.f32.mrb[0].mxu0
        %v2557 = vpop.f32.mrb[0].mxu0
        %v2558 = vadd.f32 0.0, %v2557
        %v2559 = vpop.f32.mrb[0].mxu0
        %2560 = vmatprep.mubr.bf16.mxu0 0
        %2561 = vmatmul.mubr.bf16.gmra.mrb[0].mxu0 %v2399
        %v2562 = vpop.f32.mrb[0].mxu0
        %v2563 = vadd.f32 0.0, %v2562
        %v2564 = vpop.f32.mrb[0].mxu0
        %v2565 = vpop.f32.mrb[0].mxu0
        %v2566 = vadd.f32 0.0, %v2565
        %v2567 = vpop.f32.mrb[0].mxu0
        %2568 = vmatprep.mubr.bf16.mxu0 0
        %2569 = vmatmul.mubr.bf16.gmra.mrb[0].mxu0 %v2400
        %v2570 = vpop.f32.mrb[0].mxu0
        %v2571 = vadd.f32 0.0, %v2570
        %v2572 = vpop.f32.mrb[0].mxu0
        %v2573 = vpop.f32.mrb[0].mxu0
        %v2574 = vadd.f32 0.0, %v2573
        %v2575 = vpop.f32.mrb[0].mxu0
        %2576 = vmatprep.mubr.bf16.mxu0 0
        %2577 = vmatmul.mubr.bf16.gmra.mrb[0].mxu0 %v2401
        %v2578 = vpop.f32.mrb[0].mxu0
        %v2579 = vadd.f32 0.0, %v2578
        %v2580 = vpop.f32.mrb[0].mxu0
        %v2581 = vpop.f32.mrb[0].mxu0
        %v2582 = vadd.f32 0.0, %v2581
        %v2583 = vpop.f32.mrb[0].mxu0
        %2584 = vmatprep.mubr.bf16.mxu0 0
        %2585 = vmatmul.mubr.bf16.gmra.mrb[0].mxu0 %v2402
        %v2586 = vpop.f32.mrb[0].mxu0
        %v2587 = vadd.f32 0.0, %v2586
        %v2588 = vpop.f32.mrb[0].mxu0
        %v2589 = vpop.f32.mrb[0].mxu0
        %v2590 = vadd.f32 0.0, %v2589
        %v2591 = vpop.f32.mrb[0].mxu0
        %2592 = vmatprep.mubr.bf16.mxu0 0
        %2593 = vmatmul.mubr.bf16.gmra.mrb[0].mxu0 %v2403
        %v2594 = vpop.f32.mrb[0].mxu0
        %v2595 = vadd.f32 0.0, %v2594
        %v2596 = vpop.f32.mrb[0].mxu0
        %v2597 = vpop.f32.mrb[0].mxu0
        %v2598 = vadd.f32 0.0, %v2597
        %v2599 = vpop.f32.mrb[0].mxu0
        %2600 = vmatprep.mubr.bf16.mxu0 0
        %2601 = vmatmul.mubr.bf16.gmra.mrb[0].mxu0 %v2404
        %v2602 = vpop.f32.mrb[0].mxu0
        %v2603 = vadd.f32 0.0, %v2602
        %v2604 = vpop.f32.mrb[0].mxu0
        %v2605 = vpop.f32.mrb[0].mxu0
        %v2606 = vadd.f32 0.0, %v2605
        %v2607 = vpop.f32.mrb[0].mxu0
        %2608 = vmatprep.mubr.bf16.mxu0 0
        %2609 = vmatmul.mubr.bf16.gmra.mrb[0].mxu0 %v2405
        %v2610 = vpop.f32.mrb[0].mxu0
        %v2611 = vadd.f32 0.0, %v2610
        %v2612 = vpop.f32.mrb[0].mxu0
        %v2613 = vpop.f32.mrb[0].mxu0
        %v2614 = vadd.f32 0.0, %v2613
        %v2615 = vpop.f32.mrb[0].mxu0
        %2616 = vmatprep.mubr.bf16.mxu0 0
        %2617 = vmatmul.mubr.bf16.gmra.mrb[0].mxu0 %v2406
        %v2618 = vpop.f32.mrb[0].mxu0
        %v2619 = vadd.f32 0.0, %v2618
        %v2620 = vpop.f32.mrb[0].mxu0
        %v2621 = vpop.f32.mrb[0].mxu0
        %v2622 = vadd.f32 0.0, %v2621
        %v2623 = vpop.f32.mrb[0].mxu0
        %2624 = vmatprep.mubr.bf16.mxu0 0
        %2625 = vmatmul.mubr.bf16.gmra.mrb[0].mxu0 %v2407
        %v2626 = vpop.f32.mrb[0].mxu0
        %v2627 = vadd.f32 0.0, %v2626
        %v2628 = vpop.f32.mrb[0].mxu0
        %v2629 = vpop.f32.mrb[0].mxu0
        %v2630 = vadd.f32 0.0, %v2629
        %v2631 = vpop.f32.mrb[0].mxu0
        %2632 = vdwg.mxu0
        %v2633 = vadd.f32 %v2245, %v2507
        %v2634 = vadd.f32 %v2246, %v2510
        %v2635 = vadd.f32 %v2247, %v2515
        %v2636 = vadd.f32 %v2248, %v2518
        %v2637 = vadd.f32 %v2249, %v2523
        %v2638 = vadd.f32 %v2250, %v2526
        %v2639 = vadd.f32 %v2251, %v2531
        %v2640 = vadd.f32 %v2252, %v2534
        %v2641 = vadd.f32 %v2253, %v2539
        %v2642 = vadd.f32 %v2254, %v2542
        %v2643 = vadd.f32 %v2255, %v2547
        %v2644 = vadd.f32 %v2256, %v2550
        %v2645 = vadd.f32 %v2257, %v2555
        %v2646 = vadd.f32 %v2258, %v2558
        %v2647 = vadd.f32 %v2259, %v2563
        %v2648 = vadd.f32 %v2260, %v2566
        %v2649 = vadd.f32 %v2261, %v2571
        %v2650 = vadd.f32 %v2262, %v2574
        %v2651 = vadd.f32 %v2263, %v2579
        %v2652 = vadd.f32 %v2264, %v2582
        %v2653 = vadd.f32 %v2265, %v2587
        %v2654 = vadd.f32 %v2266, %v2590
        %v2655 = vadd.f32 %v2267, %v2595
        %v2656 = vadd.f32 %v2268, %v2598
        %v2657 = vadd.f32 %v2269, %v2603
        %v2658 = vadd.f32 %v2270, %v2606
        %v2659 = vadd.f32 %v2271, %v2611
        %v2660 = vadd.f32 %v2272, %v2614
        %v2661 = vadd.f32 %v2273, %v2619
        %v2662 = vadd.f32 %v2274, %v2622
        %v2663 = vadd.f32 %v2275, %v2627
        %v2664 = vadd.f32 %v2276, %v2630
        %s2665 = smul.addr %s394, 4
        %s2666 = scalar_lea.vmem %s370, %s2665
        %v2667 = vld [vmem:[%s2666] sm:$0xf]
        %v2668 = vld [vmem:[%s2666 + $0x4] sm:$0xf]
        %v2669 = vld [vmem:[%s2666 + $0x8] sm:$0xf]
        %v2670 = vld [vmem:[%s2666 + $0xc] sm:$0xf]
        %v2671 = vld [vmem:[%s2666 + $0x10] sm:$0xf]
        %v2672 = vld [vmem:[%s2666 + $0x14] sm:$0xf]
        %v2673 = vld [vmem:[%s2666 + $0x18] sm:$0xf]
        %v2674 = vld [vmem:[%s2666 + $0x1c] sm:$0xf]
        %v2675 = vld [vmem:[%s2666 + $0x20] sm:$0xf]
        %v2676 = vld [vmem:[%s2666 + $0x24] sm:$0xf]
        %v2677 = vld [vmem:[%s2666 + $0x28] sm:$0xf]
        %v2678 = vld [vmem:[%s2666 + $0x2c] sm:$0xf]
        %v2679 = vld [vmem:[%s2666 + $0x30] sm:$0xf]
        %v2680 = vld [vmem:[%s2666 + $0x34] sm:$0xf]
        %v2681 = vld [vmem:[%s2666 + $0x38] sm:$0xf]
        %v2682 = vld [vmem:[%s2666 + $0x3c] sm:$0xf]
        %v2683 = vld [vmem:[%s2666 + $0x40] sm:$0xf]
        %v2684 = vld [vmem:[%s2666 + $0x44] sm:$0xf]
        %v2685 = vld [vmem:[%s2666 + $0x48] sm:$0xf]
        %v2686 = vld [vmem:[%s2666 + $0x4c] sm:$0xf]
        %v2687 = vld [vmem:[%s2666 + $0x50] sm:$0xf]
        %v2688 = vld [vmem:[%s2666 + $0x54] sm:$0xf]
        %v2689 = vld [vmem:[%s2666 + $0x58] sm:$0xf]
        %v2690 = vld [vmem:[%s2666 + $0x5c] sm:$0xf]
        %v2691 = vld [vmem:[%s2666 + $0x60] sm:$0xf]
        %v2692 = vld [vmem:[%s2666 + $0x64] sm:$0xf]
        %v2693 = vld [vmem:[%s2666 + $0x68] sm:$0xf]
        %v2694 = vld [vmem:[%s2666 + $0x6c] sm:$0xf]
        %v2695 = vld [vmem:[%s2666 + $0x70] sm:$0xf]
        %v2696 = vld [vmem:[%s2666 + $0x74] sm:$0xf]
        %v2697 = vld [vmem:[%s2666 + $0x78] sm:$0xf]
        %v2698 = vld [vmem:[%s2666 + $0x7c] sm:$0xf]
        %s2699 = scalar_lea.vmem %s374, 128
        %v2700 = vld [vmem:[%s2699] sm:$0xf]
        %v2701 = vld [vmem:[%s2699 + $0x4] sm:$0xf]
        %v2702 = vld [vmem:[%s2699 + $0x8] sm:$0xf]
        %v2703 = vld [vmem:[%s2699 + $0xc] sm:$0xf]
        %v2704 = vld [vmem:[%s2699 + $0x10] sm:$0xf]
        %v2705 = vld [vmem:[%s2699 + $0x14] sm:$0xf]
        %v2706 = vld [vmem:[%s2699 + $0x18] sm:$0xf]
        %v2707 = vld [vmem:[%s2699 + $0x1c] sm:$0xf]
        %v2708 = vld [vmem:[%s2699 + $0x20] sm:$0xf]
        %v2709 = vld [vmem:[%s2699 + $0x24] sm:$0xf]
        %v2710 = vld [vmem:[%s2699 + $0x28] sm:$0xf]
        %v2711 = vld [vmem:[%s2699 + $0x2c] sm:$0xf]
        %v2712 = vld [vmem:[%s2699 + $0x30] sm:$0xf]
        %v2713 = vld [vmem:[%s2699 + $0x34] sm:$0xf]
        %v2714 = vld [vmem:[%s2699 + $0x38] sm:$0xf]
        %v2715 = vld [vmem:[%s2699 + $0x3c] sm:$0xf]
        %v2748 = vunpack.c.l.b16 %v2667
        %v2749 = vunpack.c.l.b16 %v2668
        %v2750 = vunpack.c.l.b16 %v2669
        %v2751 = vunpack.c.l.b16 %v2670
        %v2752 = vunpack.c.l.b16 %v2671
        %v2753 = vunpack.c.l.b16 %v2672
        %v2754 = vunpack.c.l.b16 %v2673
        %v2755 = vunpack.c.l.b16 %v2674
        %v2756 = vunpack.c.l.b16 %v2675
        %v2757 = vunpack.c.l.b16 %v2676
        %v2758 = vunpack.c.l.b16 %v2677
        %v2759 = vunpack.c.l.b16 %v2678
        %v2760 = vunpack.c.l.b16 %v2679
        %v2761 = vunpack.c.l.b16 %v2680
        %v2762 = vunpack.c.l.b16 %v2681
        %v2763 = vunpack.c.l.b16 %v2682
        %v2764 = vunpack.c.l.b16 %v2683
        %v2765 = vunpack.c.l.b16 %v2684
        %v2766 = vunpack.c.l.b16 %v2685
        %v2767 = vunpack.c.l.b16 %v2686
        %v2768 = vunpack.c.l.b16 %v2687
        %v2769 = vunpack.c.l.b16 %v2688
        %v2770 = vunpack.c.l.b16 %v2689
        %v2771 = vunpack.c.l.b16 %v2690
        %v2772 = vunpack.c.l.b16 %v2691
        %v2773 = vunpack.c.l.b16 %v2692
        %v2774 = vunpack.c.l.b16 %v2693
        %v2775 = vunpack.c.l.b16 %v2694
        %v2776 = vunpack.c.l.b16 %v2695
        %v2777 = vunpack.c.l.b16 %v2696
        %v2778 = vunpack.c.l.b16 %v2697
        %v2779 = vunpack.c.l.b16 %v2698
        %v2780 = vpack.c.b16 %v2749, %v2748
        %v2781 = vpack.c.b16 %v2751, %v2750
        %v2782 = vpack.c.b16 %v2753, %v2752
        %v2783 = vpack.c.b16 %v2755, %v2754
        %v2784 = vpack.c.b16 %v2757, %v2756
        %v2785 = vpack.c.b16 %v2759, %v2758
        %v2786 = vpack.c.b16 %v2761, %v2760
        %v2787 = vpack.c.b16 %v2763, %v2762
        %v2788 = vpack.c.b16 %v2765, %v2764
        %v2789 = vpack.c.b16 %v2767, %v2766
        %v2790 = vpack.c.b16 %v2769, %v2768
        %v2791 = vpack.c.b16 %v2771, %v2770
        %v2792 = vpack.c.b16 %v2773, %v2772
        %v2793 = vpack.c.b16 %v2775, %v2774
        %v2794 = vpack.c.b16 %v2777, %v2776
        %v2795 = vpack.c.b16 %v2779, %v2778
        %v2828 = vunpack.c.l.b16 %v2700
        %v2829 = vunpack.c.l.b16 %v2701
        %v2830 = vunpack.c.l.b16 %v2702
        %v2831 = vunpack.c.l.b16 %v2703
        %v2832 = vunpack.c.l.b16 %v2704
        %v2833 = vunpack.c.l.b16 %v2705
        %v2834 = vunpack.c.l.b16 %v2706
        %v2835 = vunpack.c.l.b16 %v2707
        %v2836 = vunpack.c.l.b16 %v2708
        %v2837 = vunpack.c.l.b16 %v2709
        %v2838 = vunpack.c.l.b16 %v2710
        %v2839 = vunpack.c.l.b16 %v2711
        %v2840 = vunpack.c.l.b16 %v2712
        %v2841 = vunpack.c.l.b16 %v2713
        %v2842 = vunpack.c.l.b16 %v2714
        %v2843 = vunpack.c.l.b16 %v2715
        %v2844 = vpack.c.b16 %v2829, %v2828
        %v2845 = vpack.c.b16 %v2831, %v2830
        %v2846 = vpack.c.b16 %v2833, %v2832
        %v2847 = vpack.c.b16 %v2835, %v2834
        %v2848 = vpack.c.b16 %v2837, %v2836
        %v2849 = vpack.c.b16 %v2839, %v2838
        %v2850 = vpack.c.b16 %v2841, %v2840
        %v2851 = vpack.c.b16 %v2843, %v2842
        %2860 = vmatprep.subr.bf16.mxu0 0
        %2861 = vmatpush1.bf16.msra.mxu0 %v2844
        %2862 = vmatprep.subr.bf16.mxu0 0
        %2863 = vmatpush1.bf16.msra.mxu0 %v2845
        %2864 = vmatprep.subr.bf16.mxu0 0
        %2865 = vmatpush1.bf16.msra.mxu0 %v2846
        %2866 = vmatprep.subr.bf16.mxu0 0
        %2867 = vmatpush1.bf16.msra.mxu0 %v2847
        %2868 = vmatprep.subr.bf16.mxu0 0
        %2869 = vmatpush1.bf16.msra.mxu0 %v2848
        %2870 = vmatprep.subr.bf16.mxu0 0
        %2871 = vmatpush1.bf16.msra.mxu0 %v2849
        %2872 = vmatprep.subr.bf16.mxu0 0
        %2873 = vmatpush1.bf16.msra.mxu0 %v2850
        %2874 = vmatprep.subr.bf16.mxu0 0
        %2875 = vmatpush1.bf16.msra.mxu0 %v2851
        %2876 = vmatprep.subr.bf16.mxu0 0
        %2877 = vmatpush1.bf16.msra.mxu0 0
        %2878 = vmatprep.subr.bf16.mxu0 0
        %2879 = vmatpush1.bf16.msra.mxu0 0
        %2880 = vmatprep.subr.bf16.mxu0 0
        %2881 = vmatpush1.bf16.msra.mxu0 0
        %2882 = vmatprep.subr.bf16.mxu0 0
        %2883 = vmatpush1.bf16.msra.mxu0 0
        %2884 = vmatprep.subr.bf16.mxu0 0
        %2885 = vmatpush1.bf16.msra.mxu0 0
        %2886 = vmatprep.subr.bf16.mxu0 0
        %2887 = vmatpush1.bf16.msra.mxu0 0
        %2888 = vmatprep.subr.bf16.mxu0 0
        %2889 = vmatpush1.bf16.msra.mxu0 0
        %2890 = vmatprep.subr.bf16.mxu0 0
        %2891 = vmatpush1.bf16.msra.mxu0 0
        %2892 = vmatprep.mubr.bf16.mxu0 0
        %2893 = vmatmul.mubr.bf16.gmra.mrb[0].mxu0 %v2780
        %v2894 = vpop.f32.mrb[0].mxu0
        %v2895 = vadd.f32 0.0, %v2894
        %v2896 = vpop.f32.mrb[0].mxu0
        %v2897 = vpop.f32.mrb[0].mxu0
        %v2898 = vadd.f32 0.0, %v2897
        %v2899 = vpop.f32.mrb[0].mxu0
        %2900 = vmatprep.mubr.bf16.mxu0 0
        %2901 = vmatmul.mubr.bf16.gmra.mrb[0].mxu0 %v2781
        %v2902 = vpop.f32.mrb[0].mxu0
        %v2903 = vadd.f32 0.0, %v2902
        %v2904 = vpop.f32.mrb[0].mxu0
        %v2905 = vpop.f32.mrb[0].mxu0
        %v2906 = vadd.f32 0.0, %v2905
        %v2907 = vpop.f32.mrb[0].mxu0
        %2908 = vmatprep.mubr.bf16.mxu0 0
        %2909 = vmatmul.mubr.bf16.gmra.mrb[0].mxu0 %v2782
        %v2910 = vpop.f32.mrb[0].mxu0
        %v2911 = vadd.f32 0.0, %v2910
        %v2912 = vpop.f32.mrb[0].mxu0
        %v2913 = vpop.f32.mrb[0].mxu0
        %v2914 = vadd.f32 0.0, %v2913
        %v2915 = vpop.f32.mrb[0].mxu0
        %2916 = vmatprep.mubr.bf16.mxu0 0
        %2917 = vmatmul.mubr.bf16.gmra.mrb[0].mxu0 %v2783
        %v2918 = vpop.f32.mrb[0].mxu0
        %v2919 = vadd.f32 0.0, %v2918
        %v2920 = vpop.f32.mrb[0].mxu0
        %v2921 = vpop.f32.mrb[0].mxu0
        %v2922 = vadd.f32 0.0, %v2921
        %v2923 = vpop.f32.mrb[0].mxu0
        %2924 = vmatprep.mubr.bf16.mxu0 0
        %2925 = vmatmul.mubr.bf16.gmra.mrb[0].mxu0 %v2784
        %v2926 = vpop.f32.mrb[0].mxu0
        %v2927 = vadd.f32 0.0, %v2926
        %v2928 = vpop.f32.mrb[0].mxu0
        %v2929 = vpop.f32.mrb[0].mxu0
        %v2930 = vadd.f32 0.0, %v2929
        %v2931 = vpop.f32.mrb[0].mxu0
        %2932 = vmatprep.mubr.bf16.mxu0 0
        %2933 = vmatmul.mubr.bf16.gmra.mrb[0].mxu0 %v2785
        %v2934 = vpop.f32.mrb[0].mxu0
        %v2935 = vadd.f32 0.0, %v2934
        %v2936 = vpop.f32.mrb[0].mxu0
        %v2937 = vpop.f32.mrb[0].mxu0
        %v2938 = vadd.f32 0.0, %v2937
        %v2939 = vpop.f32.mrb[0].mxu0
        %2940 = vmatprep.mubr.bf16.mxu0 0
        %2941 = vmatmul.mubr.bf16.gmra.mrb[0].mxu0 %v2786
        %v2942 = vpop.f32.mrb[0].mxu0
        %v2943 = vadd.f32 0.0, %v2942
        %v2944 = vpop.f32.mrb[0].mxu0
        %v2945 = vpop.f32.mrb[0].mxu0
        %v2946 = vadd.f32 0.0, %v2945
        %v2947 = vpop.f32.mrb[0].mxu0
        %2948 = vmatprep.mubr.bf16.mxu0 0
        %2949 = vmatmul.mubr.bf16.gmra.mrb[0].mxu0 %v2787
        %v2950 = vpop.f32.mrb[0].mxu0
        %v2951 = vadd.f32 0.0, %v2950
        %v2952 = vpop.f32.mrb[0].mxu0
        %v2953 = vpop.f32.mrb[0].mxu0
        %v2954 = vadd.f32 0.0, %v2953
        %v2955 = vpop.f32.mrb[0].mxu0
        %2956 = vmatprep.mubr.bf16.mxu0 0
        %2957 = vmatmul.mubr.bf16.gmra.mrb[0].mxu0 %v2788
        %v2958 = vpop.f32.mrb[0].mxu0
        %v2959 = vadd.f32 0.0, %v2958
        %v2960 = vpop.f32.mrb[0].mxu0
        %v2961 = vpop.f32.mrb[0].mxu0
        %v2962 = vadd.f32 0.0, %v2961
        %v2963 = vpop.f32.mrb[0].mxu0
        %2964 = vmatprep.mubr.bf16.mxu0 0
        %2965 = vmatmul.mubr.bf16.gmra.mrb[0].mxu0 %v2789
        %v2966 = vpop.f32.mrb[0].mxu0
        %v2967 = vadd.f32 0.0, %v2966
        %v2968 = vpop.f32.mrb[0].mxu0
        %v2969 = vpop.f32.mrb[0].mxu0
        %v2970 = vadd.f32 0.0, %v2969
        %v2971 = vpop.f32.mrb[0].mxu0
        %2972 = vmatprep.mubr.bf16.mxu0 0
        %2973 = vmatmul.mubr.bf16.gmra.mrb[0].mxu0 %v2790
        %v2974 = vpop.f32.mrb[0].mxu0
        %v2975 = vadd.f32 0.0, %v2974
        %v2976 = vpop.f32.mrb[0].mxu0
        %v2977 = vpop.f32.mrb[0].mxu0
        %v2978 = vadd.f32 0.0, %v2977
        %v2979 = vpop.f32.mrb[0].mxu0
        %2980 = vmatprep.mubr.bf16.mxu0 0
        %2981 = vmatmul.mubr.bf16.gmra.mrb[0].mxu0 %v2791
        %v2982 = vpop.f32.mrb[0].mxu0
        %v2983 = vadd.f32 0.0, %v2982
        %v2984 = vpop.f32.mrb[0].mxu0
        %v2985 = vpop.f32.mrb[0].mxu0
        %v2986 = vadd.f32 0.0, %v2985
        %v2987 = vpop.f32.mrb[0].mxu0
        %2988 = vmatprep.mubr.bf16.mxu0 0
        %2989 = vmatmul.mubr.bf16.gmra.mrb[0].mxu0 %v2792
        %v2990 = vpop.f32.mrb[0].mxu0
        %v2991 = vadd.f32 0.0, %v2990
        %v2992 = vpop.f32.mrb[0].mxu0
        %v2993 = vpop.f32.mrb[0].mxu0
        %v2994 = vadd.f32 0.0, %v2993
        %v2995 = vpop.f32.mrb[0].mxu0
        %2996 = vmatprep.mubr.bf16.mxu0 0
        %2997 = vmatmul.mubr.bf16.gmra.mrb[0].mxu0 %v2793
        %v2998 = vpop.f32.mrb[0].mxu0
        %v2999 = vadd.f32 0.0, %v2998
        %v3000 = vpop.f32.mrb[0].mxu0
        %v3001 = vpop.f32.mrb[0].mxu0
        %v3002 = vadd.f32 0.0, %v3001
        %v3003 = vpop.f32.mrb[0].mxu0
        %3004 = vmatprep.mubr.bf16.mxu0 0
        %3005 = vmatmul.mubr.bf16.gmra.mrb[0].mxu0 %v2794
        %v3006 = vpop.f32.mrb[0].mxu0
        %v3007 = vadd.f32 0.0, %v3006
        %v3008 = vpop.f32.mrb[0].mxu0
        %v3009 = vpop.f32.mrb[0].mxu0
        %v3010 = vadd.f32 0.0, %v3009
        %v3011 = vpop.f32.mrb[0].mxu0
        %3012 = vmatprep.mubr.bf16.mxu0 0
        %3013 = vmatmul.mubr.bf16.gmra.mrb[0].mxu0 %v2795
        %v3014 = vpop.f32.mrb[0].mxu0
        %v3015 = vadd.f32 0.0, %v3014
        %v3016 = vpop.f32.mrb[0].mxu0
        %v3017 = vpop.f32.mrb[0].mxu0
        %v3018 = vadd.f32 0.0, %v3017
        %v3019 = vpop.f32.mrb[0].mxu0
        %3020 = vdwg.mxu0
        %v3021 = vadd.f32 %v2633, %v2895
        %v3022 = vadd.f32 %v2634, %v2898
        %v3023 = vadd.f32 %v2635, %v2903
        %v3024 = vadd.f32 %v2636, %v2906
        %v3025 = vadd.f32 %v2637, %v2911
        %v3026 = vadd.f32 %v2638, %v2914
        %v3027 = vadd.f32 %v2639, %v2919
        %v3028 = vadd.f32 %v2640, %v2922
        %v3029 = vadd.f32 %v2641, %v2927
        %v3030 = vadd.f32 %v2642, %v2930
        %v3031 = vadd.f32 %v2643, %v2935
        %v3032 = vadd.f32 %v2644, %v2938
        %v3033 = vadd.f32 %v2645, %v2943
        %v3034 = vadd.f32 %v2646, %v2946
        %v3035 = vadd.f32 %v2647, %v2951
        %v3036 = vadd.f32 %v2648, %v2954
        %v3037 = vadd.f32 %v2649, %v2959
        %v3038 = vadd.f32 %v2650, %v2962
        %v3039 = vadd.f32 %v2651, %v2967
        %v3040 = vadd.f32 %v2652, %v2970
        %v3041 = vadd.f32 %v2653, %v2975
        %v3042 = vadd.f32 %v2654, %v2978
        %v3043 = vadd.f32 %v2655, %v2983
        %v3044 = vadd.f32 %v2656, %v2986
        %v3045 = vadd.f32 %v2657, %v2991
        %v3046 = vadd.f32 %v2658, %v2994
        %v3047 = vadd.f32 %v2659, %v2999
        %v3048 = vadd.f32 %v2660, %v3002
        %v3049 = vadd.f32 %v2661, %v3007
        %v3050 = vadd.f32 %v2662, %v3010
        %v3051 = vadd.f32 %v2663, %v3015
        %v3052 = vadd.f32 %v2664, %v3018
        %s3053 = smul.addr %s447, 4
        %s3054 = scalar_lea.vmem %s370, %s3053
        %v3055 = vld [vmem:[%s3054] sm:$0xf]
        %v3056 = vld [vmem:[%s3054 + $0x4] sm:$0xf]
        %v3057 = vld [vmem:[%s3054 + $0x8] sm:$0xf]
        %v3058 = vld [vmem:[%s3054 + $0xc] sm:$0xf]
        %v3059 = vld [vmem:[%s3054 + $0x10] sm:$0xf]
        %v3060 = vld [vmem:[%s3054 + $0x14] sm:$0xf]
        %v3061 = vld [vmem:[%s3054 + $0x18] sm:$0xf]
        %v3062 = vld [vmem:[%s3054 + $0x1c] sm:$0xf]
        %v3063 = vld [vmem:[%s3054 + $0x20] sm:$0xf]
        %v3064 = vld [vmem:[%s3054 + $0x24] sm:$0xf]
        %v3065 = vld [vmem:[%s3054 + $0x28] sm:$0xf]
        %v3066 = vld [vmem:[%s3054 + $0x2c] sm:$0xf]
        %v3067 = vld [vmem:[%s3054 + $0x30] sm:$0xf]
        %v3068 = vld [vmem:[%s3054 + $0x34] sm:$0xf]
        %v3069 = vld [vmem:[%s3054 + $0x38] sm:$0xf]
        %v3070 = vld [vmem:[%s3054 + $0x3c] sm:$0xf]
        %v3071 = vld [vmem:[%s3054 + $0x40] sm:$0xf]
        %v3072 = vld [vmem:[%s3054 + $0x44] sm:$0xf]
        %v3073 = vld [vmem:[%s3054 + $0x48] sm:$0xf]
        %v3074 = vld [vmem:[%s3054 + $0x4c] sm:$0xf]
        %v3075 = vld [vmem:[%s3054 + $0x50] sm:$0xf]
        %v3076 = vld [vmem:[%s3054 + $0x54] sm:$0xf]
        %v3077 = vld [vmem:[%s3054 + $0x58] sm:$0xf]
        %v3078 = vld [vmem:[%s3054 + $0x5c] sm:$0xf]
        %v3079 = vld [vmem:[%s3054 + $0x60] sm:$0xf]
        %v3080 = vld [vmem:[%s3054 + $0x64] sm:$0xf]
        %v3081 = vld [vmem:[%s3054 + $0x68] sm:$0xf]
        %v3082 = vld [vmem:[%s3054 + $0x6c] sm:$0xf]
        %v3083 = vld [vmem:[%s3054 + $0x70] sm:$0xf]
        %v3084 = vld [vmem:[%s3054 + $0x74] sm:$0xf]
        %v3085 = vld [vmem:[%s3054 + $0x78] sm:$0xf]
        %v3086 = vld [vmem:[%s3054 + $0x7c] sm:$0xf]
        %s3087 = scalar_lea.vmem %s374, 320
        %v3088 = vld [vmem:[%s3087] sm:$0xf]
        %v3089 = vld [vmem:[%s3087 + $0x4] sm:$0xf]
        %v3090 = vld [vmem:[%s3087 + $0x8] sm:$0xf]
        %v3091 = vld [vmem:[%s3087 + $0xc] sm:$0xf]
        %v3092 = vld [vmem:[%s3087 + $0x10] sm:$0xf]
        %v3093 = vld [vmem:[%s3087 + $0x14] sm:$0xf]
        %v3094 = vld [vmem:[%s3087 + $0x18] sm:$0xf]
        %v3095 = vld [vmem:[%s3087 + $0x1c] sm:$0xf]
        %v3096 = vld [vmem:[%s3087 + $0x20] sm:$0xf]
        %v3097 = vld [vmem:[%s3087 + $0x24] sm:$0xf]
        %v3098 = vld [vmem:[%s3087 + $0x28] sm:$0xf]
        %v3099 = vld [vmem:[%s3087 + $0x2c] sm:$0xf]
        %v3100 = vld [vmem:[%s3087 + $0x30] sm:$0xf]
        %v3101 = vld [vmem:[%s3087 + $0x34] sm:$0xf]
        %v3102 = vld [vmem:[%s3087 + $0x38] sm:$0xf]
        %v3103 = vld [vmem:[%s3087 + $0x3c] sm:$0xf]
        %v3136 = vunpack.c.l.b16 %v3055
        %v3137 = vunpack.c.l.b16 %v3056
        %v3138 = vunpack.c.l.b16 %v3057
        %v3139 = vunpack.c.l.b16 %v3058
        %v3140 = vunpack.c.l.b16 %v3059
        %v3141 = vunpack.c.l.b16 %v3060
        %v3142 = vunpack.c.l.b16 %v3061
        %v3143 = vunpack.c.l.b16 %v3062
        %v3144 = vunpack.c.l.b16 %v3063
        %v3145 = vunpack.c.l.b16 %v3064
        %v3146 = vunpack.c.l.b16 %v3065
        %v3147 = vunpack.c.l.b16 %v3066
        %v3148 = vunpack.c.l.b16 %v3067
        %v3149 = vunpack.c.l.b16 %v3068
        %v3150 = vunpack.c.l.b16 %v3069
        %v3151 = vunpack.c.l.b16 %v3070
        %v3152 = vunpack.c.l.b16 %v3071
        %v3153 = vunpack.c.l.b16 %v3072
        %v3154 = vunpack.c.l.b16 %v3073
        %v3155 = vunpack.c.l.b16 %v3074
        %v3156 = vunpack.c.l.b16 %v3075
        %v3157 = vunpack.c.l.b16 %v3076
        %v3158 = vunpack.c.l.b16 %v3077
        %v3159 = vunpack.c.l.b16 %v3078
        %v3160 = vunpack.c.l.b16 %v3079
        %v3161 = vunpack.c.l.b16 %v3080
        %v3162 = vunpack.c.l.b16 %v3081
        %v3163 = vunpack.c.l.b16 %v3082
        %v3164 = vunpack.c.l.b16 %v3083
        %v3165 = vunpack.c.l.b16 %v3084
        %v3166 = vunpack.c.l.b16 %v3085
        %v3167 = vunpack.c.l.b16 %v3086
        %v3168 = vpack.c.b16 %v3137, %v3136
        %v3169 = vpack.c.b16 %v3139, %v3138
        %v3170 = vpack.c.b16 %v3141, %v3140
        %v3171 = vpack.c.b16 %v3143, %v3142
        %v3172 = vpack.c.b16 %v3145, %v3144
        %v3173 = vpack.c.b16 %v3147, %v3146
        %v3174 = vpack.c.b16 %v3149, %v3148
        %v3175 = vpack.c.b16 %v3151, %v3150
        %v3176 = vpack.c.b16 %v3153, %v3152
        %v3177 = vpack.c.b16 %v3155, %v3154
        %v3178 = vpack.c.b16 %v3157, %v3156
        %v3179 = vpack.c.b16 %v3159, %v3158
        %v3180 = vpack.c.b16 %v3161, %v3160
        %v3181 = vpack.c.b16 %v3163, %v3162
        %v3182 = vpack.c.b16 %v3165, %v3164
        %v3183 = vpack.c.b16 %v3167, %v3166
        %v3216 = vunpack.c.l.b16 %v3088
        %v3217 = vunpack.c.l.b16 %v3089
        %v3218 = vunpack.c.l.b16 %v3090
        %v3219 = vunpack.c.l.b16 %v3091
        %v3220 = vunpack.c.l.b16 %v3092
        %v3221 = vunpack.c.l.b16 %v3093
        %v3222 = vunpack.c.l.b16 %v3094
        %v3223 = vunpack.c.l.b16 %v3095
        %v3224 = vunpack.c.l.b16 %v3096
        %v3225 = vunpack.c.l.b16 %v3097
        %v3226 = vunpack.c.l.b16 %v3098
        %v3227 = vunpack.c.l.b16 %v3099
        %v3228 = vunpack.c.l.b16 %v3100
        %v3229 = vunpack.c.l.b16 %v3101
        %v3230 = vunpack.c.l.b16 %v3102
        %v3231 = vunpack.c.l.b16 %v3103
        %v3232 = vpack.c.b16 %v3217, %v3216
        %v3233 = vpack.c.b16 %v3219, %v3218
        %v3234 = vpack.c.b16 %v3221, %v3220
        %v3235 = vpack.c.b16 %v3223, %v3222
        %v3236 = vpack.c.b16 %v3225, %v3224
        %v3237 = vpack.c.b16 %v3227, %v3226
        %v3238 = vpack.c.b16 %v3229, %v3228
        %v3239 = vpack.c.b16 %v3231, %v3230
        %3248 = vmatprep.subr.bf16.mxu0 0
        %3249 = vmatpush1.bf16.msra.mxu0 %v3232
        %3250 = vmatprep.subr.bf16.mxu0 0
        %3251 = vmatpush1.bf16.msra.mxu0 %v3233
        %3252 = vmatprep.subr.bf16.mxu0 0
        %3253 = vmatpush1.bf16.msra.mxu0 %v3234
        %3254 = vmatprep.subr.bf16.mxu0 0
        %3255 = vmatpush1.bf16.msra.mxu0 %v3235
        %3256 = vmatprep.subr.bf16.mxu0 0
        %3257 = vmatpush1.bf16.msra.mxu0 %v3236
        %3258 = vmatprep.subr.bf16.mxu0 0
        %3259 = vmatpush1.bf16.msra.mxu0 %v3237
        %3260 = vmatprep.subr.bf16.mxu0 0
        %3261 = vmatpush1.bf16.msra.mxu0 %v3238
        %3262 = vmatprep.subr.bf16.mxu0 0
        %3263 = vmatpush1.bf16.msra.mxu0 %v3239
        %3264 = vmatprep.subr.bf16.mxu0 0
        %3265 = vmatpush1.bf16.msra.mxu0 0
        %3266 = vmatprep.subr.bf16.mxu0 0
        %3267 = vmatpush1.bf16.msra.mxu0 0
        %3268 = vmatprep.subr.bf16.mxu0 0
        %3269 = vmatpush1.bf16.msra.mxu0 0
        %3270 = vmatprep.subr.bf16.mxu0 0
        %3271 = vmatpush1.bf16.msra.mxu0 0
        %3272 = vmatprep.subr.bf16.mxu0 0
        %3273 = vmatpush1.bf16.msra.mxu0 0
        %3274 = vmatprep.subr.bf16.mxu0 0
        %3275 = vmatpush1.bf16.msra.mxu0 0
        %3276 = vmatprep.subr.bf16.mxu0 0
        %3277 = vmatpush1.bf16.msra.mxu0 0
        %3278 = vmatprep.subr.bf16.mxu0 0
        %3279 = vmatpush1.bf16.msra.mxu0 0
        %3280 = vmatprep.mubr.bf16.mxu0 0
        %3281 = vmatmul.mubr.bf16.gmra.mrb[0].mxu0 %v3168
        %v3282 = vpop.f32.mrb[0].mxu0
        %v3283 = vadd.f32 0.0, %v3282
        %v3284 = vpop.f32.mrb[0].mxu0
        %v3285 = vpop.f32.mrb[0].mxu0
        %v3286 = vadd.f32 0.0, %v3285
        %v3287 = vpop.f32.mrb[0].mxu0
        %3288 = vmatprep.mubr.bf16.mxu0 0
        %3289 = vmatmul.mubr.bf16.gmra.mrb[0].mxu0 %v3169
        %v3290 = vpop.f32.mrb[0].mxu0
        %v3291 = vadd.f32 0.0, %v3290
        %v3292 = vpop.f32.mrb[0].mxu0
        %v3293 = vpop.f32.mrb[0].mxu0
        %v3294 = vadd.f32 0.0, %v3293
        %v3295 = vpop.f32.mrb[0].mxu0
        %3296 = vmatprep.mubr.bf16.mxu0 0
        %3297 = vmatmul.mubr.bf16.gmra.mrb[0].mxu0 %v3170
        %v3298 = vpop.f32.mrb[0].mxu0
        %v3299 = vadd.f32 0.0, %v3298
        %v3300 = vpop.f32.mrb[0].mxu0
        %v3301 = vpop.f32.mrb[0].mxu0
        %v3302 = vadd.f32 0.0, %v3301
        %v3303 = vpop.f32.mrb[0].mxu0
        %3304 = vmatprep.mubr.bf16.mxu0 0
        %3305 = vmatmul.mubr.bf16.gmra.mrb[0].mxu0 %v3171
        %v3306 = vpop.f32.mrb[0].mxu0
        %v3307 = vadd.f32 0.0, %v3306
        %v3308 = vpop.f32.mrb[0].mxu0
        %v3309 = vpop.f32.mrb[0].mxu0
        %v3310 = vadd.f32 0.0, %v3309
        %v3311 = vpop.f32.mrb[0].mxu0
        %3312 = vmatprep.mubr.bf16.mxu0 0
        %3313 = vmatmul.mubr.bf16.gmra.mrb[0].mxu0 %v3172
        %v3314 = vpop.f32.mrb[0].mxu0
        %v3315 = vadd.f32 0.0, %v3314
        %v3316 = vpop.f32.mrb[0].mxu0
        %v3317 = vpop.f32.mrb[0].mxu0
        %v3318 = vadd.f32 0.0, %v3317
        %v3319 = vpop.f32.mrb[0].mxu0
        %3320 = vmatprep.mubr.bf16.mxu0 0
        %3321 = vmatmul.mubr.bf16.gmra.mrb[0].mxu0 %v3173
        %v3322 = vpop.f32.mrb[0].mxu0
        %v3323 = vadd.f32 0.0, %v3322
        %v3324 = vpop.f32.mrb[0].mxu0
        %v3325 = vpop.f32.mrb[0].mxu0
        %v3326 = vadd.f32 0.0, %v3325
        %v3327 = vpop.f32.mrb[0].mxu0
        %3328 = vmatprep.mubr.bf16.mxu0 0
        %3329 = vmatmul.mubr.bf16.gmra.mrb[0].mxu0 %v3174
        %v3330 = vpop.f32.mrb[0].mxu0
        %v3331 = vadd.f32 0.0, %v3330
        %v3332 = vpop.f32.mrb[0].mxu0
        %v3333 = vpop.f32.mrb[0].mxu0
        %v3334 = vadd.f32 0.0, %v3333
        %v3335 = vpop.f32.mrb[0].mxu0
        %3336 = vmatprep.mubr.bf16.mxu0 0
        %3337 = vmatmul.mubr.bf16.gmra.mrb[0].mxu0 %v3175
        %v3338 = vpop.f32.mrb[0].mxu0
        %v3339 = vadd.f32 0.0, %v3338
        %v3340 = vpop.f32.mrb[0].mxu0
        %v3341 = vpop.f32.mrb[0].mxu0
        %v3342 = vadd.f32 0.0, %v3341
        %v3343 = vpop.f32.mrb[0].mxu0
        %3344 = vmatprep.mubr.bf16.mxu0 0
        %3345 = vmatmul.mubr.bf16.gmra.mrb[0].mxu0 %v3176
        %v3346 = vpop.f32.mrb[0].mxu0
        %v3347 = vadd.f32 0.0, %v3346
        %v3348 = vpop.f32.mrb[0].mxu0
        %v3349 = vpop.f32.mrb[0].mxu0
        %v3350 = vadd.f32 0.0, %v3349
        %v3351 = vpop.f32.mrb[0].mxu0
        %3352 = vmatprep.mubr.bf16.mxu0 0
        %3353 = vmatmul.mubr.bf16.gmra.mrb[0].mxu0 %v3177
        %v3354 = vpop.f32.mrb[0].mxu0
        %v3355 = vadd.f32 0.0, %v3354
        %v3356 = vpop.f32.mrb[0].mxu0
        %v3357 = vpop.f32.mrb[0].mxu0
        %v3358 = vadd.f32 0.0, %v3357
        %v3359 = vpop.f32.mrb[0].mxu0
        %3360 = vmatprep.mubr.bf16.mxu0 0
        %3361 = vmatmul.mubr.bf16.gmra.mrb[0].mxu0 %v3178
        %v3362 = vpop.f32.mrb[0].mxu0
        %v3363 = vadd.f32 0.0, %v3362
        %v3364 = vpop.f32.mrb[0].mxu0
        %v3365 = vpop.f32.mrb[0].mxu0
        %v3366 = vadd.f32 0.0, %v3365
        %v3367 = vpop.f32.mrb[0].mxu0
        %3368 = vmatprep.mubr.bf16.mxu0 0
        %3369 = vmatmul.mubr.bf16.gmra.mrb[0].mxu0 %v3179
        %v3370 = vpop.f32.mrb[0].mxu0
        %v3371 = vadd.f32 0.0, %v3370
        %v3372 = vpop.f32.mrb[0].mxu0
        %v3373 = vpop.f32.mrb[0].mxu0
        %v3374 = vadd.f32 0.0, %v3373
        %v3375 = vpop.f32.mrb[0].mxu0
        %3376 = vmatprep.mubr.bf16.mxu0 0
        %3377 = vmatmul.mubr.bf16.gmra.mrb[0].mxu0 %v3180
        %v3378 = vpop.f32.mrb[0].mxu0
        %v3379 = vadd.f32 0.0, %v3378
        %v3380 = vpop.f32.mrb[0].mxu0
        %v3381 = vpop.f32.mrb[0].mxu0
        %v3382 = vadd.f32 0.0, %v3381
        %v3383 = vpop.f32.mrb[0].mxu0
        %3384 = vmatprep.mubr.bf16.mxu0 0
        %3385 = vmatmul.mubr.bf16.gmra.mrb[0].mxu0 %v3181
        %v3386 = vpop.f32.mrb[0].mxu0
        %v3387 = vadd.f32 0.0, %v3386
        %v3388 = vpop.f32.mrb[0].mxu0
        %v3389 = vpop.f32.mrb[0].mxu0
        %v3390 = vadd.f32 0.0, %v3389
        %v3391 = vpop.f32.mrb[0].mxu0
        %3392 = vmatprep.mubr.bf16.mxu0 0
        %3393 = vmatmul.mubr.bf16.gmra.mrb[0].mxu0 %v3182
        %v3394 = vpop.f32.mrb[0].mxu0
        %v3395 = vadd.f32 0.0, %v3394
        %v3396 = vpop.f32.mrb[0].mxu0
        %v3397 = vpop.f32.mrb[0].mxu0
        %v3398 = vadd.f32 0.0, %v3397
        %v3399 = vpop.f32.mrb[0].mxu0
        %3400 = vmatprep.mubr.bf16.mxu0 0
        %3401 = vmatmul.mubr.bf16.gmra.mrb[0].mxu0 %v3183
        %v3402 = vpop.f32.mrb[0].mxu0
        %v3403 = vadd.f32 0.0, %v3402
        %v3404 = vpop.f32.mrb[0].mxu0
        %v3405 = vpop.f32.mrb[0].mxu0
        %v3406 = vadd.f32 0.0, %v3405
        %v3407 = vpop.f32.mrb[0].mxu0
        %3408 = vdwg.mxu0
        %v3409 = vadd.f32 %v3021, %v3283
        %v3410 = vadd.f32 %v3022, %v3286
        %v3411 = vadd.f32 %v3023, %v3291
        %v3412 = vadd.f32 %v3024, %v3294
        %v3413 = vadd.f32 %v3025, %v3299
        %v3414 = vadd.f32 %v3026, %v3302
        %v3415 = vadd.f32 %v3027, %v3307
        %v3416 = vadd.f32 %v3028, %v3310
        %v3417 = vadd.f32 %v3029, %v3315
        %v3418 = vadd.f32 %v3030, %v3318
        %v3419 = vadd.f32 %v3031, %v3323
        %v3420 = vadd.f32 %v3032, %v3326
        %v3421 = vadd.f32 %v3033, %v3331
        %v3422 = vadd.f32 %v3034, %v3334
        %v3423 = vadd.f32 %v3035, %v3339
        %v3424 = vadd.f32 %v3036, %v3342
        %v3425 = vadd.f32 %v3037, %v3347
        %v3426 = vadd.f32 %v3038, %v3350
        %v3427 = vadd.f32 %v3039, %v3355
        %v3428 = vadd.f32 %v3040, %v3358
        %v3429 = vadd.f32 %v3041, %v3363
        %v3430 = vadd.f32 %v3042, %v3366
        %v3431 = vadd.f32 %v3043, %v3371
        %v3432 = vadd.f32 %v3044, %v3374
        %v3433 = vadd.f32 %v3045, %v3379
        %v3434 = vadd.f32 %v3046, %v3382
        %v3435 = vadd.f32 %v3047, %v3387
        %v3436 = vadd.f32 %v3048, %v3390
        %v3437 = vadd.f32 %v3049, %v3395
        %v3438 = vadd.f32 %v3050, %v3398
        %v3439 = vadd.f32 %v3051, %v3403
        %v3440 = vadd.f32 %v3052, %v3406
        %s3441 = smul.addr %s1111, 4
        %s3442 = scalar_lea.vmem %s370, %s3441
        %v3443 = vld [vmem:[%s3442] sm:$0xf]
        %v3444 = vld [vmem:[%s3442 + $0x4] sm:$0xf]
        %v3445 = vld [vmem:[%s3442 + $0x8] sm:$0xf]
        %v3446 = vld [vmem:[%s3442 + $0xc] sm:$0xf]
        %v3447 = vld [vmem:[%s3442 + $0x10] sm:$0xf]
        %v3448 = vld [vmem:[%s3442 + $0x14] sm:$0xf]
        %v3449 = vld [vmem:[%s3442 + $0x18] sm:$0xf]
        %v3450 = vld [vmem:[%s3442 + $0x1c] sm:$0xf]
        %v3451 = vld [vmem:[%s3442 + $0x20] sm:$0xf]
        %v3452 = vld [vmem:[%s3442 + $0x24] sm:$0xf]
        %v3453 = vld [vmem:[%s3442 + $0x28] sm:$0xf]
        %v3454 = vld [vmem:[%s3442 + $0x2c] sm:$0xf]
        %v3455 = vld [vmem:[%s3442 + $0x30] sm:$0xf]
        %v3456 = vld [vmem:[%s3442 + $0x34] sm:$0xf]
        %v3457 = vld [vmem:[%s3442 + $0x38] sm:$0xf]
        %v3458 = vld [vmem:[%s3442 + $0x3c] sm:$0xf]
        %v3459 = vld [vmem:[%s3442 + $0x40] sm:$0xf]
        %v3460 = vld [vmem:[%s3442 + $0x44] sm:$0xf]
        %v3461 = vld [vmem:[%s3442 + $0x48] sm:$0xf]
        %v3462 = vld [vmem:[%s3442 + $0x4c] sm:$0xf]
        %v3463 = vld [vmem:[%s3442 + $0x50] sm:$0xf]
        %v3464 = vld [vmem:[%s3442 + $0x54] sm:$0xf]
        %v3465 = vld [vmem:[%s3442 + $0x58] sm:$0xf]
        %v3466 = vld [vmem:[%s3442 + $0x5c] sm:$0xf]
        %v3467 = vld [vmem:[%s3442 + $0x60] sm:$0xf]
        %v3468 = vld [vmem:[%s3442 + $0x64] sm:$0xf]
        %v3469 = vld [vmem:[%s3442 + $0x68] sm:$0xf]
        %v3470 = vld [vmem:[%s3442 + $0x6c] sm:$0xf]
        %v3471 = vld [vmem:[%s3442 + $0x70] sm:$0xf]
        %v3472 = vld [vmem:[%s3442 + $0x74] sm:$0xf]
        %v3473 = vld [vmem:[%s3442 + $0x78] sm:$0xf]
        %v3474 = vld [vmem:[%s3442 + $0x7c] sm:$0xf]
        %s3475 = scalar_lea.vmem %s374, 512
        %v3476 = vld [vmem:[%s3475] sm:$0xf]
        %v3477 = vld [vmem:[%s3475 + $0x4] sm:$0xf]
        %v3478 = vld [vmem:[%s3475 + $0x8] sm:$0xf]
        %v3479 = vld [vmem:[%s3475 + $0xc] sm:$0xf]
        %v3480 = vld [vmem:[%s3475 + $0x10] sm:$0xf]
        %v3481 = vld [vmem:[%s3475 + $0x14] sm:$0xf]
        %v3482 = vld [vmem:[%s3475 + $0x18] sm:$0xf]
        %v3483 = vld [vmem:[%s3475 + $0x1c] sm:$0xf]
        %v3484 = vld [vmem:[%s3475 + $0x20] sm:$0xf]
        %v3485 = vld [vmem:[%s3475 + $0x24] sm:$0xf]
        %v3486 = vld [vmem:[%s3475 + $0x28] sm:$0xf]
        %v3487 = vld [vmem:[%s3475 + $0x2c] sm:$0xf]
        %v3488 = vld [vmem:[%s3475 + $0x30] sm:$0xf]
        %v3489 = vld [vmem:[%s3475 + $0x34] sm:$0xf]
        %v3490 = vld [vmem:[%s3475 + $0x38] sm:$0xf]
        %v3491 = vld [vmem:[%s3475 + $0x3c] sm:$0xf]
        %v3524 = vunpack.c.l.b16 %v3443
        %v3525 = vunpack.c.l.b16 %v3444
        %v3526 = vunpack.c.l.b16 %v3445
        %v3527 = vunpack.c.l.b16 %v3446
        %v3528 = vunpack.c.l.b16 %v3447
        %v3529 = vunpack.c.l.b16 %v3448
        %v3530 = vunpack.c.l.b16 %v3449
        %v3531 = vunpack.c.l.b16 %v3450
        %v3532 = vunpack.c.l.b16 %v3451
        %v3533 = vunpack.c.l.b16 %v3452
        %v3534 = vunpack.c.l.b16 %v3453
        %v3535 = vunpack.c.l.b16 %v3454
        %v3536 = vunpack.c.l.b16 %v3455
        %v3537 = vunpack.c.l.b16 %v3456
        %v3538 = vunpack.c.l.b16 %v3457
        %v3539 = vunpack.c.l.b16 %v3458
        %v3540 = vunpack.c.l.b16 %v3459
        %v3541 = vunpack.c.l.b16 %v3460
        %v3542 = vunpack.c.l.b16 %v3461
        %v3543 = vunpack.c.l.b16 %v3462
        %v3544 = vunpack.c.l.b16 %v3463
        %v3545 = vunpack.c.l.b16 %v3464
        %v3546 = vunpack.c.l.b16 %v3465
        %v3547 = vunpack.c.l.b16 %v3466
        %v3548 = vunpack.c.l.b16 %v3467
        %v3549 = vunpack.c.l.b16 %v3468
        %v3550 = vunpack.c.l.b16 %v3469
        %v3551 = vunpack.c.l.b16 %v3470
        %v3552 = vunpack.c.l.b16 %v3471
        %v3553 = vunpack.c.l.b16 %v3472
        %v3554 = vunpack.c.l.b16 %v3473
        %v3555 = vunpack.c.l.b16 %v3474
        %v3556 = vpack.c.b16 %v3525, %v3524
        %v3557 = vpack.c.b16 %v3527, %v3526
        %v3558 = vpack.c.b16 %v3529, %v3528
        %v3559 = vpack.c.b16 %v3531, %v3530
        %v3560 = vpack.c.b16 %v3533, %v3532
        %v3561 = vpack.c.b16 %v3535, %v3534
        %v3562 = vpack.c.b16 %v3537, %v3536
        %v3563 = vpack.c.b16 %v3539, %v3538
        %v3564 = vpack.c.b16 %v3541, %v3540
        %v3565 = vpack.c.b16 %v3543, %v3542
        %v3566 = vpack.c.b16 %v3545, %v3544
        %v3567 = vpack.c.b16 %v3547, %v3546
        %v3568 = vpack.c.b16 %v3549, %v3548
        %v3569 = vpack.c.b16 %v3551, %v3550
        %v3570 = vpack.c.b16 %v3553, %v3552
        %v3571 = vpack.c.b16 %v3555, %v3554
        %v3604 = vunpack.c.l.b16 %v3476
        %v3605 = vunpack.c.l.b16 %v3477
        %v3606 = vunpack.c.l.b16 %v3478
        %v3607 = vunpack.c.l.b16 %v3479
        %v3608 = vunpack.c.l.b16 %v3480
        %v3609 = vunpack.c.l.b16 %v3481
        %v3610 = vunpack.c.l.b16 %v3482
        %v3611 = vunpack.c.l.b16 %v3483
        %v3612 = vunpack.c.l.b16 %v3484
        %v3613 = vunpack.c.l.b16 %v3485
        %v3614 = vunpack.c.l.b16 %v3486
        %v3615 = vunpack.c.l.b16 %v3487
        %v3616 = vunpack.c.l.b16 %v3488
        %v3617 = vunpack.c.l.b16 %v3489
        %v3618 = vunpack.c.l.b16 %v3490
        %v3619 = vunpack.c.l.b16 %v3491
        %v3620 = vpack.c.b16 %v3605, %v3604
        %v3621 = vpack.c.b16 %v3607, %v3606
        %v3622 = vpack.c.b16 %v3609, %v3608
        %v3623 = vpack.c.b16 %v3611, %v3610
        %v3624 = vpack.c.b16 %v3613, %v3612
        %v3625 = vpack.c.b16 %v3615, %v3614
        %v3626 = vpack.c.b16 %v3617, %v3616
        %v3627 = vpack.c.b16 %v3619, %v3618
        %3636 = vmatprep.subr.bf16.mxu0 0
        %3637 = vmatpush1.bf16.msra.mxu0 %v3620
        %3638 = vmatprep.subr.bf16.mxu0 0
        %3639 = vmatpush1.bf16.msra.mxu0 %v3621
        %3640 = vmatprep.subr.bf16.mxu0 0
        %3641 = vmatpush1.bf16.msra.mxu0 %v3622
        %3642 = vmatprep.subr.bf16.mxu0 0
        %3643 = vmatpush1.bf16.msra.mxu0 %v3623
        %3644 = vmatprep.subr.bf16.mxu0 0
        %3645 = vmatpush1.bf16.msra.mxu0 %v3624
        %3646 = vmatprep.subr.bf16.mxu0 0
        %3647 = vmatpush1.bf16.msra.mxu0 %v3625
        %3648 = vmatprep.subr.bf16.mxu0 0
        %3649 = vmatpush1.bf16.msra.mxu0 %v3626
        %3650 = vmatprep.subr.bf16.mxu0 0
        %3651 = vmatpush1.bf16.msra.mxu0 %v3627
        %3652 = vmatprep.subr.bf16.mxu0 0
        %3653 = vmatpush1.bf16.msra.mxu0 0
        %3654 = vmatprep.subr.bf16.mxu0 0
        %3655 = vmatpush1.bf16.msra.mxu0 0
        %3656 = vmatprep.subr.bf16.mxu0 0
        %3657 = vmatpush1.bf16.msra.mxu0 0
        %3658 = vmatprep.subr.bf16.mxu0 0
        %3659 = vmatpush1.bf16.msra.mxu0 0
        %3660 = vmatprep.subr.bf16.mxu0 0
        %3661 = vmatpush1.bf16.msra.mxu0 0
        %3662 = vmatprep.subr.bf16.mxu0 0
        %3663 = vmatpush1.bf16.msra.mxu0 0
        %3664 = vmatprep.subr.bf16.mxu0 0
        %3665 = vmatpush1.bf16.msra.mxu0 0
        %3666 = vmatprep.subr.bf16.mxu0 0
        %3667 = vmatpush1.bf16.msra.mxu0 0
        %3668 = vmatprep.mubr.bf16.mxu0 0
        %3669 = vmatmul.mubr.bf16.gmra.mrb[0].mxu0 %v3556
        %v3670 = vpop.f32.mrb[0].mxu0
        %v3671 = vadd.f32 0.0, %v3670
        %v3672 = vpop.f32.mrb[0].mxu0
        %v3673 = vpop.f32.mrb[0].mxu0
        %v3674 = vadd.f32 0.0, %v3673
        %v3675 = vpop.f32.mrb[0].mxu0
        %3676 = vmatprep.mubr.bf16.mxu0 0
        %3677 = vmatmul.mubr.bf16.gmra.mrb[0].mxu0 %v3557
        %v3678 = vpop.f32.mrb[0].mxu0
        %v3679 = vadd.f32 0.0, %v3678
        %v3680 = vpop.f32.mrb[0].mxu0
        %v3681 = vpop.f32.mrb[0].mxu0
        %v3682 = vadd.f32 0.0, %v3681
        %v3683 = vpop.f32.mrb[0].mxu0
        %3684 = vmatprep.mubr.bf16.mxu0 0
        %3685 = vmatmul.mubr.bf16.gmra.mrb[0].mxu0 %v3558
        %v3686 = vpop.f32.mrb[0].mxu0
        %v3687 = vadd.f32 0.0, %v3686
        %v3688 = vpop.f32.mrb[0].mxu0
        %v3689 = vpop.f32.mrb[0].mxu0
        %v3690 = vadd.f32 0.0, %v3689
        %v3691 = vpop.f32.mrb[0].mxu0
        %3692 = vmatprep.mubr.bf16.mxu0 0
        %3693 = vmatmul.mubr.bf16.gmra.mrb[0].mxu0 %v3559
        %v3694 = vpop.f32.mrb[0].mxu0
        %v3695 = vadd.f32 0.0, %v3694
        %v3696 = vpop.f32.mrb[0].mxu0
        %v3697 = vpop.f32.mrb[0].mxu0
        %v3698 = vadd.f32 0.0, %v3697
        %v3699 = vpop.f32.mrb[0].mxu0
        %3700 = vmatprep.mubr.bf16.mxu0 0
        %3701 = vmatmul.mubr.bf16.gmra.mrb[0].mxu0 %v3560
        %v3702 = vpop.f32.mrb[0].mxu0
        %v3703 = vadd.f32 0.0, %v3702
        %v3704 = vpop.f32.mrb[0].mxu0
        %v3705 = vpop.f32.mrb[0].mxu0
        %v3706 = vadd.f32 0.0, %v3705
        %v3707 = vpop.f32.mrb[0].mxu0
        %3708 = vmatprep.mubr.bf16.mxu0 0
        %3709 = vmatmul.mubr.bf16.gmra.mrb[0].mxu0 %v3561
        %v3710 = vpop.f32.mrb[0].mxu0
        %v3711 = vadd.f32 0.0, %v3710
        %v3712 = vpop.f32.mrb[0].mxu0
        %v3713 = vpop.f32.mrb[0].mxu0
        %v3714 = vadd.f32 0.0, %v3713
        %v3715 = vpop.f32.mrb[0].mxu0
        %3716 = vmatprep.mubr.bf16.mxu0 0
        %3717 = vmatmul.mubr.bf16.gmra.mrb[0].mxu0 %v3562
        %v3718 = vpop.f32.mrb[0].mxu0
        %v3719 = vadd.f32 0.0, %v3718
        %v3720 = vpop.f32.mrb[0].mxu0
        %v3721 = vpop.f32.mrb[0].mxu0
        %v3722 = vadd.f32 0.0, %v3721
        %v3723 = vpop.f32.mrb[0].mxu0
        %3724 = vmatprep.mubr.bf16.mxu0 0
        %3725 = vmatmul.mubr.bf16.gmra.mrb[0].mxu0 %v3563
        %v3726 = vpop.f32.mrb[0].mxu0
        %v3727 = vadd.f32 0.0, %v3726
        %v3728 = vpop.f32.mrb[0].mxu0
        %v3729 = vpop.f32.mrb[0].mxu0
        %v3730 = vadd.f32 0.0, %v3729
        %v3731 = vpop.f32.mrb[0].mxu0
        %3732 = vmatprep.mubr.bf16.mxu0 0
        %3733 = vmatmul.mubr.bf16.gmra.mrb[0].mxu0 %v3564
        %v3734 = vpop.f32.mrb[0].mxu0
        %v3735 = vadd.f32 0.0, %v3734
        %v3736 = vpop.f32.mrb[0].mxu0
        %v3737 = vpop.f32.mrb[0].mxu0
        %v3738 = vadd.f32 0.0, %v3737
        %v3739 = vpop.f32.mrb[0].mxu0
        %3740 = vmatprep.mubr.bf16.mxu0 0
        %3741 = vmatmul.mubr.bf16.gmra.mrb[0].mxu0 %v3565
        %v3742 = vpop.f32.mrb[0].mxu0
        %v3743 = vadd.f32 0.0, %v3742
        %v3744 = vpop.f32.mrb[0].mxu0
        %v3745 = vpop.f32.mrb[0].mxu0
        %v3746 = vadd.f32 0.0, %v3745
        %v3747 = vpop.f32.mrb[0].mxu0
        %3748 = vmatprep.mubr.bf16.mxu0 0
        %3749 = vmatmul.mubr.bf16.gmra.mrb[0].mxu0 %v3566
        %v3750 = vpop.f32.mrb[0].mxu0
        %v3751 = vadd.f32 0.0, %v3750
        %v3752 = vpop.f32.mrb[0].mxu0
        %v3753 = vpop.f32.mrb[0].mxu0
        %v3754 = vadd.f32 0.0, %v3753
        %v3755 = vpop.f32.mrb[0].mxu0
        %3756 = vmatprep.mubr.bf16.mxu0 0
        %3757 = vmatmul.mubr.bf16.gmra.mrb[0].mxu0 %v3567
        %v3758 = vpop.f32.mrb[0].mxu0
        %v3759 = vadd.f32 0.0, %v3758
        %v3760 = vpop.f32.mrb[0].mxu0
        %v3761 = vpop.f32.mrb[0].mxu0
        %v3762 = vadd.f32 0.0, %v3761
        %v3763 = vpop.f32.mrb[0].mxu0
        %3764 = vmatprep.mubr.bf16.mxu0 0
        %3765 = vmatmul.mubr.bf16.gmra.mrb[0].mxu0 %v3568
        %v3766 = vpop.f32.mrb[0].mxu0
        %v3767 = vadd.f32 0.0, %v3766
        %v3768 = vpop.f32.mrb[0].mxu0
        %v3769 = vpop.f32.mrb[0].mxu0
        %v3770 = vadd.f32 0.0, %v3769
        %v3771 = vpop.f32.mrb[0].mxu0
        %3772 = vmatprep.mubr.bf16.mxu0 0
        %3773 = vmatmul.mubr.bf16.gmra.mrb[0].mxu0 %v3569
        %v3774 = vpop.f32.mrb[0].mxu0
        %v3775 = vadd.f32 0.0, %v3774
        %v3776 = vpop.f32.mrb[0].mxu0
        %v3777 = vpop.f32.mrb[0].mxu0
        %v3778 = vadd.f32 0.0, %v3777
        %v3779 = vpop.f32.mrb[0].mxu0
        %3780 = vmatprep.mubr.bf16.mxu0 0
        %3781 = vmatmul.mubr.bf16.gmra.mrb[0].mxu0 %v3570
        %v3782 = vpop.f32.mrb[0].mxu0
        %v3783 = vadd.f32 0.0, %v3782
        %v3784 = vpop.f32.mrb[0].mxu0
        %v3785 = vpop.f32.mrb[0].mxu0
        %v3786 = vadd.f32 0.0, %v3785
        %v3787 = vpop.f32.mrb[0].mxu0
        %3788 = vmatprep.mubr.bf16.mxu0 0
        %3789 = vmatmul.mubr.bf16.gmra.mrb[0].mxu0 %v3571
        %v3790 = vpop.f32.mrb[0].mxu0
        %v3791 = vadd.f32 0.0, %v3790
        %v3792 = vpop.f32.mrb[0].mxu0
        %v3793 = vpop.f32.mrb[0].mxu0
        %v3794 = vadd.f32 0.0, %v3793
        %v3795 = vpop.f32.mrb[0].mxu0
        %3796 = vdwg.mxu0
        %v3797 = vadd.f32 %v3409, %v3671
        %v3798 = vadd.f32 %v3410, %v3674
        %v3799 = vadd.f32 %v3411, %v3679
        %v3800 = vadd.f32 %v3412, %v3682
        %v3801 = vadd.f32 %v3413, %v3687
        %v3802 = vadd.f32 %v3414, %v3690
        %v3803 = vadd.f32 %v3415, %v3695
        %v3804 = vadd.f32 %v3416, %v3698
        %v3805 = vadd.f32 %v3417, %v3703
        %v3806 = vadd.f32 %v3418, %v3706
        %v3807 = vadd.f32 %v3419, %v3711
        %v3808 = vadd.f32 %v3420, %v3714
        %v3809 = vadd.f32 %v3421, %v3719
        %v3810 = vadd.f32 %v3422, %v3722
        %v3811 = vadd.f32 %v3423, %v3727
        %v3812 = vadd.f32 %v3424, %v3730
        %v3813 = vadd.f32 %v3425, %v3735
        %v3814 = vadd.f32 %v3426, %v3738
        %v3815 = vadd.f32 %v3427, %v3743
        %v3816 = vadd.f32 %v3428, %v3746
        %v3817 = vadd.f32 %v3429, %v3751
        %v3818 = vadd.f32 %v3430, %v3754
        %v3819 = vadd.f32 %v3431, %v3759
        %v3820 = vadd.f32 %v3432, %v3762
        %v3821 = vadd.f32 %v3433, %v3767
        %v3822 = vadd.f32 %v3434, %v3770
        %v3823 = vadd.f32 %v3435, %v3775
        %v3824 = vadd.f32 %v3436, %v3778
        %v3825 = vadd.f32 %v3437, %v3783
        %v3826 = vadd.f32 %v3438, %v3786
        %v3827 = vadd.f32 %v3439, %v3791
        %v3828 = vadd.f32 %v3440, %v3794
        %v3829 = vld [vmem:[%s377] sm:$0x1]
        %v3831 = vlaneseq
        %v3832 = vshrl.u32 %v3831, 7
        %v3833 = vsub.s32 0, %v3832
        %v3834 = vrot.slane %v3829, %v3833
        %v3836 = vadd.f32 %v3797, %v3834
        %v3837 = vadd.f32 %v3798, %v3834
        %v3838 = vadd.f32 %v3799, %v3834
        %v3839 = vadd.f32 %v3800, %v3834
        %v3840 = vadd.f32 %v3801, %v3834
        %v3841 = vadd.f32 %v3802, %v3834
        %v3842 = vadd.f32 %v3803, %v3834
        %v3843 = vadd.f32 %v3804, %v3834
        %v3844 = vadd.f32 %v3805, %v3834
        %v3845 = vadd.f32 %v3806, %v3834
        %v3846 = vadd.f32 %v3807, %v3834
        %v3847 = vadd.f32 %v3808, %v3834
        %v3848 = vadd.f32 %v3809, %v3834
        %v3849 = vadd.f32 %v3810, %v3834
        %v3850 = vadd.f32 %v3811, %v3834
        %v3851 = vadd.f32 %v3812, %v3834
        %v3852 = vadd.f32 %v3813, %v3834
        %v3853 = vadd.f32 %v3814, %v3834
        %v3854 = vadd.f32 %v3815, %v3834
        %v3855 = vadd.f32 %v3816, %v3834
        %v3856 = vadd.f32 %v3817, %v3834
        %v3857 = vadd.f32 %v3818, %v3834
        %v3858 = vadd.f32 %v3819, %v3834
        %v3859 = vadd.f32 %v3820, %v3834
        %v3860 = vadd.f32 %v3821, %v3834
        %v3861 = vadd.f32 %v3822, %v3834
        %v3862 = vadd.f32 %v3823, %v3834
        %v3863 = vadd.f32 %v3824, %v3834
        %v3864 = vadd.f32 %v3825, %v3834
        %v3865 = vadd.f32 %v3826, %v3834
        %v3866 = vadd.f32 %v3827, %v3834
        %v3867 = vadd.f32 %v3828, %v3834
        %v3868 = vld [vmem:[%s389] sm:$0xff]
        %v3869 = vld [vmem:[%s389 + $0x8] sm:$0xff]
        %v3870 = vld [vmem:[%s389 + $0x10] sm:$0xff]
        %v3871 = vld [vmem:[%s389 + $0x18] sm:$0xff]
        %v3872 = vld [vmem:[%s389 + $0x20] sm:$0xff]
        %v3873 = vld [vmem:[%s389 + $0x28] sm:$0xff]
        %v3874 = vld [vmem:[%s389 + $0x30] sm:$0xff]
        %v3875 = vld [vmem:[%s389 + $0x38] sm:$0xff]
        %v3876 = vld [vmem:[%s389 + $0x40] sm:$0xff]
        %v3877 = vld [vmem:[%s389 + $0x48] sm:$0xff]
        %v3878 = vld [vmem:[%s389 + $0x50] sm:$0xff]
        %v3879 = vld [vmem:[%s389 + $0x58] sm:$0xff]
        %v3880 = vld [vmem:[%s389 + $0x60] sm:$0xff]
        %v3881 = vld [vmem:[%s389 + $0x68] sm:$0xff]
        %v3882 = vld [vmem:[%s389 + $0x70] sm:$0xff]
        %v3883 = vld [vmem:[%s389 + $0x78] sm:$0xff]
        %v3884 = vld [vmem:[%s389 + $0x80] sm:$0xff]
        %v3885 = vld [vmem:[%s389 + $0x88] sm:$0xff]
        %v3886 = vld [vmem:[%s389 + $0x90] sm:$0xff]
        %v3887 = vld [vmem:[%s389 + $0x98] sm:$0xff]
        %v3888 = vld [vmem:[%s389 + $0xa0] sm:$0xff]
        %v3889 = vld [vmem:[%s389 + $0xa8] sm:$0xff]
        %v3890 = vld [vmem:[%s389 + $0xb0] sm:$0xff]
        %v3891 = vld [vmem:[%s389 + $0xb8] sm:$0xff]
        %v3892 = vld [vmem:[%s389 + $0xc0] sm:$0xff]
        %v3893 = vld [vmem:[%s389 + $0xc8] sm:$0xff]
        %v3894 = vld [vmem:[%s389 + $0xd0] sm:$0xff]
        %v3895 = vld [vmem:[%s389 + $0xd8] sm:$0xff]
        %v3896 = vld [vmem:[%s389 + $0xe0] sm:$0xff]
        %v3897 = vld [vmem:[%s389 + $0xe8] sm:$0xff]
        %v3898 = vld [vmem:[%s389 + $0xf0] sm:$0xff]
        %v3899 = vld [vmem:[%s389 + $0xf8] sm:$0xff]
        %v3900 = vadd.f32 %v3836, %v3868
        %v3901 = vadd.f32 %v3837, %v3869
        %v3902 = vadd.f32 %v3838, %v3870
        %v3903 = vadd.f32 %v3839, %v3871
        %v3904 = vadd.f32 %v3840, %v3872
        %v3905 = vadd.f32 %v3841, %v3873
        %v3906 = vadd.f32 %v3842, %v3874
        %v3907 = vadd.f32 %v3843, %v3875
        %v3908 = vadd.f32 %v3844, %v3876
        %v3909 = vadd.f32 %v3845, %v3877
        %v3910 = vadd.f32 %v3846, %v3878
        %v3911 = vadd.f32 %v3847, %v3879
        %v3912 = vadd.f32 %v3848, %v3880
        %v3913 = vadd.f32 %v3849, %v3881
        %v3914 = vadd.f32 %v3850, %v3882
        %v3915 = vadd.f32 %v3851, %v3883
        %v3916 = vadd.f32 %v3852, %v3884
        %v3917 = vadd.f32 %v3853, %v3885
        %v3918 = vadd.f32 %v3854, %v3886
        %v3919 = vadd.f32 %v3855, %v3887
        %v3920 = vadd.f32 %v3856, %v3888
        %v3921 = vadd.f32 %v3857, %v3889
        %v3922 = vadd.f32 %v3858, %v3890
        %v3923 = vadd.f32 %v3859, %v3891
        %v3924 = vadd.f32 %v3860, %v3892
        %v3925 = vadd.f32 %v3861, %v3893
        %v3926 = vadd.f32 %v3862, %v3894
        %v3927 = vadd.f32 %v3863, %v3895
        %v3928 = vadd.f32 %v3864, %v3896
        %v3929 = vadd.f32 %v3865, %v3897
        %v3930 = vadd.f32 %v3866, %v3898
        %v3931 = vadd.f32 %v3867, %v3899
        %3932 = vst [vmem:[%s355] sm:$0xff] %v3900
        %3933 = vst [vmem:[%s355 + $0x8] sm:$0xff] %v3901
        %3934 = vst [vmem:[%s355 + $0x10] sm:$0xff] %v3902
        %3935 = vst [vmem:[%s355 + $0x18] sm:$0xff] %v3903
        %3936 = vst [vmem:[%s355 + $0x20] sm:$0xff] %v3904
        %3937 = vst [vmem:[%s355 + $0x28] sm:$0xff] %v3905
        %3938 = vst [vmem:[%s355 + $0x30] sm:$0xff] %v3906
        %3939 = vst [vmem:[%s355 + $0x38] sm:$0xff] %v3907
        %3940 = vst [vmem:[%s355 + $0x40] sm:$0xff] %v3908
        %3941 = vst [vmem:[%s355 + $0x48] sm:$0xff] %v3909
        %3942 = vst [vmem:[%s355 + $0x50] sm:$0xff] %v3910
        %3943 = vst [vmem:[%s355 + $0x58] sm:$0xff] %v3911
        %3944 = vst [vmem:[%s355 + $0x60] sm:$0xff] %v3912
        %3945 = vst [vmem:[%s355 + $0x68] sm:$0xff] %v3913
        %3946 = vst [vmem:[%s355 + $0x70] sm:$0xff] %v3914
        %3947 = vst [vmem:[%s355 + $0x78] sm:$0xff] %v3915
        %3948 = vst [vmem:[%s355 + $0x80] sm:$0xff] %v3916
        %3949 = vst [vmem:[%s355 + $0x88] sm:$0xff] %v3917
        %3950 = vst [vmem:[%s355 + $0x90] sm:$0xff] %v3918
        %3951 = vst [vmem:[%s355 + $0x98] sm:$0xff] %v3919
        %3952 = vst [vmem:[%s355 + $0xa0] sm:$0xff] %v3920
        %3953 = vst [vmem:[%s355 + $0xa8] sm:$0xff] %v3921
        %3954 = vst [vmem:[%s355 + $0xb0] sm:$0xff] %v3922
        %3955 = vst [vmem:[%s355 + $0xb8] sm:$0xff] %v3923
        %3956 = vst [vmem:[%s355 + $0xc0] sm:$0xff] %v3924
        %3957 = vst [vmem:[%s355 + $0xc8] sm:$0xff] %v3925
        %3958 = vst [vmem:[%s355 + $0xd0] sm:$0xff] %v3926
        %3959 = vst [vmem:[%s355 + $0xd8] sm:$0xff] %v3927
        %3960 = vst [vmem:[%s355 + $0xe0] sm:$0xff] %v3928
        %3961 = vst [vmem:[%s355 + $0xe8] sm:$0xff] %v3929
        %3962 = vst [vmem:[%s355 + $0xf0] sm:$0xff] %v3930
        %3963 = vst [vmem:[%s355 + $0xf8] sm:$0xff] %v3931
        %s3964 = sand.u32 %s211, 1
        %s3965 = scalar_lea.sflag [#allocation3], %s3964
        %s3966 = sand.u32 %s211, 1
        %s3967 = smul.addr %s3966, 256
        %s3968 = scalar_lea.vmem [#allocation2], %s3967
        // Predicated region
        $region45: #{refine_forward.5} parent=43 // pred_check
          %p3969 = pneg %p221
        $region46: #{refine_forward.5} parent=43 // pred_check_branch
          %3971 = sbr.rel (%p3969) target = $region48
        $region47: #{refine_forward.5} parent=43 // pred_region
          %s3972 = smul.u32 32, %s27
          %s3974 = ssub.s32 4096, 4096
          %3975 = vsyncadd %s3965, %s3974
          %s3976 = sadd.s32 %s26, %s3972
          %s3977 = smul.addr %s25, 32
          %s3978 = sadd.s32 %s3976, %s3977
          %s3979 = smul.addr %s3978, 128
          %s3980 = scalar_lea.hbm %s6, %s3979
          %s3981 = sshll.u32 %s3968, 4
          %s3982 = int_to_ptr.vmem [resolvable:$true] %s3981
          %3987 = dma.vmem_to_hbm [thread:$0]  %s3982, 4096, %s3980, %s3965, 128, 128, 8
        $region48: #{refine_forward.5} parent=43 // pred_fallthru
          _
      $region44: #{refine_forward.5} parent=5 // pred_fallthru
        _
      %p3988 = scmp.le.s32.totalorder 2, %s15
      // Predicated region
      $region49: #{refine_forward.5} parent=5 // pred_check
        %p3989 = pneg %p3988
      $region50: #{refine_forward.5} parent=5 // pred_check_branch
        %3991 = sbr.rel (%p3989) target = $region52
      $region51: #{refine_forward.5} parent=5 // pred_region
        %s3992 = ssub.s32 %s15, 2
        // Predicated region
        $region53: #{refine_forward.5} parent=51 // pred_check
          %p3993 = pneg %p227
        $region54: #{refine_forward.5} parent=51 // pred_check_branch
          %3995 = sbr.rel (%p3993) target = $region56
        $region55: #{refine_forward.5} parent=51 // pred_region
          %s3996 = sand.u32 %s212, 1
          %s3997 = scalar_lea.sflag [#allocation3], %s3996
          %s3998 = sand.u32 %s212, 1
          %s3999 = smul.addr %s3998, 256
          %s4000 = scalar_lea.vmem [#allocation2], %s3999
          %4001 = dma.done %s3997, 4096
        $region56: #{refine_forward.5} parent=51 // pred_fallthru
          _
      $region52: #{refine_forward.5} parent=5 // pred_fallthru
        _
    $region6: #{refine_forward.5} parent=1 // loop_footer
      %s19 = sadd.s32 1, %s15
    $region7: #{refine_forward.5} parent=1 // loop_footer_branch
      %14 = sbr.rel target = $region3
    $region8: #{refine_forward.5} parent=1 // loop_exit
      _
    %4002 = vsyncpa [#allocation3], 1
    %s4003 = scalar_lea.sflag [#allocation3], 1
    %4004 = vsyncpa %s4003, 1

</llo_original>
